<compile_context>
chip_gen: v7x
topology: tpu7x:2x2x1
jax: 0.10.0
libtpu: 0.0.40
codegen_flags: <defaults>
</compile_context>

<pallas_src>
import functools

import jax
import jax.numpy as jnp
import numpy as np
from jax import lax
from jax.experimental import pallas as pl
from jax.experimental.pallas import tpu as pltpu

NEG_SLOPE = 0.2
BN_EPS = 1e-5
F32 = jnp.float32
_COMPILER_PARAMS = pltpu.CompilerParams(vmem_limit_bytes=32 * 1024 * 1024)


def _leaky(x):
    return jnp.where(x > 0, x, NEG_SLOPE * x)


# ----------------------------- Pallas kernels --------------------------------

def _conv_sum(x, s_ref, m_ref, b_ref):
    """Stride-2 (de)conv as  sum_k (S_k @ x) @ M_k + bias_row  (all MXU)."""
    acc = None
    for k in range(3):                                # static unroll, 3 taps
        t = jnp.dot(s_ref[k], x, preferred_element_type=jnp.float32)
        y = jnp.dot(t, m_ref[k], preferred_element_type=jnp.float32)
        acc = y if acc is None else acc + y
    return acc + b_ref[...]


def _bn_lrelu(y, g_ref, gamma_ref, beta_ref, inv_cnt):
    """Training-mode BatchNorm + LeakyReLU.  Rows are reduced FIRST, then a
    tiny (1,256)x(256,256) channel-grouping matmul broadcasts the per-channel
    sums back to every column (per perf review)."""
    s = jnp.sum(y, axis=0, keepdims=True)                              # (1,256)
    mean = jnp.dot(s, g_ref[...], preferred_element_type=jnp.float32) * inv_cnt
    c = y - mean
    s2 = jnp.sum(c * c, axis=0, keepdims=True)                         # (1,256)
    var = jnp.dot(s2, g_ref[...], preferred_element_type=jnp.float32) * inv_cnt
    scale = gamma_ref[...] * lax.rsqrt(var + BN_EPS)
    return _leaky(c * scale + beta_ref[...])


def _encoder_kernel(x_ref, s1_ref, m1_ref, b1_ref,
                    s2_ref, m2_ref, b2_ref,
                    g_ref, gamma_ref, beta_ref, o_ref, *, inv_cnt):
    """Conv2d(3,8,s2)+LReLU -> Conv2d(8,12,s2) -> BN(12) -> LReLU."""
    h = _leaky(_conv_sum(x_ref[...], s1_ref, m1_ref, b1_ref))
    y = _conv_sum(h, s2_ref, m2_ref, b2_ref)
    o_ref[...] = _bn_lrelu(y, g_ref, gamma_ref, beta_ref, inv_cnt).astype(
        o_ref.dtype)


def _mlp_kernel(f_ref, w1, b1, w2, b2, w3, b3, w4, b4, w5, b5, w6, b6,
                enc_ref, dec_ref):
    """All six Linear layers (encoder el1-3, decoder dl1-3) in one kernel."""
    dot = lambda a, w: jnp.dot(a, w[...], preferred_element_type=jnp.float32)
    h = _leaky(dot(f_ref[...], w1) + b1[...])
    h = _leaky(dot(h, w2) + b2[...])
    e = dot(h, w3) + b3[...]
    enc_ref[...] = e.astype(enc_ref.dtype)
    d = _leaky(dot(e, w4) + b4[...])
    d = _leaky(dot(d, w5) + b5[...])
    d = _leaky(dot(d, w6) + b6[...])
    dec_ref[...] = d.astype(dec_ref.dtype)


def _decoder_kernel(d_ref, s1_ref, m1_ref, b1_ref,
                    g_ref, gamma_ref, beta_ref,
                    s2_ref, m2_ref, b2_ref, o_ref, *, inv_cnt):
    """ConvT(12,8)+BN(8)+LReLU -> ConvT(8,3)+tanh."""
    h = _conv_sum(d_ref[...], s1_ref, m1_ref, b1_ref)
    h = _bn_lrelu(h, g_ref, gamma_ref, beta_ref, inv_cnt)
    y = _conv_sum(h, s2_ref, m2_ref, b2_ref)
    o_ref[...] = jnp.tanh(y).astype(o_ref.dtype)


# ----------------- one-time host-side constant / weight prep -----------------

def _conv2d_consts(w, bias, B, H, W):
    """Conv2d(k=3, s=2, p=1).  w: (Cout, Cin, 3, 3) PyTorch layout.
    Input rows (b*H+h), cols (w*Cin+ci); output rows (b*Ho+ho), cols
    (wo*Cout+co); all column dims padded to 256 lanes."""
    Cout, Cin = w.shape[0], w.shape[1]
    Ho, Wo = H // 2, W // 2
    S = np.zeros((3, B * Ho, B * H), np.float32)
    M = np.zeros((3, 256, 256), np.float32)
    brow = np.zeros((1, 256), np.float32)
    for kh in range(3):
        for b in range(B):
            for ho in range(Ho):
                hi = 2 * ho - 1 + kh
                if 0 <= hi < H:
                    S[kh, b * Ho + ho, b * H + hi] = 1.0
        for wo in range(Wo):
            for kw in range(3):
                wi = 2 * wo - 1 + kw
                if 0 <= wi < W:
                    M[kh, wi * Cin:(wi + 1) * Cin,
                          wo * Cout:(wo + 1) * Cout] = w[:, :, kh, kw].T
    brow[0, :Wo * Cout] = np.tile(bias, Wo)
    return S, M, brow


def _deconv2d_consts(w, bias, B, H, W):
    """ConvTranspose2d(k=3, s=2, p=1, output_padding=1).
    w: (Cin, Cout, 3, 3) PyTorch layout.  out[oy] <- in[(oy+1-ky)/2]."""
    Cin, Cout = w.shape[0], w.shape[1]
    Ho, Wo = 2 * H, 2 * W
    S = np.zeros((3, B * Ho, B * H), np.float32)
    M = np.zeros((3, 256, 256), np.float32)
    brow = np.zeros((1, 256), np.float32)
    for ky in range(3):
        for b in range(B):
            for oy in range(Ho):
                num = oy + 1 - ky
                if num % 2 == 0 and 0 <= num // 2 < H:
                    S[ky, b * Ho + oy, b * H + num // 2] = 1.0
        for ox in range(Wo):
            for kx in range(3):
                num = ox + 1 - kx
                if num % 2 == 0 and 0 <= num // 2 < W:
                    wi = num // 2
                    M[ky, wi * Cin:(wi + 1) * Cin,
                          ox * Cout:(ox + 1) * Cout] = w[:, :, ky, kx]
    brow[0, :Wo * Cout] = np.tile(bias, Wo)
    return S, M, brow


def _group_matrix(C, real_cols):
    """(256,256) 0/1 matrix grouping columns by BatchNorm channel (col % C)."""
    j = np.arange(256)
    valid = j < real_cols
    G = ((j[:, None] % C) == (j[None, :] % C)) & valid[:, None] & valid[None, :]
    return G.astype(np.float32)


def _prep_el1(w, b):
    """Linear(3072,128): permute rows from PyTorch Flatten order (c,h,w) to
    the kernel's (h, w, c) row layout and lane-pad to 4096 input features."""
    wp = np.zeros((16, 256, 128), np.float32)
    wp[:, :192, :] = np.transpose(
        w.reshape(128, 12, 16, 16), (2, 3, 1, 0)).reshape(16, 192, 128)
    return wp.reshape(4096, 128), b.reshape(1, 128).astype(np.float32)


def _prep_square(w, b, kin, kout):
    """Small Linear: (out,in) torch weight -> lane-padded (128,128) (in,out)."""
    wp = np.zeros((128, 128), np.float32)
    wp[:kin, :kout] = w.T
    bp = np.zeros((1, 128), np.float32)
    bp[0, :kout] = b
    return wp, bp


def _prep_dl3(w, b):
    """Linear(128,3072): permute output columns from PyTorch Unflatten order
    (c,h,w) to the kernel's (h, w, c) layout, lane-padded to 4096 outputs."""
    wp = np.zeros((16, 256, 128), np.float32)
    wp[:, :192, :] = np.transpose(
        w.reshape(12, 16, 16, 128), (1, 2, 0, 3)).reshape(16, 192, 128)
    bp = np.zeros((16, 256), np.float32)
    bp[:, :192] = np.transpose(b.reshape(12, 16, 16), (1, 2, 0)).reshape(16, 192)
    return np.ascontiguousarray(wp.reshape(4096, 128).T), bp.reshape(1, 4096)


def prepare_params(p, batch):
    """One-time conversion of natural (PyTorch-layout) params into the
    kernel-ready constants (runs on host; nothing here re-executes per step)."""
    a = lambda v: np.asarray(v, np.float32)
    cp = {}
    cp["enc_s1"], cp["enc_m1"], cp["enc_b1"] = _conv2d_consts(
        a(p["ec1_w"]), a(p["ec1_b"]), batch, 64, 64)
    cp["enc_s2"], cp["enc_m2"], cp["enc_b2"] = _conv2d_consts(
        a(p["ec2_w"]), a(p["ec2_b"]), batch, 32, 32)
    cp["enc_g"] = _group_matrix(12, 192)
    row = np.zeros((1, 256), np.float32); row[0, :192] = np.tile(a(p["ebn_g"]), 16)
    cp["enc_gamma"] = row
    row = np.zeros((1, 256), np.float32); row[0, :192] = np.tile(a(p["ebn_b"]), 16)
    cp["enc_beta"] = row

    cp["w1"], cp["b1"] = _prep_el1(a(p["el1_w"]), a(p["el1_b"]))
    cp["w2"], cp["b2"] = _prep_square(a(p["el2_w"]), a(p["el2_b"]), 128, 16)
    cp["w3"], cp["b3"] = _prep_square(a(p["el3_w"]), a(p["el3_b"]), 16, 3)
    cp["w4"], cp["b4"] = _prep_square(a(p["dl1_w"]), a(p["dl1_b"]), 3, 16)
    cp["w5"], cp["b5"] = _prep_square(a(p["dl2_w"]), a(p["dl2_b"]), 16, 128)
    cp["w6"], cp["b6"] = _prep_dl3(a(p["dl3_w"]), a(p["dl3_b"]))

    cp["dec_s1"], cp["dec_m1"], cp["dec_b1"] = _deconv2d_consts(
        a(p["dc1_w"]), a(p["dc1_b"]), batch, 16, 16)
    cp["dec_g"] = _group_matrix(8, 256)
    cp["dec_gamma"] = np.tile(a(p["dbn_g"]), 32).reshape(1, 256)
    cp["dec_beta"] = np.tile(a(p["dbn_b"]), 32).reshape(1, 256)
    cp["dec_s2"], cp["dec_m2"], cp["dec_b2"] = _deconv2d_consts(
        a(p["dc2_w"]), a(p["dc2_b"]), batch, 32, 32)
    return {k: jnp.asarray(v) for k, v in cp.items()}


# -------------------------------- forward ------------------------------------

def autoencoder_forward(x, cp):
    B = x.shape[0]
    assert cp["enc_s1"].shape[2] == B * 64, "params prepared for another batch"
    enc_inv = 1.0 / (B * 16 * 16)          # BN count for 12-channel encoder BN
    dec_inv = 1.0 / (B * 32 * 32)          # BN count for 8-channel decoder BN

    # NCHW -> row-major (b*H + h, w*C + c), lane-padded to 256 (boundary only).
    xr = jnp.pad(x.transpose(0, 2, 3, 1).reshape(B * 64, 192),
                 ((0, 0), (0, 64)))

    h = pl.pallas_call(
        functools.partial(_encoder_kernel, inv_cnt=enc_inv),
        out_shape=jax.ShapeDtypeStruct((B * 16, 256), F32),
        compiler_params=_COMPILER_PARAMS,
    )(xr, cp["enc_s1"], cp["enc_m1"], cp["enc_b1"],
      cp["enc_s2"], cp["enc_m2"], cp["enc_b2"],
      cp["enc_g"], cp["enc_gamma"], cp["enc_beta"])

    # Flatten: row-major reshape of (B*16,256) already matches the permuted,
    # lane-padded el1 weight layout (free bitcast); pad rows to a sublane tile.
    Bp = ((B + 7) // 8) * 8
    f = h.reshape(B, 16 * 256)
    if Bp != B:
        f = jnp.pad(f, ((0, Bp - B), (0, 0)))

    enc_p, dec_p = pl.pallas_call(
        _mlp_kernel,
        out_shape=(jax.ShapeDtypeStruct((Bp, 128), F32),
                   jax.ShapeDtypeStruct((Bp, 4096), F32)),
        compiler_params=_COMPILER_PARAMS,
    )(f, cp["w1"], cp["b1"], cp["w2"], cp["b2"], cp["w3"], cp["b3"],
      cp["w4"], cp["b4"], cp["w5"], cp["b5"], cp["w6"], cp["b6"])
    encoded = enc_p[:B, :3]

    # Unflatten: free row-major reshape into the deconv row layout.
    d = dec_p[:B].reshape(B * 16, 256)

    y = pl.pallas_call(
        functools.partial(_decoder_kernel, inv_cnt=dec_inv),
        out_shape=jax.ShapeDtypeStruct((B * 64, 256), F32),
        compiler_params=_COMPILER_PARAMS,
    )(d, cp["dec_s1"], cp["dec_m1"], cp["dec_b1"],
      cp["dec_g"], cp["dec_gamma"], cp["dec_beta"],
      cp["dec_s2"], cp["dec_m2"], cp["dec_b2"])

    decoded = y[:, :192].reshape(B, 64, 64, 3).transpose(0, 3, 1, 2)
    return encoded, decoded


# ------------------------ parameters & pure-JAX reference --------------------

def init_params(key):
    def u(k, shape, fan_in):
        bound = 1.0 / float(np.sqrt(fan_in))
        return jax.random.uniform(k, shape, F32, -bound, bound)

    ks = iter(jax.random.split(key, 24))
    p = {}
    p["ec1_w"] = u(next(ks), (8, 3, 3, 3), 27);    p["ec1_b"] = u(next(ks), (8,), 27)
    p["ec2_w"] = u(next(ks), (12, 8, 3, 3), 72);   p["ec2_b"] = u(next(ks), (12,), 72)
    p["ebn_g"] = jnp.ones((12,), F32);             p["ebn_b"] = jnp.zeros((12,), F32)
    p["el1_w"] = u(next(ks), (128, 3072), 3072);   p["el1_b"] = u(next(ks), (128,), 3072)
    p["el2_w"] = u(next(ks), (16, 128), 128);      p["el2_b"] = u(next(ks), (16,), 128)
    p["el3_w"] = u(next(ks), (3, 16), 16);         p["el3_b"] = u(next(ks), (3,), 16)
    p["dl1_w"] = u(next(ks), (16, 3), 3);          p["dl1_b"] = u(next(ks), (16,), 3)
    p["dl2_w"] = u(next(ks), (128, 16), 16);       p["dl2_b"] = u(next(ks), (128,), 16)
    p["dl3_w"] = u(next(ks), (3072, 128), 128);    p["dl3_b"] = u(next(ks), (3072,), 128)
    p["dc1_w"] = u(next(ks), (12, 8, 3, 3), 72);   p["dc1_b"] = u(next(ks), (8,), 72)
    p["dbn_g"] = jnp.ones((8,), F32);              p["dbn_b"] = jnp.zeros((8,), F32)
    p["dc2_w"] = u(next(ks), (8, 3, 3, 3), 27);    p["dc2_b"] = u(next(ks), (3,), 27)
    return p


def reference_forward(x, p):
    """Pure-JAX reference mirroring the PyTorch module (training-mode BN)."""
    hi = lax.Precision.HIGHEST
    lr = lambda v: jnp.where(v > 0, v, NEG_SLOPE * v)

    def bn(v, g, b):
        mean = jnp.mean(v, axis=(0, 2, 3), keepdims=True)
        var = jnp.mean((v - mean) ** 2, axis=(0, 2, 3), keepdims=True)
        return ((v - mean) * lax.rsqrt(var + BN_EPS) * g.reshape(1, -1, 1, 1)
                + b.reshape(1, -1, 1, 1))

    def conv(v, w, b):
        o = lax.conv_general_dilated(
            v, w, (2, 2), ((1, 1), (1, 1)),
            dimension_numbers=("NCHW", "OIHW", "NCHW"), precision=hi)
        return o + b.reshape(1, -1, 1, 1)

    def deconv(v, w, b):
        o = lax.conv_general_dilated(
            v, w[:, :, ::-1, ::-1], (1, 1), ((1, 2), (1, 2)),
            lhs_dilation=(2, 2),
            dimension_numbers=("NCHW", "IOHW", "NCHW"), precision=hi)
        return o + b.reshape(1, -1, 1, 1)

    def linear(v, w, b):
        return jnp.dot(v, w.T, precision=hi) + b

    B = x.shape[0]
    h = lr(conv(x, p["ec1_w"], p["ec1_b"]))
    h = lr(bn(conv(h, p["ec2_w"], p["ec2_b"]), p["ebn_g"], p["ebn_b"]))
    f = h.reshape(B, -1)
    f = lr(linear(f, p["el1_w"], p["el1_b"]))
    f = lr(linear(f, p["el2_w"], p["el2_b"]))
    enc = linear(f, p["el3_w"], p["el3_b"])
    d = lr(linear(enc, p["dl1_w"], p["dl1_b"]))
    d = lr(linear(d, p["dl2_w"], p["dl2_b"]))
    d = lr(linear(d, p["dl3_w"], p["dl3_b"]))
    d = d.reshape(B, 12, 16, 16)
    d = lr(bn(deconv(d, p["dc1_w"], p["dc1_b"]), p["dbn_g"], p["dbn_b"]))
    d = jnp.tanh(deconv(d, p["dc2_w"], p["dc2_b"]))
    return enc, d


if __name__ == "__main__":
    key = jax.random.PRNGKey(0)
    pkey, xkey = jax.random.split(key)
    params = init_params(pkey)
    x = jax.random.normal(xkey, (2, 3, 64, 64), F32)

    cparams = prepare_params(params, batch=x.shape[0])   # one-time weight prep

    fwd = jax.jit(autoencoder_forward)
    encoded, decoded = fwd(x, cparams)
    jax.block_until_ready((encoded, decoded))

    assert encoded.shape == (2, 3), encoded.shape
    assert decoded.shape == (2, 3, 64, 64), decoded.shape
    assert bool(jnp.all(jnp.isfinite(encoded)))
    assert bool(jnp.all(jnp.isfinite(decoded)))
    assert bool(jnp.all(jnp.abs(decoded) <= 1.0))        # tanh output range

    # Numerical validation against the pure-JAX reference of the module.
    enc_ref, dec_ref = jax.jit(reference_forward)(x, params)
    err_e = float(jnp.max(jnp.abs(encoded - enc_ref)))
    err_d = float(jnp.max(jnp.abs(decoded - dec_ref)))
    assert err_e < 3e-2 and err_d < 5e-2, (err_e, err_d)

    print("KERNEL_OK")
</pallas_src>

<mosaic_0001>
module attributes {stable_mosaic.version = 11 : i64} {
  func.func @_encoder_kernel(%arg0: memref<128x256xf32, #tpu.memory_space<vmem>>, %arg1: memref<3x64x128xf32, #tpu.memory_space<vmem>>, %arg2: memref<3x256x256xf32, #tpu.memory_space<vmem>>, %arg3: memref<1x256xf32, #tpu.memory_space<vmem>>, %arg4: memref<3x32x64xf32, #tpu.memory_space<vmem>>, %arg5: memref<3x256x256xf32, #tpu.memory_space<vmem>>, %arg6: memref<1x256xf32, #tpu.memory_space<vmem>>, %arg7: memref<256x256xf32, #tpu.memory_space<vmem>>, %arg8: memref<1x256xf32, #tpu.memory_space<vmem>>, %arg9: memref<1x256xf32, #tpu.memory_space<vmem>>, %arg10: memref<32x256xf32, #tpu.memory_space<vmem>>) attributes {dimension_semantics = [], scalar_prefetch = 0 : i64, scratch_operands = 0 : i64, tpu.core_type = #tpu.core_type<tc>} {
    %c0 = arith.constant 0 : index
    %c0_0 = arith.constant 0 : index
    %0 = vector.load %arg0[%c0, %c0_0] : memref<128x256xf32, #tpu.memory_space<vmem>>, vector<128x256xf32>
    %c0_1 = arith.constant 0 : index
    %c0_2 = arith.constant 0 : index
    %c0_3 = arith.constant 0 : index
    %1 = vector.load %arg1[%c0_1, %c0_2, %c0_3] : memref<3x64x128xf32, #tpu.memory_space<vmem>>, vector<1x64x128xf32>
    %2 = vector.shape_cast %1 : vector<1x64x128xf32> to vector<64x128xf32>
    %cst = arith.constant dense<0.000000e+00> : vector<64x256xf32>
    %3 = tpu.matmul %2, %0, %cst {dimension_numbers = #tpu.dot_dimension_numbers<[1], [0], [0], [1], [0, 0, 1, 1], [], []>} : vector<64x128xf32>, vector<128x256xf32>, vector<64x256xf32> -> vector<64x256xf32>
    %c0_4 = arith.constant 0 : index
    %c0_5 = arith.constant 0 : index
    %c0_6 = arith.constant 0 : index
    %4 = vector.load %arg2[%c0_4, %c0_5, %c0_6] : memref<3x256x256xf32, #tpu.memory_space<vmem>>, vector<1x256x256xf32>
    %5 = vector.shape_cast %4 : vector<1x256x256xf32> to vector<256x256xf32>
    %cst_7 = arith.constant dense<0.000000e+00> : vector<64x256xf32>
    %6 = tpu.matmul %3, %5, %cst_7 {dimension_numbers = #tpu.dot_dimension_numbers<[1], [0], [0], [1], [0, 0, 1, 1], [], []>} : vector<64x256xf32>, vector<256x256xf32>, vector<64x256xf32> -> vector<64x256xf32>
    %c1 = arith.constant 1 : index
    %c0_8 = arith.constant 0 : index
    %c0_9 = arith.constant 0 : index
    %7 = vector.load %arg1[%c1, %c0_8, %c0_9] : memref<3x64x128xf32, #tpu.memory_space<vmem>>, vector<1x64x128xf32>
    %8 = vector.shape_cast %7 : vector<1x64x128xf32> to vector<64x128xf32>
    %cst_10 = arith.constant dense<0.000000e+00> : vector<64x256xf32>
    %9 = tpu.matmul %8, %0, %cst_10 {dimension_numbers = #tpu.dot_dimension_numbers<[1], [0], [0], [1], [0, 0, 1, 1], [], []>} : vector<64x128xf32>, vector<128x256xf32>, vector<64x256xf32> -> vector<64x256xf32>
    %c1_11 = arith.constant 1 : index
    %c0_12 = arith.constant 0 : index
    %c0_13 = arith.constant 0 : index
    %10 = vector.load %arg2[%c1_11, %c0_12, %c0_13] : memref<3x256x256xf32, #tpu.memory_space<vmem>>, vector<1x256x256xf32>
    %11 = vector.shape_cast %10 : vector<1x256x256xf32> to vector<256x256xf32>
    %cst_14 = arith.constant dense<0.000000e+00> : vector<64x256xf32>
    %12 = tpu.matmul %9, %11, %cst_14 {dimension_numbers = #tpu.dot_dimension_numbers<[1], [0], [0], [1], [0, 0, 1, 1], [], []>} : vector<64x256xf32>, vector<256x256xf32>, vector<64x256xf32> -> vector<64x256xf32>
    %13 = arith.addf %6, %12 : vector<64x256xf32>
    %c2 = arith.constant 2 : index
    %c0_15 = arith.constant 0 : index
    %c0_16 = arith.constant 0 : index
    %14 = vector.load %arg1[%c2, %c0_15, %c0_16] : memref<3x64x128xf32, #tpu.memory_space<vmem>>, vector<1x64x128xf32>
    %15 = vector.shape_cast %14 : vector<1x64x128xf32> to vector<64x128xf32>
    %cst_17 = arith.constant dense<0.000000e+00> : vector<64x256xf32>
    %16 = tpu.matmul %15, %0, %cst_17 {dimension_numbers = #tpu.dot_dimension_numbers<[1], [0], [0], [1], [0, 0, 1, 1], [], []>} : vector<64x128xf32>, vector<128x256xf32>, vector<64x256xf32> -> vector<64x256xf32>
    %c2_18 = arith.constant 2 : index
    %c0_19 = arith.constant 0 : index
    %c0_20 = arith.constant 0 : index
    %17 = vector.load %arg2[%c2_18, %c0_19, %c0_20] : memref<3x256x256xf32, #tpu.memory_space<vmem>>, vector<1x256x256xf32>
    %18 = vector.shape_cast %17 : vector<1x256x256xf32> to vector<256x256xf32>
    %cst_21 = arith.constant dense<0.000000e+00> : vector<64x256xf32>
    %19 = tpu.matmul %16, %18, %cst_21 {dimension_numbers = #tpu.dot_dimension_numbers<[1], [0], [0], [1], [0, 0, 1, 1], [], []>} : vector<64x256xf32>, vector<256x256xf32>, vector<64x256xf32> -> vector<64x256xf32>
    %20 = arith.addf %13, %19 : vector<64x256xf32>
    %c0_22 = arith.constant 0 : index
    %c0_23 = arith.constant 0 : index
    %21 = vector.load %arg3[%c0_22, %c0_23] : memref<1x256xf32, #tpu.memory_space<vmem>>, vector<1x256xf32>
    %22 = vector.broadcast %21 : vector<1x256xf32> to vector<64x256xf32>
    %23 = arith.addf %20, %22 : vector<64x256xf32>
    %cst_24 = arith.constant 0.000000e+00 : f32
    %24 = vector.broadcast %cst_24 : f32 to vector<64x256xf32>
    %25 = arith.cmpf ogt, %23, %24 : vector<64x256xf32>
    %cst_25 = arith.constant 2.000000e-01 : f32
    %26 = vector.broadcast %cst_25 : f32 to vector<64x256xf32>
    %27 = arith.mulf %26, %23 : vector<64x256xf32>
    %28 = arith.select %25, %23, %27 : vector<64x256xi1>, vector<64x256xf32>
    %c0_26 = arith.constant 0 : index
    %c0_27 = arith.constant 0 : index
    %c0_28 = arith.constant 0 : index
    %29 = vector.load %arg4[%c0_26, %c0_27, %c0_28] : memref<3x32x64xf32, #tpu.memory_space<vmem>>, vector<1x32x64xf32>
    %30 = vector.shape_cast %29 : vector<1x32x64xf32> to vector<32x64xf32>
    %cst_29 = arith.constant dense<0.000000e+00> : vector<32x256xf32>
    %31 = tpu.matmul %30, %28, %cst_29 {dimension_numbers = #tpu.dot_dimension_numbers<[1], [0], [0], [1], [0, 0, 1, 1], [], []>} : vector<32x64xf32>, vector<64x256xf32>, vector<32x256xf32> -> vector<32x256xf32>
    %c0_30 = arith.constant 0 : index
    %c0_31 = arith.constant 0 : index
    %c0_32 = arith.constant 0 : index
    %32 = vector.load %arg5[%c0_30, %c0_31, %c0_32] : memref<3x256x256xf32, #tpu.memory_space<vmem>>, vector<1x256x256xf32>
    %33 = vector.shape_cast %32 : vector<1x256x256xf32> to vector<256x256xf32>
    %cst_33 = arith.constant dense<0.000000e+00> : vector<32x256xf32>
    %34 = tpu.matmul %31, %33, %cst_33 {dimension_numbers = #tpu.dot_dimension_numbers<[1], [0], [0], [1], [0, 0, 1, 1], [], []>} : vector<32x256xf32>, vector<256x256xf32>, vector<32x256xf32> -> vector<32x256xf32>
    %c1_34 = arith.constant 1 : index
    %c0_35 = arith.constant 0 : index
    %c0_36 = arith.constant 0 : index
    %35 = vector.load %arg4[%c1_34, %c0_35, %c0_36] : memref<3x32x64xf32, #tpu.memory_space<vmem>>, vector<1x32x64xf32>
    %36 = vector.shape_cast %35 : vector<1x32x64xf32> to vector<32x64xf32>
    %cst_37 = arith.constant dense<0.000000e+00> : vector<32x256xf32>
    %37 = tpu.matmul %36, %28, %cst_37 {dimension_numbers = #tpu.dot_dimension_numbers<[1], [0], [0], [1], [0, 0, 1, 1], [], []>} : vector<32x64xf32>, vector<64x256xf32>, vector<32x256xf32> -> vector<32x256xf32>
    %c1_38 = arith.constant 1 : index
    %c0_39 = arith.constant 0 : index
    %c0_40 = arith.constant 0 : index
    %38 = vector.load %arg5[%c1_38, %c0_39, %c0_40] : memref<3x256x256xf32, #tpu.memory_space<vmem>>, vector<1x256x256xf32>
    %39 = vector.shape_cast %38 : vector<1x256x256xf32> to vector<256x256xf32>
    %cst_41 = arith.constant dense<0.000000e+00> : vector<32x256xf32>
    %40 = tpu.matmul %37, %39, %cst_41 {dimension_numbers = #tpu.dot_dimension_numbers<[1], [0], [0], [1], [0, 0, 1, 1], [], []>} : vector<32x256xf32>, vector<256x256xf32>, vector<32x256xf32> -> vector<32x256xf32>
    %41 = arith.addf %34, %40 : vector<32x256xf32>
    %c2_42 = arith.constant 2 : index
    %c0_43 = arith.constant 0 : index
    %c0_44 = arith.constant 0 : index
    %42 = vector.load %arg4[%c2_42, %c0_43, %c0_44] : memref<3x32x64xf32, #tpu.memory_space<vmem>>, vector<1x32x64xf32>
    %43 = vector.shape_cast %42 : vector<1x32x64xf32> to vector<32x64xf32>
    %cst_45 = arith.constant dense<0.000000e+00> : vector<32x256xf32>
    %44 = tpu.matmul %43, %28, %cst_45 {dimension_numbers = #tpu.dot_dimension_numbers<[1], [0], [0], [1], [0, 0, 1, 1], [], []>} : vector<32x64xf32>, vector<64x256xf32>, vector<32x256xf32> -> vector<32x256xf32>
    %c2_46 = arith.constant 2 : index
    %c0_47 = arith.constant 0 : index
    %c0_48 = arith.constant 0 : index
    %45 = vector.load %arg5[%c2_46, %c0_47, %c0_48] : memref<3x256x256xf32, #tpu.memory_space<vmem>>, vector<1x256x256xf32>
    %46 = vector.shape_cast %45 : vector<1x256x256xf32> to vector<256x256xf32>
    %cst_49 = arith.constant dense<0.000000e+00> : vector<32x256xf32>
    %47 = tpu.matmul %44, %46, %cst_49 {dimension_numbers = #tpu.dot_dimension_numbers<[1], [0], [0], [1], [0, 0, 1, 1], [], []>} : vector<32x256xf32>, vector<256x256xf32>, vector<32x256xf32> -> vector<32x256xf32>
    %48 = arith.addf %41, %47 : vector<32x256xf32>
    %c0_50 = arith.constant 0 : index
    %c0_51 = arith.constant 0 : index
    %49 = vector.load %arg6[%c0_50, %c0_51] : memref<1x256xf32, #tpu.memory_space<vmem>>, vector<1x256xf32>
    %50 = vector.broadcast %49 : vector<1x256xf32> to vector<32x256xf32>
    %51 = arith.addf %48, %50 : vector<32x256xf32>
    %cst_52 = arith.constant dense<0.000000e+00> : vector<256xf32>
    %52 = vector.multi_reduction <add>, %51, %cst_52 [0] : vector<32x256xf32> to vector<256xf32>
    %53 = vector.shape_cast %52 : vector<256xf32> to vector<1x256xf32>
    %c0_53 = arith.constant 0 : index
    %c0_54 = arith.constant 0 : index
    %54 = vector.load %arg7[%c0_53, %c0_54] : memref<256x256xf32, #tpu.memory_space<vmem>>, vector<256x256xf32>
    %cst_55 = arith.constant dense<0.000000e+00> : vector<1x256xf32>
    %55 = tpu.matmul %53, %54, %cst_55 {dimension_numbers = #tpu.dot_dimension_numbers<[1], [0], [0], [1], [0, 0, 1, 1], [], []>} : vector<1x256xf32>, vector<256x256xf32>, vector<1x256xf32> -> vector<1x256xf32>
    %cst_56 = arith.constant 0.001953125 : f32
    %56 = vector.broadcast %cst_56 : f32 to vector<1x256xf32>
    %57 = arith.mulf %55, %56 : vector<1x256xf32>
    %58 = vector.broadcast %57 : vector<1x256xf32> to vector<32x256xf32>
    %59 = arith.subf %51, %58 : vector<32x256xf32>
    %60 = arith.mulf %59, %59 : vector<32x256xf32>
    %cst_57 = arith.constant dense<0.000000e+00> : vector<256xf32>
    %61 = vector.multi_reduction <add>, %60, %cst_57 [0] : vector<32x256xf32> to vector<256xf32>
    %62 = vector.shape_cast %61 : vector<256xf32> to vector<1x256xf32>
    %c0_58 = arith.constant 0 : index
    %c0_59 = arith.constant 0 : index
    %63 = vector.load %arg7[%c0_58, %c0_59] : memref<256x256xf32, #tpu.memory_space<vmem>>, vector<256x256xf32>
    %cst_60 = arith.constant dense<0.000000e+00> : vector<1x256xf32>
    %64 = tpu.matmul %62, %63, %cst_60 {dimension_numbers = #tpu.dot_dimension_numbers<[1], [0], [0], [1], [0, 0, 1, 1], [], []>} : vector<1x256xf32>, vector<256x256xf32>, vector<1x256xf32> -> vector<1x256xf32>
    %cst_61 = arith.constant 0.001953125 : f32
    %65 = vector.broadcast %cst_61 : f32 to vector<1x256xf32>
    %66 = arith.mulf %64, %65 : vector<1x256xf32>
    %c0_62 = arith.constant 0 : index
    %c0_63 = arith.constant 0 : index
    %67 = vector.load %arg8[%c0_62, %c0_63] : memref<1x256xf32, #tpu.memory_space<vmem>>, vector<1x256xf32>
    %cst_64 = arith.constant 9.99999974E-6 : f32
    %68 = vector.broadcast %cst_64 : f32 to vector<1x256xf32>
    %69 = arith.addf %66, %68 : vector<1x256xf32>
    %70 = math.rsqrt %69 : vector<1x256xf32>
    %71 = arith.mulf %67, %70 : vector<1x256xf32>
    %72 = vector.broadcast %71 : vector<1x256xf32> to vector<32x256xf32>
    %73 = arith.mulf %59, %72 : vector<32x256xf32>
    %c0_65 = arith.constant 0 : index
    %c0_66 = arith.constant 0 : index
    %74 = vector.load %arg9[%c0_65, %c0_66] : memref<1x256xf32, #tpu.memory_space<vmem>>, vector<1x256xf32>
    %75 = vector.broadcast %74 : vector<1x256xf32> to vector<32x256xf32>
    %76 = arith.addf %73, %75 : vector<32x256xf32>
    %cst_67 = arith.constant 0.000000e+00 : f32
    %77 = vector.broadcast %cst_67 : f32 to vector<32x256xf32>
    %78 = arith.cmpf ogt, %76, %77 : vector<32x256xf32>
    %cst_68 = arith.constant 2.000000e-01 : f32
    %79 = vector.broadcast %cst_68 : f32 to vector<32x256xf32>
    %80 = arith.mulf %79, %76 : vector<32x256xf32>
    %81 = arith.select %78, %76, %80 : vector<32x256xi1>, vector<32x256xf32>
    %c0_69 = arith.constant 0 : index
    %c0_70 = arith.constant 0 : index
    %82 = vector.load %arg10[%c0_69, %c0_70] : memref<32x256xf32, #tpu.memory_space<vmem>>, vector<32x256xf32>
    tpu.vector_store %arg10[%c0_69, %c0_70], %81 {strides = array<i32>} : memref<32x256xf32, #tpu.memory_space<vmem>>, vector<32x256xf32>,
    return
  }
}

module attributes {stable_mosaic.version = 11 : i64} {
  func.func @_mlp_kernel(%arg0: memref<8x4096xf32, #tpu.memory_space<vmem>>, %arg1: memref<4096x128xf32, #tpu.memory_space<vmem>>, %arg2: memref<1x128xf32, #tpu.memory_space<vmem>>, %arg3: memref<128x128xf32, #tpu.memory_space<vmem>>, %arg4: memref<1x128xf32, #tpu.memory_space<vmem>>, %arg5: memref<128x128xf32, #tpu.memory_space<vmem>>, %arg6: memref<1x128xf32, #tpu.memory_space<vmem>>, %arg7: memref<128x128xf32, #tpu.memory_space<vmem>>, %arg8: memref<1x128xf32, #tpu.memory_space<vmem>>, %arg9: memref<128x128xf32, #tpu.memory_space<vmem>>, %arg10: memref<1x128xf32, #tpu.memory_space<vmem>>, %arg11: memref<128x4096xf32, #tpu.memory_space<vmem>>, %arg12: memref<1x4096xf32, #tpu.memory_space<vmem>>, %arg13: memref<8x128xf32, #tpu.memory_space<vmem>>, %arg14: memref<8x4096xf32, #tpu.memory_space<vmem>>) attributes {dimension_semantics = [], scalar_prefetch = 0 : i64, scratch_operands = 0 : i64, tpu.core_type = #tpu.core_type<tc>} {
    %c0 = arith.constant 0 : index
    %c0_0 = arith.constant 0 : index
    %0 = vector.load %arg0[%c0, %c0_0] : memref<8x4096xf32, #tpu.memory_space<vmem>>, vector<8x4096xf32>
    %c0_1 = arith.constant 0 : index
    %c0_2 = arith.constant 0 : index
    %1 = vector.load %arg1[%c0_1, %c0_2] : memref<4096x128xf32, #tpu.memory_space<vmem>>, vector<4096x128xf32>
    %cst = arith.constant dense<0.000000e+00> : vector<8x128xf32>
    %2 = tpu.matmul %0, %1, %cst {dimension_numbers = #tpu.dot_dimension_numbers<[1], [0], [0], [1], [0, 0, 1, 1], [], []>} : vector<8x4096xf32>, vector<4096x128xf32>, vector<8x128xf32> -> vector<8x128xf32>
    %c0_3 = arith.constant 0 : index
    %c0_4 = arith.constant 0 : index
    %3 = vector.load %arg2[%c0_3, %c0_4] : memref<1x128xf32, #tpu.memory_space<vmem>>, vector<1x128xf32>
    %4 = vector.broadcast %3 : vector<1x128xf32> to vector<8x128xf32>
    %5 = arith.addf %2, %4 : vector<8x128xf32>
    %cst_5 = arith.constant 0.000000e+00 : f32
    %6 = vector.broadcast %cst_5 : f32 to vector<8x128xf32>
    %7 = arith.cmpf ogt, %5, %6 : vector<8x128xf32>
    %cst_6 = arith.constant 2.000000e-01 : f32
    %8 = vector.broadcast %cst_6 : f32 to vector<8x128xf32>
    %9 = arith.mulf %8, %5 : vector<8x128xf32>
    %10 = arith.select %7, %5, %9 : vector<8x128xi1>, vector<8x128xf32>
    %c0_7 = arith.constant 0 : index
    %c0_8 = arith.constant 0 : index
    %11 = vector.load %arg3[%c0_7, %c0_8] : memref<128x128xf32, #tpu.memory_space<vmem>>, vector<128x128xf32>
    %cst_9 = arith.constant dense<0.000000e+00> : vector<8x128xf32>
    %12 = tpu.matmul %10, %11, %cst_9 {dimension_numbers = #tpu.dot_dimension_numbers<[1], [0], [0], [1], [0, 0, 1, 1], [], []>} : vector<8x128xf32>, vector<128x128xf32>, vector<8x128xf32> -> vector<8x128xf32>
    %c0_10 = arith.constant 0 : index
    %c0_11 = arith.constant 0 : index
    %13 = vector.load %arg4[%c0_10, %c0_11] : memref<1x128xf32, #tpu.memory_space<vmem>>, vector<1x128xf32>
    %14 = vector.broadcast %13 : vector<1x128xf32> to vector<8x128xf32>
    %15 = arith.addf %12, %14 : vector<8x128xf32>
    %cst_12 = arith.constant 0.000000e+00 : f32
    %16 = vector.broadcast %cst_12 : f32 to vector<8x128xf32>
    %17 = arith.cmpf ogt, %15, %16 : vector<8x128xf32>
    %cst_13 = arith.constant 2.000000e-01 : f32
    %18 = vector.broadcast %cst_13 : f32 to vector<8x128xf32>
    %19 = arith.mulf %18, %15 : vector<8x128xf32>
    %20 = arith.select %17, %15, %19 : vector<8x128xi1>, vector<8x128xf32>
    %c0_14 = arith.constant 0 : index
    %c0_15 = arith.constant 0 : index
    %21 = vector.load %arg5[%c0_14, %c0_15] : memref<128x128xf32, #tpu.memory_space<vmem>>, vector<128x128xf32>
    %cst_16 = arith.constant dense<0.000000e+00> : vector<8x128xf32>
    %22 = tpu.matmul %20, %21, %cst_16 {dimension_numbers = #tpu.dot_dimension_numbers<[1], [0], [0], [1], [0, 0, 1, 1], [], []>} : vector<8x128xf32>, vector<128x128xf32>, vector<8x128xf32> -> vector<8x128xf32>
    %c0_17 = arith.constant 0 : index
    %c0_18 = arith.constant 0 : index
    %23 = vector.load %arg6[%c0_17, %c0_18] : memref<1x128xf32, #tpu.memory_space<vmem>>, vector<1x128xf32>
    %24 = vector.broadcast %23 : vector<1x128xf32> to vector<8x128xf32>
    %25 = arith.addf %22, %24 : vector<8x128xf32>
    %c0_19 = arith.constant 0 : index
    %c0_20 = arith.constant 0 : index
    %26 = vector.load %arg13[%c0_19, %c0_20] : memref<8x128xf32, #tpu.memory_space<vmem>>, vector<8x128xf32>
    tpu.vector_store %arg13[%c0_19, %c0_20], %25 {strides = array<i32>} : memref<8x128xf32, #tpu.memory_space<vmem>>, vector<8x128xf32>,
    %c0_21 = arith.constant 0 : index
    %c0_22 = arith.constant 0 : index
    %27 = vector.load %arg7[%c0_21, %c0_22] : memref<128x128xf32, #tpu.memory_space<vmem>>, vector<128x128xf32>
    %cst_23 = arith.constant dense<0.000000e+00> : vector<8x128xf32>
    %28 = tpu.matmul %25, %27, %cst_23 {dimension_numbers = #tpu.dot_dimension_numbers<[1], [0], [0], [1], [0, 0, 1, 1], [], []>} : vector<8x128xf32>, vector<128x128xf32>, vector<8x128xf32> -> vector<8x128xf32>
    %c0_24 = arith.constant 0 : index
    %c0_25 = arith.constant 0 : index
    %29 = vector.load %arg8[%c0_24, %c0_25] : memref<1x128xf32, #tpu.memory_space<vmem>>, vector<1x128xf32>
    %30 = vector.broadcast %29 : vector<1x128xf32> to vector<8x128xf32>
    %31 = arith.addf %28, %30 : vector<8x128xf32>
    %cst_26 = arith.constant 0.000000e+00 : f32
    %32 = vector.broadcast %cst_26 : f32 to vector<8x128xf32>
    %33 = arith.cmpf ogt, %31, %32 : vector<8x128xf32>
    %cst_27 = arith.constant 2.000000e-01 : f32
    %34 = vector.broadcast %cst_27 : f32 to vector<8x128xf32>
    %35 = arith.mulf %34, %31 : vector<8x128xf32>
    %36 = arith.select %33, %31, %35 : vector<8x128xi1>, vector<8x128xf32>
    %c0_28 = arith.constant 0 : index
    %c0_29 = arith.constant 0 : index
    %37 = vector.load %arg9[%c0_28, %c0_29] : memref<128x128xf32, #tpu.memory_space<vmem>>, vector<128x128xf32>
    %cst_30 = arith.constant dense<0.000000e+00> : vector<8x128xf32>
    %38 = tpu.matmul %36, %37, %cst_30 {dimension_numbers = #tpu.dot_dimension_numbers<[1], [0], [0], [1], [0, 0, 1, 1], [], []>} : vector<8x128xf32>, vector<128x128xf32>, vector<8x128xf32> -> vector<8x128xf32>
    %c0_31 = arith.constant 0 : index
    %c0_32 = arith.constant 0 : index
    %39 = vector.load %arg10[%c0_31, %c0_32] : memref<1x128xf32, #tpu.memory_space<vmem>>, vector<1x128xf32>
    %40 = vector.broadcast %39 : vector<1x128xf32> to vector<8x128xf32>
    %41 = arith.addf %38, %40 : vector<8x128xf32>
    %cst_33 = arith.constant 0.000000e+00 : f32
    %42 = vector.broadcast %cst_33 : f32 to vector<8x128xf32>
    %43 = arith.cmpf ogt, %41, %42 : vector<8x128xf32>
    %cst_34 = arith.constant 2.000000e-01 : f32
    %44 = vector.broadcast %cst_34 : f32 to vector<8x128xf32>
    %45 = arith.mulf %44, %41 : vector<8x128xf32>
    %46 = arith.select %43, %41, %45 : vector<8x128xi1>, vector<8x128xf32>
    %c0_35 = arith.constant 0 : index
    %c0_36 = arith.constant 0 : index
    %47 = vector.load %arg11[%c0_35, %c0_36] : memref<128x4096xf32, #tpu.memory_space<vmem>>, vector<128x4096xf32>
    %cst_37 = arith.constant dense<0.000000e+00> : vector<8x4096xf32>
    %48 = tpu.matmul %46, %47, %cst_37 {dimension_numbers = #tpu.dot_dimension_numbers<[1], [0], [0], [1], [0, 0, 1, 1], [], []>} : vector<8x128xf32>, vector<128x4096xf32>, vector<8x4096xf32> -> vector<8x4096xf32>
    %c0_38 = arith.constant 0 : index
    %c0_39 = arith.constant 0 : index
    %49 = vector.load %arg12[%c0_38, %c0_39] : memref<1x4096xf32, #tpu.memory_space<vmem>>, vector<1x4096xf32>
    %50 = vector.broadcast %49 : vector<1x4096xf32> to vector<8x4096xf32>
    %51 = arith.addf %48, %50 : vector<8x4096xf32>
    %cst_40 = arith.constant 0.000000e+00 : f32
    %52 = vector.broadcast %cst_40 : f32 to vector<8x4096xf32>
    %53 = arith.cmpf ogt, %51, %52 : vector<8x4096xf32>
    %cst_41 = arith.constant 2.000000e-01 : f32
    %54 = vector.broadcast %cst_41 : f32 to vector<8x4096xf32>
    %55 = arith.mulf %54, %51 : vector<8x4096xf32>
    %56 = arith.select %53, %51, %55 : vector<8x4096xi1>, vector<8x4096xf32>
    %c0_42 = arith.constant 0 : index
    %c0_43 = arith.constant 0 : index
    %57 = vector.load %arg14[%c0_42, %c0_43] : memref<8x4096xf32, #tpu.memory_space<vmem>>, vector<8x4096xf32>
    tpu.vector_store %arg14[%c0_42, %c0_43], %56 {strides = array<i32>} : memref<8x4096xf32, #tpu.memory_space<vmem>>, vector<8x4096xf32>,
    return
  }
}

module attributes {stable_mosaic.version = 11 : i64} {
  func.func @_decoder_kernel(%arg0: memref<32x256xf32, #tpu.memory_space<vmem>>, %arg1: memref<3x64x32xf32, #tpu.memory_space<vmem>>, %arg2: memref<3x256x256xf32, #tpu.memory_space<vmem>>, %arg3: memref<1x256xf32, #tpu.memory_space<vmem>>, %arg4: memref<256x256xf32, #tpu.memory_space<vmem>>, %arg5: memref<1x256xf32, #tpu.memory_space<vmem>>, %arg6: memref<1x256xf32, #tpu.memory_space<vmem>>, %arg7: memref<3x128x64xf32, #tpu.memory_space<vmem>>, %arg8: memref<3x256x256xf32, #tpu.memory_space<vmem>>, %arg9: memref<1x256xf32, #tpu.memory_space<vmem>>, %arg10: memref<128x256xf32, #tpu.memory_space<vmem>>) attributes {dimension_semantics = [], scalar_prefetch = 0 : i64, scratch_operands = 0 : i64, tpu.core_type = #tpu.core_type<tc>} {
    %c0 = arith.constant 0 : index
    %c0_0 = arith.constant 0 : index
    %0 = vector.load %arg0[%c0, %c0_0] : memref<32x256xf32, #tpu.memory_space<vmem>>, vector<32x256xf32>
    %c0_1 = arith.constant 0 : index
    %c0_2 = arith.constant 0 : index
    %c0_3 = arith.constant 0 : index
    %1 = vector.load %arg1[%c0_1, %c0_2, %c0_3] : memref<3x64x32xf32, #tpu.memory_space<vmem>>, vector<1x64x32xf32>
    %2 = vector.shape_cast %1 : vector<1x64x32xf32> to vector<64x32xf32>
    %cst = arith.constant dense<0.000000e+00> : vector<64x256xf32>
    %3 = tpu.matmul %2, %0, %cst {dimension_numbers = #tpu.dot_dimension_numbers<[1], [0], [0], [1], [0, 0, 1, 1], [], []>} : vector<64x32xf32>, vector<32x256xf32>, vector<64x256xf32> -> vector<64x256xf32>
    %c0_4 = arith.constant 0 : index
    %c0_5 = arith.constant 0 : index
    %c0_6 = arith.constant 0 : index
    %4 = vector.load %arg2[%c0_4, %c0_5, %c0_6] : memref<3x256x256xf32, #tpu.memory_space<vmem>>, vector<1x256x256xf32>
    %5 = vector.shape_cast %4 : vector<1x256x256xf32> to vector<256x256xf32>
    %cst_7 = arith.constant dense<0.000000e+00> : vector<64x256xf32>
    %6 = tpu.matmul %3, %5, %cst_7 {dimension_numbers = #tpu.dot_dimension_numbers<[1], [0], [0], [1], [0, 0, 1, 1], [], []>} : vector<64x256xf32>, vector<256x256xf32>, vector<64x256xf32> -> vector<64x256xf32>
    %c1 = arith.constant 1 : index
    %c0_8 = arith.constant 0 : index
    %c0_9 = arith.constant 0 : index
    %7 = vector.load %arg1[%c1, %c0_8, %c0_9] : memref<3x64x32xf32, #tpu.memory_space<vmem>>, vector<1x64x32xf32>
    %8 = vector.shape_cast %7 : vector<1x64x32xf32> to vector<64x32xf32>
    %cst_10 = arith.constant dense<0.000000e+00> : vector<64x256xf32>
    %9 = tpu.matmul %8, %0, %cst_10 {dimension_numbers = #tpu.dot_dimension_numbers<[1], [0], [0], [1], [0, 0, 1, 1], [], []>} : vector<64x32xf32>, vector<32x256xf32>, vector<64x256xf32> -> vector<64x256xf32>
    %c1_11 = arith.constant 1 : index
    %c0_12 = arith.constant 0 : index
    %c0_13 = arith.constant 0 : index
    %10 = vector.load %arg2[%c1_11, %c0_12, %c0_13] : memref<3x256x256xf32, #tpu.memory_space<vmem>>, vector<1x256x256xf32>
    %11 = vector.shape_cast %10 : vector<1x256x256xf32> to vector<256x256xf32>
    %cst_14 = arith.constant dense<0.000000e+00> : vector<64x256xf32>
    %12 = tpu.matmul %9, %11, %cst_14 {dimension_numbers = #tpu.dot_dimension_numbers<[1], [0], [0], [1], [0, 0, 1, 1], [], []>} : vector<64x256xf32>, vector<256x256xf32>, vector<64x256xf32> -> vector<64x256xf32>
    %13 = arith.addf %6, %12 : vector<64x256xf32>
    %c2 = arith.constant 2 : index
    %c0_15 = arith.constant 0 : index
    %c0_16 = arith.constant 0 : index
    %14 = vector.load %arg1[%c2, %c0_15, %c0_16] : memref<3x64x32xf32, #tpu.memory_space<vmem>>, vector<1x64x32xf32>
    %15 = vector.shape_cast %14 : vector<1x64x32xf32> to vector<64x32xf32>
    %cst_17 = arith.constant dense<0.000000e+00> : vector<64x256xf32>
    %16 = tpu.matmul %15, %0, %cst_17 {dimension_numbers = #tpu.dot_dimension_numbers<[1], [0], [0], [1], [0, 0, 1, 1], [], []>} : vector<64x32xf32>, vector<32x256xf32>, vector<64x256xf32> -> vector<64x256xf32>
    %c2_18 = arith.constant 2 : index
    %c0_19 = arith.constant 0 : index
    %c0_20 = arith.constant 0 : index
    %17 = vector.load %arg2[%c2_18, %c0_19, %c0_20] : memref<3x256x256xf32, #tpu.memory_space<vmem>>, vector<1x256x256xf32>
    %18 = vector.shape_cast %17 : vector<1x256x256xf32> to vector<256x256xf32>
    %cst_21 = arith.constant dense<0.000000e+00> : vector<64x256xf32>
    %19 = tpu.matmul %16, %18, %cst_21 {dimension_numbers = #tpu.dot_dimension_numbers<[1], [0], [0], [1], [0, 0, 1, 1], [], []>} : vector<64x256xf32>, vector<256x256xf32>, vector<64x256xf32> -> vector<64x256xf32>
    %20 = arith.addf %13, %19 : vector<64x256xf32>
    %c0_22 = arith.constant 0 : index
    %c0_23 = arith.constant 0 : index
    %21 = vector.load %arg3[%c0_22, %c0_23] : memref<1x256xf32, #tpu.memory_space<vmem>>, vector<1x256xf32>
    %22 = vector.broadcast %21 : vector<1x256xf32> to vector<64x256xf32>
    %23 = arith.addf %20, %22 : vector<64x256xf32>
    %cst_24 = arith.constant dense<0.000000e+00> : vector<256xf32>
    %24 = vector.multi_reduction <add>, %23, %cst_24 [0] : vector<64x256xf32> to vector<256xf32>
    %25 = vector.shape_cast %24 : vector<256xf32> to vector<1x256xf32>
    %c0_25 = arith.constant 0 : index
    %c0_26 = arith.constant 0 : index
    %26 = vector.load %arg4[%c0_25, %c0_26] : memref<256x256xf32, #tpu.memory_space<vmem>>, vector<256x256xf32>
    %cst_27 = arith.constant dense<0.000000e+00> : vector<1x256xf32>
    %27 = tpu.matmul %25, %26, %cst_27 {dimension_numbers = #tpu.dot_dimension_numbers<[1], [0], [0], [1], [0, 0, 1, 1], [], []>} : vector<1x256xf32>, vector<256x256xf32>, vector<1x256xf32> -> vector<1x256xf32>
    %cst_28 = arith.constant 4.8828125E-4 : f32
    %28 = vector.broadcast %cst_28 : f32 to vector<1x256xf32>
    %29 = arith.mulf %27, %28 : vector<1x256xf32>
    %30 = vector.broadcast %29 : vector<1x256xf32> to vector<64x256xf32>
    %31 = arith.subf %23, %30 : vector<64x256xf32>
    %32 = arith.mulf %31, %31 : vector<64x256xf32>
    %cst_29 = arith.constant dense<0.000000e+00> : vector<256xf32>
    %33 = vector.multi_reduction <add>, %32, %cst_29 [0] : vector<64x256xf32> to vector<256xf32>
    %34 = vector.shape_cast %33 : vector<256xf32> to vector<1x256xf32>
    %c0_30 = arith.constant 0 : index
    %c0_31 = arith.constant 0 : index
    %35 = vector.load %arg4[%c0_30, %c0_31] : memref<256x256xf32, #tpu.memory_space<vmem>>, vector<256x256xf32>
    %cst_32 = arith.constant dense<0.000000e+00> : vector<1x256xf32>
    %36 = tpu.matmul %34, %35, %cst_32 {dimension_numbers = #tpu.dot_dimension_numbers<[1], [0], [0], [1], [0, 0, 1, 1], [], []>} : vector<1x256xf32>, vector<256x256xf32>, vector<1x256xf32> -> vector<1x256xf32>
    %cst_33 = arith.constant 4.8828125E-4 : f32
    %37 = vector.broadcast %cst_33 : f32 to vector<1x256xf32>
    %38 = arith.mulf %36, %37 : vector<1x256xf32>
    %c0_34 = arith.constant 0 : index
    %c0_35 = arith.constant 0 : index
    %39 = vector.load %arg5[%c0_34, %c0_35] : memref<1x256xf32, #tpu.memory_space<vmem>>, vector<1x256xf32>
    %cst_36 = arith.constant 9.99999974E-6 : f32
    %40 = vector.broadcast %cst_36 : f32 to vector<1x256xf32>
    %41 = arith.addf %38, %40 : vector<1x256xf32>
    %42 = math.rsqrt %41 : vector<1x256xf32>
    %43 = arith.mulf %39, %42 : vector<1x256xf32>
    %44 = vector.broadcast %43 : vector<1x256xf32> to vector<64x256xf32>
    %45 = arith.mulf %31, %44 : vector<64x256xf32>
    %c0_37 = arith.constant 0 : index
    %c0_38 = arith.constant 0 : index
    %46 = vector.load %arg6[%c0_37, %c0_38] : memref<1x256xf32, #tpu.memory_space<vmem>>, vector<1x256xf32>
    %47 = vector.broadcast %46 : vector<1x256xf32> to vector<64x256xf32>
    %48 = arith.addf %45, %47 : vector<64x256xf32>
    %cst_39 = arith.constant 0.000000e+00 : f32
    %49 = vector.broadcast %cst_39 : f32 to vector<64x256xf32>
    %50 = arith.cmpf ogt, %48, %49 : vector<64x256xf32>
    %cst_40 = arith.constant 2.000000e-01 : f32
    %51 = vector.broadcast %cst_40 : f32 to vector<64x256xf32>
    %52 = arith.mulf %51, %48 : vector<64x256xf32>
    %53 = arith.select %50, %48, %52 : vector<64x256xi1>, vector<64x256xf32>
    %c0_41 = arith.constant 0 : index
    %c0_42 = arith.constant 0 : index
    %c0_43 = arith.constant 0 : index
    %54 = vector.load %arg7[%c0_41, %c0_42, %c0_43] : memref<3x128x64xf32, #tpu.memory_space<vmem>>, vector<1x128x64xf32>
    %55 = vector.shape_cast %54 : vector<1x128x64xf32> to vector<128x64xf32>
    %cst_44 = arith.constant dense<0.000000e+00> : vector<128x256xf32>
    %56 = tpu.matmul %55, %53, %cst_44 {dimension_numbers = #tpu.dot_dimension_numbers<[1], [0], [0], [1], [0, 0, 1, 1], [], []>} : vector<128x64xf32>, vector<64x256xf32>, vector<128x256xf32> -> vector<128x256xf32>
    %c0_45 = arith.constant 0 : index
    %c0_46 = arith.constant 0 : index
    %c0_47 = arith.constant 0 : index
    %57 = vector.load %arg8[%c0_45, %c0_46, %c0_47] : memref<3x256x256xf32, #tpu.memory_space<vmem>>, vector<1x256x256xf32>
    %58 = vector.shape_cast %57 : vector<1x256x256xf32> to vector<256x256xf32>
    %cst_48 = arith.constant dense<0.000000e+00> : vector<128x256xf32>
    %59 = tpu.matmul %56, %58, %cst_48 {dimension_numbers = #tpu.dot_dimension_numbers<[1], [0], [0], [1], [0, 0, 1, 1], [], []>} : vector<128x256xf32>, vector<256x256xf32>, vector<128x256xf32> -> vector<128x256xf32>
    %c1_49 = arith.constant 1 : index
    %c0_50 = arith.constant 0 : index
    %c0_51 = arith.constant 0 : index
    %60 = vector.load %arg7[%c1_49, %c0_50, %c0_51] : memref<3x128x64xf32, #tpu.memory_space<vmem>>, vector<1x128x64xf32>
    %61 = vector.shape_cast %60 : vector<1x128x64xf32> to vector<128x64xf32>
    %cst_52 = arith.constant dense<0.000000e+00> : vector<128x256xf32>
    %62 = tpu.matmul %61, %53, %cst_52 {dimension_numbers = #tpu.dot_dimension_numbers<[1], [0], [0], [1], [0, 0, 1, 1], [], []>} : vector<128x64xf32>, vector<64x256xf32>, vector<128x256xf32> -> vector<128x256xf32>
    %c1_53 = arith.constant 1 : index
    %c0_54 = arith.constant 0 : index
    %c0_55 = arith.constant 0 : index
    %63 = vector.load %arg8[%c1_53, %c0_54, %c0_55] : memref<3x256x256xf32, #tpu.memory_space<vmem>>, vector<1x256x256xf32>
    %64 = vector.shape_cast %63 : vector<1x256x256xf32> to vector<256x256xf32>
    %cst_56 = arith.constant dense<0.000000e+00> : vector<128x256xf32>
    %65 = tpu.matmul %62, %64, %cst_56 {dimension_numbers = #tpu.dot_dimension_numbers<[1], [0], [0], [1], [0, 0, 1, 1], [], []>} : vector<128x256xf32>, vector<256x256xf32>, vector<128x256xf32> -> vector<128x256xf32>
    %66 = arith.addf %59, %65 : vector<128x256xf32>
    %c2_57 = arith.constant 2 : index
    %c0_58 = arith.constant 0 : index
    %c0_59 = arith.constant 0 : index
    %67 = vector.load %arg7[%c2_57, %c0_58, %c0_59] : memref<3x128x64xf32, #tpu.memory_space<vmem>>, vector<1x128x64xf32>
    %68 = vector.shape_cast %67 : vector<1x128x64xf32> to vector<128x64xf32>
    %cst_60 = arith.constant dense<0.000000e+00> : vector<128x256xf32>
    %69 = tpu.matmul %68, %53, %cst_60 {dimension_numbers = #tpu.dot_dimension_numbers<[1], [0], [0], [1], [0, 0, 1, 1], [], []>} : vector<128x64xf32>, vector<64x256xf32>, vector<128x256xf32> -> vector<128x256xf32>
    %c2_61 = arith.constant 2 : index
    %c0_62 = arith.constant 0 : index
    %c0_63 = arith.constant 0 : index
    %70 = vector.load %arg8[%c2_61, %c0_62, %c0_63] : memref<3x256x256xf32, #tpu.memory_space<vmem>>, vector<1x256x256xf32>
    %71 = vector.shape_cast %70 : vector<1x256x256xf32> to vector<256x256xf32>
    %cst_64 = arith.constant dense<0.000000e+00> : vector<128x256xf32>
    %72 = tpu.matmul %69, %71, %cst_64 {dimension_numbers = #tpu.dot_dimension_numbers<[1], [0], [0], [1], [0, 0, 1, 1], [], []>} : vector<128x256xf32>, vector<256x256xf32>, vector<128x256xf32> -> vector<128x256xf32>
    %73 = arith.addf %66, %72 : vector<128x256xf32>
    %c0_65 = arith.constant 0 : index
    %c0_66 = arith.constant 0 : index
    %74 = vector.load %arg9[%c0_65, %c0_66] : memref<1x256xf32, #tpu.memory_space<vmem>>, vector<1x256xf32>
    %75 = vector.broadcast %74 : vector<1x256xf32> to vector<128x256xf32>
    %76 = arith.addf %73, %75 : vector<128x256xf32>
    %77 = math.tanh %76 : vector<128x256xf32>
    %c0_67 = arith.constant 0 : index
    %c0_68 = arith.constant 0 : index
    %78 = vector.load %arg10[%c0_67, %c0_68] : memref<128x256xf32, #tpu.memory_space<vmem>>, vector<128x256xf32>
    tpu.vector_store %arg10[%c0_67, %c0_68], %77 {strides = array<i32>} : memref<128x256xf32, #tpu.memory_space<vmem>>, vector<128x256xf32>,
    return
  }
}

</mosaic_0001>

<llo_original>
// kernel: autoencoder_forward.3
$region0: #{autoencoder_forward.3}
  #allocation0 [shape = 'u32[]', space=smem, size = 0x4, offset = 0x4, fixed_abs, tag = 'smem constant byte address 0x4 - core index']
  #allocation1 [shape = 'u32[144,128]{1,0:T(1,128)}', space=vmem, size = 0x12000, scoped, tag = 'internal scratch']
  %s0 = inlined_call_operand.vmem [shape: f32[128,256], index: 0, kind: input, shape index: {}]
  %s1 = inlined_call_operand.hbm [shape: f32[3,64,128], index: 1, kind: input, shape index: {}]
  %s2 = inlined_call_operand.hbm [shape: f32[3,256,256], index: 2, kind: input, shape index: {}]
  %s3 = inlined_call_operand.hbm [shape: f32[1,256], index: 3, kind: input, shape index: {}]
  %s4 = inlined_call_operand.hbm [shape: f32[3,32,64], index: 4, kind: input, shape index: {}]
  %s5 = inlined_call_operand.hbm [shape: f32[3,256,256], index: 5, kind: input, shape index: {}]
  %s6 = inlined_call_operand.hbm [shape: f32[1,256], index: 6, kind: input, shape index: {}]
  %s7 = inlined_call_operand.hbm [shape: f32[256,256], index: 7, kind: input, shape index: {}]
  %s8 = inlined_call_operand.hbm [shape: f32[1,256], index: 8, kind: input, shape index: {}]
  %s9 = inlined_call_operand.hbm [shape: f32[1,256], index: 9, kind: input, shape index: {}]
  %s10 = inlined_call_operand.vmem [shape: f32[32,256], index: 10, kind: output, shape index: {}]
  %s11 = sld [smem:[#allocation0]]
  $region86: #{autoencoder_forward.3} parent=0
    _
  %s13 = ssub.s32 1, %s11
  %s14 = scalar_select 0, %s13, %s11
  $region1: #{autoencoder_forward.3} parent=0
    #allocation2 [shape = 'u8[98304]{0}', space=vmem, size = 0x18000, scoped, tag = 'input window, operand 1, single buffered']
    #allocation3 [shape = 's32[1]{0}', space=sflag, size = 0x4, scoped, tag = 'scoped memory for autoencoder_forward.3']
    #allocation4 [shape = 'u8[786432]{0}', space=vmem, size = 0xc0000, scoped, tag = 'input window, operand 2, single buffered']
    #allocation5 [shape = 's32[1]{0}', space=sflag, size = 0x4, scoped, tag = 'scoped memory for autoencoder_forward.3']
    #allocation6 [shape = 'u8[1024]{0}', space=vmem, size = 0x400, scoped, tag = 'input window, operand 3, single buffered']
    #allocation7 [shape = 'u8[49152]{0}', space=vmem, size = 0xc000, scoped, tag = 'input window, operand 4, single buffered']
    #allocation8 [shape = 's32[1]{0}', space=sflag, size = 0x4, scoped, tag = 'scoped memory for autoencoder_forward.3']
    #allocation9 [shape = 'u8[786432]{0}', space=vmem, size = 0xc0000, scoped, tag = 'input window, operand 5, single buffered']
    #allocation10 [shape = 'u8[1024]{0}', space=vmem, size = 0x400, scoped, tag = 'input window, operand 6, single buffered']
    #allocation11 [shape = 's32[1]{0}', space=sflag, size = 0x4, scoped, tag = 'scoped memory for autoencoder_forward.3']
    #allocation12 [shape = 'u8[262144]{0}', space=vmem, size = 0x40000, scoped, tag = 'input window, operand 7, single buffered']
    #allocation13 [shape = 'u8[1024]{0}', space=vmem, size = 0x400, scoped, tag = 'input window, operand 8, single buffered']
    #allocation14 [shape = 's32[1]{0}', space=sflag, size = 0x4, scoped, tag = 'scoped memory for autoencoder_forward.3']
    #allocation15 [shape = 'u8[1024]{0}', space=vmem, size = 0x400, scoped, tag = 'input window, operand 9, single buffered']
    %15 = vsyncpa [#allocation3], 0
    %16 = vsyncpa [#allocation5], 0
    %17 = vsyncpa [#allocation8], 0
    %18 = vsyncpa [#allocation11], 0
    %19 = vsyncpa [#allocation14], 0
    // Predicated region
    $region2: #{autoencoder_forward.3} parent=1 // pred_check
      _
    $region3: #{autoencoder_forward.3} parent=1 // pred_check_branch
      %21 = sbr.rel (0) target = $region5
    $region4: #{autoencoder_forward.3} parent=1 // pred_region
      _
    $region5: #{autoencoder_forward.3} parent=1 // pred_fallthru
      _
    // Predicated region
    $region6: #{autoencoder_forward.3} parent=1 // pred_check
      _
    $region7: #{autoencoder_forward.3} parent=1 // pred_check_branch
      %23 = sbr.rel (0) target = $region9
    $region8: #{autoencoder_forward.3} parent=1 // pred_region
      %s25 = ssub.s32 3072, 3072
      %26 = vsyncadd [#allocation3], %s25
      %s27 = sshll.u32 [#allocation2], 4
      %s28 = int_to_ptr.vmem [resolvable:$true] %s27
      %33 = dma.hbm_to_vmem [thread:$0]  %s1, 3072, %s28, [#allocation3], 128, 128, 8
    $region9: #{autoencoder_forward.3} parent=1 // pred_fallthru
      _
    // Predicated region
    $region10: #{autoencoder_forward.3} parent=1 // pred_check
      _
    $region11: #{autoencoder_forward.3} parent=1 // pred_check_branch
      %35 = sbr.rel (0) target = $region13
    $region12: #{autoencoder_forward.3} parent=1 // pred_region
      %s37 = ssub.s32 24576, 24576
      %38 = vsyncadd [#allocation5], %s37
      %s39 = sshll.u32 [#allocation4], 4
      %s40 = int_to_ptr.vmem [resolvable:$true] %s39
      %45 = dma.hbm_to_vmem [thread:$0]  %s2, 24576, %s40, [#allocation5], 256, 256, 16
    $region13: #{autoencoder_forward.3} parent=1 // pred_fallthru
      _
    // Predicated region
    $region14: #{autoencoder_forward.3} parent=1 // pred_check
      _
    $region15: #{autoencoder_forward.3} parent=1 // pred_check_branch
      %47 = sbr.rel (0) target = $region17
    $region16: #{autoencoder_forward.3} parent=1 // pred_region
      %s49 = ssub.s32 32, 32
      %50 = vsyncadd [#allocation5], %s49
      %s52 = sshll.u32 [#allocation6], 4
      %s53 = int_to_ptr.vmem [resolvable:$true] %s52
      %55 = dma.hbm_to_vmem [thread:$0]  %s3, 32, %s53, [#allocation5]
    $region17: #{autoencoder_forward.3} parent=1 // pred_fallthru
      _
    // Predicated region
    $region18: #{autoencoder_forward.3} parent=1 // pred_check
      _
    $region19: #{autoencoder_forward.3} parent=1 // pred_check_branch
      %57 = sbr.rel (0) target = $region21
    $region20: #{autoencoder_forward.3} parent=1 // pred_region
      %s59 = ssub.s32 1536, 1536
      %60 = vsyncadd [#allocation8], %s59
      %s61 = sshll.u32 [#allocation7], 4
      %s62 = int_to_ptr.vmem [resolvable:$true] %s61
      %67 = dma.hbm_to_vmem [thread:$0]  %s4, 1536, %s62, [#allocation8], 128, 128, 8
    $region21: #{autoencoder_forward.3} parent=1 // pred_fallthru
      _
    // Predicated region
    $region22: #{autoencoder_forward.3} parent=1 // pred_check
      _
    $region23: #{autoencoder_forward.3} parent=1 // pred_check_branch
      %69 = sbr.rel (0) target = $region25
    $region24: #{autoencoder_forward.3} parent=1 // pred_region
      %s71 = ssub.s32 24576, 24576
      %72 = vsyncadd [#allocation8], %s71
      %s73 = sshll.u32 [#allocation9], 4
      %s74 = int_to_ptr.vmem [resolvable:$true] %s73
      %79 = dma.hbm_to_vmem [thread:$0]  %s5, 24576, %s74, [#allocation8], 256, 256, 16
    $region25: #{autoencoder_forward.3} parent=1 // pred_fallthru
      _
    // Predicated region
    $region26: #{autoencoder_forward.3} parent=1 // pred_check
      _
    $region27: #{autoencoder_forward.3} parent=1 // pred_check_branch
      %81 = sbr.rel (0) target = $region29
    $region28: #{autoencoder_forward.3} parent=1 // pred_region
      %s83 = ssub.s32 32, 32
      %84 = vsyncadd [#allocation11], %s83
      %s86 = sshll.u32 [#allocation10], 4
      %s87 = int_to_ptr.vmem [resolvable:$true] %s86
      %89 = dma.hbm_to_vmem [thread:$0]  %s6, 32, %s87, [#allocation11]
    $region29: #{autoencoder_forward.3} parent=1 // pred_fallthru
      _
    // Predicated region
    $region30: #{autoencoder_forward.3} parent=1 // pred_check
      _
    $region31: #{autoencoder_forward.3} parent=1 // pred_check_branch
      %91 = sbr.rel (0) target = $region33
    $region32: #{autoencoder_forward.3} parent=1 // pred_region
      %s93 = ssub.s32 8192, 8192
      %94 = vsyncadd [#allocation11], %s93
      %s95 = sshll.u32 [#allocation12], 4
      %s96 = int_to_ptr.vmem [resolvable:$true] %s95
      %101 = dma.hbm_to_vmem [thread:$0]  %s7, 8192, %s96, [#allocation11], 256, 256, 16
    $region33: #{autoencoder_forward.3} parent=1 // pred_fallthru
      _
    // Predicated region
    $region34: #{autoencoder_forward.3} parent=1 // pred_check
      _
    $region35: #{autoencoder_forward.3} parent=1 // pred_check_branch
      %103 = sbr.rel (0) target = $region37
    $region36: #{autoencoder_forward.3} parent=1 // pred_region
      %s105 = ssub.s32 32, 32
      %106 = vsyncadd [#allocation14], %s105
      %s108 = sshll.u32 [#allocation13], 4
      %s109 = int_to_ptr.vmem [resolvable:$true] %s108
      %111 = dma.hbm_to_vmem [thread:$0]  %s8, 32, %s109, [#allocation14]
    $region37: #{autoencoder_forward.3} parent=1 // pred_fallthru
      _
    // Predicated region
    $region38: #{autoencoder_forward.3} parent=1 // pred_check
      _
    $region39: #{autoencoder_forward.3} parent=1 // pred_check_branch
      %113 = sbr.rel (0) target = $region41
    $region40: #{autoencoder_forward.3} parent=1 // pred_region
      %s115 = ssub.s32 32, 32
      %116 = vsyncadd [#allocation14], %s115
      %s118 = sshll.u32 [#allocation15], 4
      %s119 = int_to_ptr.vmem [resolvable:$true] %s118
      %121 = dma.hbm_to_vmem [thread:$0]  %s9, 32, %s119, [#allocation14]
    $region41: #{autoencoder_forward.3} parent=1 // pred_fallthru
      _
    // Predicated region
    $region42: #{autoencoder_forward.3} parent=1 // pred_check
      _
    $region43: #{autoencoder_forward.3} parent=1 // pred_check_branch
      %123 = sbr.rel (0) target = $region45
    $region44: #{autoencoder_forward.3} parent=1 // pred_region
      %124 = dma.done [#allocation3], 3072
    $region45: #{autoencoder_forward.3} parent=1 // pred_fallthru
      _
    // Predicated region
    $region46: #{autoencoder_forward.3} parent=1 // pred_check
      _
    $region47: #{autoencoder_forward.3} parent=1 // pred_check_branch
      %126 = sbr.rel (0) target = $region49
    $region48: #{autoencoder_forward.3} parent=1 // pred_region
      %127 = dma.done [#allocation5], 24576
    $region49: #{autoencoder_forward.3} parent=1 // pred_fallthru
      _
    // Predicated region
    $region50: #{autoencoder_forward.3} parent=1 // pred_check
      _
    $region51: #{autoencoder_forward.3} parent=1 // pred_check_branch
      %129 = sbr.rel (0) target = $region53
    $region52: #{autoencoder_forward.3} parent=1 // pred_region
      %130 = dma.done [#allocation5], 32
    $region53: #{autoencoder_forward.3} parent=1 // pred_fallthru
      _
    // Predicated region
    $region54: #{autoencoder_forward.3} parent=1 // pred_check
      _
    $region55: #{autoencoder_forward.3} parent=1 // pred_check_branch
      %132 = sbr.rel (0) target = $region57
    $region56: #{autoencoder_forward.3} parent=1 // pred_region
      %133 = dma.done [#allocation8], 1536
    $region57: #{autoencoder_forward.3} parent=1 // pred_fallthru
      _
    // Predicated region
    $region58: #{autoencoder_forward.3} parent=1 // pred_check
      _
    $region59: #{autoencoder_forward.3} parent=1 // pred_check_branch
      %135 = sbr.rel (0) target = $region61
    $region60: #{autoencoder_forward.3} parent=1 // pred_region
      %136 = dma.done [#allocation8], 24576
    $region61: #{autoencoder_forward.3} parent=1 // pred_fallthru
      _
    // Predicated region
    $region62: #{autoencoder_forward.3} parent=1 // pred_check
      _
    $region63: #{autoencoder_forward.3} parent=1 // pred_check_branch
      %138 = sbr.rel (0) target = $region65
    $region64: #{autoencoder_forward.3} parent=1 // pred_region
      %139 = dma.done [#allocation11], 32
    $region65: #{autoencoder_forward.3} parent=1 // pred_fallthru
      _
    // Predicated region
    $region66: #{autoencoder_forward.3} parent=1 // pred_check
      _
    $region67: #{autoencoder_forward.3} parent=1 // pred_check_branch
      %141 = sbr.rel (0) target = $region69
    $region68: #{autoencoder_forward.3} parent=1 // pred_region
      %142 = dma.done [#allocation11], 8192
    $region69: #{autoencoder_forward.3} parent=1 // pred_fallthru
      _
    // Predicated region
    $region70: #{autoencoder_forward.3} parent=1 // pred_check
      _
    $region71: #{autoencoder_forward.3} parent=1 // pred_check_branch
      %144 = sbr.rel (0) target = $region73
    $region72: #{autoencoder_forward.3} parent=1 // pred_region
      %145 = dma.done [#allocation14], 32
    $region73: #{autoencoder_forward.3} parent=1 // pred_fallthru
      _
    // Predicated region
    $region74: #{autoencoder_forward.3} parent=1 // pred_check
      _
    $region75: #{autoencoder_forward.3} parent=1 // pred_check_branch
      %147 = sbr.rel (0) target = $region77
    $region76: #{autoencoder_forward.3} parent=1 // pred_region
      %148 = dma.done [#allocation14], 32
    $region77: #{autoencoder_forward.3} parent=1 // pred_fallthru
      _
    %v149 = vld [vmem:[%s0] sm:$0xff]
    %v150 = vld [vmem:[%s0 + $0x8] sm:$0xff]
    %v151 = vld [vmem:[%s0 + $0x10] sm:$0xff]
    %v152 = vld [vmem:[%s0 + $0x18] sm:$0xff]
    %v153 = vld [vmem:[%s0 + $0x20] sm:$0xff]
    %v154 = vld [vmem:[%s0 + $0x28] sm:$0xff]
    %v155 = vld [vmem:[%s0 + $0x30] sm:$0xff]
    %v156 = vld [vmem:[%s0 + $0x38] sm:$0xff]
    %v157 = vld [vmem:[%s0 + $0x40] sm:$0xff]
    %v158 = vld [vmem:[%s0 + $0x48] sm:$0xff]
    %v159 = vld [vmem:[%s0 + $0x50] sm:$0xff]
    %v160 = vld [vmem:[%s0 + $0x58] sm:$0xff]
    %v161 = vld [vmem:[%s0 + $0x60] sm:$0xff]
    %v162 = vld [vmem:[%s0 + $0x68] sm:$0xff]
    %v163 = vld [vmem:[%s0 + $0x70] sm:$0xff]
    %v164 = vld [vmem:[%s0 + $0x78] sm:$0xff]
    %v165 = vld [vmem:[%s0 + $0x80] sm:$0xff]
    %v166 = vld [vmem:[%s0 + $0x88] sm:$0xff]
    %v167 = vld [vmem:[%s0 + $0x90] sm:$0xff]
    %v168 = vld [vmem:[%s0 + $0x98] sm:$0xff]
    %v169 = vld [vmem:[%s0 + $0xa0] sm:$0xff]
    %v170 = vld [vmem:[%s0 + $0xa8] sm:$0xff]
    %v171 = vld [vmem:[%s0 + $0xb0] sm:$0xff]
    %v172 = vld [vmem:[%s0 + $0xb8] sm:$0xff]
    %v173 = vld [vmem:[%s0 + $0xc0] sm:$0xff]
    %v174 = vld [vmem:[%s0 + $0xc8] sm:$0xff]
    %v175 = vld [vmem:[%s0 + $0xd0] sm:$0xff]
    %v176 = vld [vmem:[%s0 + $0xd8] sm:$0xff]
    %v177 = vld [vmem:[%s0 + $0xe0] sm:$0xff]
    %v178 = vld [vmem:[%s0 + $0xe8] sm:$0xff]
    %v179 = vld [vmem:[%s0 + $0xf0] sm:$0xff]
    %v180 = vld [vmem:[%s0 + $0xf8] sm:$0xff]
    %v181 = vld [vmem:[#allocation2] sm:$0xff]
    %v182 = vld [vmem:[#allocation2 + $0x8] sm:$0xff]
    %v183 = vld [vmem:[#allocation2 + $0x10] sm:$0xff]
    %v184 = vld [vmem:[#allocation2 + $0x18] sm:$0xff]
    %v185 = vld [vmem:[#allocation2 + $0x20] sm:$0xff]
    %v186 = vld [vmem:[#allocation2 + $0x28] sm:$0xff]
    %v187 = vld [vmem:[#allocation2 + $0x30] sm:$0xff]
    %v188 = vld [vmem:[#allocation2 + $0x38] sm:$0xff]
    %189 = vmatprep.subr.mxu0 %v150
    %190 = vmatpush1.msra.mxu0 %v149
    %191 = vmatprep.subr.mxu0 %v152
    %192 = vmatpush1.msra.mxu0 %v151
    %193 = vmatprep.subr.mxu0 %v154
    %194 = vmatpush1.msra.mxu0 %v153
    %195 = vmatprep.subr.mxu0 %v156
    %196 = vmatpush1.msra.mxu0 %v155
    %197 = vmatprep.subr.mxu0 %v158
    %198 = vmatpush1.msra.mxu0 %v157
    %199 = vmatprep.subr.mxu0 %v160
    %200 = vmatpush1.msra.mxu0 %v159
    %201 = vmatprep.subr.mxu0 %v162
    %202 = vmatpush1.msra.mxu0 %v161
    %203 = vmatprep.subr.mxu0 %v164
    %204 = vmatpush1.msra.mxu0 %v163
    %205 = vmatprep.subr.mxu0 %v166
    %206 = vmatpush1.msra.mxu0 %v165
    %207 = vmatprep.subr.mxu0 %v168
    %208 = vmatpush1.msra.mxu0 %v167
    %209 = vmatprep.subr.mxu0 %v170
    %210 = vmatpush1.msra.mxu0 %v169
    %211 = vmatprep.subr.mxu0 %v172
    %212 = vmatpush1.msra.mxu0 %v171
    %213 = vmatprep.subr.mxu0 %v174
    %214 = vmatpush1.msra.mxu0 %v173
    %215 = vmatprep.subr.mxu0 %v176
    %216 = vmatpush1.msra.mxu0 %v175
    %217 = vmatprep.subr.mxu0 %v178
    %218 = vmatpush1.msra.mxu0 %v177
    %219 = vmatprep.subr.mxu0 %v180
    %220 = vmatpush1.msra.mxu0 %v179
    %221 = vmatprep.subr.mxu0 0.0
    %222 = vmatpush1.msra.mxu0 0.0
    %223 = vmatprep.subr.mxu0 0.0
    %224 = vmatpush1.msra.mxu0 0.0
    %225 = vmatprep.subr.mxu0 0.0
    %226 = vmatpush1.msra.mxu0 0.0
    %227 = vmatprep.subr.mxu0 0.0
    %228 = vmatpush1.msra.mxu0 0.0
    %229 = vmatprep.subr.mxu0 0.0
    %230 = vmatpush1.msra.mxu0 0.0
    %231 = vmatprep.subr.mxu0 0.0
    %232 = vmatpush1.msra.mxu0 0.0
    %233 = vmatprep.subr.mxu0 0.0
    %234 = vmatpush1.msra.mxu0 0.0
    %235 = vmatprep.subr.mxu0 0.0
    %236 = vmatpush1.msra.mxu0 0.0
    %237 = vmatprep.subr.mxu0 0.0
    %238 = vmatpush1.msra.mxu0 0.0
    %239 = vmatprep.subr.mxu0 0.0
    %240 = vmatpush1.msra.mxu0 0.0
    %241 = vmatprep.subr.mxu0 0.0
    %242 = vmatpush1.msra.mxu0 0.0
    %243 = vmatprep.subr.mxu0 0.0
    %244 = vmatpush1.msra.mxu0 0.0
    %245 = vmatprep.subr.mxu0 0.0
    %246 = vmatpush1.msra.mxu0 0.0
    %247 = vmatprep.subr.mxu0 0.0
    %248 = vmatpush1.msra.mxu0 0.0
    %249 = vmatprep.subr.mxu0 0.0
    %250 = vmatpush1.msra.mxu0 0.0
    %251 = vmatprep.subr.mxu0 0.0
    %252 = vmatpush1.msra.mxu0 0.0
    %253 = vmatprep.mubr.f32.mxu0 0.0
    %254 = vmatmul.mubr.f32.gmra.mrb[0].mxu0 %v181
    %v255 = vpop.f32.mrb[0].mxu0
    %v256 = vadd.f32 0.0, %v255
    %v257 = vpop.f32.mrb[0].mxu0
    %v258 = vadd.f32 0.0, %v257
    %259 = vmatprep.mubr.f32.mxu0 0.0
    %260 = vmatmul.mubr.f32.gmra.mrb[0].mxu0 %v182
    %v261 = vpop.f32.mrb[0].mxu0
    %v262 = vadd.f32 0.0, %v261
    %v263 = vpop.f32.mrb[0].mxu0
    %v264 = vadd.f32 0.0, %v263
    %265 = vmatprep.mubr.f32.mxu0 0.0
    %266 = vmatmul.mubr.f32.gmra.mrb[0].mxu0 %v183
    %v267 = vpop.f32.mrb[0].mxu0
    %v268 = vadd.f32 0.0, %v267
    %v269 = vpop.f32.mrb[0].mxu0
    %v270 = vadd.f32 0.0, %v269
    %271 = vmatprep.mubr.f32.mxu0 0.0
    %272 = vmatmul.mubr.f32.gmra.mrb[0].mxu0 %v184
    %v273 = vpop.f32.mrb[0].mxu0
    %v274 = vadd.f32 0.0, %v273
    %v275 = vpop.f32.mrb[0].mxu0
    %v276 = vadd.f32 0.0, %v275
    %277 = vmatprep.mubr.f32.mxu0 0.0
    %278 = vmatmul.mubr.f32.gmra.mrb[0].mxu0 %v185
    %v279 = vpop.f32.mrb[0].mxu0
    %v280 = vadd.f32 0.0, %v279
    %v281 = vpop.f32.mrb[0].mxu0
    %v282 = vadd.f32 0.0, %v281
    %283 = vmatprep.mubr.f32.mxu0 0.0
    %284 = vmatmul.mubr.f32.gmra.mrb[0].mxu0 %v186
    %v285 = vpop.f32.mrb[0].mxu0
    %v286 = vadd.f32 0.0, %v285
    %v287 = vpop.f32.mrb[0].mxu0
    %v288 = vadd.f32 0.0, %v287
    %289 = vmatprep.mubr.f32.mxu0 0.0
    %290 = vmatmul.mubr.f32.gmra.mrb[0].mxu0 %v187
    %v291 = vpop.f32.mrb[0].mxu0
    %v292 = vadd.f32 0.0, %v291
    %v293 = vpop.f32.mrb[0].mxu0
    %v294 = vadd.f32 0.0, %v293
    %295 = vmatprep.mubr.f32.mxu0 0.0
    %296 = vmatmul.mubr.f32.gmra.mrb[0].mxu0 %v188
    %v297 = vpop.f32.mrb[0].mxu0
    %v298 = vadd.f32 0.0, %v297
    %v299 = vpop.f32.mrb[0].mxu0
    %v300 = vadd.f32 0.0, %v299
    %301 = vdwg.mxu0
    %v302 = vld [vmem:[#allocation4] sm:$0xff]
    %v303 = vld [vmem:[#allocation4 + $0x8] sm:$0xff]
    %v304 = vld [vmem:[#allocation4 + $0x10] sm:$0xff]
    %v305 = vld [vmem:[#allocation4 + $0x18] sm:$0xff]
    %v306 = vld [vmem:[#allocation4 + $0x20] sm:$0xff]
    %v307 = vld [vmem:[#allocation4 + $0x28] sm:$0xff]
    %v308 = vld [vmem:[#allocation4 + $0x30] sm:$0xff]
    %v309 = vld [vmem:[#allocation4 + $0x38] sm:$0xff]
    %v310 = vld [vmem:[#allocation4 + $0x40] sm:$0xff]
    %v311 = vld [vmem:[#allocation4 + $0x48] sm:$0xff]
    %v312 = vld [vmem:[#allocation4 + $0x50] sm:$0xff]
    %v313 = vld [vmem:[#allocation4 + $0x58] sm:$0xff]
    %v314 = vld [vmem:[#allocation4 + $0x60] sm:$0xff]
    %v315 = vld [vmem:[#allocation4 + $0x68] sm:$0xff]
    %v316 = vld [vmem:[#allocation4 + $0x70] sm:$0xff]
    %v317 = vld [vmem:[#allocation4 + $0x78] sm:$0xff]
    %v318 = vld [vmem:[#allocation4 + $0x80] sm:$0xff]
    %v319 = vld [vmem:[#allocation4 + $0x88] sm:$0xff]
    %v320 = vld [vmem:[#allocation4 + $0x90] sm:$0xff]
    %v321 = vld [vmem:[#allocation4 + $0x98] sm:$0xff]
    %v322 = vld [vmem:[#allocation4 + $0xa0] sm:$0xff]
    %v323 = vld [vmem:[#allocation4 + $0xa8] sm:$0xff]
    %v324 = vld [vmem:[#allocation4 + $0xb0] sm:$0xff]
    %v325 = vld [vmem:[#allocation4 + $0xb8] sm:$0xff]
    %v326 = vld [vmem:[#allocation4 + $0xc0] sm:$0xff]
    %v327 = vld [vmem:[#allocation4 + $0xc8] sm:$0xff]
    %v328 = vld [vmem:[#allocation4 + $0xd0] sm:$0xff]
    %v329 = vld [vmem:[#allocation4 + $0xd8] sm:$0xff]
    %v330 = vld [vmem:[#allocation4 + $0xe0] sm:$0xff]
    %v331 = vld [vmem:[#allocation4 + $0xe8] sm:$0xff]
    %v332 = vld [vmem:[#allocation4 + $0xf0] sm:$0xff]
    %v333 = vld [vmem:[#allocation4 + $0xf8] sm:$0xff]
    %v334 = vld [vmem:[#allocation4 + $0x100] sm:$0xff]
    %v335 = vld [vmem:[#allocation4 + $0x108] sm:$0xff]
    %v336 = vld [vmem:[#allocation4 + $0x110] sm:$0xff]
    %v337 = vld [vmem:[#allocation4 + $0x118] sm:$0xff]
    %v338 = vld [vmem:[#allocation4 + $0x120] sm:$0xff]
    %v339 = vld [vmem:[#allocation4 + $0x128] sm:$0xff]
    %v340 = vld [vmem:[#allocation4 + $0x130] sm:$0xff]
    %v341 = vld [vmem:[#allocation4 + $0x138] sm:$0xff]
    %v342 = vld [vmem:[#allocation4 + $0x140] sm:$0xff]
    %v343 = vld [vmem:[#allocation4 + $0x148] sm:$0xff]
    %v344 = vld [vmem:[#allocation4 + $0x150] sm:$0xff]
    %v345 = vld [vmem:[#allocation4 + $0x158] sm:$0xff]
    %v346 = vld [vmem:[#allocation4 + $0x160] sm:$0xff]
    %v347 = vld [vmem:[#allocation4 + $0x168] sm:$0xff]
    %v348 = vld [vmem:[#allocation4 + $0x170] sm:$0xff]
    %v349 = vld [vmem:[#allocation4 + $0x178] sm:$0xff]
    %v350 = vld [vmem:[#allocation4 + $0x180] sm:$0xff]
    %v351 = vld [vmem:[#allocation4 + $0x188] sm:$0xff]
    %v352 = vld [vmem:[#allocation4 + $0x190] sm:$0xff]
    %v353 = vld [vmem:[#allocation4 + $0x198] sm:$0xff]
    %v354 = vld [vmem:[#allocation4 + $0x1a0] sm:$0xff]
    %v355 = vld [vmem:[#allocation4 + $0x1a8] sm:$0xff]
    %v356 = vld [vmem:[#allocation4 + $0x1b0] sm:$0xff]
    %v357 = vld [vmem:[#allocation4 + $0x1b8] sm:$0xff]
    %v358 = vld [vmem:[#allocation4 + $0x1c0] sm:$0xff]
    %v359 = vld [vmem:[#allocation4 + $0x1c8] sm:$0xff]
    %v360 = vld [vmem:[#allocation4 + $0x1d0] sm:$0xff]
    %v361 = vld [vmem:[#allocation4 + $0x1d8] sm:$0xff]
    %v362 = vld [vmem:[#allocation4 + $0x1e0] sm:$0xff]
    %v363 = vld [vmem:[#allocation4 + $0x1e8] sm:$0xff]
    %v364 = vld [vmem:[#allocation4 + $0x1f0] sm:$0xff]
    %v365 = vld [vmem:[#allocation4 + $0x1f8] sm:$0xff]
    %s366 = scalar_lea.vmem [#allocation2], 64
    %v367 = vld [vmem:[%s366] sm:$0xff]
    %v368 = vld [vmem:[%s366 + $0x8] sm:$0xff]
    %v369 = vld [vmem:[%s366 + $0x10] sm:$0xff]
    %v370 = vld [vmem:[%s366 + $0x18] sm:$0xff]
    %v371 = vld [vmem:[%s366 + $0x20] sm:$0xff]
    %v372 = vld [vmem:[%s366 + $0x28] sm:$0xff]
    %v373 = vld [vmem:[%s366 + $0x30] sm:$0xff]
    %v374 = vld [vmem:[%s366 + $0x38] sm:$0xff]
    %375 = vmatprep.subr.mxu0 %v150
    %376 = vmatpush1.msra.mxu0 %v149
    %377 = vmatprep.subr.mxu0 %v152
    %378 = vmatpush1.msra.mxu0 %v151
    %379 = vmatprep.subr.mxu0 %v154
    %380 = vmatpush1.msra.mxu0 %v153
    %381 = vmatprep.subr.mxu0 %v156
    %382 = vmatpush1.msra.mxu0 %v155
    %383 = vmatprep.subr.mxu0 %v158
    %384 = vmatpush1.msra.mxu0 %v157
    %385 = vmatprep.subr.mxu0 %v160
    %386 = vmatpush1.msra.mxu0 %v159
    %387 = vmatprep.subr.mxu0 %v162
    %388 = vmatpush1.msra.mxu0 %v161
    %389 = vmatprep.subr.mxu0 %v164
    %390 = vmatpush1.msra.mxu0 %v163
    %391 = vmatprep.subr.mxu0 %v166
    %392 = vmatpush1.msra.mxu0 %v165
    %393 = vmatprep.subr.mxu0 %v168
    %394 = vmatpush1.msra.mxu0 %v167
    %395 = vmatprep.subr.mxu0 %v170
    %396 = vmatpush1.msra.mxu0 %v169
    %397 = vmatprep.subr.mxu0 %v172
    %398 = vmatpush1.msra.mxu0 %v171
    %399 = vmatprep.subr.mxu0 %v174
    %400 = vmatpush1.msra.mxu0 %v173
    %401 = vmatprep.subr.mxu0 %v176
    %402 = vmatpush1.msra.mxu0 %v175
    %403 = vmatprep.subr.mxu0 %v178
    %404 = vmatpush1.msra.mxu0 %v177
    %405 = vmatprep.subr.mxu0 %v180
    %406 = vmatpush1.msra.mxu0 %v179
    %407 = vmatprep.subr.mxu0 0.0
    %408 = vmatpush1.msra.mxu0 0.0
    %409 = vmatprep.subr.mxu0 0.0
    %410 = vmatpush1.msra.mxu0 0.0
    %411 = vmatprep.subr.mxu0 0.0
    %412 = vmatpush1.msra.mxu0 0.0
    %413 = vmatprep.subr.mxu0 0.0
    %414 = vmatpush1.msra.mxu0 0.0
    %415 = vmatprep.subr.mxu0 0.0
    %416 = vmatpush1.msra.mxu0 0.0
    %417 = vmatprep.subr.mxu0 0.0
    %418 = vmatpush1.msra.mxu0 0.0
    %419 = vmatprep.subr.mxu0 0.0
    %420 = vmatpush1.msra.mxu0 0.0
    %421 = vmatprep.subr.mxu0 0.0
    %422 = vmatpush1.msra.mxu0 0.0
    %423 = vmatprep.subr.mxu0 0.0
    %424 = vmatpush1.msra.mxu0 0.0
    %425 = vmatprep.subr.mxu0 0.0
    %426 = vmatpush1.msra.mxu0 0.0
    %427 = vmatprep.subr.mxu0 0.0
    %428 = vmatpush1.msra.mxu0 0.0
    %429 = vmatprep.subr.mxu0 0.0
    %430 = vmatpush1.msra.mxu0 0.0
    %431 = vmatprep.subr.mxu0 0.0
    %432 = vmatpush1.msra.mxu0 0.0
    %433 = vmatprep.subr.mxu0 0.0
    %434 = vmatpush1.msra.mxu0 0.0
    %435 = vmatprep.subr.mxu0 0.0
    %436 = vmatpush1.msra.mxu0 0.0
    %437 = vmatprep.subr.mxu0 0.0
    %438 = vmatpush1.msra.mxu0 0.0
    %439 = vmatprep.mubr.f32.mxu0 0.0
    %440 = vmatmul.mubr.f32.gmra.mrb[0].mxu0 %v367
    %v441 = vpop.f32.mrb[0].mxu0
    %v442 = vadd.f32 0.0, %v441
    %v443 = vpop.f32.mrb[0].mxu0
    %v444 = vadd.f32 0.0, %v443
    %445 = vmatprep.mubr.f32.mxu0 0.0
    %446 = vmatmul.mubr.f32.gmra.mrb[0].mxu0 %v368
    %v447 = vpop.f32.mrb[0].mxu0
    %v448 = vadd.f32 0.0, %v447
    %v449 = vpop.f32.mrb[0].mxu0
    %v450 = vadd.f32 0.0, %v449
    %451 = vmatprep.mubr.f32.mxu0 0.0
    %452 = vmatmul.mubr.f32.gmra.mrb[0].mxu0 %v369
    %v453 = vpop.f32.mrb[0].mxu0
    %v454 = vadd.f32 0.0, %v453
    %v455 = vpop.f32.mrb[0].mxu0
    %v456 = vadd.f32 0.0, %v455
    %457 = vmatprep.mubr.f32.mxu0 0.0
    %458 = vmatmul.mubr.f32.gmra.mrb[0].mxu0 %v370
    %v459 = vpop.f32.mrb[0].mxu0
    %v460 = vadd.f32 0.0, %v459
    %v461 = vpop.f32.mrb[0].mxu0
    %v462 = vadd.f32 0.0, %v461
    %463 = vmatprep.mubr.f32.mxu0 0.0
    %464 = vmatmul.mubr.f32.gmra.mrb[0].mxu0 %v371
    %v465 = vpop.f32.mrb[0].mxu0
    %v466 = vadd.f32 0.0, %v465
    %v467 = vpop.f32.mrb[0].mxu0
    %v468 = vadd.f32 0.0, %v467
    %469 = vmatprep.mubr.f32.mxu0 0.0
    %470 = vmatmul.mubr.f32.gmra.mrb[0].mxu0 %v372
    %v471 = vpop.f32.mrb[0].mxu0
    %v472 = vadd.f32 0.0, %v471
    %v473 = vpop.f32.mrb[0].mxu0
    %v474 = vadd.f32 0.0, %v473
    %475 = vmatprep.mubr.f32.mxu0 0.0
    %476 = vmatmul.mubr.f32.gmra.mrb[0].mxu0 %v373
    %v477 = vpop.f32.mrb[0].mxu0
    %v478 = vadd.f32 0.0, %v477
    %v479 = vpop.f32.mrb[0].mxu0
    %v480 = vadd.f32 0.0, %v479
    %481 = vmatprep.mubr.f32.mxu0 0.0
    %482 = vmatmul.mubr.f32.gmra.mrb[0].mxu0 %v374
    %v483 = vpop.f32.mrb[0].mxu0
    %v484 = vadd.f32 0.0, %v483
    %v485 = vpop.f32.mrb[0].mxu0
    %v486 = vadd.f32 0.0, %v485
    %487 = vdwg.mxu0
    %s488 = scalar_lea.vmem [#allocation4], 512
    %v489 = vld [vmem:[%s488] sm:$0xff]
    %v490 = vld [vmem:[%s488 + $0x8] sm:$0xff]
    %v491 = vld [vmem:[%s488 + $0x10] sm:$0xff]
    %v492 = vld [vmem:[%s488 + $0x18] sm:$0xff]
    %v493 = vld [vmem:[%s488 + $0x20] sm:$0xff]
    %v494 = vld [vmem:[%s488 + $0x28] sm:$0xff]
    %v495 = vld [vmem:[%s488 + $0x30] sm:$0xff]
    %v496 = vld [vmem:[%s488 + $0x38] sm:$0xff]
    %v497 = vld [vmem:[%s488 + $0x40] sm:$0xff]
    %v498 = vld [vmem:[%s488 + $0x48] sm:$0xff]
    %v499 = vld [vmem:[%s488 + $0x50] sm:$0xff]
    %v500 = vld [vmem:[%s488 + $0x58] sm:$0xff]
    %v501 = vld [vmem:[%s488 + $0x60] sm:$0xff]
    %v502 = vld [vmem:[%s488 + $0x68] sm:$0xff]
    %v503 = vld [vmem:[%s488 + $0x70] sm:$0xff]
    %v504 = vld [vmem:[%s488 + $0x78] sm:$0xff]
    %v505 = vld [vmem:[%s488 + $0x80] sm:$0xff]
    %v506 = vld [vmem:[%s488 + $0x88] sm:$0xff]
    %v507 = vld [vmem:[%s488 + $0x90] sm:$0xff]
    %v508 = vld [vmem:[%s488 + $0x98] sm:$0xff]
    %v509 = vld [vmem:[%s488 + $0xa0] sm:$0xff]
    %v510 = vld [vmem:[%s488 + $0xa8] sm:$0xff]
    %v511 = vld [vmem:[%s488 + $0xb0] sm:$0xff]
    %v512 = vld [vmem:[%s488 + $0xb8] sm:$0xff]
    %v513 = vld [vmem:[%s488 + $0xc0] sm:$0xff]
    %v514 = vld [vmem:[%s488 + $0xc8] sm:$0xff]
    %v515 = vld [vmem:[%s488 + $0xd0] sm:$0xff]
    %v516 = vld [vmem:[%s488 + $0xd8] sm:$0xff]
    %v517 = vld [vmem:[%s488 + $0xe0] sm:$0xff]
    %v518 = vld [vmem:[%s488 + $0xe8] sm:$0xff]
    %v519 = vld [vmem:[%s488 + $0xf0] sm:$0xff]
    %v520 = vld [vmem:[%s488 + $0xf8] sm:$0xff]
    %v521 = vld [vmem:[%s488 + $0x100] sm:$0xff]
    %v522 = vld [vmem:[%s488 + $0x108] sm:$0xff]
    %v523 = vld [vmem:[%s488 + $0x110] sm:$0xff]
    %v524 = vld [vmem:[%s488 + $0x118] sm:$0xff]
    %v525 = vld [vmem:[%s488 + $0x120] sm:$0xff]
    %v526 = vld [vmem:[%s488 + $0x128] sm:$0xff]
    %v527 = vld [vmem:[%s488 + $0x130] sm:$0xff]
    %v528 = vld [vmem:[%s488 + $0x138] sm:$0xff]
    %v529 = vld [vmem:[%s488 + $0x140] sm:$0xff]
    %v530 = vld [vmem:[%s488 + $0x148] sm:$0xff]
    %v531 = vld [vmem:[%s488 + $0x150] sm:$0xff]
    %v532 = vld [vmem:[%s488 + $0x158] sm:$0xff]
    %v533 = vld [vmem:[%s488 + $0x160] sm:$0xff]
    %v534 = vld [vmem:[%s488 + $0x168] sm:$0xff]
    %v535 = vld [vmem:[%s488 + $0x170] sm:$0xff]
    %v536 = vld [vmem:[%s488 + $0x178] sm:$0xff]
    %v537 = vld [vmem:[%s488 + $0x180] sm:$0xff]
    %v538 = vld [vmem:[%s488 + $0x188] sm:$0xff]
    %v539 = vld [vmem:[%s488 + $0x190] sm:$0xff]
    %v540 = vld [vmem:[%s488 + $0x198] sm:$0xff]
    %v541 = vld [vmem:[%s488 + $0x1a0] sm:$0xff]
    %v542 = vld [vmem:[%s488 + $0x1a8] sm:$0xff]
    %v543 = vld [vmem:[%s488 + $0x1b0] sm:$0xff]
    %v544 = vld [vmem:[%s488 + $0x1b8] sm:$0xff]
    %v545 = vld [vmem:[%s488 + $0x1c0] sm:$0xff]
    %v546 = vld [vmem:[%s488 + $0x1c8] sm:$0xff]
    %v547 = vld [vmem:[%s488 + $0x1d0] sm:$0xff]
    %v548 = vld [vmem:[%s488 + $0x1d8] sm:$0xff]
    %v549 = vld [vmem:[%s488 + $0x1e0] sm:$0xff]
    %v550 = vld [vmem:[%s488 + $0x1e8] sm:$0xff]
    %v551 = vld [vmem:[%s488 + $0x1f0] sm:$0xff]
    %v552 = vld [vmem:[%s488 + $0x1f8] sm:$0xff]
    %553 = vmatprep.subr.mxu0 %v490
    %554 = vmatpush1.msra.mxu0 %v489
    %555 = vmatprep.subr.mxu0 %v492
    %556 = vmatpush1.msra.mxu0 %v491
    %557 = vmatprep.subr.mxu0 %v494
    %558 = vmatpush1.msra.mxu0 %v493
    %559 = vmatprep.subr.mxu0 %v496
    %560 = vmatpush1.msra.mxu0 %v495
    %561 = vmatprep.subr.mxu0 %v498
    %562 = vmatpush1.msra.mxu0 %v497
    %563 = vmatprep.subr.mxu0 %v500
    %564 = vmatpush1.msra.mxu0 %v499
    %565 = vmatprep.subr.mxu0 %v502
    %566 = vmatpush1.msra.mxu0 %v501
    %567 = vmatprep.subr.mxu0 %v504
    %568 = vmatpush1.msra.mxu0 %v503
    %569 = vmatprep.subr.mxu0 %v506
    %570 = vmatpush1.msra.mxu0 %v505
    %571 = vmatprep.subr.mxu0 %v508
    %572 = vmatpush1.msra.mxu0 %v507
    %573 = vmatprep.subr.mxu0 %v510
    %574 = vmatpush1.msra.mxu0 %v509
    %575 = vmatprep.subr.mxu0 %v512
    %576 = vmatpush1.msra.mxu0 %v511
    %577 = vmatprep.subr.mxu0 %v514
    %578 = vmatpush1.msra.mxu0 %v513
    %579 = vmatprep.subr.mxu0 %v516
    %580 = vmatpush1.msra.mxu0 %v515
    %581 = vmatprep.subr.mxu0 %v518
    %582 = vmatpush1.msra.mxu0 %v517
    %583 = vmatprep.subr.mxu0 %v520
    %584 = vmatpush1.msra.mxu0 %v519
    %585 = vmatprep.subr.mxu0 %v522
    %586 = vmatpush1.msra.mxu0 %v521
    %587 = vmatprep.subr.mxu0 %v524
    %588 = vmatpush1.msra.mxu0 %v523
    %589 = vmatprep.subr.mxu0 %v526
    %590 = vmatpush1.msra.mxu0 %v525
    %591 = vmatprep.subr.mxu0 %v528
    %592 = vmatpush1.msra.mxu0 %v527
    %593 = vmatprep.subr.mxu0 %v530
    %594 = vmatpush1.msra.mxu0 %v529
    %595 = vmatprep.subr.mxu0 %v532
    %596 = vmatpush1.msra.mxu0 %v531
    %597 = vmatprep.subr.mxu0 %v534
    %598 = vmatpush1.msra.mxu0 %v533
    %599 = vmatprep.subr.mxu0 %v536
    %600 = vmatpush1.msra.mxu0 %v535
    %601 = vmatprep.subr.mxu0 %v538
    %602 = vmatpush1.msra.mxu0 %v537
    %603 = vmatprep.subr.mxu0 %v540
    %604 = vmatpush1.msra.mxu0 %v539
    %605 = vmatprep.subr.mxu0 %v542
    %606 = vmatpush1.msra.mxu0 %v541
    %607 = vmatprep.subr.mxu0 %v544
    %608 = vmatpush1.msra.mxu0 %v543
    %609 = vmatprep.subr.mxu0 %v546
    %610 = vmatpush1.msra.mxu0 %v545
    %611 = vmatprep.subr.mxu0 %v548
    %612 = vmatpush1.msra.mxu0 %v547
    %613 = vmatprep.subr.mxu0 %v550
    %614 = vmatpush1.msra.mxu0 %v549
    %615 = vmatprep.subr.mxu0 %v552
    %616 = vmatpush1.msra.mxu0 %v551
    %617 = vmatprep.mubr.f32.mxu0 %v444
    %618 = vmatmul.mubr.f32.gmra.mrb[0].mxu0 %v442
    %v619 = vpop.f32.mrb[0].mxu0
    %v620 = vadd.f32 0.0, %v619
    %v621 = vpop.f32.mrb[0].mxu0
    %v622 = vadd.f32 0.0, %v621
    %623 = vmatprep.mubr.f32.mxu0 %v450
    %624 = vmatmul.mubr.f32.gmra.mrb[0].mxu0 %v448
    %v625 = vpop.f32.mrb[0].mxu0
    %v626 = vadd.f32 0.0, %v625
    %v627 = vpop.f32.mrb[0].mxu0
    %v628 = vadd.f32 0.0, %v627
    %629 = vmatprep.mubr.f32.mxu0 %v456
    %630 = vmatmul.mubr.f32.gmra.mrb[0].mxu0 %v454
    %v631 = vpop.f32.mrb[0].mxu0
    %v632 = vadd.f32 0.0, %v631
    %v633 = vpop.f32.mrb[0].mxu0
    %v634 = vadd.f32 0.0, %v633
    %635 = vmatprep.mubr.f32.mxu0 %v462
    %636 = vmatmul.mubr.f32.gmra.mrb[0].mxu0 %v460
    %v637 = vpop.f32.mrb[0].mxu0
    %v638 = vadd.f32 0.0, %v637
    %v639 = vpop.f32.mrb[0].mxu0
    %v640 = vadd.f32 0.0, %v639
    %641 = vmatprep.mubr.f32.mxu0 %v468
    %642 = vmatmul.mubr.f32.gmra.mrb[0].mxu0 %v466
    %v643 = vpop.f32.mrb[0].mxu0
    %v644 = vadd.f32 0.0, %v643
    %v645 = vpop.f32.mrb[0].mxu0
    %v646 = vadd.f32 0.0, %v645
    %647 = vmatprep.mubr.f32.mxu0 %v474
    %648 = vmatmul.mubr.f32.gmra.mrb[0].mxu0 %v472
    %v649 = vpop.f32.mrb[0].mxu0
    %v650 = vadd.f32 0.0, %v649
    %v651 = vpop.f32.mrb[0].mxu0
    %v652 = vadd.f32 0.0, %v651
    %653 = vmatprep.mubr.f32.mxu0 %v480
    %654 = vmatmul.mubr.f32.gmra.mrb[0].mxu0 %v478
    %v655 = vpop.f32.mrb[0].mxu0
    %v656 = vadd.f32 0.0, %v655
    %v657 = vpop.f32.mrb[0].mxu0
    %v658 = vadd.f32 0.0, %v657
    %659 = vmatprep.mubr.f32.mxu0 %v486
    %660 = vmatmul.mubr.f32.gmra.mrb[0].mxu0 %v484
    %v661 = vpop.f32.mrb[0].mxu0
    %v662 = vadd.f32 0.0, %v661
    %v663 = vpop.f32.mrb[0].mxu0
    %v664 = vadd.f32 0.0, %v663
    %665 = vdwg.mxu0
    %666 = vmatprep.subr.mxu0 %v303
    %667 = vmatpush1.msra.mxu0 %v302
    %668 = vmatprep.subr.mxu0 %v305
    %669 = vmatpush1.msra.mxu0 %v304
    %670 = vmatprep.subr.mxu0 %v307
    %671 = vmatpush1.msra.mxu0 %v306
    %672 = vmatprep.subr.mxu0 %v309
    %673 = vmatpush1.msra.mxu0 %v308
    %674 = vmatprep.subr.mxu0 %v311
    %675 = vmatpush1.msra.mxu0 %v310
    %676 = vmatprep.subr.mxu0 %v313
    %677 = vmatpush1.msra.mxu0 %v312
    %678 = vmatprep.subr.mxu0 %v315
    %679 = vmatpush1.msra.mxu0 %v314
    %680 = vmatprep.subr.mxu0 %v317
    %681 = vmatpush1.msra.mxu0 %v316
    %682 = vmatprep.subr.mxu0 %v319
    %683 = vmatpush1.msra.mxu0 %v318
    %684 = vmatprep.subr.mxu0 %v321
    %685 = vmatpush1.msra.mxu0 %v320
    %686 = vmatprep.subr.mxu0 %v323
    %687 = vmatpush1.msra.mxu0 %v322
    %688 = vmatprep.subr.mxu0 %v325
    %689 = vmatpush1.msra.mxu0 %v324
    %690 = vmatprep.subr.mxu0 %v327
    %691 = vmatpush1.msra.mxu0 %v326
    %692 = vmatprep.subr.mxu0 %v329
    %693 = vmatpush1.msra.mxu0 %v328
    %694 = vmatprep.subr.mxu0 %v331
    %695 = vmatpush1.msra.mxu0 %v330
    %696 = vmatprep.subr.mxu0 %v333
    %697 = vmatpush1.msra.mxu0 %v332
    %698 = vmatprep.subr.mxu0 %v335
    %699 = vmatpush1.msra.mxu0 %v334
    %700 = vmatprep.subr.mxu0 %v337
    %701 = vmatpush1.msra.mxu0 %v336
    %702 = vmatprep.subr.mxu0 %v339
    %703 = vmatpush1.msra.mxu0 %v338
    %704 = vmatprep.subr.mxu0 %v341
    %705 = vmatpush1.msra.mxu0 %v340
    %706 = vmatprep.subr.mxu0 %v343
    %707 = vmatpush1.msra.mxu0 %v342
    %708 = vmatprep.subr.mxu0 %v345
    %709 = vmatpush1.msra.mxu0 %v344
    %710 = vmatprep.subr.mxu0 %v347
    %711 = vmatpush1.msra.mxu0 %v346
    %712 = vmatprep.subr.mxu0 %v349
    %713 = vmatpush1.msra.mxu0 %v348
    %714 = vmatprep.subr.mxu0 %v351
    %715 = vmatpush1.msra.mxu0 %v350
    %716 = vmatprep.subr.mxu0 %v353
    %717 = vmatpush1.msra.mxu0 %v352
    %718 = vmatprep.subr.mxu0 %v355
    %719 = vmatpush1.msra.mxu0 %v354
    %720 = vmatprep.subr.mxu0 %v357
    %721 = vmatpush1.msra.mxu0 %v356
    %722 = vmatprep.subr.mxu0 %v359
    %723 = vmatpush1.msra.mxu0 %v358
    %724 = vmatprep.subr.mxu0 %v361
    %725 = vmatpush1.msra.mxu0 %v360
    %726 = vmatprep.subr.mxu0 %v363
    %727 = vmatpush1.msra.mxu0 %v362
    %728 = vmatprep.subr.mxu0 %v365
    %729 = vmatpush1.msra.mxu0 %v364
    %730 = vmatprep.mubr.f32.mxu0 %v258
    %731 = vmatmul.mubr.f32.gmra.mrb[0].mxu0 %v256
    %v732 = vpop.f32.mrb[0].mxu0
    %v733 = vadd.f32 %v620, %v732
    %v734 = vpop.f32.mrb[0].mxu0
    %v735 = vadd.f32 %v622, %v734
    %736 = vmatprep.mubr.f32.mxu0 %v264
    %737 = vmatmul.mubr.f32.gmra.mrb[0].mxu0 %v262
    %v738 = vpop.f32.mrb[0].mxu0
    %v739 = vadd.f32 %v626, %v738
    %v740 = vpop.f32.mrb[0].mxu0
    %v741 = vadd.f32 %v628, %v740
    %742 = vmatprep.mubr.f32.mxu0 %v270
    %743 = vmatmul.mubr.f32.gmra.mrb[0].mxu0 %v268
    %v744 = vpop.f32.mrb[0].mxu0
    %v745 = vadd.f32 %v632, %v744
    %v746 = vpop.f32.mrb[0].mxu0
    %v747 = vadd.f32 %v634, %v746
    %748 = vmatprep.mubr.f32.mxu0 %v276
    %749 = vmatmul.mubr.f32.gmra.mrb[0].mxu0 %v274
    %v750 = vpop.f32.mrb[0].mxu0
    %v751 = vadd.f32 %v638, %v750
    %v752 = vpop.f32.mrb[0].mxu0
    %v753 = vadd.f32 %v640, %v752
    %754 = vmatprep.mubr.f32.mxu0 %v282
    %755 = vmatmul.mubr.f32.gmra.mrb[0].mxu0 %v280
    %v756 = vpop.f32.mrb[0].mxu0
    %v757 = vadd.f32 %v644, %v756
    %v758 = vpop.f32.mrb[0].mxu0
    %v759 = vadd.f32 %v646, %v758
    %760 = vmatprep.mubr.f32.mxu0 %v288
    %761 = vmatmul.mubr.f32.gmra.mrb[0].mxu0 %v286
    %v762 = vpop.f32.mrb[0].mxu0
    %v763 = vadd.f32 %v650, %v762
    %v764 = vpop.f32.mrb[0].mxu0
    %v765 = vadd.f32 %v652, %v764
    %766 = vmatprep.mubr.f32.mxu0 %v294
    %767 = vmatmul.mubr.f32.gmra.mrb[0].mxu0 %v292
    %v768 = vpop.f32.mrb[0].mxu0
    %v769 = vadd.f32 %v656, %v768
    %v770 = vpop.f32.mrb[0].mxu0
    %v771 = vadd.f32 %v658, %v770
    %772 = vmatprep.mubr.f32.mxu0 %v300
    %773 = vmatmul.mubr.f32.gmra.mrb[0].mxu0 %v298
    %v774 = vpop.f32.mrb[0].mxu0
    %v775 = vadd.f32 %v662, %v774
    %v776 = vpop.f32.mrb[0].mxu0
    %v777 = vadd.f32 %v664, %v776
    %778 = vdwg.mxu0
    %s779 = scalar_lea.vmem [#allocation2], 128
    %v780 = vld [vmem:[%s779] sm:$0xff]
    %v781 = vld [vmem:[%s779 + $0x8] sm:$0xff]
    %v782 = vld [vmem:[%s779 + $0x10] sm:$0xff]
    %v783 = vld [vmem:[%s779 + $0x18] sm:$0xff]
    %v784 = vld [vmem:[%s779 + $0x20] sm:$0xff]
    %v785 = vld [vmem:[%s779 + $0x28] sm:$0xff]
    %v786 = vld [vmem:[%s779 + $0x30] sm:$0xff]
    %v787 = vld [vmem:[%s779 + $0x38] sm:$0xff]
    %788 = vmatprep.subr.mxu0 %v150
    %789 = vmatpush1.msra.mxu0 %v149
    %790 = vmatprep.subr.mxu0 %v152
    %791 = vmatpush1.msra.mxu0 %v151
    %792 = vmatprep.subr.mxu0 %v154
    %793 = vmatpush1.msra.mxu0 %v153
    %794 = vmatprep.subr.mxu0 %v156
    %795 = vmatpush1.msra.mxu0 %v155
    %796 = vmatprep.subr.mxu0 %v158
    %797 = vmatpush1.msra.mxu0 %v157
    %798 = vmatprep.subr.mxu0 %v160
    %799 = vmatpush1.msra.mxu0 %v159
    %800 = vmatprep.subr.mxu0 %v162
    %801 = vmatpush1.msra.mxu0 %v161
    %802 = vmatprep.subr.mxu0 %v164
    %803 = vmatpush1.msra.mxu0 %v163
    %804 = vmatprep.subr.mxu0 %v166
    %805 = vmatpush1.msra.mxu0 %v165
    %806 = vmatprep.subr.mxu0 %v168
    %807 = vmatpush1.msra.mxu0 %v167
    %808 = vmatprep.subr.mxu0 %v170
    %809 = vmatpush1.msra.mxu0 %v169
    %810 = vmatprep.subr.mxu0 %v172
    %811 = vmatpush1.msra.mxu0 %v171
    %812 = vmatprep.subr.mxu0 %v174
    %813 = vmatpush1.msra.mxu0 %v173
    %814 = vmatprep.subr.mxu0 %v176
    %815 = vmatpush1.msra.mxu0 %v175
    %816 = vmatprep.subr.mxu0 %v178
    %817 = vmatpush1.msra.mxu0 %v177
    %818 = vmatprep.subr.mxu0 %v180
    %819 = vmatpush1.msra.mxu0 %v179
    %820 = vmatprep.subr.mxu0 0.0
    %821 = vmatpush1.msra.mxu0 0.0
    %822 = vmatprep.subr.mxu0 0.0
    %823 = vmatpush1.msra.mxu0 0.0
    %824 = vmatprep.subr.mxu0 0.0
    %825 = vmatpush1.msra.mxu0 0.0
    %826 = vmatprep.subr.mxu0 0.0
    %827 = vmatpush1.msra.mxu0 0.0
    %828 = vmatprep.subr.mxu0 0.0
    %829 = vmatpush1.msra.mxu0 0.0
    %830 = vmatprep.subr.mxu0 0.0
    %831 = vmatpush1.msra.mxu0 0.0
    %832 = vmatprep.subr.mxu0 0.0
    %833 = vmatpush1.msra.mxu0 0.0
    %834 = vmatprep.subr.mxu0 0.0
    %835 = vmatpush1.msra.mxu0 0.0
    %836 = vmatprep.subr.mxu0 0.0
    %837 = vmatpush1.msra.mxu0 0.0
    %838 = vmatprep.subr.mxu0 0.0
    %839 = vmatpush1.msra.mxu0 0.0
    %840 = vmatprep.subr.mxu0 0.0
    %841 = vmatpush1.msra.mxu0 0.0
    %842 = vmatprep.subr.mxu0 0.0
    %843 = vmatpush1.msra.mxu0 0.0
    %844 = vmatprep.subr.mxu0 0.0
    %845 = vmatpush1.msra.mxu0 0.0
    %846 = vmatprep.subr.mxu0 0.0
    %847 = vmatpush1.msra.mxu0 0.0
    %848 = vmatprep.subr.mxu0 0.0
    %849 = vmatpush1.msra.mxu0 0.0
    %850 = vmatprep.subr.mxu0 0.0
    %851 = vmatpush1.msra.mxu0 0.0
    %852 = vmatprep.mubr.f32.mxu0 0.0
    %853 = vmatmul.mubr.f32.gmra.mrb[0].mxu0 %v780
    %v854 = vpop.f32.mrb[0].mxu0
    %v855 = vadd.f32 0.0, %v854
    %v856 = vpop.f32.mrb[0].mxu0
    %v857 = vadd.f32 0.0, %v856
    %858 = vmatprep.mubr.f32.mxu0 0.0
    %859 = vmatmul.mubr.f32.gmra.mrb[0].mxu0 %v781
    %v860 = vpop.f32.mrb[0].mxu0
    %v861 = vadd.f32 0.0, %v860
    %v862 = vpop.f32.mrb[0].mxu0
    %v863 = vadd.f32 0.0, %v862
    %864 = vmatprep.mubr.f32.mxu0 0.0
    %865 = vmatmul.mubr.f32.gmra.mrb[0].mxu0 %v782
    %v866 = vpop.f32.mrb[0].mxu0
    %v867 = vadd.f32 0.0, %v866
    %v868 = vpop.f32.mrb[0].mxu0
    %v869 = vadd.f32 0.0, %v868
    %870 = vmatprep.mubr.f32.mxu0 0.0
    %871 = vmatmul.mubr.f32.gmra.mrb[0].mxu0 %v783
    %v872 = vpop.f32.mrb[0].mxu0
    %v873 = vadd.f32 0.0, %v872
    %v874 = vpop.f32.mrb[0].mxu0
    %v875 = vadd.f32 0.0, %v874
    %876 = vmatprep.mubr.f32.mxu0 0.0
    %877 = vmatmul.mubr.f32.gmra.mrb[0].mxu0 %v784
    %v878 = vpop.f32.mrb[0].mxu0
    %v879 = vadd.f32 0.0, %v878
    %v880 = vpop.f32.mrb[0].mxu0
    %v881 = vadd.f32 0.0, %v880
    %882 = vmatprep.mubr.f32.mxu0 0.0
    %883 = vmatmul.mubr.f32.gmra.mrb[0].mxu0 %v785
    %v884 = vpop.f32.mrb[0].mxu0
    %v885 = vadd.f32 0.0, %v884
    %v886 = vpop.f32.mrb[0].mxu0
    %v887 = vadd.f32 0.0, %v886
    %888 = vmatprep.mubr.f32.mxu0 0.0
    %889 = vmatmul.mubr.f32.gmra.mrb[0].mxu0 %v786
    %v890 = vpop.f32.mrb[0].mxu0
    %v891 = vadd.f32 0.0, %v890
    %v892 = vpop.f32.mrb[0].mxu0
    %v893 = vadd.f32 0.0, %v892
    %894 = vmatprep.mubr.f32.mxu0 0.0
    %895 = vmatmul.mubr.f32.gmra.mrb[0].mxu0 %v787
    %v896 = vpop.f32.mrb[0].mxu0
    %v897 = vadd.f32 0.0, %v896
    %v898 = vpop.f32.mrb[0].mxu0
    %v899 = vadd.f32 0.0, %v898
    %900 = vdwg.mxu0
    %s901 = scalar_lea.vmem [#allocation4], 1024
    %v902 = vld [vmem:[%s901] sm:$0xff]
    %v903 = vld [vmem:[%s901 + $0x8] sm:$0xff]
    %v904 = vld [vmem:[%s901 + $0x10] sm:$0xff]
    %v905 = vld [vmem:[%s901 + $0x18] sm:$0xff]
    %v906 = vld [vmem:[%s901 + $0x20] sm:$0xff]
    %v907 = vld [vmem:[%s901 + $0x28] sm:$0xff]
    %v908 = vld [vmem:[%s901 + $0x30] sm:$0xff]
    %v909 = vld [vmem:[%s901 + $0x38] sm:$0xff]
    %v910 = vld [vmem:[%s901 + $0x40] sm:$0xff]
    %v911 = vld [vmem:[%s901 + $0x48] sm:$0xff]
    %v912 = vld [vmem:[%s901 + $0x50] sm:$0xff]
    %v913 = vld [vmem:[%s901 + $0x58] sm:$0xff]
    %v914 = vld [vmem:[%s901 + $0x60] sm:$0xff]
    %v915 = vld [vmem:[%s901 + $0x68] sm:$0xff]
    %v916 = vld [vmem:[%s901 + $0x70] sm:$0xff]
    %v917 = vld [vmem:[%s901 + $0x78] sm:$0xff]
    %v918 = vld [vmem:[%s901 + $0x80] sm:$0xff]
    %v919 = vld [vmem:[%s901 + $0x88] sm:$0xff]
    %v920 = vld [vmem:[%s901 + $0x90] sm:$0xff]
    %v921 = vld [vmem:[%s901 + $0x98] sm:$0xff]
    %v922 = vld [vmem:[%s901 + $0xa0] sm:$0xff]
    %v923 = vld [vmem:[%s901 + $0xa8] sm:$0xff]
    %v924 = vld [vmem:[%s901 + $0xb0] sm:$0xff]
    %v925 = vld [vmem:[%s901 + $0xb8] sm:$0xff]
    %v926 = vld [vmem:[%s901 + $0xc0] sm:$0xff]
    %v927 = vld [vmem:[%s901 + $0xc8] sm:$0xff]
    %v928 = vld [vmem:[%s901 + $0xd0] sm:$0xff]
    %v929 = vld [vmem:[%s901 + $0xd8] sm:$0xff]
    %v930 = vld [vmem:[%s901 + $0xe0] sm:$0xff]
    %v931 = vld [vmem:[%s901 + $0xe8] sm:$0xff]
    %v932 = vld [vmem:[%s901 + $0xf0] sm:$0xff]
    %v933 = vld [vmem:[%s901 + $0xf8] sm:$0xff]
    %v934 = vld [vmem:[%s901 + $0x100] sm:$0xff]
    %v935 = vld [vmem:[%s901 + $0x108] sm:$0xff]
    %v936 = vld [vmem:[%s901 + $0x110] sm:$0xff]
    %v937 = vld [vmem:[%s901 + $0x118] sm:$0xff]
    %v938 = vld [vmem:[%s901 + $0x120] sm:$0xff]
    %v939 = vld [vmem:[%s901 + $0x128] sm:$0xff]
    %v940 = vld [vmem:[%s901 + $0x130] sm:$0xff]
    %v941 = vld [vmem:[%s901 + $0x138] sm:$0xff]
    %v942 = vld [vmem:[%s901 + $0x140] sm:$0xff]
    %v943 = vld [vmem:[%s901 + $0x148] sm:$0xff]
    %v944 = vld [vmem:[%s901 + $0x150] sm:$0xff]
    %v945 = vld [vmem:[%s901 + $0x158] sm:$0xff]
    %v946 = vld [vmem:[%s901 + $0x160] sm:$0xff]
    %v947 = vld [vmem:[%s901 + $0x168] sm:$0xff]
    %v948 = vld [vmem:[%s901 + $0x170] sm:$0xff]
    %v949 = vld [vmem:[%s901 + $0x178] sm:$0xff]
    %v950 = vld [vmem:[%s901 + $0x180] sm:$0xff]
    %v951 = vld [vmem:[%s901 + $0x188] sm:$0xff]
    %v952 = vld [vmem:[%s901 + $0x190] sm:$0xff]
    %v953 = vld [vmem:[%s901 + $0x198] sm:$0xff]
    %v954 = vld [vmem:[%s901 + $0x1a0] sm:$0xff]
    %v955 = vld [vmem:[%s901 + $0x1a8] sm:$0xff]
    %v956 = vld [vmem:[%s901 + $0x1b0] sm:$0xff]
    %v957 = vld [vmem:[%s901 + $0x1b8] sm:$0xff]
    %v958 = vld [vmem:[%s901 + $0x1c0] sm:$0xff]
    %v959 = vld [vmem:[%s901 + $0x1c8] sm:$0xff]
    %v960 = vld [vmem:[%s901 + $0x1d0] sm:$0xff]
    %v961 = vld [vmem:[%s901 + $0x1d8] sm:$0xff]
    %v962 = vld [vmem:[%s901 + $0x1e0] sm:$0xff]
    %v963 = vld [vmem:[%s901 + $0x1e8] sm:$0xff]
    %v964 = vld [vmem:[%s901 + $0x1f0] sm:$0xff]
    %v965 = vld [vmem:[%s901 + $0x1f8] sm:$0xff]
    %966 = vmatprep.subr.mxu0 %v903
    %967 = vmatpush1.msra.mxu0 %v902
    %968 = vmatprep.subr.mxu0 %v905
    %969 = vmatpush1.msra.mxu0 %v904
    %970 = vmatprep.subr.mxu0 %v907
    %971 = vmatpush1.msra.mxu0 %v906
    %972 = vmatprep.subr.mxu0 %v909
    %973 = vmatpush1.msra.mxu0 %v908
    %974 = vmatprep.subr.mxu0 %v911
    %975 = vmatpush1.msra.mxu0 %v910
    %976 = vmatprep.subr.mxu0 %v913
    %977 = vmatpush1.msra.mxu0 %v912
    %978 = vmatprep.subr.mxu0 %v915
    %979 = vmatpush1.msra.mxu0 %v914
    %980 = vmatprep.subr.mxu0 %v917
    %981 = vmatpush1.msra.mxu0 %v916
    %982 = vmatprep.subr.mxu0 %v919
    %983 = vmatpush1.msra.mxu0 %v918
    %984 = vmatprep.subr.mxu0 %v921
    %985 = vmatpush1.msra.mxu0 %v920
    %986 = vmatprep.subr.mxu0 %v923
    %987 = vmatpush1.msra.mxu0 %v922
    %988 = vmatprep.subr.mxu0 %v925
    %989 = vmatpush1.msra.mxu0 %v924
    %990 = vmatprep.subr.mxu0 %v927
    %991 = vmatpush1.msra.mxu0 %v926
    %992 = vmatprep.subr.mxu0 %v929
    %993 = vmatpush1.msra.mxu0 %v928
    %994 = vmatprep.subr.mxu0 %v931
    %995 = vmatpush1.msra.mxu0 %v930
    %996 = vmatprep.subr.mxu0 %v933
    %997 = vmatpush1.msra.mxu0 %v932
    %998 = vmatprep.subr.mxu0 %v935
    %999 = vmatpush1.msra.mxu0 %v934
    %1000 = vmatprep.subr.mxu0 %v937
    %1001 = vmatpush1.msra.mxu0 %v936
    %1002 = vmatprep.subr.mxu0 %v939
    %1003 = vmatpush1.msra.mxu0 %v938
    %1004 = vmatprep.subr.mxu0 %v941
    %1005 = vmatpush1.msra.mxu0 %v940
    %1006 = vmatprep.subr.mxu0 %v943
    %1007 = vmatpush1.msra.mxu0 %v942
    %1008 = vmatprep.subr.mxu0 %v945
    %1009 = vmatpush1.msra.mxu0 %v944
    %1010 = vmatprep.subr.mxu0 %v947
    %1011 = vmatpush1.msra.mxu0 %v946
    %1012 = vmatprep.subr.mxu0 %v949
    %1013 = vmatpush1.msra.mxu0 %v948
    %1014 = vmatprep.subr.mxu0 %v951
    %1015 = vmatpush1.msra.mxu0 %v950
    %1016 = vmatprep.subr.mxu0 %v953
    %1017 = vmatpush1.msra.mxu0 %v952
    %1018 = vmatprep.subr.mxu0 %v955
    %1019 = vmatpush1.msra.mxu0 %v954
    %1020 = vmatprep.subr.mxu0 %v957
    %1021 = vmatpush1.msra.mxu0 %v956
    %1022 = vmatprep.subr.mxu0 %v959
    %1023 = vmatpush1.msra.mxu0 %v958
    %1024 = vmatprep.subr.mxu0 %v961
    %1025 = vmatpush1.msra.mxu0 %v960
    %1026 = vmatprep.subr.mxu0 %v963
    %1027 = vmatpush1.msra.mxu0 %v962
    %1028 = vmatprep.subr.mxu0 %v965
    %1029 = vmatpush1.msra.mxu0 %v964
    %1030 = vmatprep.mubr.f32.mxu0 %v857
    %1031 = vmatmul.mubr.f32.gmra.mrb[0].mxu0 %v855
    %v1032 = vpop.f32.mrb[0].mxu0
    %v1033 = vadd.f32 0.0, %v1032
    %v1034 = vpop.f32.mrb[0].mxu0
    %v1035 = vadd.f32 0.0, %v1034
    %1036 = vmatprep.mubr.f32.mxu0 %v863
    %1037 = vmatmul.mubr.f32.gmra.mrb[0].mxu0 %v861
    %v1038 = vpop.f32.mrb[0].mxu0
    %v1039 = vadd.f32 0.0, %v1038
    %v1040 = vpop.f32.mrb[0].mxu0
    %v1041 = vadd.f32 0.0, %v1040
    %1042 = vmatprep.mubr.f32.mxu0 %v869
    %1043 = vmatmul.mubr.f32.gmra.mrb[0].mxu0 %v867
    %v1044 = vpop.f32.mrb[0].mxu0
    %v1045 = vadd.f32 0.0, %v1044
    %v1046 = vpop.f32.mrb[0].mxu0
    %v1047 = vadd.f32 0.0, %v1046
    %1048 = vmatprep.mubr.f32.mxu0 %v875
    %1049 = vmatmul.mubr.f32.gmra.mrb[0].mxu0 %v873
    %v1050 = vpop.f32.mrb[0].mxu0
    %v1051 = vadd.f32 0.0, %v1050
    %v1052 = vpop.f32.mrb[0].mxu0
    %v1053 = vadd.f32 0.0, %v1052
    %1054 = vmatprep.mubr.f32.mxu0 %v881
    %1055 = vmatmul.mubr.f32.gmra.mrb[0].mxu0 %v879
    %v1056 = vpop.f32.mrb[0].mxu0
    %v1057 = vadd.f32 0.0, %v1056
    %v1058 = vpop.f32.mrb[0].mxu0
    %v1059 = vadd.f32 0.0, %v1058
    %1060 = vmatprep.mubr.f32.mxu0 %v887
    %1061 = vmatmul.mubr.f32.gmra.mrb[0].mxu0 %v885
    %v1062 = vpop.f32.mrb[0].mxu0
    %v1063 = vadd.f32 0.0, %v1062
    %v1064 = vpop.f32.mrb[0].mxu0
    %v1065 = vadd.f32 0.0, %v1064
    %1066 = vmatprep.mubr.f32.mxu0 %v893
    %1067 = vmatmul.mubr.f32.gmra.mrb[0].mxu0 %v891
    %v1068 = vpop.f32.mrb[0].mxu0
    %v1069 = vadd.f32 0.0, %v1068
    %v1070 = vpop.f32.mrb[0].mxu0
    %v1071 = vadd.f32 0.0, %v1070
    %1072 = vmatprep.mubr.f32.mxu0 %v899
    %1073 = vmatmul.mubr.f32.gmra.mrb[0].mxu0 %v897
    %v1074 = vpop.f32.mrb[0].mxu0
    %v1075 = vadd.f32 0.0, %v1074
    %v1076 = vpop.f32.mrb[0].mxu0
    %v1077 = vadd.f32 0.0, %v1076
    %1078 = vdwg.mxu0
    %v1079 = vadd.f32 %v733, %v1033
    %v1080 = vadd.f32 %v735, %v1035
    %v1081 = vadd.f32 %v739, %v1039
    %v1082 = vadd.f32 %v741, %v1041
    %v1083 = vadd.f32 %v745, %v1045
    %v1084 = vadd.f32 %v747, %v1047
    %v1085 = vadd.f32 %v751, %v1051
    %v1086 = vadd.f32 %v753, %v1053
    %v1087 = vadd.f32 %v757, %v1057
    %v1088 = vadd.f32 %v759, %v1059
    %v1089 = vadd.f32 %v763, %v1063
    %v1090 = vadd.f32 %v765, %v1065
    %v1091 = vadd.f32 %v769, %v1069
    %v1092 = vadd.f32 %v771, %v1071
    %v1093 = vadd.f32 %v775, %v1075
    %v1094 = vadd.f32 %v777, %v1077
    %v1095 = vld [vmem:[#allocation6] sm:$0x3]
    %v1097 = vlaneseq
    %v1098 = vshrl.u32 %v1097, 7
    %v1099 = vsub.s32 0, %v1098
    %v1100 = vrot.slane %v1095, %v1099
    %v1101 = vlaneseq
    %v1102 = vshrl.u32 %v1101, 7
    %v1103 = vsub.s32 1, %v1102
    %v1104 = vrot.slane %v1095, %v1103
    %v1107 = vadd.f32 %v1079, %v1100
    %v1108 = vadd.f32 %v1080, %v1104
    %v1109 = vadd.f32 %v1081, %v1100
    %v1110 = vadd.f32 %v1082, %v1104
    %v1111 = vadd.f32 %v1083, %v1100
    %v1112 = vadd.f32 %v1084, %v1104
    %v1113 = vadd.f32 %v1085, %v1100
    %v1114 = vadd.f32 %v1086, %v1104
    %v1115 = vadd.f32 %v1087, %v1100
    %v1116 = vadd.f32 %v1088, %v1104
    %v1117 = vadd.f32 %v1089, %v1100
    %v1118 = vadd.f32 %v1090, %v1104
    %v1119 = vadd.f32 %v1091, %v1100
    %v1120 = vadd.f32 %v1092, %v1104
    %v1121 = vadd.f32 %v1093, %v1100
    %v1122 = vadd.f32 %v1094, %v1104
    %vm1123 = vcmp.gt.f32.partialorder %v1107, 0.0
    %vm1124 = vcmp.gt.f32.partialorder %v1108, 0.0
    %vm1125 = vcmp.gt.f32.partialorder %v1109, 0.0
    %vm1126 = vcmp.gt.f32.partialorder %v1110, 0.0
    %vm1127 = vcmp.gt.f32.partialorder %v1111, 0.0
    %vm1128 = vcmp.gt.f32.partialorder %v1112, 0.0
    %vm1129 = vcmp.gt.f32.partialorder %v1113, 0.0
    %vm1130 = vcmp.gt.f32.partialorder %v1114, 0.0
    %vm1131 = vcmp.gt.f32.partialorder %v1115, 0.0
    %vm1132 = vcmp.gt.f32.partialorder %v1116, 0.0
    %vm1133 = vcmp.gt.f32.partialorder %v1117, 0.0
    %vm1134 = vcmp.gt.f32.partialorder %v1118, 0.0
    %vm1135 = vcmp.gt.f32.partialorder %v1119, 0.0
    %vm1136 = vcmp.gt.f32.partialorder %v1120, 0.0
    %vm1137 = vcmp.gt.f32.partialorder %v1121, 0.0
    %vm1138 = vcmp.gt.f32.partialorder %v1122, 0.0
    %v1139 = vmul.f32 %v1107, 0.2
    %v1140 = vmul.f32 %v1108, 0.2
    %v1141 = vmul.f32 %v1109, 0.2
    %v1142 = vmul.f32 %v1110, 0.2
    %v1143 = vmul.f32 %v1111, 0.2
    %v1144 = vmul.f32 %v1112, 0.2
    %v1145 = vmul.f32 %v1113, 0.2
    %v1146 = vmul.f32 %v1114, 0.2
    %v1147 = vmul.f32 %v1115, 0.2
    %v1148 = vmul.f32 %v1116, 0.2
    %v1149 = vmul.f32 %v1117, 0.2
    %v1150 = vmul.f32 %v1118, 0.2
    %v1151 = vmul.f32 %v1119, 0.2
    %v1152 = vmul.f32 %v1120, 0.2
    %v1153 = vmul.f32 %v1121, 0.2
    %v1154 = vmul.f32 %v1122, 0.2
    %v1155 = vsel %vm1123, %v1107, %v1139
    %v1156 = vsel %vm1124, %v1108, %v1140
    %v1157 = vsel %vm1125, %v1109, %v1141
    %v1158 = vsel %vm1126, %v1110, %v1142
    %v1159 = vsel %vm1127, %v1111, %v1143
    %v1160 = vsel %vm1128, %v1112, %v1144
    %v1161 = vsel %vm1129, %v1113, %v1145
    %v1162 = vsel %vm1130, %v1114, %v1146
    %v1163 = vsel %vm1131, %v1115, %v1147
    %v1164 = vsel %vm1132, %v1116, %v1148
    %v1165 = vsel %vm1133, %v1117, %v1149
    %v1166 = vsel %vm1134, %v1118, %v1150
    %v1167 = vsel %vm1135, %v1119, %v1151
    %v1168 = vsel %vm1136, %v1120, %v1152
    %v1169 = vsel %vm1137, %v1121, %v1153
    %v1170 = vsel %vm1138, %v1122, %v1154
    %v1171 = vld [vmem:[#allocation7] sm:$0xff]
    %v1172 = vld [vmem:[#allocation7 + $0x8] sm:$0xff]
    %v1173 = vld [vmem:[#allocation7 + $0x10] sm:$0xff]
    %v1174 = vld [vmem:[#allocation7 + $0x18] sm:$0xff]
    %vm1175 = vcmask 523264
    %v1177 = vsel %vm1175, %v1171, 0
    %v1180 = vsel %vm1175, %v1172, 0
    %v1183 = vsel %vm1175, %v1173, 0
    %v1186 = vsel %vm1175, %v1174, 0
    %1188 = vmatprep.subr.mxu0 %v1156
    %1189 = vmatpush1.msra.mxu0 %v1155
    %1190 = vmatprep.subr.mxu0 %v1158
    %1191 = vmatpush1.msra.mxu0 %v1157
    %1192 = vmatprep.subr.mxu0 %v1160
    %1193 = vmatpush1.msra.mxu0 %v1159
    %1194 = vmatprep.subr.mxu0 %v1162
    %1195 = vmatpush1.msra.mxu0 %v1161
    %1196 = vmatprep.subr.mxu0 %v1164
    %1197 = vmatpush1.msra.mxu0 %v1163
    %1198 = vmatprep.subr.mxu0 %v1166
    %1199 = vmatpush1.msra.mxu0 %v1165
    %1200 = vmatprep.subr.mxu0 %v1168
    %1201 = vmatpush1.msra.mxu0 %v1167
    %1202 = vmatprep.subr.mxu0 %v1170
    %1203 = vmatpush1.msra.mxu0 %v1169
    %1204 = vmatprep.subr.mxu0 0.0
    %1205 = vmatpush1.msra.mxu0 0.0
    %1206 = vmatprep.subr.mxu0 0.0
    %1207 = vmatpush1.msra.mxu0 0.0
    %1208 = vmatprep.subr.mxu0 0.0
    %1209 = vmatpush1.msra.mxu0 0.0
    %1210 = vmatprep.subr.mxu0 0.0
    %1211 = vmatpush1.msra.mxu0 0.0
    %1212 = vmatprep.subr.mxu0 0.0
    %1213 = vmatpush1.msra.mxu0 0.0
    %1214 = vmatprep.subr.mxu0 0.0
    %1215 = vmatpush1.msra.mxu0 0.0
    %1216 = vmatprep.subr.mxu0 0.0
    %1217 = vmatpush1.msra.mxu0 0.0
    %1218 = vmatprep.subr.mxu0 0.0
    %1219 = vmatpush1.msra.mxu0 0.0
    %1220 = vmatprep.subr.mxu0 0.0
    %1221 = vmatpush1.msra.mxu0 0.0
    %1222 = vmatprep.subr.mxu0 0.0
    %1223 = vmatpush1.msra.mxu0 0.0
    %1224 = vmatprep.subr.mxu0 0.0
    %1225 = vmatpush1.msra.mxu0 0.0
    %1226 = vmatprep.subr.mxu0 0.0
    %1227 = vmatpush1.msra.mxu0 0.0
    %1228 = vmatprep.subr.mxu0 0.0
    %1229 = vmatpush1.msra.mxu0 0.0
    %1230 = vmatprep.subr.mxu0 0.0
    %1231 = vmatpush1.msra.mxu0 0.0
    %1232 = vmatprep.subr.mxu0 0.0
    %1233 = vmatpush1.msra.mxu0 0.0
    %1234 = vmatprep.subr.mxu0 0.0
    %1235 = vmatpush1.msra.mxu0 0.0
    %1236 = vmatprep.subr.mxu0 0.0
    %1237 = vmatpush1.msra.mxu0 0.0
    %1238 = vmatprep.subr.mxu0 0.0
    %1239 = vmatpush1.msra.mxu0 0.0
    %1240 = vmatprep.subr.mxu0 0.0
    %1241 = vmatpush1.msra.mxu0 0.0
    %1242 = vmatprep.subr.mxu0 0.0
    %1243 = vmatpush1.msra.mxu0 0.0
    %1244 = vmatprep.subr.mxu0 0.0
    %1245 = vmatpush1.msra.mxu0 0.0
    %1246 = vmatprep.subr.mxu0 0.0
    %1247 = vmatpush1.msra.mxu0 0.0
    %1248 = vmatprep.subr.mxu0 0.0
    %1249 = vmatpush1.msra.mxu0 0.0
    %1250 = vmatprep.subr.mxu0 0.0
    %1251 = vmatpush1.msra.mxu0 0.0
    %1252 = vmatprep.mubr.f32.mxu0 0.0
    %1253 = vmatmul.mubr.f32.gmra.mrb[0].mxu0 %v1177
    %v1254 = vpop.f32.mrb[0].mxu0
    %v1255 = vadd.f32 0.0, %v1254
    %v1256 = vpop.f32.mrb[0].mxu0
    %v1257 = vadd.f32 0.0, %v1256
    %1258 = vmatprep.mubr.f32.mxu0 0.0
    %1259 = vmatmul.mubr.f32.gmra.mrb[0].mxu0 %v1180
    %v1260 = vpop.f32.mrb[0].mxu0
    %v1261 = vadd.f32 0.0, %v1260
    %v1262 = vpop.f32.mrb[0].mxu0
    %v1263 = vadd.f32 0.0, %v1262
    %1264 = vmatprep.mubr.f32.mxu0 0.0
    %1265 = vmatmul.mubr.f32.gmra.mrb[0].mxu0 %v1183
    %v1266 = vpop.f32.mrb[0].mxu0
    %v1267 = vadd.f32 0.0, %v1266
    %v1268 = vpop.f32.mrb[0].mxu0
    %v1269 = vadd.f32 0.0, %v1268
    %1270 = vmatprep.mubr.f32.mxu0 0.0
    %1271 = vmatmul.mubr.f32.gmra.mrb[0].mxu0 %v1186
    %v1272 = vpop.f32.mrb[0].mxu0
    %v1273 = vadd.f32 0.0, %v1272
    %v1274 = vpop.f32.mrb[0].mxu0
    %v1275 = vadd.f32 0.0, %v1274
    %1276 = vdwg.mxu0
    %v1277 = vld [vmem:[#allocation9] sm:$0xff]
    %v1278 = vld [vmem:[#allocation9 + $0x8] sm:$0xff]
    %v1279 = vld [vmem:[#allocation9 + $0x10] sm:$0xff]
    %v1280 = vld [vmem:[#allocation9 + $0x18] sm:$0xff]
    %v1281 = vld [vmem:[#allocation9 + $0x20] sm:$0xff]
    %v1282 = vld [vmem:[#allocation9 + $0x28] sm:$0xff]
    %v1283 = vld [vmem:[#allocation9 + $0x30] sm:$0xff]
    %v1284 = vld [vmem:[#allocation9 + $0x38] sm:$0xff]
    %v1285 = vld [vmem:[#allocation9 + $0x40] sm:$0xff]
    %v1286 = vld [vmem:[#allocation9 + $0x48] sm:$0xff]
    %v1287 = vld [vmem:[#allocation9 + $0x50] sm:$0xff]
    %v1288 = vld [vmem:[#allocation9 + $0x58] sm:$0xff]
    %v1289 = vld [vmem:[#allocation9 + $0x60] sm:$0xff]
    %v1290 = vld [vmem:[#allocation9 + $0x68] sm:$0xff]
    %v1291 = vld [vmem:[#allocation9 + $0x70] sm:$0xff]
    %v1292 = vld [vmem:[#allocation9 + $0x78] sm:$0xff]
    %v1293 = vld [vmem:[#allocation9 + $0x80] sm:$0xff]
    %v1294 = vld [vmem:[#allocation9 + $0x88] sm:$0xff]
    %v1295 = vld [vmem:[#allocation9 + $0x90] sm:$0xff]
    %v1296 = vld [vmem:[#allocation9 + $0x98] sm:$0xff]
    %v1297 = vld [vmem:[#allocation9 + $0xa0] sm:$0xff]
    %v1298 = vld [vmem:[#allocation9 + $0xa8] sm:$0xff]
    %v1299 = vld [vmem:[#allocation9 + $0xb0] sm:$0xff]
    %v1300 = vld [vmem:[#allocation9 + $0xb8] sm:$0xff]
    %v1301 = vld [vmem:[#allocation9 + $0xc0] sm:$0xff]
    %v1302 = vld [vmem:[#allocation9 + $0xc8] sm:$0xff]
    %v1303 = vld [vmem:[#allocation9 + $0xd0] sm:$0xff]
    %v1304 = vld [vmem:[#allocation9 + $0xd8] sm:$0xff]
    %v1305 = vld [vmem:[#allocation9 + $0xe0] sm:$0xff]
    %v1306 = vld [vmem:[#allocation9 + $0xe8] sm:$0xff]
    %v1307 = vld [vmem:[#allocation9 + $0xf0] sm:$0xff]
    %v1308 = vld [vmem:[#allocation9 + $0xf8] sm:$0xff]
    %v1309 = vld [vmem:[#allocation9 + $0x100] sm:$0xff]
    %v1310 = vld [vmem:[#allocation9 + $0x108] sm:$0xff]
    %v1311 = vld [vmem:[#allocation9 + $0x110] sm:$0xff]
    %v1312 = vld [vmem:[#allocation9 + $0x118] sm:$0xff]
    %v1313 = vld [vmem:[#allocation9 + $0x120] sm:$0xff]
    %v1314 = vld [vmem:[#allocation9 + $0x128] sm:$0xff]
    %v1315 = vld [vmem:[#allocation9 + $0x130] sm:$0xff]
    %v1316 = vld [vmem:[#allocation9 + $0x138] sm:$0xff]
    %v1317 = vld [vmem:[#allocation9 + $0x140] sm:$0xff]
    %v1318 = vld [vmem:[#allocation9 + $0x148] sm:$0xff]
    %v1319 = vld [vmem:[#allocation9 + $0x150] sm:$0xff]
    %v1320 = vld [vmem:[#allocation9 + $0x158] sm:$0xff]
    %v1321 = vld [vmem:[#allocation9 + $0x160] sm:$0xff]
    %v1322 = vld [vmem:[#allocation9 + $0x168] sm:$0xff]
    %v1323 = vld [vmem:[#allocation9 + $0x170] sm:$0xff]
    %v1324 = vld [vmem:[#allocation9 + $0x178] sm:$0xff]
    %v1325 = vld [vmem:[#allocation9 + $0x180] sm:$0xff]
    %v1326 = vld [vmem:[#allocation9 + $0x188] sm:$0xff]
    %v1327 = vld [vmem:[#allocation9 + $0x190] sm:$0xff]
    %v1328 = vld [vmem:[#allocation9 + $0x198] sm:$0xff]
    %v1329 = vld [vmem:[#allocation9 + $0x1a0] sm:$0xff]
    %v1330 = vld [vmem:[#allocation9 + $0x1a8] sm:$0xff]
    %v1331 = vld [vmem:[#allocation9 + $0x1b0] sm:$0xff]
    %v1332 = vld [vmem:[#allocation9 + $0x1b8] sm:$0xff]
    %v1333 = vld [vmem:[#allocation9 + $0x1c0] sm:$0xff]
    %v1334 = vld [vmem:[#allocation9 + $0x1c8] sm:$0xff]
    %v1335 = vld [vmem:[#allocation9 + $0x1d0] sm:$0xff]
    %v1336 = vld [vmem:[#allocation9 + $0x1d8] sm:$0xff]
    %v1337 = vld [vmem:[#allocation9 + $0x1e0] sm:$0xff]
    %v1338 = vld [vmem:[#allocation9 + $0x1e8] sm:$0xff]
    %v1339 = vld [vmem:[#allocation9 + $0x1f0] sm:$0xff]
    %v1340 = vld [vmem:[#allocation9 + $0x1f8] sm:$0xff]
    %s1341 = scalar_lea.vmem [#allocation7], 32
    %v1342 = vld [vmem:[%s1341] sm:$0xff]
    %v1343 = vld [vmem:[%s1341 + $0x8] sm:$0xff]
    %v1344 = vld [vmem:[%s1341 + $0x10] sm:$0xff]
    %v1345 = vld [vmem:[%s1341 + $0x18] sm:$0xff]
    %v1347 = vsel %vm1175, %v1342, 0
    %v1350 = vsel %vm1175, %v1343, 0
    %v1353 = vsel %vm1175, %v1344, 0
    %v1356 = vsel %vm1175, %v1345, 0
    %1358 = vmatprep.subr.mxu0 %v1156
    %1359 = vmatpush1.msra.mxu0 %v1155
    %1360 = vmatprep.subr.mxu0 %v1158
    %1361 = vmatpush1.msra.mxu0 %v1157
    %1362 = vmatprep.subr.mxu0 %v1160
    %1363 = vmatpush1.msra.mxu0 %v1159
    %1364 = vmatprep.subr.mxu0 %v1162
    %1365 = vmatpush1.msra.mxu0 %v1161
    %1366 = vmatprep.subr.mxu0 %v1164
    %1367 = vmatpush1.msra.mxu0 %v1163
    %1368 = vmatprep.subr.mxu0 %v1166
    %1369 = vmatpush1.msra.mxu0 %v1165
    %1370 = vmatprep.subr.mxu0 %v1168
    %1371 = vmatpush1.msra.mxu0 %v1167
    %1372 = vmatprep.subr.mxu0 %v1170
    %1373 = vmatpush1.msra.mxu0 %v1169
    %1374 = vmatprep.subr.mxu0 0.0
    %1375 = vmatpush1.msra.mxu0 0.0
    %1376 = vmatprep.subr.mxu0 0.0
    %1377 = vmatpush1.msra.mxu0 0.0
    %1378 = vmatprep.subr.mxu0 0.0
    %1379 = vmatpush1.msra.mxu0 0.0
    %1380 = vmatprep.subr.mxu0 0.0
    %1381 = vmatpush1.msra.mxu0 0.0
    %1382 = vmatprep.subr.mxu0 0.0
    %1383 = vmatpush1.msra.mxu0 0.0
    %1384 = vmatprep.subr.mxu0 0.0
    %1385 = vmatpush1.msra.mxu0 0.0
    %1386 = vmatprep.subr.mxu0 0.0
    %1387 = vmatpush1.msra.mxu0 0.0
    %1388 = vmatprep.subr.mxu0 0.0
    %1389 = vmatpush1.msra.mxu0 0.0
    %1390 = vmatprep.subr.mxu0 0.0
    %1391 = vmatpush1.msra.mxu0 0.0
    %1392 = vmatprep.subr.mxu0 0.0
    %1393 = vmatpush1.msra.mxu0 0.0
    %1394 = vmatprep.subr.mxu0 0.0
    %1395 = vmatpush1.msra.mxu0 0.0
    %1396 = vmatprep.subr.mxu0 0.0
    %1397 = vmatpush1.msra.mxu0 0.0
    %1398 = vmatprep.subr.mxu0 0.0
    %1399 = vmatpush1.msra.mxu0 0.0
    %1400 = vmatprep.subr.mxu0 0.0
    %1401 = vmatpush1.msra.mxu0 0.0
    %1402 = vmatprep.subr.mxu0 0.0
    %1403 = vmatpush1.msra.mxu0 0.0
    %1404 = vmatprep.subr.mxu0 0.0
    %1405 = vmatpush1.msra.mxu0 0.0
    %1406 = vmatprep.subr.mxu0 0.0
    %1407 = vmatpush1.msra.mxu0 0.0
    %1408 = vmatprep.subr.mxu0 0.0
    %1409 = vmatpush1.msra.mxu0 0.0
    %1410 = vmatprep.subr.mxu0 0.0
    %1411 = vmatpush1.msra.mxu0 0.0
    %1412 = vmatprep.subr.mxu0 0.0
    %1413 = vmatpush1.msra.mxu0 0.0
    %1414 = vmatprep.subr.mxu0 0.0
    %1415 = vmatpush1.msra.mxu0 0.0
    %1416 = vmatprep.subr.mxu0 0.0
    %1417 = vmatpush1.msra.mxu0 0.0
    %1418 = vmatprep.subr.mxu0 0.0
    %1419 = vmatpush1.msra.mxu0 0.0
    %1420 = vmatprep.subr.mxu0 0.0
    %1421 = vmatpush1.msra.mxu0 0.0
    %1422 = vmatprep.mubr.f32.mxu0 0.0
    %1423 = vmatmul.mubr.f32.gmra.mrb[0].mxu0 %v1347
    %v1424 = vpop.f32.mrb[0].mxu0
    %v1425 = vadd.f32 0.0, %v1424
    %v1426 = vpop.f32.mrb[0].mxu0
    %v1427 = vadd.f32 0.0, %v1426
    %1428 = vmatprep.mubr.f32.mxu0 0.0
    %1429 = vmatmul.mubr.f32.gmra.mrb[0].mxu0 %v1350
    %v1430 = vpop.f32.mrb[0].mxu0
    %v1431 = vadd.f32 0.0, %v1430
    %v1432 = vpop.f32.mrb[0].mxu0
    %v1433 = vadd.f32 0.0, %v1432
    %1434 = vmatprep.mubr.f32.mxu0 0.0
    %1435 = vmatmul.mubr.f32.gmra.mrb[0].mxu0 %v1353
    %v1436 = vpop.f32.mrb[0].mxu0
    %v1437 = vadd.f32 0.0, %v1436
    %v1438 = vpop.f32.mrb[0].mxu0
    %v1439 = vadd.f32 0.0, %v1438
    %1440 = vmatprep.mubr.f32.mxu0 0.0
    %1441 = vmatmul.mubr.f32.gmra.mrb[0].mxu0 %v1356
    %v1442 = vpop.f32.mrb[0].mxu0
    %v1443 = vadd.f32 0.0, %v1442
    %v1444 = vpop.f32.mrb[0].mxu0
    %v1445 = vadd.f32 0.0, %v1444
    %1446 = vdwg.mxu0
    %s1447 = scalar_lea.vmem [#allocation9], 512
    %v1448 = vld [vmem:[%s1447] sm:$0xff]
    %v1449 = vld [vmem:[%s1447 + $0x8] sm:$0xff]
    %v1450 = vld [vmem:[%s1447 + $0x10] sm:$0xff]
    %v1451 = vld [vmem:[%s1447 + $0x18] sm:$0xff]
    %v1452 = vld [vmem:[%s1447 + $0x20] sm:$0xff]
    %v1453 = vld [vmem:[%s1447 + $0x28] sm:$0xff]
    %v1454 = vld [vmem:[%s1447 + $0x30] sm:$0xff]
    %v1455 = vld [vmem:[%s1447 + $0x38] sm:$0xff]
    %v1456 = vld [vmem:[%s1447 + $0x40] sm:$0xff]
    %v1457 = vld [vmem:[%s1447 + $0x48] sm:$0xff]
    %v1458 = vld [vmem:[%s1447 + $0x50] sm:$0xff]
    %v1459 = vld [vmem:[%s1447 + $0x58] sm:$0xff]
    %v1460 = vld [vmem:[%s1447 + $0x60] sm:$0xff]
    %v1461 = vld [vmem:[%s1447 + $0x68] sm:$0xff]
    %v1462 = vld [vmem:[%s1447 + $0x70] sm:$0xff]
    %v1463 = vld [vmem:[%s1447 + $0x78] sm:$0xff]
    %v1464 = vld [vmem:[%s1447 + $0x80] sm:$0xff]
    %v1465 = vld [vmem:[%s1447 + $0x88] sm:$0xff]
    %v1466 = vld [vmem:[%s1447 + $0x90] sm:$0xff]
    %v1467 = vld [vmem:[%s1447 + $0x98] sm:$0xff]
    %v1468 = vld [vmem:[%s1447 + $0xa0] sm:$0xff]
    %v1469 = vld [vmem:[%s1447 + $0xa8] sm:$0xff]
    %v1470 = vld [vmem:[%s1447 + $0xb0] sm:$0xff]
    %v1471 = vld [vmem:[%s1447 + $0xb8] sm:$0xff]
    %v1472 = vld [vmem:[%s1447 + $0xc0] sm:$0xff]
    %v1473 = vld [vmem:[%s1447 + $0xc8] sm:$0xff]
    %v1474 = vld [vmem:[%s1447 + $0xd0] sm:$0xff]
    %v1475 = vld [vmem:[%s1447 + $0xd8] sm:$0xff]
    %v1476 = vld [vmem:[%s1447 + $0xe0] sm:$0xff]
    %v1477 = vld [vmem:[%s1447 + $0xe8] sm:$0xff]
    %v1478 = vld [vmem:[%s1447 + $0xf0] sm:$0xff]
    %v1479 = vld [vmem:[%s1447 + $0xf8] sm:$0xff]
    %v1480 = vld [vmem:[%s1447 + $0x100] sm:$0xff]
    %v1481 = vld [vmem:[%s1447 + $0x108] sm:$0xff]
    %v1482 = vld [vmem:[%s1447 + $0x110] sm:$0xff]
    %v1483 = vld [vmem:[%s1447 + $0x118] sm:$0xff]
    %v1484 = vld [vmem:[%s1447 + $0x120] sm:$0xff]
    %v1485 = vld [vmem:[%s1447 + $0x128] sm:$0xff]
    %v1486 = vld [vmem:[%s1447 + $0x130] sm:$0xff]
    %v1487 = vld [vmem:[%s1447 + $0x138] sm:$0xff]
    %v1488 = vld [vmem:[%s1447 + $0x140] sm:$0xff]
    %v1489 = vld [vmem:[%s1447 + $0x148] sm:$0xff]
    %v1490 = vld [vmem:[%s1447 + $0x150] sm:$0xff]
    %v1491 = vld [vmem:[%s1447 + $0x158] sm:$0xff]
    %v1492 = vld [vmem:[%s1447 + $0x160] sm:$0xff]
    %v1493 = vld [vmem:[%s1447 + $0x168] sm:$0xff]
    %v1494 = vld [vmem:[%s1447 + $0x170] sm:$0xff]
    %v1495 = vld [vmem:[%s1447 + $0x178] sm:$0xff]
    %v1496 = vld [vmem:[%s1447 + $0x180] sm:$0xff]
    %v1497 = vld [vmem:[%s1447 + $0x188] sm:$0xff]
    %v1498 = vld [vmem:[%s1447 + $0x190] sm:$0xff]
    %v1499 = vld [vmem:[%s1447 + $0x198] sm:$0xff]
    %v1500 = vld [vmem:[%s1447 + $0x1a0] sm:$0xff]
    %v1501 = vld [vmem:[%s1447 + $0x1a8] sm:$0xff]
    %v1502 = vld [vmem:[%s1447 + $0x1b0] sm:$0xff]
    %v1503 = vld [vmem:[%s1447 + $0x1b8] sm:$0xff]
    %v1504 = vld [vmem:[%s1447 + $0x1c0] sm:$0xff]
    %v1505 = vld [vmem:[%s1447 + $0x1c8] sm:$0xff]
    %v1506 = vld [vmem:[%s1447 + $0x1d0] sm:$0xff]
    %v1507 = vld [vmem:[%s1447 + $0x1d8] sm:$0xff]
    %v1508 = vld [vmem:[%s1447 + $0x1e0] sm:$0xff]
    %v1509 = vld [vmem:[%s1447 + $0x1e8] sm:$0xff]
    %v1510 = vld [vmem:[%s1447 + $0x1f0] sm:$0xff]
    %v1511 = vld [vmem:[%s1447 + $0x1f8] sm:$0xff]
    %1512 = vmatprep.subr.mxu0 %v1449
    %1513 = vmatpush1.msra.mxu0 %v1448
    %1514 = vmatprep.subr.mxu0 %v1451
    %1515 = vmatpush1.msra.mxu0 %v1450
    %1516 = vmatprep.subr.mxu0 %v1453
    %1517 = vmatpush1.msra.mxu0 %v1452
    %1518 = vmatprep.subr.mxu0 %v1455
    %1519 = vmatpush1.msra.mxu0 %v1454
    %1520 = vmatprep.subr.mxu0 %v1457
    %1521 = vmatpush1.msra.mxu0 %v1456
    %1522 = vmatprep.subr.mxu0 %v1459
    %1523 = vmatpush1.msra.mxu0 %v1458
    %1524 = vmatprep.subr.mxu0 %v1461
    %1525 = vmatpush1.msra.mxu0 %v1460
    %1526 = vmatprep.subr.mxu0 %v1463
    %1527 = vmatpush1.msra.mxu0 %v1462
    %1528 = vmatprep.subr.mxu0 %v1465
    %1529 = vmatpush1.msra.mxu0 %v1464
    %1530 = vmatprep.subr.mxu0 %v1467
    %1531 = vmatpush1.msra.mxu0 %v1466
    %1532 = vmatprep.subr.mxu0 %v1469
    %1533 = vmatpush1.msra.mxu0 %v1468
    %1534 = vmatprep.subr.mxu0 %v1471
    %1535 = vmatpush1.msra.mxu0 %v1470
    %1536 = vmatprep.subr.mxu0 %v1473
    %1537 = vmatpush1.msra.mxu0 %v1472
    %1538 = vmatprep.subr.mxu0 %v1475
    %1539 = vmatpush1.msra.mxu0 %v1474
    %1540 = vmatprep.subr.mxu0 %v1477
    %1541 = vmatpush1.msra.mxu0 %v1476
    %1542 = vmatprep.subr.mxu0 %v1479
    %1543 = vmatpush1.msra.mxu0 %v1478
    %1544 = vmatprep.subr.mxu0 %v1481
    %1545 = vmatpush1.msra.mxu0 %v1480
    %1546 = vmatprep.subr.mxu0 %v1483
    %1547 = vmatpush1.msra.mxu0 %v1482
    %1548 = vmatprep.subr.mxu0 %v1485
    %1549 = vmatpush1.msra.mxu0 %v1484
    %1550 = vmatprep.subr.mxu0 %v1487
    %1551 = vmatpush1.msra.mxu0 %v1486
    %1552 = vmatprep.subr.mxu0 %v1489
    %1553 = vmatpush1.msra.mxu0 %v1488
    %1554 = vmatprep.subr.mxu0 %v1491
    %1555 = vmatpush1.msra.mxu0 %v1490
    %1556 = vmatprep.subr.mxu0 %v1493
    %1557 = vmatpush1.msra.mxu0 %v1492
    %1558 = vmatprep.subr.mxu0 %v1495
    %1559 = vmatpush1.msra.mxu0 %v1494
    %1560 = vmatprep.subr.mxu0 %v1497
    %1561 = vmatpush1.msra.mxu0 %v1496
    %1562 = vmatprep.subr.mxu0 %v1499
    %1563 = vmatpush1.msra.mxu0 %v1498
    %1564 = vmatprep.subr.mxu0 %v1501
    %1565 = vmatpush1.msra.mxu0 %v1500
    %1566 = vmatprep.subr.mxu0 %v1503
    %1567 = vmatpush1.msra.mxu0 %v1502
    %1568 = vmatprep.subr.mxu0 %v1505
    %1569 = vmatpush1.msra.mxu0 %v1504
    %1570 = vmatprep.subr.mxu0 %v1507
    %1571 = vmatpush1.msra.mxu0 %v1506
    %1572 = vmatprep.subr.mxu0 %v1509
    %1573 = vmatpush1.msra.mxu0 %v1508
    %1574 = vmatprep.subr.mxu0 %v1511
    %1575 = vmatpush1.msra.mxu0 %v1510
    %1576 = vmatprep.mubr.f32.mxu0 %v1427
    %1577 = vmatmul.mubr.f32.gmra.mrb[0].mxu0 %v1425
    %v1578 = vpop.f32.mrb[0].mxu0
    %v1579 = vadd.f32 0.0, %v1578
    %v1580 = vpop.f32.mrb[0].mxu0
    %v1581 = vadd.f32 0.0, %v1580
    %1582 = vmatprep.mubr.f32.mxu0 %v1433
    %1583 = vmatmul.mubr.f32.gmra.mrb[0].mxu0 %v1431
    %v1584 = vpop.f32.mrb[0].mxu0
    %v1585 = vadd.f32 0.0, %v1584
    %v1586 = vpop.f32.mrb[0].mxu0
    %v1587 = vadd.f32 0.0, %v1586
    %1588 = vmatprep.mubr.f32.mxu0 %v1439
    %1589 = vmatmul.mubr.f32.gmra.mrb[0].mxu0 %v1437
    %v1590 = vpop.f32.mrb[0].mxu0
    %v1591 = vadd.f32 0.0, %v1590
    %v1592 = vpop.f32.mrb[0].mxu0
    %v1593 = vadd.f32 0.0, %v1592
    %1594 = vmatprep.mubr.f32.mxu0 %v1445
    %1595 = vmatmul.mubr.f32.gmra.mrb[0].mxu0 %v1443
    %v1596 = vpop.f32.mrb[0].mxu0
    %v1597 = vadd.f32 0.0, %v1596
    %v1598 = vpop.f32.mrb[0].mxu0
    %v1599 = vadd.f32 0.0, %v1598
    %1600 = vdwg.mxu0
    %1601 = vmatprep.subr.mxu0 %v1278
    %1602 = vmatpush1.msra.mxu0 %v1277
    %1603 = vmatprep.subr.mxu0 %v1280
    %1604 = vmatpush1.msra.mxu0 %v1279
    %1605 = vmatprep.subr.mxu0 %v1282
    %1606 = vmatpush1.msra.mxu0 %v1281
    %1607 = vmatprep.subr.mxu0 %v1284
    %1608 = vmatpush1.msra.mxu0 %v1283
    %1609 = vmatprep.subr.mxu0 %v1286
    %1610 = vmatpush1.msra.mxu0 %v1285
    %1611 = vmatprep.subr.mxu0 %v1288
    %1612 = vmatpush1.msra.mxu0 %v1287
    %1613 = vmatprep.subr.mxu0 %v1290
    %1614 = vmatpush1.msra.mxu0 %v1289
    %1615 = vmatprep.subr.mxu0 %v1292
    %1616 = vmatpush1.msra.mxu0 %v1291
    %1617 = vmatprep.subr.mxu0 %v1294
    %1618 = vmatpush1.msra.mxu0 %v1293
    %1619 = vmatprep.subr.mxu0 %v1296
    %1620 = vmatpush1.msra.mxu0 %v1295
    %1621 = vmatprep.subr.mxu0 %v1298
    %1622 = vmatpush1.msra.mxu0 %v1297
    %1623 = vmatprep.subr.mxu0 %v1300
    %1624 = vmatpush1.msra.mxu0 %v1299
    %1625 = vmatprep.subr.mxu0 %v1302
    %1626 = vmatpush1.msra.mxu0 %v1301
    %1627 = vmatprep.subr.mxu0 %v1304
    %1628 = vmatpush1.msra.mxu0 %v1303
    %1629 = vmatprep.subr.mxu0 %v1306
    %1630 = vmatpush1.msra.mxu0 %v1305
    %1631 = vmatprep.subr.mxu0 %v1308
    %1632 = vmatpush1.msra.mxu0 %v1307
    %1633 = vmatprep.subr.mxu0 %v1310
    %1634 = vmatpush1.msra.mxu0 %v1309
    %1635 = vmatprep.subr.mxu0 %v1312
    %1636 = vmatpush1.msra.mxu0 %v1311
    %1637 = vmatprep.subr.mxu0 %v1314
    %1638 = vmatpush1.msra.mxu0 %v1313
    %1639 = vmatprep.subr.mxu0 %v1316
    %1640 = vmatpush1.msra.mxu0 %v1315
    %1641 = vmatprep.subr.mxu0 %v1318
    %1642 = vmatpush1.msra.mxu0 %v1317
    %1643 = vmatprep.subr.mxu0 %v1320
    %1644 = vmatpush1.msra.mxu0 %v1319
    %1645 = vmatprep.subr.mxu0 %v1322
    %1646 = vmatpush1.msra.mxu0 %v1321
    %1647 = vmatprep.subr.mxu0 %v1324
    %1648 = vmatpush1.msra.mxu0 %v1323
    %1649 = vmatprep.subr.mxu0 %v1326
    %1650 = vmatpush1.msra.mxu0 %v1325
    %1651 = vmatprep.subr.mxu0 %v1328
    %1652 = vmatpush1.msra.mxu0 %v1327
    %1653 = vmatprep.subr.mxu0 %v1330
    %1654 = vmatpush1.msra.mxu0 %v1329
    %1655 = vmatprep.subr.mxu0 %v1332
    %1656 = vmatpush1.msra.mxu0 %v1331
    %1657 = vmatprep.subr.mxu0 %v1334
    %1658 = vmatpush1.msra.mxu0 %v1333
    %1659 = vmatprep.subr.mxu0 %v1336
    %1660 = vmatpush1.msra.mxu0 %v1335
    %1661 = vmatprep.subr.mxu0 %v1338
    %1662 = vmatpush1.msra.mxu0 %v1337
    %1663 = vmatprep.subr.mxu0 %v1340
    %1664 = vmatpush1.msra.mxu0 %v1339
    %1665 = vmatprep.mubr.f32.mxu0 %v1257
    %1666 = vmatmul.mubr.f32.gmra.mrb[0].mxu0 %v1255
    %v1667 = vpop.f32.mrb[0].mxu0
    %v1668 = vadd.f32 %v1579, %v1667
    %v1669 = vpop.f32.mrb[0].mxu0
    %v1670 = vadd.f32 %v1581, %v1669
    %1671 = vmatprep.mubr.f32.mxu0 %v1263
    %1672 = vmatmul.mubr.f32.gmra.mrb[0].mxu0 %v1261
    %v1673 = vpop.f32.mrb[0].mxu0
    %v1674 = vadd.f32 %v1585, %v1673
    %v1675 = vpop.f32.mrb[0].mxu0
    %v1676 = vadd.f32 %v1587, %v1675
    %1677 = vmatprep.mubr.f32.mxu0 %v1269
    %1678 = vmatmul.mubr.f32.gmra.mrb[0].mxu0 %v1267
    %v1679 = vpop.f32.mrb[0].mxu0
    %v1680 = vadd.f32 %v1591, %v1679
    %v1681 = vpop.f32.mrb[0].mxu0
    %v1682 = vadd.f32 %v1593, %v1681
    %1683 = vmatprep.mubr.f32.mxu0 %v1275
    %1684 = vmatmul.mubr.f32.gmra.mrb[0].mxu0 %v1273
    %v1685 = vpop.f32.mrb[0].mxu0
    %v1686 = vadd.f32 %v1597, %v1685
    %v1687 = vpop.f32.mrb[0].mxu0
    %v1688 = vadd.f32 %v1599, %v1687
    %1689 = vdwg.mxu0
    %s1690 = scalar_lea.vmem [#allocation7], 64
    %v1691 = vld [vmem:[%s1690] sm:$0xff]
    %v1692 = vld [vmem:[%s1690 + $0x8] sm:$0xff]
    %v1693 = vld [vmem:[%s1690 + $0x10] sm:$0xff]
    %v1694 = vld [vmem:[%s1690 + $0x18] sm:$0xff]
    %v1696 = vsel %vm1175, %v1691, 0
    %v1699 = vsel %vm1175, %v1692, 0
    %v1702 = vsel %vm1175, %v1693, 0
    %v1705 = vsel %vm1175, %v1694, 0
    %1707 = vmatprep.subr.mxu0 %v1156
    %1708 = vmatpush1.msra.mxu0 %v1155
    %1709 = vmatprep.subr.mxu0 %v1158
    %1710 = vmatpush1.msra.mxu0 %v1157
    %1711 = vmatprep.subr.mxu0 %v1160
    %1712 = vmatpush1.msra.mxu0 %v1159
    %1713 = vmatprep.subr.mxu0 %v1162
    %1714 = vmatpush1.msra.mxu0 %v1161
    %1715 = vmatprep.subr.mxu0 %v1164
    %1716 = vmatpush1.msra.mxu0 %v1163
    %1717 = vmatprep.subr.mxu0 %v1166
    %1718 = vmatpush1.msra.mxu0 %v1165
    %1719 = vmatprep.subr.mxu0 %v1168
    %1720 = vmatpush1.msra.mxu0 %v1167
    %1721 = vmatprep.subr.mxu0 %v1170
    %1722 = vmatpush1.msra.mxu0 %v1169
    %1723 = vmatprep.subr.mxu0 0.0
    %1724 = vmatpush1.msra.mxu0 0.0
    %1725 = vmatprep.subr.mxu0 0.0
    %1726 = vmatpush1.msra.mxu0 0.0
    %1727 = vmatprep.subr.mxu0 0.0
    %1728 = vmatpush1.msra.mxu0 0.0
    %1729 = vmatprep.subr.mxu0 0.0
    %1730 = vmatpush1.msra.mxu0 0.0
    %1731 = vmatprep.subr.mxu0 0.0
    %1732 = vmatpush1.msra.mxu0 0.0
    %1733 = vmatprep.subr.mxu0 0.0
    %1734 = vmatpush1.msra.mxu0 0.0
    %1735 = vmatprep.subr.mxu0 0.0
    %1736 = vmatpush1.msra.mxu0 0.0
    %1737 = vmatprep.subr.mxu0 0.0
    %1738 = vmatpush1.msra.mxu0 0.0
    %1739 = vmatprep.subr.mxu0 0.0
    %1740 = vmatpush1.msra.mxu0 0.0
    %1741 = vmatprep.subr.mxu0 0.0
    %1742 = vmatpush1.msra.mxu0 0.0
    %1743 = vmatprep.subr.mxu0 0.0
    %1744 = vmatpush1.msra.mxu0 0.0
    %1745 = vmatprep.subr.mxu0 0.0
    %1746 = vmatpush1.msra.mxu0 0.0
    %1747 = vmatprep.subr.mxu0 0.0
    %1748 = vmatpush1.msra.mxu0 0.0
    %1749 = vmatprep.subr.mxu0 0.0
    %1750 = vmatpush1.msra.mxu0 0.0
    %1751 = vmatprep.subr.mxu0 0.0
    %1752 = vmatpush1.msra.mxu0 0.0
    %1753 = vmatprep.subr.mxu0 0.0
    %1754 = vmatpush1.msra.mxu0 0.0
    %1755 = vmatprep.subr.mxu0 0.0
    %1756 = vmatpush1.msra.mxu0 0.0
    %1757 = vmatprep.subr.mxu0 0.0
    %1758 = vmatpush1.msra.mxu0 0.0
    %1759 = vmatprep.subr.mxu0 0.0
    %1760 = vmatpush1.msra.mxu0 0.0
    %1761 = vmatprep.subr.mxu0 0.0
    %1762 = vmatpush1.msra.mxu0 0.0
    %1763 = vmatprep.subr.mxu0 0.0
    %1764 = vmatpush1.msra.mxu0 0.0
    %1765 = vmatprep.subr.mxu0 0.0
    %1766 = vmatpush1.msra.mxu0 0.0
    %1767 = vmatprep.subr.mxu0 0.0
    %1768 = vmatpush1.msra.mxu0 0.0
    %1769 = vmatprep.subr.mxu0 0.0
    %1770 = vmatpush1.msra.mxu0 0.0
    %1771 = vmatprep.mubr.f32.mxu0 0.0
    %1772 = vmatmul.mubr.f32.gmra.mrb[0].mxu0 %v1696
    %v1773 = vpop.f32.mrb[0].mxu0
    %v1774 = vadd.f32 0.0, %v1773
    %v1775 = vpop.f32.mrb[0].mxu0
    %v1776 = vadd.f32 0.0, %v1775
    %1777 = vmatprep.mubr.f32.mxu0 0.0
    %1778 = vmatmul.mubr.f32.gmra.mrb[0].mxu0 %v1699
    %v1779 = vpop.f32.mrb[0].mxu0
    %v1780 = vadd.f32 0.0, %v1779
    %v1781 = vpop.f32.mrb[0].mxu0
    %v1782 = vadd.f32 0.0, %v1781
    %1783 = vmatprep.mubr.f32.mxu0 0.0
    %1784 = vmatmul.mubr.f32.gmra.mrb[0].mxu0 %v1702
    %v1785 = vpop.f32.mrb[0].mxu0
    %v1786 = vadd.f32 0.0, %v1785
    %v1787 = vpop.f32.mrb[0].mxu0
    %v1788 = vadd.f32 0.0, %v1787
    %1789 = vmatprep.mubr.f32.mxu0 0.0
    %1790 = vmatmul.mubr.f32.gmra.mrb[0].mxu0 %v1705
    %v1791 = vpop.f32.mrb[0].mxu0
    %v1792 = vadd.f32 0.0, %v1791
    %v1793 = vpop.f32.mrb[0].mxu0
    %v1794 = vadd.f32 0.0, %v1793
    %1795 = vdwg.mxu0
    %s1796 = scalar_lea.vmem [#allocation9], 1024
    %v1797 = vld [vmem:[%s1796] sm:$0xff]
    %v1798 = vld [vmem:[%s1796 + $0x8] sm:$0xff]
    %v1799 = vld [vmem:[%s1796 + $0x10] sm:$0xff]
    %v1800 = vld [vmem:[%s1796 + $0x18] sm:$0xff]
    %v1801 = vld [vmem:[%s1796 + $0x20] sm:$0xff]
    %v1802 = vld [vmem:[%s1796 + $0x28] sm:$0xff]
    %v1803 = vld [vmem:[%s1796 + $0x30] sm:$0xff]
    %v1804 = vld [vmem:[%s1796 + $0x38] sm:$0xff]
    %v1805 = vld [vmem:[%s1796 + $0x40] sm:$0xff]
    %v1806 = vld [vmem:[%s1796 + $0x48] sm:$0xff]
    %v1807 = vld [vmem:[%s1796 + $0x50] sm:$0xff]
    %v1808 = vld [vmem:[%s1796 + $0x58] sm:$0xff]
    %v1809 = vld [vmem:[%s1796 + $0x60] sm:$0xff]
    %v1810 = vld [vmem:[%s1796 + $0x68] sm:$0xff]
    %v1811 = vld [vmem:[%s1796 + $0x70] sm:$0xff]
    %v1812 = vld [vmem:[%s1796 + $0x78] sm:$0xff]
    %v1813 = vld [vmem:[%s1796 + $0x80] sm:$0xff]
    %v1814 = vld [vmem:[%s1796 + $0x88] sm:$0xff]
    %v1815 = vld [vmem:[%s1796 + $0x90] sm:$0xff]
    %v1816 = vld [vmem:[%s1796 + $0x98] sm:$0xff]
    %v1817 = vld [vmem:[%s1796 + $0xa0] sm:$0xff]
    %v1818 = vld [vmem:[%s1796 + $0xa8] sm:$0xff]
    %v1819 = vld [vmem:[%s1796 + $0xb0] sm:$0xff]
    %v1820 = vld [vmem:[%s1796 + $0xb8] sm:$0xff]
    %v1821 = vld [vmem:[%s1796 + $0xc0] sm:$0xff]
    %v1822 = vld [vmem:[%s1796 + $0xc8] sm:$0xff]
    %v1823 = vld [vmem:[%s1796 + $0xd0] sm:$0xff]
    %v1824 = vld [vmem:[%s1796 + $0xd8] sm:$0xff]
    %v1825 = vld [vmem:[%s1796 + $0xe0] sm:$0xff]
    %v1826 = vld [vmem:[%s1796 + $0xe8] sm:$0xff]
    %v1827 = vld [vmem:[%s1796 + $0xf0] sm:$0xff]
    %v1828 = vld [vmem:[%s1796 + $0xf8] sm:$0xff]
    %v1829 = vld [vmem:[%s1796 + $0x100] sm:$0xff]
    %v1830 = vld [vmem:[%s1796 + $0x108] sm:$0xff]
    %v1831 = vld [vmem:[%s1796 + $0x110] sm:$0xff]
    %v1832 = vld [vmem:[%s1796 + $0x118] sm:$0xff]
    %v1833 = vld [vmem:[%s1796 + $0x120] sm:$0xff]
    %v1834 = vld [vmem:[%s1796 + $0x128] sm:$0xff]
    %v1835 = vld [vmem:[%s1796 + $0x130] sm:$0xff]
    %v1836 = vld [vmem:[%s1796 + $0x138] sm:$0xff]
    %v1837 = vld [vmem:[%s1796 + $0x140] sm:$0xff]
    %v1838 = vld [vmem:[%s1796 + $0x148] sm:$0xff]
    %v1839 = vld [vmem:[%s1796 + $0x150] sm:$0xff]
    %v1840 = vld [vmem:[%s1796 + $0x158] sm:$0xff]
    %v1841 = vld [vmem:[%s1796 + $0x160] sm:$0xff]
    %v1842 = vld [vmem:[%s1796 + $0x168] sm:$0xff]
    %v1843 = vld [vmem:[%s1796 + $0x170] sm:$0xff]
    %v1844 = vld [vmem:[%s1796 + $0x178] sm:$0xff]
    %v1845 = vld [vmem:[%s1796 + $0x180] sm:$0xff]
    %v1846 = vld [vmem:[%s1796 + $0x188] sm:$0xff]
    %v1847 = vld [vmem:[%s1796 + $0x190] sm:$0xff]
    %v1848 = vld [vmem:[%s1796 + $0x198] sm:$0xff]
    %v1849 = vld [vmem:[%s1796 + $0x1a0] sm:$0xff]
    %v1850 = vld [vmem:[%s1796 + $0x1a8] sm:$0xff]
    %v1851 = vld [vmem:[%s1796 + $0x1b0] sm:$0xff]
    %v1852 = vld [vmem:[%s1796 + $0x1b8] sm:$0xff]
    %v1853 = vld [vmem:[%s1796 + $0x1c0] sm:$0xff]
    %v1854 = vld [vmem:[%s1796 + $0x1c8] sm:$0xff]
    %v1855 = vld [vmem:[%s1796 + $0x1d0] sm:$0xff]
    %v1856 = vld [vmem:[%s1796 + $0x1d8] sm:$0xff]
    %v1857 = vld [vmem:[%s1796 + $0x1e0] sm:$0xff]
    %v1858 = vld [vmem:[%s1796 + $0x1e8] sm:$0xff]
    %v1859 = vld [vmem:[%s1796 + $0x1f0] sm:$0xff]
    %v1860 = vld [vmem:[%s1796 + $0x1f8] sm:$0xff]
    %1861 = vmatprep.subr.mxu0 %v1798
    %1862 = vmatpush1.msra.mxu0 %v1797
    %1863 = vmatprep.subr.mxu0 %v1800
    %1864 = vmatpush1.msra.mxu0 %v1799
    %1865 = vmatprep.subr.mxu0 %v1802
    %1866 = vmatpush1.msra.mxu0 %v1801
    %1867 = vmatprep.subr.mxu0 %v1804
    %1868 = vmatpush1.msra.mxu0 %v1803
    %1869 = vmatprep.subr.mxu0 %v1806
    %1870 = vmatpush1.msra.mxu0 %v1805
    %1871 = vmatprep.subr.mxu0 %v1808
    %1872 = vmatpush1.msra.mxu0 %v1807
    %1873 = vmatprep.subr.mxu0 %v1810
    %1874 = vmatpush1.msra.mxu0 %v1809
    %1875 = vmatprep.subr.mxu0 %v1812
    %1876 = vmatpush1.msra.mxu0 %v1811
    %1877 = vmatprep.subr.mxu0 %v1814
    %1878 = vmatpush1.msra.mxu0 %v1813
    %1879 = vmatprep.subr.mxu0 %v1816
    %1880 = vmatpush1.msra.mxu0 %v1815
    %1881 = vmatprep.subr.mxu0 %v1818
    %1882 = vmatpush1.msra.mxu0 %v1817
    %1883 = vmatprep.subr.mxu0 %v1820
    %1884 = vmatpush1.msra.mxu0 %v1819
    %1885 = vmatprep.subr.mxu0 %v1822
    %1886 = vmatpush1.msra.mxu0 %v1821
    %1887 = vmatprep.subr.mxu0 %v1824
    %1888 = vmatpush1.msra.mxu0 %v1823
    %1889 = vmatprep.subr.mxu0 %v1826
    %1890 = vmatpush1.msra.mxu0 %v1825
    %1891 = vmatprep.subr.mxu0 %v1828
    %1892 = vmatpush1.msra.mxu0 %v1827
    %1893 = vmatprep.subr.mxu0 %v1830
    %1894 = vmatpush1.msra.mxu0 %v1829
    %1895 = vmatprep.subr.mxu0 %v1832
    %1896 = vmatpush1.msra.mxu0 %v1831
    %1897 = vmatprep.subr.mxu0 %v1834
    %1898 = vmatpush1.msra.mxu0 %v1833
    %1899 = vmatprep.subr.mxu0 %v1836
    %1900 = vmatpush1.msra.mxu0 %v1835
    %1901 = vmatprep.subr.mxu0 %v1838
    %1902 = vmatpush1.msra.mxu0 %v1837
    %1903 = vmatprep.subr.mxu0 %v1840
    %1904 = vmatpush1.msra.mxu0 %v1839
    %1905 = vmatprep.subr.mxu0 %v1842
    %1906 = vmatpush1.msra.mxu0 %v1841
    %1907 = vmatprep.subr.mxu0 %v1844
    %1908 = vmatpush1.msra.mxu0 %v1843
    %1909 = vmatprep.subr.mxu0 %v1846
    %1910 = vmatpush1.msra.mxu0 %v1845
    %1911 = vmatprep.subr.mxu0 %v1848
    %1912 = vmatpush1.msra.mxu0 %v1847
    %1913 = vmatprep.subr.mxu0 %v1850
    %1914 = vmatpush1.msra.mxu0 %v1849
    %1915 = vmatprep.subr.mxu0 %v1852
    %1916 = vmatpush1.msra.mxu0 %v1851
    %1917 = vmatprep.subr.mxu0 %v1854
    %1918 = vmatpush1.msra.mxu0 %v1853
    %1919 = vmatprep.subr.mxu0 %v1856
    %1920 = vmatpush1.msra.mxu0 %v1855
    %1921 = vmatprep.subr.mxu0 %v1858
    %1922 = vmatpush1.msra.mxu0 %v1857
    %1923 = vmatprep.subr.mxu0 %v1860
    %1924 = vmatpush1.msra.mxu0 %v1859
    %1925 = vmatprep.mubr.f32.mxu0 %v1776
    %1926 = vmatmul.mubr.f32.gmra.mrb[0].mxu0 %v1774
    %v1927 = vpop.f32.mrb[0].mxu0
    %v1928 = vadd.f32 0.0, %v1927
    %v1929 = vpop.f32.mrb[0].mxu0
    %v1930 = vadd.f32 0.0, %v1929
    %1931 = vmatprep.mubr.f32.mxu0 %v1782
    %1932 = vmatmul.mubr.f32.gmra.mrb[0].mxu0 %v1780
    %v1933 = vpop.f32.mrb[0].mxu0
    %v1934 = vadd.f32 0.0, %v1933
    %v1935 = vpop.f32.mrb[0].mxu0
    %v1936 = vadd.f32 0.0, %v1935
    %1937 = vmatprep.mubr.f32.mxu0 %v1788
    %1938 = vmatmul.mubr.f32.gmra.mrb[0].mxu0 %v1786
    %v1939 = vpop.f32.mrb[0].mxu0
    %v1940 = vadd.f32 0.0, %v1939
    %v1941 = vpop.f32.mrb[0].mxu0
    %v1942 = vadd.f32 0.0, %v1941
    %1943 = vmatprep.mubr.f32.mxu0 %v1794
    %1944 = vmatmul.mubr.f32.gmra.mrb[0].mxu0 %v1792
    %v1945 = vpop.f32.mrb[0].mxu0
    %v1946 = vadd.f32 0.0, %v1945
    %v1947 = vpop.f32.mrb[0].mxu0
    %v1948 = vadd.f32 0.0, %v1947
    %1949 = vdwg.mxu0
    %v1950 = vadd.f32 %v1668, %v1928
    %v1951 = vadd.f32 %v1670, %v1930
    %v1952 = vadd.f32 %v1674, %v1934
    %v1953 = vadd.f32 %v1676, %v1936
    %v1954 = vadd.f32 %v1680, %v1940
    %v1955 = vadd.f32 %v1682, %v1942
    %v1956 = vadd.f32 %v1686, %v1946
    %v1957 = vadd.f32 %v1688, %v1948
    %v1958 = vld [vmem:[#allocation10] sm:$0x3]
    %v1960 = vlaneseq
    %v1961 = vshrl.u32 %v1960, 7
    %v1962 = vsub.s32 0, %v1961
    %v1963 = vrot.slane %v1958, %v1962
    %v1964 = vlaneseq
    %v1965 = vshrl.u32 %v1964, 7
    %v1966 = vsub.s32 1, %v1965
    %v1967 = vrot.slane %v1958, %v1966
    %v1970 = vadd.f32 %v1950, %v1963
    %v1971 = vadd.f32 %v1951, %v1967
    %v1972 = vadd.f32 %v1952, %v1963
    %v1973 = vadd.f32 %v1953, %v1967
    %v1974 = vadd.f32 %v1954, %v1963
    %v1975 = vadd.f32 %v1955, %v1967
    %v1976 = vadd.f32 %v1956, %v1963
    %v1977 = vadd.f32 %v1957, %v1967
    %v1978 = vadd.f32 %v1970, %v1972
    %v1979 = vadd.f32 %v1978, %v1974
    %v1980 = vadd.f32 %v1979, %v1976
    %v1981 = vrot.slane %v1980, 4
    %v1982 = vadd.f32 %v1980, %v1981
    %v1983 = vrot.slane %v1982, 2
    %v1984 = vadd.f32 %v1982, %v1983
    %v1985 = vrot.slane %v1984, 1
    %v1986 = vadd.f32 %v1984, %v1985
    %v1987 = vadd.f32 %v1971, %v1973
    %v1988 = vadd.f32 %v1987, %v1975
    %v1989 = vadd.f32 %v1988, %v1977
    %v1990 = vrot.slane %v1989, 4
    %v1991 = vadd.f32 %v1989, %v1990
    %v1992 = vrot.slane %v1991, 2
    %v1993 = vadd.f32 %v1991, %v1992
    %v1994 = vrot.slane %v1993, 1
    %v1995 = vadd.f32 %v1993, %v1994
    %v1996 = vld [vmem:[#allocation12] sm:$0xff]
    %v1997 = vld [vmem:[#allocation12 + $0x8] sm:$0xff]
    %v1998 = vld [vmem:[#allocation12 + $0x10] sm:$0xff]
    %v1999 = vld [vmem:[#allocation12 + $0x18] sm:$0xff]
    %v2000 = vld [vmem:[#allocation12 + $0x20] sm:$0xff]
    %v2001 = vld [vmem:[#allocation12 + $0x28] sm:$0xff]
    %v2002 = vld [vmem:[#allocation12 + $0x30] sm:$0xff]
    %v2003 = vld [vmem:[#allocation12 + $0x38] sm:$0xff]
    %v2004 = vld [vmem:[#allocation12 + $0x40] sm:$0xff]
    %v2005 = vld [vmem:[#allocation12 + $0x48] sm:$0xff]
    %v2006 = vld [vmem:[#allocation12 + $0x50] sm:$0xff]
    %v2007 = vld [vmem:[#allocation12 + $0x58] sm:$0xff]
    %v2008 = vld [vmem:[#allocation12 + $0x60] sm:$0xff]
    %v2009 = vld [vmem:[#allocation12 + $0x68] sm:$0xff]
    %v2010 = vld [vmem:[#allocation12 + $0x70] sm:$0xff]
    %v2011 = vld [vmem:[#allocation12 + $0x78] sm:$0xff]
    %v2012 = vld [vmem:[#allocation12 + $0x80] sm:$0xff]
    %v2013 = vld [vmem:[#allocation12 + $0x88] sm:$0xff]
    %v2014 = vld [vmem:[#allocation12 + $0x90] sm:$0xff]
    %v2015 = vld [vmem:[#allocation12 + $0x98] sm:$0xff]
    %v2016 = vld [vmem:[#allocation12 + $0xa0] sm:$0xff]
    %v2017 = vld [vmem:[#allocation12 + $0xa8] sm:$0xff]
    %v2018 = vld [vmem:[#allocation12 + $0xb0] sm:$0xff]
    %v2019 = vld [vmem:[#allocation12 + $0xb8] sm:$0xff]
    %v2020 = vld [vmem:[#allocation12 + $0xc0] sm:$0xff]
    %v2021 = vld [vmem:[#allocation12 + $0xc8] sm:$0xff]
    %v2022 = vld [vmem:[#allocation12 + $0xd0] sm:$0xff]
    %v2023 = vld [vmem:[#allocation12 + $0xd8] sm:$0xff]
    %v2024 = vld [vmem:[#allocation12 + $0xe0] sm:$0xff]
    %v2025 = vld [vmem:[#allocation12 + $0xe8] sm:$0xff]
    %v2026 = vld [vmem:[#allocation12 + $0xf0] sm:$0xff]
    %v2027 = vld [vmem:[#allocation12 + $0xf8] sm:$0xff]
    %v2028 = vld [vmem:[#allocation12 + $0x100] sm:$0xff]
    %v2029 = vld [vmem:[#allocation12 + $0x108] sm:$0xff]
    %v2030 = vld [vmem:[#allocation12 + $0x110] sm:$0xff]
    %v2031 = vld [vmem:[#allocation12 + $0x118] sm:$0xff]
    %v2032 = vld [vmem:[#allocation12 + $0x120] sm:$0xff]
    %v2033 = vld [vmem:[#allocation12 + $0x128] sm:$0xff]
    %v2034 = vld [vmem:[#allocation12 + $0x130] sm:$0xff]
    %v2035 = vld [vmem:[#allocation12 + $0x138] sm:$0xff]
    %v2036 = vld [vmem:[#allocation12 + $0x140] sm:$0xff]
    %v2037 = vld [vmem:[#allocation12 + $0x148] sm:$0xff]
    %v2038 = vld [vmem:[#allocation12 + $0x150] sm:$0xff]
    %v2039 = vld [vmem:[#allocation12 + $0x158] sm:$0xff]
    %v2040 = vld [vmem:[#allocation12 + $0x160] sm:$0xff]
    %v2041 = vld [vmem:[#allocation12 + $0x168] sm:$0xff]
    %v2042 = vld [vmem:[#allocation12 + $0x170] sm:$0xff]
    %v2043 = vld [vmem:[#allocation12 + $0x178] sm:$0xff]
    %v2044 = vld [vmem:[#allocation12 + $0x180] sm:$0xff]
    %v2045 = vld [vmem:[#allocation12 + $0x188] sm:$0xff]
    %v2046 = vld [vmem:[#allocation12 + $0x190] sm:$0xff]
    %v2047 = vld [vmem:[#allocation12 + $0x198] sm:$0xff]
    %v2048 = vld [vmem:[#allocation12 + $0x1a0] sm:$0xff]
    %v2049 = vld [vmem:[#allocation12 + $0x1a8] sm:$0xff]
    %v2050 = vld [vmem:[#allocation12 + $0x1b0] sm:$0xff]
    %v2051 = vld [vmem:[#allocation12 + $0x1b8] sm:$0xff]
    %v2052 = vld [vmem:[#allocation12 + $0x1c0] sm:$0xff]
    %v2053 = vld [vmem:[#allocation12 + $0x1c8] sm:$0xff]
    %v2054 = vld [vmem:[#allocation12 + $0x1d0] sm:$0xff]
    %v2055 = vld [vmem:[#allocation12 + $0x1d8] sm:$0xff]
    %v2056 = vld [vmem:[#allocation12 + $0x1e0] sm:$0xff]
    %v2057 = vld [vmem:[#allocation12 + $0x1e8] sm:$0xff]
    %v2058 = vld [vmem:[#allocation12 + $0x1f0] sm:$0xff]
    %v2059 = vld [vmem:[#allocation12 + $0x1f8] sm:$0xff]
    %2060 = vmatprep.subr.mxu0 %v1997
    %2061 = vmatpush1.msra.mxu0 %v1996
    %2062 = vmatprep.subr.mxu0 %v1999
    %2063 = vmatpush1.msra.mxu0 %v1998
    %2064 = vmatprep.subr.mxu0 %v2001
    %2065 = vmatpush1.msra.mxu0 %v2000
    %2066 = vmatprep.subr.mxu0 %v2003
    %2067 = vmatpush1.msra.mxu0 %v2002
    %2068 = vmatprep.subr.mxu0 %v2005
    %2069 = vmatpush1.msra.mxu0 %v2004
    %2070 = vmatprep.subr.mxu0 %v2007
    %2071 = vmatpush1.msra.mxu0 %v2006
    %2072 = vmatprep.subr.mxu0 %v2009
    %2073 = vmatpush1.msra.mxu0 %v2008
    %2074 = vmatprep.subr.mxu0 %v2011
    %2075 = vmatpush1.msra.mxu0 %v2010
    %2076 = vmatprep.subr.mxu0 %v2013
    %2077 = vmatpush1.msra.mxu0 %v2012
    %2078 = vmatprep.subr.mxu0 %v2015
    %2079 = vmatpush1.msra.mxu0 %v2014
    %2080 = vmatprep.subr.mxu0 %v2017
    %2081 = vmatpush1.msra.mxu0 %v2016
    %2082 = vmatprep.subr.mxu0 %v2019
    %2083 = vmatpush1.msra.mxu0 %v2018
    %2084 = vmatprep.subr.mxu0 %v2021
    %2085 = vmatpush1.msra.mxu0 %v2020
    %2086 = vmatprep.subr.mxu0 %v2023
    %2087 = vmatpush1.msra.mxu0 %v2022
    %2088 = vmatprep.subr.mxu0 %v2025
    %2089 = vmatpush1.msra.mxu0 %v2024
    %2090 = vmatprep.subr.mxu0 %v2027
    %2091 = vmatpush1.msra.mxu0 %v2026
    %2092 = vmatprep.subr.mxu0 %v2029
    %2093 = vmatpush1.msra.mxu0 %v2028
    %2094 = vmatprep.subr.mxu0 %v2031
    %2095 = vmatpush1.msra.mxu0 %v2030
    %2096 = vmatprep.subr.mxu0 %v2033
    %2097 = vmatpush1.msra.mxu0 %v2032
    %2098 = vmatprep.subr.mxu0 %v2035
    %2099 = vmatpush1.msra.mxu0 %v2034
    %2100 = vmatprep.subr.mxu0 %v2037
    %2101 = vmatpush1.msra.mxu0 %v2036
    %2102 = vmatprep.subr.mxu0 %v2039
    %2103 = vmatpush1.msra.mxu0 %v2038
    %2104 = vmatprep.subr.mxu0 %v2041
    %2105 = vmatpush1.msra.mxu0 %v2040
    %2106 = vmatprep.subr.mxu0 %v2043
    %2107 = vmatpush1.msra.mxu0 %v2042
    %2108 = vmatprep.subr.mxu0 %v2045
    %2109 = vmatpush1.msra.mxu0 %v2044
    %2110 = vmatprep.subr.mxu0 %v2047
    %2111 = vmatpush1.msra.mxu0 %v2046
    %2112 = vmatprep.subr.mxu0 %v2049
    %2113 = vmatpush1.msra.mxu0 %v2048
    %2114 = vmatprep.subr.mxu0 %v2051
    %2115 = vmatpush1.msra.mxu0 %v2050
    %2116 = vmatprep.subr.mxu0 %v2053
    %2117 = vmatpush1.msra.mxu0 %v2052
    %2118 = vmatprep.subr.mxu0 %v2055
    %2119 = vmatpush1.msra.mxu0 %v2054
    %2120 = vmatprep.subr.mxu0 %v2057
    %2121 = vmatpush1.msra.mxu0 %v2056
    %2122 = vmatprep.subr.mxu0 %v2059
    %2123 = vmatpush1.msra.mxu0 %v2058
    %2124 = vmatprep.mubr.f32.mxu0 %v1995
    %2125 = vmatmul.mubr.f32.gmra.mrb[0].mxu0 %v1986
    %v2126 = vpop.f32.mrb[0].mxu0
    %v2127 = vadd.f32 0.0, %v2126
    %v2128 = vpop.f32.mrb[0].mxu0
    %v2129 = vadd.f32 0.0, %v2128
    %2130 = vdwg.mxu0
    %v2131 = vmul.f32 %v2127, 0.001953125
    %v2132 = vmul.f32 %v2129, 0.001953125
    %v2133 = vlaneseq
    %v2134 = vshrl.u32 %v2133, 7
    %v2135 = vsub.s32 0, %v2134
    %v2136 = vrot.slane %v2131, %v2135
    %v2137 = vlaneseq
    %v2138 = vshrl.u32 %v2137, 7
    %v2139 = vsub.s32 0, %v2138
    %v2140 = vrot.slane %v2132, %v2139
    %v2141 = vsub.f32 %v1970, %v2136
    %v2142 = vsub.f32 %v1971, %v2140
    %v2143 = vsub.f32 %v1972, %v2136
    %v2144 = vsub.f32 %v1973, %v2140
    %v2145 = vsub.f32 %v1974, %v2136
    %v2146 = vsub.f32 %v1975, %v2140
    %v2147 = vsub.f32 %v1976, %v2136
    %v2148 = vsub.f32 %v1977, %v2140
    %v2149 = vmul.f32 %v2141, %v2141
    %v2150 = vmul.f32 %v2142, %v2142
    %v2151 = vmul.f32 %v2143, %v2143
    %v2152 = vmul.f32 %v2144, %v2144
    %v2153 = vmul.f32 %v2145, %v2145
    %v2154 = vmul.f32 %v2146, %v2146
    %v2155 = vmul.f32 %v2147, %v2147
    %v2156 = vmul.f32 %v2148, %v2148
    %v2157 = vadd.f32 %v2149, %v2151
    %v2158 = vadd.f32 %v2157, %v2153
    %v2159 = vadd.f32 %v2158, %v2155
    %v2160 = vrot.slane %v2159, 4
    %v2161 = vadd.f32 %v2159, %v2160
    %v2162 = vrot.slane %v2161, 2
    %v2163 = vadd.f32 %v2161, %v2162
    %v2164 = vrot.slane %v2163, 1
    %v2165 = vadd.f32 %v2163, %v2164
    %v2166 = vadd.f32 %v2150, %v2152
    %v2167 = vadd.f32 %v2166, %v2154
    %v2168 = vadd.f32 %v2167, %v2156
    %v2169 = vrot.slane %v2168, 4
    %v2170 = vadd.f32 %v2168, %v2169
    %v2171 = vrot.slane %v2170, 2
    %v2172 = vadd.f32 %v2170, %v2171
    %v2173 = vrot.slane %v2172, 1
    %v2174 = vadd.f32 %v2172, %v2173
    %2175 = vmatprep.subr.mxu0 %v1997
    %2176 = vmatpush1.msra.mxu0 %v1996
    %2177 = vmatprep.subr.mxu0 %v1999
    %2178 = vmatpush1.msra.mxu0 %v1998
    %2179 = vmatprep.subr.mxu0 %v2001
    %2180 = vmatpush1.msra.mxu0 %v2000
    %2181 = vmatprep.subr.mxu0 %v2003
    %2182 = vmatpush1.msra.mxu0 %v2002
    %2183 = vmatprep.subr.mxu0 %v2005
    %2184 = vmatpush1.msra.mxu0 %v2004
    %2185 = vmatprep.subr.mxu0 %v2007
    %2186 = vmatpush1.msra.mxu0 %v2006
    %2187 = vmatprep.subr.mxu0 %v2009
    %2188 = vmatpush1.msra.mxu0 %v2008
    %2189 = vmatprep.subr.mxu0 %v2011
    %2190 = vmatpush1.msra.mxu0 %v2010
    %2191 = vmatprep.subr.mxu0 %v2013
    %2192 = vmatpush1.msra.mxu0 %v2012
    %2193 = vmatprep.subr.mxu0 %v2015
    %2194 = vmatpush1.msra.mxu0 %v2014
    %2195 = vmatprep.subr.mxu0 %v2017
    %2196 = vmatpush1.msra.mxu0 %v2016
    %2197 = vmatprep.subr.mxu0 %v2019
    %2198 = vmatpush1.msra.mxu0 %v2018
    %2199 = vmatprep.subr.mxu0 %v2021
    %2200 = vmatpush1.msra.mxu0 %v2020
    %2201 = vmatprep.subr.mxu0 %v2023
    %2202 = vmatpush1.msra.mxu0 %v2022
    %2203 = vmatprep.subr.mxu0 %v2025
    %2204 = vmatpush1.msra.mxu0 %v2024
    %2205 = vmatprep.subr.mxu0 %v2027
    %2206 = vmatpush1.msra.mxu0 %v2026
    %2207 = vmatprep.subr.mxu0 %v2029
    %2208 = vmatpush1.msra.mxu0 %v2028
    %2209 = vmatprep.subr.mxu0 %v2031
    %2210 = vmatpush1.msra.mxu0 %v2030
    %2211 = vmatprep.subr.mxu0 %v2033
    %2212 = vmatpush1.msra.mxu0 %v2032
    %2213 = vmatprep.subr.mxu0 %v2035
    %2214 = vmatpush1.msra.mxu0 %v2034
    %2215 = vmatprep.subr.mxu0 %v2037
    %2216 = vmatpush1.msra.mxu0 %v2036
    %2217 = vmatprep.subr.mxu0 %v2039
    %2218 = vmatpush1.msra.mxu0 %v2038
    %2219 = vmatprep.subr.mxu0 %v2041
    %2220 = vmatpush1.msra.mxu0 %v2040
    %2221 = vmatprep.subr.mxu0 %v2043
    %2222 = vmatpush1.msra.mxu0 %v2042
    %2223 = vmatprep.subr.mxu0 %v2045
    %2224 = vmatpush1.msra.mxu0 %v2044
    %2225 = vmatprep.subr.mxu0 %v2047
    %2226 = vmatpush1.msra.mxu0 %v2046
    %2227 = vmatprep.subr.mxu0 %v2049
    %2228 = vmatpush1.msra.mxu0 %v2048
    %2229 = vmatprep.subr.mxu0 %v2051
    %2230 = vmatpush1.msra.mxu0 %v2050
    %2231 = vmatprep.subr.mxu0 %v2053
    %2232 = vmatpush1.msra.mxu0 %v2052
    %2233 = vmatprep.subr.mxu0 %v2055
    %2234 = vmatpush1.msra.mxu0 %v2054
    %2235 = vmatprep.subr.mxu0 %v2057
    %2236 = vmatpush1.msra.mxu0 %v2056
    %2237 = vmatprep.subr.mxu0 %v2059
    %2238 = vmatpush1.msra.mxu0 %v2058
    %2239 = vmatprep.mubr.f32.mxu0 %v2174
    %2240 = vmatmul.mubr.f32.gmra.mrb[0].mxu0 %v2165
    %v2241 = vpop.f32.mrb[0].mxu0
    %v2242 = vadd.f32 0.0, %v2241
    %v2243 = vpop.f32.mrb[0].mxu0
    %v2244 = vadd.f32 0.0, %v2243
    %2245 = vdwg.mxu0
    %v2246 = vmul.f32 %v2242, 0.001953125
    %v2247 = vmul.f32 %v2244, 0.001953125
    %v2248 = vld [vmem:[#allocation13] sm:$0x3]
    %v2249 = vadd.f32 %v2246, 1e-05
    %v2250 = vadd.f32 %v2247, 1e-05
    %v2251 = vrsqrt.pop %v2249
    %v2252 = vrsqrt.pop %v2250
    %v2255 = vcombine.low %v2251, %v2252
    %v2257 = vunpack.c.l.s4 1966171168
    %v2258 = vunpack.c.0.s8 %v2257
    %v2259 = vlaneseq
    %v2260 = vshrl.u32 %v2259, 7
    %v2261 = vsub.s32 %v2258, %v2260
    %v2262 = vrot.slane %v2255, %v2261
    %v2264 = vunpack.c.l.s4 1966171168
    %v2265 = vunpack.c.0.s8 %v2264
    %v2266 = vlaneseq
    %v2267 = vshrl.u32 %v2266, 7
    %v2268 = vsub.s32 %v2265, %v2267
    %v2269 = vrot.slane %v2262, %v2268
    %v2271 = vmul.f32 %v2248, %v2269
    %v2273 = vlaneseq
    %v2274 = vshrl.u32 %v2273, 7
    %v2275 = vsub.s32 0, %v2274
    %v2276 = vrot.slane %v2271, %v2275
    %v2277 = vlaneseq
    %v2278 = vshrl.u32 %v2277, 7
    %v2279 = vsub.s32 1, %v2278
    %v2280 = vrot.slane %v2271, %v2279
    %v2283 = vmul.f32 %v2141, %v2276
    %v2284 = vmul.f32 %v2142, %v2280
    %v2285 = vmul.f32 %v2143, %v2276
    %v2286 = vmul.f32 %v2144, %v2280
    %v2287 = vmul.f32 %v2145, %v2276
    %v2288 = vmul.f32 %v2146, %v2280
    %v2289 = vmul.f32 %v2147, %v2276
    %v2290 = vmul.f32 %v2148, %v2280
    %v2291 = vld [vmem:[#allocation15] sm:$0x3]
    %v2293 = vlaneseq
    %v2294 = vshrl.u32 %v2293, 7
    %v2295 = vsub.s32 0, %v2294
    %v2296 = vrot.slane %v2291, %v2295
    %v2297 = vlaneseq
    %v2298 = vshrl.u32 %v2297, 7
    %v2299 = vsub.s32 1, %v2298
    %v2300 = vrot.slane %v2291, %v2299
    %v2303 = vadd.f32 %v2283, %v2296
    %v2304 = vadd.f32 %v2284, %v2300
    %v2305 = vadd.f32 %v2285, %v2296
    %v2306 = vadd.f32 %v2286, %v2300
    %v2307 = vadd.f32 %v2287, %v2296
    %v2308 = vadd.f32 %v2288, %v2300
    %v2309 = vadd.f32 %v2289, %v2296
    %v2310 = vadd.f32 %v2290, %v2300
    %vm2311 = vcmp.gt.f32.partialorder %v2303, 0.0
    %vm2312 = vcmp.gt.f32.partialorder %v2304, 0.0
    %vm2313 = vcmp.gt.f32.partialorder %v2305, 0.0
    %vm2314 = vcmp.gt.f32.partialorder %v2306, 0.0
    %vm2315 = vcmp.gt.f32.partialorder %v2307, 0.0
    %vm2316 = vcmp.gt.f32.partialorder %v2308, 0.0
    %vm2317 = vcmp.gt.f32.partialorder %v2309, 0.0
    %vm2318 = vcmp.gt.f32.partialorder %v2310, 0.0
    %v2319 = vmul.f32 %v2303, 0.2
    %v2320 = vmul.f32 %v2304, 0.2
    %v2321 = vmul.f32 %v2305, 0.2
    %v2322 = vmul.f32 %v2306, 0.2
    %v2323 = vmul.f32 %v2307, 0.2
    %v2324 = vmul.f32 %v2308, 0.2
    %v2325 = vmul.f32 %v2309, 0.2
    %v2326 = vmul.f32 %v2310, 0.2
    %v2327 = vsel %vm2311, %v2303, %v2319
    %v2328 = vsel %vm2312, %v2304, %v2320
    %v2329 = vsel %vm2313, %v2305, %v2321
    %v2330 = vsel %vm2314, %v2306, %v2322
    %v2331 = vsel %vm2315, %v2307, %v2323
    %v2332 = vsel %vm2316, %v2308, %v2324
    %v2333 = vsel %vm2317, %v2309, %v2325
    %v2334 = vsel %vm2318, %v2310, %v2326
    %2335 = vst [vmem:[%s10] sm:$0xff] %v2327
    %2336 = vst [vmem:[%s10 + $0x8] sm:$0xff] %v2328
    %2337 = vst [vmem:[%s10 + $0x10] sm:$0xff] %v2329
    %2338 = vst [vmem:[%s10 + $0x18] sm:$0xff] %v2330
    %2339 = vst [vmem:[%s10 + $0x20] sm:$0xff] %v2331
    %2340 = vst [vmem:[%s10 + $0x28] sm:$0xff] %v2332
    %2341 = vst [vmem:[%s10 + $0x30] sm:$0xff] %v2333
    %2342 = vst [vmem:[%s10 + $0x38] sm:$0xff] %v2334
    // Predicated region
    $region78: #{autoencoder_forward.3} parent=1 // pred_check
      _
    $region79: #{autoencoder_forward.3} parent=1 // pred_check_branch
      %2344 = sbr.rel (0) target = $region81
    $region80: #{autoencoder_forward.3} parent=1 // pred_region
      _
    $region81: #{autoencoder_forward.3} parent=1 // pred_fallthru
      _
    // Predicated region
    $region82: #{autoencoder_forward.3} parent=1 // pred_check
      _
    $region83: #{autoencoder_forward.3} parent=1 // pred_check_branch
      %2346 = sbr.rel (0) target = $region85
    $region84: #{autoencoder_forward.3} parent=1 // pred_region
      _
    $region85: #{autoencoder_forward.3} parent=1 // pred_fallthru
      _
    %2347 = vsyncpa [#allocation3], 1
    %2348 = vsyncpa [#allocation5], 1
    %2349 = vsyncpa [#allocation8], 1
    %2350 = vsyncpa [#allocation11], 1
    %2351 = vsyncpa [#allocation14], 1

// kernel: autoencoder_forward.5
$region0: #{autoencoder_forward.5}
  #allocation0 [shape = 'u32[]', space=smem, size = 0x4, offset = 0x4, fixed_abs, tag = 'smem constant byte address 0x4 - core index']
  #allocation1 [shape = 'u32[144,128]{1,0:T(1,128)}', space=vmem, size = 0x12000, scoped, tag = 'internal scratch']
  %s0 = inlined_call_operand.vmem [shape: f32[32,256], index: 0, kind: input, shape index: {}]
  %s1 = inlined_call_operand.vmem [shape: f32[3,64,32], index: 1, kind: input, shape index: {}]
  %s2 = inlined_call_operand.vmem [shape: f32[3,256,256], index: 2, kind: input, shape index: {}]
  %s3 = inlined_call_operand.vmem [shape: f32[1,256], index: 3, kind: input, shape index: {}]
  %s4 = inlined_call_operand.vmem [shape: f32[256,256], index: 4, kind: input, shape index: {}]
  %s5 = inlined_call_operand.vmem [shape: f32[1,256], index: 5, kind: input, shape index: {}]
  %s6 = inlined_call_operand.vmem [shape: f32[1,256], index: 6, kind: input, shape index: {}]
  %s7 = inlined_call_operand.vmem [shape: f32[3,128,64], index: 7, kind: input, shape index: {}]
  %s8 = inlined_call_operand.vmem [shape: f32[3,256,256], index: 8, kind: input, shape index: {}]
  %s9 = inlined_call_operand.vmem [shape: f32[1,256], index: 9, kind: input, shape index: {}]
  %s10 = inlined_call_operand.vmem [shape: f32[128,256], index: 10, kind: output, shape index: {}]
  %s11 = sld [smem:[#allocation0]]
  $region50: #{autoencoder_forward.5} parent=0
    _
  %s13 = ssub.s32 1, %s11
  %s14 = scalar_select 0, %s13, %s11
  // Predicated region
  $region2: #{autoencoder_forward.5} parent=0 // pred_check
    _
  $region3: #{autoencoder_forward.5} parent=0 // pred_check_branch
    %16 = sbr.rel (0) target = $region5
  $region4: #{autoencoder_forward.5} parent=0 // pred_region
    _
  $region5: #{autoencoder_forward.5} parent=0 // pred_fallthru
    _
  // Predicated region
  $region6: #{autoencoder_forward.5} parent=0 // pred_check
    _
  $region7: #{autoencoder_forward.5} parent=0 // pred_check_branch
    %18 = sbr.rel (0) target = $region9
  $region8: #{autoencoder_forward.5} parent=0 // pred_region
    _
  $region9: #{autoencoder_forward.5} parent=0 // pred_fallthru
    _
  // Predicated region
  $region10: #{autoencoder_forward.5} parent=0 // pred_check
    _
  $region11: #{autoencoder_forward.5} parent=0 // pred_check_branch
    %20 = sbr.rel (0) target = $region13
  $region12: #{autoencoder_forward.5} parent=0 // pred_region
    _
  $region13: #{autoencoder_forward.5} parent=0 // pred_fallthru
    _
  // Predicated region
  $region14: #{autoencoder_forward.5} parent=0 // pred_check
    _
  $region15: #{autoencoder_forward.5} parent=0 // pred_check_branch
    %22 = sbr.rel (0) target = $region17
  $region16: #{autoencoder_forward.5} parent=0 // pred_region
    _
  $region17: #{autoencoder_forward.5} parent=0 // pred_fallthru
    _
  // Predicated region
  $region18: #{autoencoder_forward.5} parent=0 // pred_check
    _
  $region19: #{autoencoder_forward.5} parent=0 // pred_check_branch
    %24 = sbr.rel (0) target = $region21
  $region20: #{autoencoder_forward.5} parent=0 // pred_region
    _
  $region21: #{autoencoder_forward.5} parent=0 // pred_fallthru
    _
  // Predicated region
  $region22: #{autoencoder_forward.5} parent=0 // pred_check
    _
  $region23: #{autoencoder_forward.5} parent=0 // pred_check_branch
    %26 = sbr.rel (0) target = $region25
  $region24: #{autoencoder_forward.5} parent=0 // pred_region
    _
  $region25: #{autoencoder_forward.5} parent=0 // pred_fallthru
    _
  // Predicated region
  $region26: #{autoencoder_forward.5} parent=0 // pred_check
    _
  $region27: #{autoencoder_forward.5} parent=0 // pred_check_branch
    %28 = sbr.rel (0) target = $region29
  $region28: #{autoencoder_forward.5} parent=0 // pred_region
    _
  $region29: #{autoencoder_forward.5} parent=0 // pred_fallthru
    _
  // Predicated region
  $region30: #{autoencoder_forward.5} parent=0 // pred_check
    _
  $region31: #{autoencoder_forward.5} parent=0 // pred_check_branch
    %30 = sbr.rel (0) target = $region33
  $region32: #{autoencoder_forward.5} parent=0 // pred_region
    _
  $region33: #{autoencoder_forward.5} parent=0 // pred_fallthru
    _
  // Predicated region
  $region34: #{autoencoder_forward.5} parent=0 // pred_check
    _
  $region35: #{autoencoder_forward.5} parent=0 // pred_check_branch
    %32 = sbr.rel (0) target = $region37
  $region36: #{autoencoder_forward.5} parent=0 // pred_region
    _
  $region37: #{autoencoder_forward.5} parent=0 // pred_fallthru
    _
  // Predicated region
  $region38: #{autoencoder_forward.5} parent=0 // pred_check
    _
  $region39: #{autoencoder_forward.5} parent=0 // pred_check_branch
    %34 = sbr.rel (0) target = $region41
  $region40: #{autoencoder_forward.5} parent=0 // pred_region
    _
  $region41: #{autoencoder_forward.5} parent=0 // pred_fallthru
    _
  %v35 = vld [vmem:[%s0] sm:$0xff]
  %v36 = vld [vmem:[%s0 + $0x8] sm:$0xff]
  %v37 = vld [vmem:[%s0 + $0x10] sm:$0xff]
  %v38 = vld [vmem:[%s0 + $0x18] sm:$0xff]
  %v39 = vld [vmem:[%s0 + $0x20] sm:$0xff]
  %v40 = vld [vmem:[%s0 + $0x28] sm:$0xff]
  %v41 = vld [vmem:[%s0 + $0x30] sm:$0xff]
  %v42 = vld [vmem:[%s0 + $0x38] sm:$0xff]
  %v43 = vld [vmem:[%s1] sm:$0xff]
  %v44 = vld [vmem:[%s1 + $0x8] sm:$0xff]
  %v45 = vld [vmem:[%s1 + $0x10] sm:$0xff]
  %v46 = vld [vmem:[%s1 + $0x18] sm:$0xff]
  %v47 = vld [vmem:[%s1 + $0x20] sm:$0xff]
  %v48 = vld [vmem:[%s1 + $0x28] sm:$0xff]
  %v49 = vld [vmem:[%s1 + $0x30] sm:$0xff]
  %v50 = vld [vmem:[%s1 + $0x38] sm:$0xff]
  %vm51 = vcmask 261120
  %v53 = vsel %vm51, %v43, 0
  %v56 = vsel %vm51, %v44, 0
  %v59 = vsel %vm51, %v45, 0
  %v62 = vsel %vm51, %v46, 0
  %v65 = vsel %vm51, %v47, 0
  %v68 = vsel %vm51, %v48, 0
  %v71 = vsel %vm51, %v49, 0
  %v74 = vsel %vm51, %v50, 0
  %76 = vmatprep.subr.mxu0 %v36
  %77 = vmatpush1.msra.mxu0 %v35
  %78 = vmatprep.subr.mxu0 %v38
  %79 = vmatpush1.msra.mxu0 %v37
  %80 = vmatprep.subr.mxu0 %v40
  %81 = vmatpush1.msra.mxu0 %v39
  %82 = vmatprep.subr.mxu0 %v42
  %83 = vmatpush1.msra.mxu0 %v41
  %84 = vmatprep.subr.mxu0 0.0
  %85 = vmatpush1.msra.mxu0 0.0
  %86 = vmatprep.subr.mxu0 0.0
  %87 = vmatpush1.msra.mxu0 0.0
  %88 = vmatprep.subr.mxu0 0.0
  %89 = vmatpush1.msra.mxu0 0.0
  %90 = vmatprep.subr.mxu0 0.0
  %91 = vmatpush1.msra.mxu0 0.0
  %92 = vmatprep.subr.mxu0 0.0
  %93 = vmatpush1.msra.mxu0 0.0
  %94 = vmatprep.subr.mxu0 0.0
  %95 = vmatpush1.msra.mxu0 0.0
  %96 = vmatprep.subr.mxu0 0.0
  %97 = vmatpush1.msra.mxu0 0.0
  %98 = vmatprep.subr.mxu0 0.0
  %99 = vmatpush1.msra.mxu0 0.0
  %100 = vmatprep.subr.mxu0 0.0
  %101 = vmatpush1.msra.mxu0 0.0
  %102 = vmatprep.subr.mxu0 0.0
  %103 = vmatpush1.msra.mxu0 0.0
  %104 = vmatprep.subr.mxu0 0.0
  %105 = vmatpush1.msra.mxu0 0.0
  %106 = vmatprep.subr.mxu0 0.0
  %107 = vmatpush1.msra.mxu0 0.0
  %108 = vmatprep.subr.mxu0 0.0
  %109 = vmatpush1.msra.mxu0 0.0
  %110 = vmatprep.subr.mxu0 0.0
  %111 = vmatpush1.msra.mxu0 0.0
  %112 = vmatprep.subr.mxu0 0.0
  %113 = vmatpush1.msra.mxu0 0.0
  %114 = vmatprep.subr.mxu0 0.0
  %115 = vmatpush1.msra.mxu0 0.0
  %116 = vmatprep.subr.mxu0 0.0
  %117 = vmatpush1.msra.mxu0 0.0
  %118 = vmatprep.subr.mxu0 0.0
  %119 = vmatpush1.msra.mxu0 0.0
  %120 = vmatprep.subr.mxu0 0.0
  %121 = vmatpush1.msra.mxu0 0.0
  %122 = vmatprep.subr.mxu0 0.0
  %123 = vmatpush1.msra.mxu0 0.0
  %124 = vmatprep.subr.mxu0 0.0
  %125 = vmatpush1.msra.mxu0 0.0
  %126 = vmatprep.subr.mxu0 0.0
  %127 = vmatpush1.msra.mxu0 0.0
  %128 = vmatprep.subr.mxu0 0.0
  %129 = vmatpush1.msra.mxu0 0.0
  %130 = vmatprep.subr.mxu0 0.0
  %131 = vmatpush1.msra.mxu0 0.0
  %132 = vmatprep.subr.mxu0 0.0
  %133 = vmatpush1.msra.mxu0 0.0
  %134 = vmatprep.subr.mxu0 0.0
  %135 = vmatpush1.msra.mxu0 0.0
  %136 = vmatprep.subr.mxu0 0.0
  %137 = vmatpush1.msra.mxu0 0.0
  %138 = vmatprep.subr.mxu0 0.0
  %139 = vmatpush1.msra.mxu0 0.0
  %140 = vmatprep.mubr.f32.mxu0 0.0
  %141 = vmatmul.mubr.f32.gmra.mrb[0].mxu0 %v53
  %v142 = vpop.f32.mrb[0].mxu0
  %v143 = vadd.f32 0.0, %v142
  %v144 = vpop.f32.mrb[0].mxu0
  %v145 = vadd.f32 0.0, %v144
  %146 = vmatprep.mubr.f32.mxu0 0.0
  %147 = vmatmul.mubr.f32.gmra.mrb[0].mxu0 %v56
  %v148 = vpop.f32.mrb[0].mxu0
  %v149 = vadd.f32 0.0, %v148
  %v150 = vpop.f32.mrb[0].mxu0
  %v151 = vadd.f32 0.0, %v150
  %152 = vmatprep.mubr.f32.mxu0 0.0
  %153 = vmatmul.mubr.f32.gmra.mrb[0].mxu0 %v59
  %v154 = vpop.f32.mrb[0].mxu0
  %v155 = vadd.f32 0.0, %v154
  %v156 = vpop.f32.mrb[0].mxu0
  %v157 = vadd.f32 0.0, %v156
  %158 = vmatprep.mubr.f32.mxu0 0.0
  %159 = vmatmul.mubr.f32.gmra.mrb[0].mxu0 %v62
  %v160 = vpop.f32.mrb[0].mxu0
  %v161 = vadd.f32 0.0, %v160
  %v162 = vpop.f32.mrb[0].mxu0
  %v163 = vadd.f32 0.0, %v162
  %164 = vmatprep.mubr.f32.mxu0 0.0
  %165 = vmatmul.mubr.f32.gmra.mrb[0].mxu0 %v65
  %v166 = vpop.f32.mrb[0].mxu0
  %v167 = vadd.f32 0.0, %v166
  %v168 = vpop.f32.mrb[0].mxu0
  %v169 = vadd.f32 0.0, %v168
  %170 = vmatprep.mubr.f32.mxu0 0.0
  %171 = vmatmul.mubr.f32.gmra.mrb[0].mxu0 %v68
  %v172 = vpop.f32.mrb[0].mxu0
  %v173 = vadd.f32 0.0, %v172
  %v174 = vpop.f32.mrb[0].mxu0
  %v175 = vadd.f32 0.0, %v174
  %176 = vmatprep.mubr.f32.mxu0 0.0
  %177 = vmatmul.mubr.f32.gmra.mrb[0].mxu0 %v71
  %v178 = vpop.f32.mrb[0].mxu0
  %v179 = vadd.f32 0.0, %v178
  %v180 = vpop.f32.mrb[0].mxu0
  %v181 = vadd.f32 0.0, %v180
  %182 = vmatprep.mubr.f32.mxu0 0.0
  %183 = vmatmul.mubr.f32.gmra.mrb[0].mxu0 %v74
  %v184 = vpop.f32.mrb[0].mxu0
  %v185 = vadd.f32 0.0, %v184
  %v186 = vpop.f32.mrb[0].mxu0
  %v187 = vadd.f32 0.0, %v186
  %188 = vdwg.mxu0
  %v189 = vld [vmem:[%s2] sm:$0xff]
  %v190 = vld [vmem:[%s2 + $0x8] sm:$0xff]
  %v191 = vld [vmem:[%s2 + $0x10] sm:$0xff]
  %v192 = vld [vmem:[%s2 + $0x18] sm:$0xff]
  %v193 = vld [vmem:[%s2 + $0x20] sm:$0xff]
  %v194 = vld [vmem:[%s2 + $0x28] sm:$0xff]
  %v195 = vld [vmem:[%s2 + $0x30] sm:$0xff]
  %v196 = vld [vmem:[%s2 + $0x38] sm:$0xff]
  %v197 = vld [vmem:[%s2 + $0x40] sm:$0xff]
  %v198 = vld [vmem:[%s2 + $0x48] sm:$0xff]
  %v199 = vld [vmem:[%s2 + $0x50] sm:$0xff]
  %v200 = vld [vmem:[%s2 + $0x58] sm:$0xff]
  %v201 = vld [vmem:[%s2 + $0x60] sm:$0xff]
  %v202 = vld [vmem:[%s2 + $0x68] sm:$0xff]
  %v203 = vld [vmem:[%s2 + $0x70] sm:$0xff]
  %v204 = vld [vmem:[%s2 + $0x78] sm:$0xff]
  %v205 = vld [vmem:[%s2 + $0x80] sm:$0xff]
  %v206 = vld [vmem:[%s2 + $0x88] sm:$0xff]
  %v207 = vld [vmem:[%s2 + $0x90] sm:$0xff]
  %v208 = vld [vmem:[%s2 + $0x98] sm:$0xff]
  %v209 = vld [vmem:[%s2 + $0xa0] sm:$0xff]
  %v210 = vld [vmem:[%s2 + $0xa8] sm:$0xff]
  %v211 = vld [vmem:[%s2 + $0xb0] sm:$0xff]
  %v212 = vld [vmem:[%s2 + $0xb8] sm:$0xff]
  %v213 = vld [vmem:[%s2 + $0xc0] sm:$0xff]
  %v214 = vld [vmem:[%s2 + $0xc8] sm:$0xff]
  %v215 = vld [vmem:[%s2 + $0xd0] sm:$0xff]
  %v216 = vld [vmem:[%s2 + $0xd8] sm:$0xff]
  %v217 = vld [vmem:[%s2 + $0xe0] sm:$0xff]
  %v218 = vld [vmem:[%s2 + $0xe8] sm:$0xff]
  %v219 = vld [vmem:[%s2 + $0xf0] sm:$0xff]
  %v220 = vld [vmem:[%s2 + $0xf8] sm:$0xff]
  %v221 = vld [vmem:[%s2 + $0x100] sm:$0xff]
  %v222 = vld [vmem:[%s2 + $0x108] sm:$0xff]
  %v223 = vld [vmem:[%s2 + $0x110] sm:$0xff]
  %v224 = vld [vmem:[%s2 + $0x118] sm:$0xff]
  %v225 = vld [vmem:[%s2 + $0x120] sm:$0xff]
  %v226 = vld [vmem:[%s2 + $0x128] sm:$0xff]
  %v227 = vld [vmem:[%s2 + $0x130] sm:$0xff]
  %v228 = vld [vmem:[%s2 + $0x138] sm:$0xff]
  %v229 = vld [vmem:[%s2 + $0x140] sm:$0xff]
  %v230 = vld [vmem:[%s2 + $0x148] sm:$0xff]
  %v231 = vld [vmem:[%s2 + $0x150] sm:$0xff]
  %v232 = vld [vmem:[%s2 + $0x158] sm:$0xff]
  %v233 = vld [vmem:[%s2 + $0x160] sm:$0xff]
  %v234 = vld [vmem:[%s2 + $0x168] sm:$0xff]
  %v235 = vld [vmem:[%s2 + $0x170] sm:$0xff]
  %v236 = vld [vmem:[%s2 + $0x178] sm:$0xff]
  %v237 = vld [vmem:[%s2 + $0x180] sm:$0xff]
  %v238 = vld [vmem:[%s2 + $0x188] sm:$0xff]
  %v239 = vld [vmem:[%s2 + $0x190] sm:$0xff]
  %v240 = vld [vmem:[%s2 + $0x198] sm:$0xff]
  %v241 = vld [vmem:[%s2 + $0x1a0] sm:$0xff]
  %v242 = vld [vmem:[%s2 + $0x1a8] sm:$0xff]
  %v243 = vld [vmem:[%s2 + $0x1b0] sm:$0xff]
  %v244 = vld [vmem:[%s2 + $0x1b8] sm:$0xff]
  %v245 = vld [vmem:[%s2 + $0x1c0] sm:$0xff]
  %v246 = vld [vmem:[%s2 + $0x1c8] sm:$0xff]
  %v247 = vld [vmem:[%s2 + $0x1d0] sm:$0xff]
  %v248 = vld [vmem:[%s2 + $0x1d8] sm:$0xff]
  %v249 = vld [vmem:[%s2 + $0x1e0] sm:$0xff]
  %v250 = vld [vmem:[%s2 + $0x1e8] sm:$0xff]
  %v251 = vld [vmem:[%s2 + $0x1f0] sm:$0xff]
  %v252 = vld [vmem:[%s2 + $0x1f8] sm:$0xff]
  %s253 = scalar_lea.vmem %s1, 64
  %v254 = vld [vmem:[%s253] sm:$0xff]
  %v255 = vld [vmem:[%s253 + $0x8] sm:$0xff]
  %v256 = vld [vmem:[%s253 + $0x10] sm:$0xff]
  %v257 = vld [vmem:[%s253 + $0x18] sm:$0xff]
  %v258 = vld [vmem:[%s253 + $0x20] sm:$0xff]
  %v259 = vld [vmem:[%s253 + $0x28] sm:$0xff]
  %v260 = vld [vmem:[%s253 + $0x30] sm:$0xff]
  %v261 = vld [vmem:[%s253 + $0x38] sm:$0xff]
  %v263 = vsel %vm51, %v254, 0
  %v266 = vsel %vm51, %v255, 0
  %v269 = vsel %vm51, %v256, 0
  %v272 = vsel %vm51, %v257, 0
  %v275 = vsel %vm51, %v258, 0
  %v278 = vsel %vm51, %v259, 0
  %v281 = vsel %vm51, %v260, 0
  %v284 = vsel %vm51, %v261, 0
  %286 = vmatprep.subr.mxu0 %v36
  %287 = vmatpush1.msra.mxu0 %v35
  %288 = vmatprep.subr.mxu0 %v38
  %289 = vmatpush1.msra.mxu0 %v37
  %290 = vmatprep.subr.mxu0 %v40
  %291 = vmatpush1.msra.mxu0 %v39
  %292 = vmatprep.subr.mxu0 %v42
  %293 = vmatpush1.msra.mxu0 %v41
  %294 = vmatprep.subr.mxu0 0.0
  %295 = vmatpush1.msra.mxu0 0.0
  %296 = vmatprep.subr.mxu0 0.0
  %297 = vmatpush1.msra.mxu0 0.0
  %298 = vmatprep.subr.mxu0 0.0
  %299 = vmatpush1.msra.mxu0 0.0
  %300 = vmatprep.subr.mxu0 0.0
  %301 = vmatpush1.msra.mxu0 0.0
  %302 = vmatprep.subr.mxu0 0.0
  %303 = vmatpush1.msra.mxu0 0.0
  %304 = vmatprep.subr.mxu0 0.0
  %305 = vmatpush1.msra.mxu0 0.0
  %306 = vmatprep.subr.mxu0 0.0
  %307 = vmatpush1.msra.mxu0 0.0
  %308 = vmatprep.subr.mxu0 0.0
  %309 = vmatpush1.msra.mxu0 0.0
  %310 = vmatprep.subr.mxu0 0.0
  %311 = vmatpush1.msra.mxu0 0.0
  %312 = vmatprep.subr.mxu0 0.0
  %313 = vmatpush1.msra.mxu0 0.0
  %314 = vmatprep.subr.mxu0 0.0
  %315 = vmatpush1.msra.mxu0 0.0
  %316 = vmatprep.subr.mxu0 0.0
  %317 = vmatpush1.msra.mxu0 0.0
  %318 = vmatprep.subr.mxu0 0.0
  %319 = vmatpush1.msra.mxu0 0.0
  %320 = vmatprep.subr.mxu0 0.0
  %321 = vmatpush1.msra.mxu0 0.0
  %322 = vmatprep.subr.mxu0 0.0
  %323 = vmatpush1.msra.mxu0 0.0
  %324 = vmatprep.subr.mxu0 0.0
  %325 = vmatpush1.msra.mxu0 0.0
  %326 = vmatprep.subr.mxu0 0.0
  %327 = vmatpush1.msra.mxu0 0.0
  %328 = vmatprep.subr.mxu0 0.0
  %329 = vmatpush1.msra.mxu0 0.0
  %330 = vmatprep.subr.mxu0 0.0
  %331 = vmatpush1.msra.mxu0 0.0
  %332 = vmatprep.subr.mxu0 0.0
  %333 = vmatpush1.msra.mxu0 0.0
  %334 = vmatprep.subr.mxu0 0.0
  %335 = vmatpush1.msra.mxu0 0.0
  %336 = vmatprep.subr.mxu0 0.0
  %337 = vmatpush1.msra.mxu0 0.0
  %338 = vmatprep.subr.mxu0 0.0
  %339 = vmatpush1.msra.mxu0 0.0
  %340 = vmatprep.subr.mxu0 0.0
  %341 = vmatpush1.msra.mxu0 0.0
  %342 = vmatprep.subr.mxu0 0.0
  %343 = vmatpush1.msra.mxu0 0.0
  %344 = vmatprep.subr.mxu0 0.0
  %345 = vmatpush1.msra.mxu0 0.0
  %346 = vmatprep.subr.mxu0 0.0
  %347 = vmatpush1.msra.mxu0 0.0
  %348 = vmatprep.subr.mxu0 0.0
  %349 = vmatpush1.msra.mxu0 0.0
  %350 = vmatprep.mubr.f32.mxu0 0.0
  %351 = vmatmul.mubr.f32.gmra.mrb[0].mxu0 %v263
  %v352 = vpop.f32.mrb[0].mxu0
  %v353 = vadd.f32 0.0, %v352
  %v354 = vpop.f32.mrb[0].mxu0
  %v355 = vadd.f32 0.0, %v354
  %356 = vmatprep.mubr.f32.mxu0 0.0
  %357 = vmatmul.mubr.f32.gmra.mrb[0].mxu0 %v266
  %v358 = vpop.f32.mrb[0].mxu0
  %v359 = vadd.f32 0.0, %v358
  %v360 = vpop.f32.mrb[0].mxu0
  %v361 = vadd.f32 0.0, %v360
  %362 = vmatprep.mubr.f32.mxu0 0.0
  %363 = vmatmul.mubr.f32.gmra.mrb[0].mxu0 %v269
  %v364 = vpop.f32.mrb[0].mxu0
  %v365 = vadd.f32 0.0, %v364
  %v366 = vpop.f32.mrb[0].mxu0
  %v367 = vadd.f32 0.0, %v366
  %368 = vmatprep.mubr.f32.mxu0 0.0
  %369 = vmatmul.mubr.f32.gmra.mrb[0].mxu0 %v272
  %v370 = vpop.f32.mrb[0].mxu0
  %v371 = vadd.f32 0.0, %v370
  %v372 = vpop.f32.mrb[0].mxu0
  %v373 = vadd.f32 0.0, %v372
  %374 = vmatprep.mubr.f32.mxu0 0.0
  %375 = vmatmul.mubr.f32.gmra.mrb[0].mxu0 %v275
  %v376 = vpop.f32.mrb[0].mxu0
  %v377 = vadd.f32 0.0, %v376
  %v378 = vpop.f32.mrb[0].mxu0
  %v379 = vadd.f32 0.0, %v378
  %380 = vmatprep.mubr.f32.mxu0 0.0
  %381 = vmatmul.mubr.f32.gmra.mrb[0].mxu0 %v278
  %v382 = vpop.f32.mrb[0].mxu0
  %v383 = vadd.f32 0.0, %v382
  %v384 = vpop.f32.mrb[0].mxu0
  %v385 = vadd.f32 0.0, %v384
  %386 = vmatprep.mubr.f32.mxu0 0.0
  %387 = vmatmul.mubr.f32.gmra.mrb[0].mxu0 %v281
  %v388 = vpop.f32.mrb[0].mxu0
  %v389 = vadd.f32 0.0, %v388
  %v390 = vpop.f32.mrb[0].mxu0
  %v391 = vadd.f32 0.0, %v390
  %392 = vmatprep.mubr.f32.mxu0 0.0
  %393 = vmatmul.mubr.f32.gmra.mrb[0].mxu0 %v284
  %v394 = vpop.f32.mrb[0].mxu0
  %v395 = vadd.f32 0.0, %v394
  %v396 = vpop.f32.mrb[0].mxu0
  %v397 = vadd.f32 0.0, %v396
  %398 = vdwg.mxu0
  %s399 = scalar_lea.vmem %s2, 512
  %v400 = vld [vmem:[%s399] sm:$0xff]
  %v401 = vld [vmem:[%s399 + $0x8] sm:$0xff]
  %v402 = vld [vmem:[%s399 + $0x10] sm:$0xff]
  %v403 = vld [vmem:[%s399 + $0x18] sm:$0xff]
  %v404 = vld [vmem:[%s399 + $0x20] sm:$0xff]
  %v405 = vld [vmem:[%s399 + $0x28] sm:$0xff]
  %v406 = vld [vmem:[%s399 + $0x30] sm:$0xff]
  %v407 = vld [vmem:[%s399 + $0x38] sm:$0xff]
  %v408 = vld [vmem:[%s399 + $0x40] sm:$0xff]
  %v409 = vld [vmem:[%s399 + $0x48] sm:$0xff]
  %v410 = vld [vmem:[%s399 + $0x50] sm:$0xff]
  %v411 = vld [vmem:[%s399 + $0x58] sm:$0xff]
  %v412 = vld [vmem:[%s399 + $0x60] sm:$0xff]
  %v413 = vld [vmem:[%s399 + $0x68] sm:$0xff]
  %v414 = vld [vmem:[%s399 + $0x70] sm:$0xff]
  %v415 = vld [vmem:[%s399 + $0x78] sm:$0xff]
  %v416 = vld [vmem:[%s399 + $0x80] sm:$0xff]
  %v417 = vld [vmem:[%s399 + $0x88] sm:$0xff]
  %v418 = vld [vmem:[%s399 + $0x90] sm:$0xff]
  %v419 = vld [vmem:[%s399 + $0x98] sm:$0xff]
  %v420 = vld [vmem:[%s399 + $0xa0] sm:$0xff]
  %v421 = vld [vmem:[%s399 + $0xa8] sm:$0xff]
  %v422 = vld [vmem:[%s399 + $0xb0] sm:$0xff]
  %v423 = vld [vmem:[%s399 + $0xb8] sm:$0xff]
  %v424 = vld [vmem:[%s399 + $0xc0] sm:$0xff]
  %v425 = vld [vmem:[%s399 + $0xc8] sm:$0xff]
  %v426 = vld [vmem:[%s399 + $0xd0] sm:$0xff]
  %v427 = vld [vmem:[%s399 + $0xd8] sm:$0xff]
  %v428 = vld [vmem:[%s399 + $0xe0] sm:$0xff]
  %v429 = vld [vmem:[%s399 + $0xe8] sm:$0xff]
  %v430 = vld [vmem:[%s399 + $0xf0] sm:$0xff]
  %v431 = vld [vmem:[%s399 + $0xf8] sm:$0xff]
  %v432 = vld [vmem:[%s399 + $0x100] sm:$0xff]
  %v433 = vld [vmem:[%s399 + $0x108] sm:$0xff]
  %v434 = vld [vmem:[%s399 + $0x110] sm:$0xff]
  %v435 = vld [vmem:[%s399 + $0x118] sm:$0xff]
  %v436 = vld [vmem:[%s399 + $0x120] sm:$0xff]
  %v437 = vld [vmem:[%s399 + $0x128] sm:$0xff]
  %v438 = vld [vmem:[%s399 + $0x130] sm:$0xff]
  %v439 = vld [vmem:[%s399 + $0x138] sm:$0xff]
  %v440 = vld [vmem:[%s399 + $0x140] sm:$0xff]
  %v441 = vld [vmem:[%s399 + $0x148] sm:$0xff]
  %v442 = vld [vmem:[%s399 + $0x150] sm:$0xff]
  %v443 = vld [vmem:[%s399 + $0x158] sm:$0xff]
  %v444 = vld [vmem:[%s399 + $0x160] sm:$0xff]
  %v445 = vld [vmem:[%s399 + $0x168] sm:$0xff]
  %v446 = vld [vmem:[%s399 + $0x170] sm:$0xff]
  %v447 = vld [vmem:[%s399 + $0x178] sm:$0xff]
  %v448 = vld [vmem:[%s399 + $0x180] sm:$0xff]
  %v449 = vld [vmem:[%s399 + $0x188] sm:$0xff]
  %v450 = vld [vmem:[%s399 + $0x190] sm:$0xff]
  %v451 = vld [vmem:[%s399 + $0x198] sm:$0xff]
  %v452 = vld [vmem:[%s399 + $0x1a0] sm:$0xff]
  %v453 = vld [vmem:[%s399 + $0x1a8] sm:$0xff]
  %v454 = vld [vmem:[%s399 + $0x1b0] sm:$0xff]
  %v455 = vld [vmem:[%s399 + $0x1b8] sm:$0xff]
  %v456 = vld [vmem:[%s399 + $0x1c0] sm:$0xff]
  %v457 = vld [vmem:[%s399 + $0x1c8] sm:$0xff]
  %v458 = vld [vmem:[%s399 + $0x1d0] sm:$0xff]
  %v459 = vld [vmem:[%s399 + $0x1d8] sm:$0xff]
  %v460 = vld [vmem:[%s399 + $0x1e0] sm:$0xff]
  %v461 = vld [vmem:[%s399 + $0x1e8] sm:$0xff]
  %v462 = vld [vmem:[%s399 + $0x1f0] sm:$0xff]
  %v463 = vld [vmem:[%s399 + $0x1f8] sm:$0xff]
  %464 = vmatprep.subr.mxu0 %v401
  %465 = vmatpush1.msra.mxu0 %v400
  %466 = vmatprep.subr.mxu0 %v403
  %467 = vmatpush1.msra.mxu0 %v402
  %468 = vmatprep.subr.mxu0 %v405
  %469 = vmatpush1.msra.mxu0 %v404
  %470 = vmatprep.subr.mxu0 %v407
  %471 = vmatpush1.msra.mxu0 %v406
  %472 = vmatprep.subr.mxu0 %v409
  %473 = vmatpush1.msra.mxu0 %v408
  %474 = vmatprep.subr.mxu0 %v411
  %475 = vmatpush1.msra.mxu0 %v410
  %476 = vmatprep.subr.mxu0 %v413
  %477 = vmatpush1.msra.mxu0 %v412
  %478 = vmatprep.subr.mxu0 %v415
  %479 = vmatpush1.msra.mxu0 %v414
  %480 = vmatprep.subr.mxu0 %v417
  %481 = vmatpush1.msra.mxu0 %v416
  %482 = vmatprep.subr.mxu0 %v419
  %483 = vmatpush1.msra.mxu0 %v418
  %484 = vmatprep.subr.mxu0 %v421
  %485 = vmatpush1.msra.mxu0 %v420
  %486 = vmatprep.subr.mxu0 %v423
  %487 = vmatpush1.msra.mxu0 %v422
  %488 = vmatprep.subr.mxu0 %v425
  %489 = vmatpush1.msra.mxu0 %v424
  %490 = vmatprep.subr.mxu0 %v427
  %491 = vmatpush1.msra.mxu0 %v426
  %492 = vmatprep.subr.mxu0 %v429
  %493 = vmatpush1.msra.mxu0 %v428
  %494 = vmatprep.subr.mxu0 %v431
  %495 = vmatpush1.msra.mxu0 %v430
  %496 = vmatprep.subr.mxu0 %v433
  %497 = vmatpush1.msra.mxu0 %v432
  %498 = vmatprep.subr.mxu0 %v435
  %499 = vmatpush1.msra.mxu0 %v434
  %500 = vmatprep.subr.mxu0 %v437
  %501 = vmatpush1.msra.mxu0 %v436
  %502 = vmatprep.subr.mxu0 %v439
  %503 = vmatpush1.msra.mxu0 %v438
  %504 = vmatprep.subr.mxu0 %v441
  %505 = vmatpush1.msra.mxu0 %v440
  %506 = vmatprep.subr.mxu0 %v443
  %507 = vmatpush1.msra.mxu0 %v442
  %508 = vmatprep.subr.mxu0 %v445
  %509 = vmatpush1.msra.mxu0 %v444
  %510 = vmatprep.subr.mxu0 %v447
  %511 = vmatpush1.msra.mxu0 %v446
  %512 = vmatprep.subr.mxu0 %v449
  %513 = vmatpush1.msra.mxu0 %v448
  %514 = vmatprep.subr.mxu0 %v451
  %515 = vmatpush1.msra.mxu0 %v450
  %516 = vmatprep.subr.mxu0 %v453
  %517 = vmatpush1.msra.mxu0 %v452
  %518 = vmatprep.subr.mxu0 %v455
  %519 = vmatpush1.msra.mxu0 %v454
  %520 = vmatprep.subr.mxu0 %v457
  %521 = vmatpush1.msra.mxu0 %v456
  %522 = vmatprep.subr.mxu0 %v459
  %523 = vmatpush1.msra.mxu0 %v458
  %524 = vmatprep.subr.mxu0 %v461
  %525 = vmatpush1.msra.mxu0 %v460
  %526 = vmatprep.subr.mxu0 %v463
  %527 = vmatpush1.msra.mxu0 %v462
  %528 = vmatprep.mubr.f32.mxu0 %v355
  %529 = vmatmul.mubr.f32.gmra.mrb[0].mxu0 %v353
  %v530 = vpop.f32.mrb[0].mxu0
  %v531 = vadd.f32 0.0, %v530
  %v532 = vpop.f32.mrb[0].mxu0
  %v533 = vadd.f32 0.0, %v532
  %534 = vmatprep.mubr.f32.mxu0 %v361
  %535 = vmatmul.mubr.f32.gmra.mrb[0].mxu0 %v359
  %v536 = vpop.f32.mrb[0].mxu0
  %v537 = vadd.f32 0.0, %v536
  %v538 = vpop.f32.mrb[0].mxu0
  %v539 = vadd.f32 0.0, %v538
  %540 = vmatprep.mubr.f32.mxu0 %v367
  %541 = vmatmul.mubr.f32.gmra.mrb[0].mxu0 %v365
  %v542 = vpop.f32.mrb[0].mxu0
  %v543 = vadd.f32 0.0, %v542
  %v544 = vpop.f32.mrb[0].mxu0
  %v545 = vadd.f32 0.0, %v544
  %546 = vmatprep.mubr.f32.mxu0 %v373
  %547 = vmatmul.mubr.f32.gmra.mrb[0].mxu0 %v371
  %v548 = vpop.f32.mrb[0].mxu0
  %v549 = vadd.f32 0.0, %v548
  %v550 = vpop.f32.mrb[0].mxu0
  %v551 = vadd.f32 0.0, %v550
  %552 = vmatprep.mubr.f32.mxu0 %v379
  %553 = vmatmul.mubr.f32.gmra.mrb[0].mxu0 %v377
  %v554 = vpop.f32.mrb[0].mxu0
  %v555 = vadd.f32 0.0, %v554
  %v556 = vpop.f32.mrb[0].mxu0
  %v557 = vadd.f32 0.0, %v556
  %558 = vmatprep.mubr.f32.mxu0 %v385
  %559 = vmatmul.mubr.f32.gmra.mrb[0].mxu0 %v383
  %v560 = vpop.f32.mrb[0].mxu0
  %v561 = vadd.f32 0.0, %v560
  %v562 = vpop.f32.mrb[0].mxu0
  %v563 = vadd.f32 0.0, %v562
  %564 = vmatprep.mubr.f32.mxu0 %v391
  %565 = vmatmul.mubr.f32.gmra.mrb[0].mxu0 %v389
  %v566 = vpop.f32.mrb[0].mxu0
  %v567 = vadd.f32 0.0, %v566
  %v568 = vpop.f32.mrb[0].mxu0
  %v569 = vadd.f32 0.0, %v568
  %570 = vmatprep.mubr.f32.mxu0 %v397
  %571 = vmatmul.mubr.f32.gmra.mrb[0].mxu0 %v395
  %v572 = vpop.f32.mrb[0].mxu0
  %v573 = vadd.f32 0.0, %v572
  %v574 = vpop.f32.mrb[0].mxu0
  %v575 = vadd.f32 0.0, %v574
  %576 = vdwg.mxu0
  %577 = vmatprep.subr.mxu0 %v190
  %578 = vmatpush1.msra.mxu0 %v189
  %579 = vmatprep.subr.mxu0 %v192
  %580 = vmatpush1.msra.mxu0 %v191
  %581 = vmatprep.subr.mxu0 %v194
  %582 = vmatpush1.msra.mxu0 %v193
  %583 = vmatprep.subr.mxu0 %v196
  %584 = vmatpush1.msra.mxu0 %v195
  %585 = vmatprep.subr.mxu0 %v198
  %586 = vmatpush1.msra.mxu0 %v197
  %587 = vmatprep.subr.mxu0 %v200
  %588 = vmatpush1.msra.mxu0 %v199
  %589 = vmatprep.subr.mxu0 %v202
  %590 = vmatpush1.msra.mxu0 %v201
  %591 = vmatprep.subr.mxu0 %v204
  %592 = vmatpush1.msra.mxu0 %v203
  %593 = vmatprep.subr.mxu0 %v206
  %594 = vmatpush1.msra.mxu0 %v205
  %595 = vmatprep.subr.mxu0 %v208
  %596 = vmatpush1.msra.mxu0 %v207
  %597 = vmatprep.subr.mxu0 %v210
  %598 = vmatpush1.msra.mxu0 %v209
  %599 = vmatprep.subr.mxu0 %v212
  %600 = vmatpush1.msra.mxu0 %v211
  %601 = vmatprep.subr.mxu0 %v214
  %602 = vmatpush1.msra.mxu0 %v213
  %603 = vmatprep.subr.mxu0 %v216
  %604 = vmatpush1.msra.mxu0 %v215
  %605 = vmatprep.subr.mxu0 %v218
  %606 = vmatpush1.msra.mxu0 %v217
  %607 = vmatprep.subr.mxu0 %v220
  %608 = vmatpush1.msra.mxu0 %v219
  %609 = vmatprep.subr.mxu0 %v222
  %610 = vmatpush1.msra.mxu0 %v221
  %611 = vmatprep.subr.mxu0 %v224
  %612 = vmatpush1.msra.mxu0 %v223
  %613 = vmatprep.subr.mxu0 %v226
  %614 = vmatpush1.msra.mxu0 %v225
  %615 = vmatprep.subr.mxu0 %v228
  %616 = vmatpush1.msra.mxu0 %v227
  %617 = vmatprep.subr.mxu0 %v230
  %618 = vmatpush1.msra.mxu0 %v229
  %619 = vmatprep.subr.mxu0 %v232
  %620 = vmatpush1.msra.mxu0 %v231
  %621 = vmatprep.subr.mxu0 %v234
  %622 = vmatpush1.msra.mxu0 %v233
  %623 = vmatprep.subr.mxu0 %v236
  %624 = vmatpush1.msra.mxu0 %v235
  %625 = vmatprep.subr.mxu0 %v238
  %626 = vmatpush1.msra.mxu0 %v237
  %627 = vmatprep.subr.mxu0 %v240
  %628 = vmatpush1.msra.mxu0 %v239
  %629 = vmatprep.subr.mxu0 %v242
  %630 = vmatpush1.msra.mxu0 %v241
  %631 = vmatprep.subr.mxu0 %v244
  %632 = vmatpush1.msra.mxu0 %v243
  %633 = vmatprep.subr.mxu0 %v246
  %634 = vmatpush1.msra.mxu0 %v245
  %635 = vmatprep.subr.mxu0 %v248
  %636 = vmatpush1.msra.mxu0 %v247
  %637 = vmatprep.subr.mxu0 %v250
  %638 = vmatpush1.msra.mxu0 %v249
  %639 = vmatprep.subr.mxu0 %v252
  %640 = vmatpush1.msra.mxu0 %v251
  %641 = vmatprep.mubr.f32.mxu0 %v145
  %642 = vmatmul.mubr.f32.gmra.mrb[0].mxu0 %v143
  %v643 = vpop.f32.mrb[0].mxu0
  %v644 = vadd.f32 %v531, %v643
  %v645 = vpop.f32.mrb[0].mxu0
  %v646 = vadd.f32 %v533, %v645
  %647 = vmatprep.mubr.f32.mxu0 %v151
  %648 = vmatmul.mubr.f32.gmra.mrb[0].mxu0 %v149
  %v649 = vpop.f32.mrb[0].mxu0
  %v650 = vadd.f32 %v537, %v649
  %v651 = vpop.f32.mrb[0].mxu0
  %v652 = vadd.f32 %v539, %v651
  %653 = vmatprep.mubr.f32.mxu0 %v157
  %654 = vmatmul.mubr.f32.gmra.mrb[0].mxu0 %v155
  %v655 = vpop.f32.mrb[0].mxu0
  %v656 = vadd.f32 %v543, %v655
  %v657 = vpop.f32.mrb[0].mxu0
  %v658 = vadd.f32 %v545, %v657
  %659 = vmatprep.mubr.f32.mxu0 %v163
  %660 = vmatmul.mubr.f32.gmra.mrb[0].mxu0 %v161
  %v661 = vpop.f32.mrb[0].mxu0
  %v662 = vadd.f32 %v549, %v661
  %v663 = vpop.f32.mrb[0].mxu0
  %v664 = vadd.f32 %v551, %v663
  %665 = vmatprep.mubr.f32.mxu0 %v169
  %666 = vmatmul.mubr.f32.gmra.mrb[0].mxu0 %v167
  %v667 = vpop.f32.mrb[0].mxu0
  %v668 = vadd.f32 %v555, %v667
  %v669 = vpop.f32.mrb[0].mxu0
  %v670 = vadd.f32 %v557, %v669
  %671 = vmatprep.mubr.f32.mxu0 %v175
  %672 = vmatmul.mubr.f32.gmra.mrb[0].mxu0 %v173
  %v673 = vpop.f32.mrb[0].mxu0
  %v674 = vadd.f32 %v561, %v673
  %v675 = vpop.f32.mrb[0].mxu0
  %v676 = vadd.f32 %v563, %v675
  %677 = vmatprep.mubr.f32.mxu0 %v181
  %678 = vmatmul.mubr.f32.gmra.mrb[0].mxu0 %v179
  %v679 = vpop.f32.mrb[0].mxu0
  %v680 = vadd.f32 %v567, %v679
  %v681 = vpop.f32.mrb[0].mxu0
  %v682 = vadd.f32 %v569, %v681
  %683 = vmatprep.mubr.f32.mxu0 %v187
  %684 = vmatmul.mubr.f32.gmra.mrb[0].mxu0 %v185
  %v685 = vpop.f32.mrb[0].mxu0
  %v686 = vadd.f32 %v573, %v685
  %v687 = vpop.f32.mrb[0].mxu0
  %v688 = vadd.f32 %v575, %v687
  %689 = vdwg.mxu0
  %s690 = scalar_lea.vmem %s1, 128
  %v691 = vld [vmem:[%s690] sm:$0xff]
  %v692 = vld [vmem:[%s690 + $0x8] sm:$0xff]
  %v693 = vld [vmem:[%s690 + $0x10] sm:$0xff]
  %v694 = vld [vmem:[%s690 + $0x18] sm:$0xff]
  %v695 = vld [vmem:[%s690 + $0x20] sm:$0xff]
  %v696 = vld [vmem:[%s690 + $0x28] sm:$0xff]
  %v697 = vld [vmem:[%s690 + $0x30] sm:$0xff]
  %v698 = vld [vmem:[%s690 + $0x38] sm:$0xff]
  %v700 = vsel %vm51, %v691, 0
  %v703 = vsel %vm51, %v692, 0
  %v706 = vsel %vm51, %v693, 0
  %v709 = vsel %vm51, %v694, 0
  %v712 = vsel %vm51, %v695, 0
  %v715 = vsel %vm51, %v696, 0
  %v718 = vsel %vm51, %v697, 0
  %v721 = vsel %vm51, %v698, 0
  %723 = vmatprep.subr.mxu0 %v36
  %724 = vmatpush1.msra.mxu0 %v35
  %725 = vmatprep.subr.mxu0 %v38
  %726 = vmatpush1.msra.mxu0 %v37
  %727 = vmatprep.subr.mxu0 %v40
  %728 = vmatpush1.msra.mxu0 %v39
  %729 = vmatprep.subr.mxu0 %v42
  %730 = vmatpush1.msra.mxu0 %v41
  %731 = vmatprep.subr.mxu0 0.0
  %732 = vmatpush1.msra.mxu0 0.0
  %733 = vmatprep.subr.mxu0 0.0
  %734 = vmatpush1.msra.mxu0 0.0
  %735 = vmatprep.subr.mxu0 0.0
  %736 = vmatpush1.msra.mxu0 0.0
  %737 = vmatprep.subr.mxu0 0.0
  %738 = vmatpush1.msra.mxu0 0.0
  %739 = vmatprep.subr.mxu0 0.0
  %740 = vmatpush1.msra.mxu0 0.0
  %741 = vmatprep.subr.mxu0 0.0
  %742 = vmatpush1.msra.mxu0 0.0
  %743 = vmatprep.subr.mxu0 0.0
  %744 = vmatpush1.msra.mxu0 0.0
  %745 = vmatprep.subr.mxu0 0.0
  %746 = vmatpush1.msra.mxu0 0.0
  %747 = vmatprep.subr.mxu0 0.0
  %748 = vmatpush1.msra.mxu0 0.0
  %749 = vmatprep.subr.mxu0 0.0
  %750 = vmatpush1.msra.mxu0 0.0
  %751 = vmatprep.subr.mxu0 0.0
  %752 = vmatpush1.msra.mxu0 0.0
  %753 = vmatprep.subr.mxu0 0.0
  %754 = vmatpush1.msra.mxu0 0.0
  %755 = vmatprep.subr.mxu0 0.0
  %756 = vmatpush1.msra.mxu0 0.0
  %757 = vmatprep.subr.mxu0 0.0
  %758 = vmatpush1.msra.mxu0 0.0
  %759 = vmatprep.subr.mxu0 0.0
  %760 = vmatpush1.msra.mxu0 0.0
  %761 = vmatprep.subr.mxu0 0.0
  %762 = vmatpush1.msra.mxu0 0.0
  %763 = vmatprep.subr.mxu0 0.0
  %764 = vmatpush1.msra.mxu0 0.0
  %765 = vmatprep.subr.mxu0 0.0
  %766 = vmatpush1.msra.mxu0 0.0
  %767 = vmatprep.subr.mxu0 0.0
  %768 = vmatpush1.msra.mxu0 0.0
  %769 = vmatprep.subr.mxu0 0.0
  %770 = vmatpush1.msra.mxu0 0.0
  %771 = vmatprep.subr.mxu0 0.0
  %772 = vmatpush1.msra.mxu0 0.0
  %773 = vmatprep.subr.mxu0 0.0
  %774 = vmatpush1.msra.mxu0 0.0
  %775 = vmatprep.subr.mxu0 0.0
  %776 = vmatpush1.msra.mxu0 0.0
  %777 = vmatprep.subr.mxu0 0.0
  %778 = vmatpush1.msra.mxu0 0.0
  %779 = vmatprep.subr.mxu0 0.0
  %780 = vmatpush1.msra.mxu0 0.0
  %781 = vmatprep.subr.mxu0 0.0
  %782 = vmatpush1.msra.mxu0 0.0
  %783 = vmatprep.subr.mxu0 0.0
  %784 = vmatpush1.msra.mxu0 0.0
  %785 = vmatprep.subr.mxu0 0.0
  %786 = vmatpush1.msra.mxu0 0.0
  %787 = vmatprep.mubr.f32.mxu0 0.0
  %788 = vmatmul.mubr.f32.gmra.mrb[0].mxu0 %v700
  %v789 = vpop.f32.mrb[0].mxu0
  %v790 = vadd.f32 0.0, %v789
  %v791 = vpop.f32.mrb[0].mxu0
  %v792 = vadd.f32 0.0, %v791
  %793 = vmatprep.mubr.f32.mxu0 0.0
  %794 = vmatmul.mubr.f32.gmra.mrb[0].mxu0 %v703
  %v795 = vpop.f32.mrb[0].mxu0
  %v796 = vadd.f32 0.0, %v795
  %v797 = vpop.f32.mrb[0].mxu0
  %v798 = vadd.f32 0.0, %v797
  %799 = vmatprep.mubr.f32.mxu0 0.0
  %800 = vmatmul.mubr.f32.gmra.mrb[0].mxu0 %v706
  %v801 = vpop.f32.mrb[0].mxu0
  %v802 = vadd.f32 0.0, %v801
  %v803 = vpop.f32.mrb[0].mxu0
  %v804 = vadd.f32 0.0, %v803
  %805 = vmatprep.mubr.f32.mxu0 0.0
  %806 = vmatmul.mubr.f32.gmra.mrb[0].mxu0 %v709
  %v807 = vpop.f32.mrb[0].mxu0
  %v808 = vadd.f32 0.0, %v807
  %v809 = vpop.f32.mrb[0].mxu0
  %v810 = vadd.f32 0.0, %v809
  %811 = vmatprep.mubr.f32.mxu0 0.0
  %812 = vmatmul.mubr.f32.gmra.mrb[0].mxu0 %v712
  %v813 = vpop.f32.mrb[0].mxu0
  %v814 = vadd.f32 0.0, %v813
  %v815 = vpop.f32.mrb[0].mxu0
  %v816 = vadd.f32 0.0, %v815
  %817 = vmatprep.mubr.f32.mxu0 0.0
  %818 = vmatmul.mubr.f32.gmra.mrb[0].mxu0 %v715
  %v819 = vpop.f32.mrb[0].mxu0
  %v820 = vadd.f32 0.0, %v819
  %v821 = vpop.f32.mrb[0].mxu0
  %v822 = vadd.f32 0.0, %v821
  %823 = vmatprep.mubr.f32.mxu0 0.0
  %824 = vmatmul.mubr.f32.gmra.mrb[0].mxu0 %v718
  %v825 = vpop.f32.mrb[0].mxu0
  %v826 = vadd.f32 0.0, %v825
  %v827 = vpop.f32.mrb[0].mxu0
  %v828 = vadd.f32 0.0, %v827
  %829 = vmatprep.mubr.f32.mxu0 0.0
  %830 = vmatmul.mubr.f32.gmra.mrb[0].mxu0 %v721
  %v831 = vpop.f32.mrb[0].mxu0
  %v832 = vadd.f32 0.0, %v831
  %v833 = vpop.f32.mrb[0].mxu0
  %v834 = vadd.f32 0.0, %v833
  %835 = vdwg.mxu0
  %s836 = scalar_lea.vmem %s2, 1024
  %v837 = vld [vmem:[%s836] sm:$0xff]
  %v838 = vld [vmem:[%s836 + $0x8] sm:$0xff]
  %v839 = vld [vmem:[%s836 + $0x10] sm:$0xff]
  %v840 = vld [vmem:[%s836 + $0x18] sm:$0xff]
  %v841 = vld [vmem:[%s836 + $0x20] sm:$0xff]
  %v842 = vld [vmem:[%s836 + $0x28] sm:$0xff]
  %v843 = vld [vmem:[%s836 + $0x30] sm:$0xff]
  %v844 = vld [vmem:[%s836 + $0x38] sm:$0xff]
  %v845 = vld [vmem:[%s836 + $0x40] sm:$0xff]
  %v846 = vld [vmem:[%s836 + $0x48] sm:$0xff]
  %v847 = vld [vmem:[%s836 + $0x50] sm:$0xff]
  %v848 = vld [vmem:[%s836 + $0x58] sm:$0xff]
  %v849 = vld [vmem:[%s836 + $0x60] sm:$0xff]
  %v850 = vld [vmem:[%s836 + $0x68] sm:$0xff]
  %v851 = vld [vmem:[%s836 + $0x70] sm:$0xff]
  %v852 = vld [vmem:[%s836 + $0x78] sm:$0xff]
  %v853 = vld [vmem:[%s836 + $0x80] sm:$0xff]
  %v854 = vld [vmem:[%s836 + $0x88] sm:$0xff]
  %v855 = vld [vmem:[%s836 + $0x90] sm:$0xff]
  %v856 = vld [vmem:[%s836 + $0x98] sm:$0xff]
  %v857 = vld [vmem:[%s836 + $0xa0] sm:$0xff]
  %v858 = vld [vmem:[%s836 + $0xa8] sm:$0xff]
  %v859 = vld [vmem:[%s836 + $0xb0] sm:$0xff]
  %v860 = vld [vmem:[%s836 + $0xb8] sm:$0xff]
  %v861 = vld [vmem:[%s836 + $0xc0] sm:$0xff]
  %v862 = vld [vmem:[%s836 + $0xc8] sm:$0xff]
  %v863 = vld [vmem:[%s836 + $0xd0] sm:$0xff]
  %v864 = vld [vmem:[%s836 + $0xd8] sm:$0xff]
  %v865 = vld [vmem:[%s836 + $0xe0] sm:$0xff]
  %v866 = vld [vmem:[%s836 + $0xe8] sm:$0xff]
  %v867 = vld [vmem:[%s836 + $0xf0] sm:$0xff]
  %v868 = vld [vmem:[%s836 + $0xf8] sm:$0xff]
  %v869 = vld [vmem:[%s836 + $0x100] sm:$0xff]
  %v870 = vld [vmem:[%s836 + $0x108] sm:$0xff]
  %v871 = vld [vmem:[%s836 + $0x110] sm:$0xff]
  %v872 = vld [vmem:[%s836 + $0x118] sm:$0xff]
  %v873 = vld [vmem:[%s836 + $0x120] sm:$0xff]
  %v874 = vld [vmem:[%s836 + $0x128] sm:$0xff]
  %v875 = vld [vmem:[%s836 + $0x130] sm:$0xff]
  %v876 = vld [vmem:[%s836 + $0x138] sm:$0xff]
  %v877 = vld [vmem:[%s836 + $0x140] sm:$0xff]
  %v878 = vld [vmem:[%s836 + $0x148] sm:$0xff]
  %v879 = vld [vmem:[%s836 + $0x150] sm:$0xff]
  %v880 = vld [vmem:[%s836 + $0x158] sm:$0xff]
  %v881 = vld [vmem:[%s836 + $0x160] sm:$0xff]
  %v882 = vld [vmem:[%s836 + $0x168] sm:$0xff]
  %v883 = vld [vmem:[%s836 + $0x170] sm:$0xff]
  %v884 = vld [vmem:[%s836 + $0x178] sm:$0xff]
  %v885 = vld [vmem:[%s836 + $0x180] sm:$0xff]
  %v886 = vld [vmem:[%s836 + $0x188] sm:$0xff]
  %v887 = vld [vmem:[%s836 + $0x190] sm:$0xff]
  %v888 = vld [vmem:[%s836 + $0x198] sm:$0xff]
  %v889 = vld [vmem:[%s836 + $0x1a0] sm:$0xff]
  %v890 = vld [vmem:[%s836 + $0x1a8] sm:$0xff]
  %v891 = vld [vmem:[%s836 + $0x1b0] sm:$0xff]
  %v892 = vld [vmem:[%s836 + $0x1b8] sm:$0xff]
  %v893 = vld [vmem:[%s836 + $0x1c0] sm:$0xff]
  %v894 = vld [vmem:[%s836 + $0x1c8] sm:$0xff]
  %v895 = vld [vmem:[%s836 + $0x1d0] sm:$0xff]
  %v896 = vld [vmem:[%s836 + $0x1d8] sm:$0xff]
  %v897 = vld [vmem:[%s836 + $0x1e0] sm:$0xff]
  %v898 = vld [vmem:[%s836 + $0x1e8] sm:$0xff]
  %v899 = vld [vmem:[%s836 + $0x1f0] sm:$0xff]
  %v900 = vld [vmem:[%s836 + $0x1f8] sm:$0xff]
  %901 = vmatprep.subr.mxu0 %v838
  %902 = vmatpush1.msra.mxu0 %v837
  %903 = vmatprep.subr.mxu0 %v840
  %904 = vmatpush1.msra.mxu0 %v839
  %905 = vmatprep.subr.mxu0 %v842
  %906 = vmatpush1.msra.mxu0 %v841
  %907 = vmatprep.subr.mxu0 %v844
  %908 = vmatpush1.msra.mxu0 %v843
  %909 = vmatprep.subr.mxu0 %v846
  %910 = vmatpush1.msra.mxu0 %v845
  %911 = vmatprep.subr.mxu0 %v848
  %912 = vmatpush1.msra.mxu0 %v847
  %913 = vmatprep.subr.mxu0 %v850
  %914 = vmatpush1.msra.mxu0 %v849
  %915 = vmatprep.subr.mxu0 %v852
  %916 = vmatpush1.msra.mxu0 %v851
  %917 = vmatprep.subr.mxu0 %v854
  %918 = vmatpush1.msra.mxu0 %v853
  %919 = vmatprep.subr.mxu0 %v856
  %920 = vmatpush1.msra.mxu0 %v855
  %921 = vmatprep.subr.mxu0 %v858
  %922 = vmatpush1.msra.mxu0 %v857
  %923 = vmatprep.subr.mxu0 %v860
  %924 = vmatpush1.msra.mxu0 %v859
  %925 = vmatprep.subr.mxu0 %v862
  %926 = vmatpush1.msra.mxu0 %v861
  %927 = vmatprep.subr.mxu0 %v864
  %928 = vmatpush1.msra.mxu0 %v863
  %929 = vmatprep.subr.mxu0 %v866
  %930 = vmatpush1.msra.mxu0 %v865
  %931 = vmatprep.subr.mxu0 %v868
  %932 = vmatpush1.msra.mxu0 %v867
  %933 = vmatprep.subr.mxu0 %v870
  %934 = vmatpush1.msra.mxu0 %v869
  %935 = vmatprep.subr.mxu0 %v872
  %936 = vmatpush1.msra.mxu0 %v871
  %937 = vmatprep.subr.mxu0 %v874
  %938 = vmatpush1.msra.mxu0 %v873
  %939 = vmatprep.subr.mxu0 %v876
  %940 = vmatpush1.msra.mxu0 %v875
  %941 = vmatprep.subr.mxu0 %v878
  %942 = vmatpush1.msra.mxu0 %v877
  %943 = vmatprep.subr.mxu0 %v880
  %944 = vmatpush1.msra.mxu0 %v879
  %945 = vmatprep.subr.mxu0 %v882
  %946 = vmatpush1.msra.mxu0 %v881
  %947 = vmatprep.subr.mxu0 %v884
  %948 = vmatpush1.msra.mxu0 %v883
  %949 = vmatprep.subr.mxu0 %v886
  %950 = vmatpush1.msra.mxu0 %v885
  %951 = vmatprep.subr.mxu0 %v888
  %952 = vmatpush1.msra.mxu0 %v887
  %953 = vmatprep.subr.mxu0 %v890
  %954 = vmatpush1.msra.mxu0 %v889
  %955 = vmatprep.subr.mxu0 %v892
  %956 = vmatpush1.msra.mxu0 %v891
  %957 = vmatprep.subr.mxu0 %v894
  %958 = vmatpush1.msra.mxu0 %v893
  %959 = vmatprep.subr.mxu0 %v896
  %960 = vmatpush1.msra.mxu0 %v895
  %961 = vmatprep.subr.mxu0 %v898
  %962 = vmatpush1.msra.mxu0 %v897
  %963 = vmatprep.subr.mxu0 %v900
  %964 = vmatpush1.msra.mxu0 %v899
  %965 = vmatprep.mubr.f32.mxu0 %v792
  %966 = vmatmul.mubr.f32.gmra.mrb[0].mxu0 %v790
  %v967 = vpop.f32.mrb[0].mxu0
  %v968 = vadd.f32 0.0, %v967
  %v969 = vpop.f32.mrb[0].mxu0
  %v970 = vadd.f32 0.0, %v969
  %971 = vmatprep.mubr.f32.mxu0 %v798
  %972 = vmatmul.mubr.f32.gmra.mrb[0].mxu0 %v796
  %v973 = vpop.f32.mrb[0].mxu0
  %v974 = vadd.f32 0.0, %v973
  %v975 = vpop.f32.mrb[0].mxu0
  %v976 = vadd.f32 0.0, %v975
  %977 = vmatprep.mubr.f32.mxu0 %v804
  %978 = vmatmul.mubr.f32.gmra.mrb[0].mxu0 %v802
  %v979 = vpop.f32.mrb[0].mxu0
  %v980 = vadd.f32 0.0, %v979
  %v981 = vpop.f32.mrb[0].mxu0
  %v982 = vadd.f32 0.0, %v981
  %983 = vmatprep.mubr.f32.mxu0 %v810
  %984 = vmatmul.mubr.f32.gmra.mrb[0].mxu0 %v808
  %v985 = vpop.f32.mrb[0].mxu0
  %v986 = vadd.f32 0.0, %v985
  %v987 = vpop.f32.mrb[0].mxu0
  %v988 = vadd.f32 0.0, %v987
  %989 = vmatprep.mubr.f32.mxu0 %v816
  %990 = vmatmul.mubr.f32.gmra.mrb[0].mxu0 %v814
  %v991 = vpop.f32.mrb[0].mxu0
  %v992 = vadd.f32 0.0, %v991
  %v993 = vpop.f32.mrb[0].mxu0
  %v994 = vadd.f32 0.0, %v993
  %995 = vmatprep.mubr.f32.mxu0 %v822
  %996 = vmatmul.mubr.f32.gmra.mrb[0].mxu0 %v820
  %v997 = vpop.f32.mrb[0].mxu0
  %v998 = vadd.f32 0.0, %v997
  %v999 = vpop.f32.mrb[0].mxu0
  %v1000 = vadd.f32 0.0, %v999
  %1001 = vmatprep.mubr.f32.mxu0 %v828
  %1002 = vmatmul.mubr.f32.gmra.mrb[0].mxu0 %v826
  %v1003 = vpop.f32.mrb[0].mxu0
  %v1004 = vadd.f32 0.0, %v1003
  %v1005 = vpop.f32.mrb[0].mxu0
  %v1006 = vadd.f32 0.0, %v1005
  %1007 = vmatprep.mubr.f32.mxu0 %v834
  %1008 = vmatmul.mubr.f32.gmra.mrb[0].mxu0 %v832
  %v1009 = vpop.f32.mrb[0].mxu0
  %v1010 = vadd.f32 0.0, %v1009
  %v1011 = vpop.f32.mrb[0].mxu0
  %v1012 = vadd.f32 0.0, %v1011
  %1013 = vdwg.mxu0
  %v1014 = vadd.f32 %v644, %v968
  %v1015 = vadd.f32 %v646, %v970
  %v1016 = vadd.f32 %v650, %v974
  %v1017 = vadd.f32 %v652, %v976
  %v1018 = vadd.f32 %v656, %v980
  %v1019 = vadd.f32 %v658, %v982
  %v1020 = vadd.f32 %v662, %v986
  %v1021 = vadd.f32 %v664, %v988
  %v1022 = vadd.f32 %v668, %v992
  %v1023 = vadd.f32 %v670, %v994
  %v1024 = vadd.f32 %v674, %v998
  %v1025 = vadd.f32 %v676, %v1000
  %v1026 = vadd.f32 %v680, %v1004
  %v1027 = vadd.f32 %v682, %v1006
  %v1028 = vadd.f32 %v686, %v1010
  %v1029 = vadd.f32 %v688, %v1012
  %v1030 = vld [vmem:[%s3] sm:$0x3]
  %v1032 = vlaneseq
  %v1033 = vshrl.u32 %v1032, 7
  %v1034 = vsub.s32 0, %v1033
  %v1035 = vrot.slane %v1030, %v1034
  %v1036 = vlaneseq
  %v1037 = vshrl.u32 %v1036, 7
  %v1038 = vsub.s32 1, %v1037
  %v1039 = vrot.slane %v1030, %v1038
  %v1042 = vadd.f32 %v1014, %v1035
  %v1043 = vadd.f32 %v1015, %v1039
  %v1044 = vadd.f32 %v1016, %v1035
  %v1045 = vadd.f32 %v1017, %v1039
  %v1046 = vadd.f32 %v1018, %v1035
  %v1047 = vadd.f32 %v1019, %v1039
  %v1048 = vadd.f32 %v1020, %v1035
  %v1049 = vadd.f32 %v1021, %v1039
  %v1050 = vadd.f32 %v1022, %v1035
  %v1051 = vadd.f32 %v1023, %v1039
  %v1052 = vadd.f32 %v1024, %v1035
  %v1053 = vadd.f32 %v1025, %v1039
  %v1054 = vadd.f32 %v1026, %v1035
  %v1055 = vadd.f32 %v1027, %v1039
  %v1056 = vadd.f32 %v1028, %v1035
  %v1057 = vadd.f32 %v1029, %v1039
  %v1058 = vadd.f32 %v1042, %v1044
  %v1059 = vadd.f32 %v1058, %v1046
  %v1060 = vadd.f32 %v1059, %v1048
  %v1061 = vadd.f32 %v1060, %v1050
  %v1062 = vadd.f32 %v1061, %v1052
  %v1063 = vadd.f32 %v1062, %v1054
  %v1064 = vadd.f32 %v1063, %v1056
  %v1065 = vrot.slane %v1064, 4
  %v1066 = vadd.f32 %v1064, %v1065
  %v1067 = vrot.slane %v1066, 2
  %v1068 = vadd.f32 %v1066, %v1067
  %v1069 = vrot.slane %v1068, 1
  %v1070 = vadd.f32 %v1068, %v1069
  %v1071 = vadd.f32 %v1043, %v1045
  %v1072 = vadd.f32 %v1071, %v1047
  %v1073 = vadd.f32 %v1072, %v1049
  %v1074 = vadd.f32 %v1073, %v1051
  %v1075 = vadd.f32 %v1074, %v1053
  %v1076 = vadd.f32 %v1075, %v1055
  %v1077 = vadd.f32 %v1076, %v1057
  %v1078 = vrot.slane %v1077, 4
  %v1079 = vadd.f32 %v1077, %v1078
  %v1080 = vrot.slane %v1079, 2
  %v1081 = vadd.f32 %v1079, %v1080
  %v1082 = vrot.slane %v1081, 1
  %v1083 = vadd.f32 %v1081, %v1082
  %v1084 = vld [vmem:[%s4] sm:$0xff]
  %v1085 = vld [vmem:[%s4 + $0x8] sm:$0xff]
  %v1086 = vld [vmem:[%s4 + $0x10] sm:$0xff]
  %v1087 = vld [vmem:[%s4 + $0x18] sm:$0xff]
  %v1088 = vld [vmem:[%s4 + $0x20] sm:$0xff]
  %v1089 = vld [vmem:[%s4 + $0x28] sm:$0xff]
  %v1090 = vld [vmem:[%s4 + $0x30] sm:$0xff]
  %v1091 = vld [vmem:[%s4 + $0x38] sm:$0xff]
  %v1092 = vld [vmem:[%s4 + $0x40] sm:$0xff]
  %v1093 = vld [vmem:[%s4 + $0x48] sm:$0xff]
  %v1094 = vld [vmem:[%s4 + $0x50] sm:$0xff]
  %v1095 = vld [vmem:[%s4 + $0x58] sm:$0xff]
  %v1096 = vld [vmem:[%s4 + $0x60] sm:$0xff]
  %v1097 = vld [vmem:[%s4 + $0x68] sm:$0xff]
  %v1098 = vld [vmem:[%s4 + $0x70] sm:$0xff]
  %v1099 = vld [vmem:[%s4 + $0x78] sm:$0xff]
  %v1100 = vld [vmem:[%s4 + $0x80] sm:$0xff]
  %v1101 = vld [vmem:[%s4 + $0x88] sm:$0xff]
  %v1102 = vld [vmem:[%s4 + $0x90] sm:$0xff]
  %v1103 = vld [vmem:[%s4 + $0x98] sm:$0xff]
  %v1104 = vld [vmem:[%s4 + $0xa0] sm:$0xff]
  %v1105 = vld [vmem:[%s4 + $0xa8] sm:$0xff]
  %v1106 = vld [vmem:[%s4 + $0xb0] sm:$0xff]
  %v1107 = vld [vmem:[%s4 + $0xb8] sm:$0xff]
  %v1108 = vld [vmem:[%s4 + $0xc0] sm:$0xff]
  %v1109 = vld [vmem:[%s4 + $0xc8] sm:$0xff]
  %v1110 = vld [vmem:[%s4 + $0xd0] sm:$0xff]
  %v1111 = vld [vmem:[%s4 + $0xd8] sm:$0xff]
  %v1112 = vld [vmem:[%s4 + $0xe0] sm:$0xff]
  %v1113 = vld [vmem:[%s4 + $0xe8] sm:$0xff]
  %v1114 = vld [vmem:[%s4 + $0xf0] sm:$0xff]
  %v1115 = vld [vmem:[%s4 + $0xf8] sm:$0xff]
  %v1116 = vld [vmem:[%s4 + $0x100] sm:$0xff]
  %v1117 = vld [vmem:[%s4 + $0x108] sm:$0xff]
  %v1118 = vld [vmem:[%s4 + $0x110] sm:$0xff]
  %v1119 = vld [vmem:[%s4 + $0x118] sm:$0xff]
  %v1120 = vld [vmem:[%s4 + $0x120] sm:$0xff]
  %v1121 = vld [vmem:[%s4 + $0x128] sm:$0xff]
  %v1122 = vld [vmem:[%s4 + $0x130] sm:$0xff]
  %v1123 = vld [vmem:[%s4 + $0x138] sm:$0xff]
  %v1124 = vld [vmem:[%s4 + $0x140] sm:$0xff]
  %v1125 = vld [vmem:[%s4 + $0x148] sm:$0xff]
  %v1126 = vld [vmem:[%s4 + $0x150] sm:$0xff]
  %v1127 = vld [vmem:[%s4 + $0x158] sm:$0xff]
  %v1128 = vld [vmem:[%s4 + $0x160] sm:$0xff]
  %v1129 = vld [vmem:[%s4 + $0x168] sm:$0xff]
  %v1130 = vld [vmem:[%s4 + $0x170] sm:$0xff]
  %v1131 = vld [vmem:[%s4 + $0x178] sm:$0xff]
  %v1132 = vld [vmem:[%s4 + $0x180] sm:$0xff]
  %v1133 = vld [vmem:[%s4 + $0x188] sm:$0xff]
  %v1134 = vld [vmem:[%s4 + $0x190] sm:$0xff]
  %v1135 = vld [vmem:[%s4 + $0x198] sm:$0xff]
  %v1136 = vld [vmem:[%s4 + $0x1a0] sm:$0xff]
  %v1137 = vld [vmem:[%s4 + $0x1a8] sm:$0xff]
  %v1138 = vld [vmem:[%s4 + $0x1b0] sm:$0xff]
  %v1139 = vld [vmem:[%s4 + $0x1b8] sm:$0xff]
  %v1140 = vld [vmem:[%s4 + $0x1c0] sm:$0xff]
  %v1141 = vld [vmem:[%s4 + $0x1c8] sm:$0xff]
  %v1142 = vld [vmem:[%s4 + $0x1d0] sm:$0xff]
  %v1143 = vld [vmem:[%s4 + $0x1d8] sm:$0xff]
  %v1144 = vld [vmem:[%s4 + $0x1e0] sm:$0xff]
  %v1145 = vld [vmem:[%s4 + $0x1e8] sm:$0xff]
  %v1146 = vld [vmem:[%s4 + $0x1f0] sm:$0xff]
  %v1147 = vld [vmem:[%s4 + $0x1f8] sm:$0xff]
  %1148 = vmatprep.subr.mxu0 %v1085
  %1149 = vmatpush1.msra.mxu0 %v1084
  %1150 = vmatprep.subr.mxu0 %v1087
  %1151 = vmatpush1.msra.mxu0 %v1086
  %1152 = vmatprep.subr.mxu0 %v1089
  %1153 = vmatpush1.msra.mxu0 %v1088
  %1154 = vmatprep.subr.mxu0 %v1091
  %1155 = vmatpush1.msra.mxu0 %v1090
  %1156 = vmatprep.subr.mxu0 %v1093
  %1157 = vmatpush1.msra.mxu0 %v1092
  %1158 = vmatprep.subr.mxu0 %v1095
  %1159 = vmatpush1.msra.mxu0 %v1094
  %1160 = vmatprep.subr.mxu0 %v1097
  %1161 = vmatpush1.msra.mxu0 %v1096
  %1162 = vmatprep.subr.mxu0 %v1099
  %1163 = vmatpush1.msra.mxu0 %v1098
  %1164 = vmatprep.subr.mxu0 %v1101
  %1165 = vmatpush1.msra.mxu0 %v1100
  %1166 = vmatprep.subr.mxu0 %v1103
  %1167 = vmatpush1.msra.mxu0 %v1102
  %1168 = vmatprep.subr.mxu0 %v1105
  %1169 = vmatpush1.msra.mxu0 %v1104
  %1170 = vmatprep.subr.mxu0 %v1107
  %1171 = vmatpush1.msra.mxu0 %v1106
  %1172 = vmatprep.subr.mxu0 %v1109
  %1173 = vmatpush1.msra.mxu0 %v1108
  %1174 = vmatprep.subr.mxu0 %v1111
  %1175 = vmatpush1.msra.mxu0 %v1110
  %1176 = vmatprep.subr.mxu0 %v1113
  %1177 = vmatpush1.msra.mxu0 %v1112
  %1178 = vmatprep.subr.mxu0 %v1115
  %1179 = vmatpush1.msra.mxu0 %v1114
  %1180 = vmatprep.subr.mxu0 %v1117
  %1181 = vmatpush1.msra.mxu0 %v1116
  %1182 = vmatprep.subr.mxu0 %v1119
  %1183 = vmatpush1.msra.mxu0 %v1118
  %1184 = vmatprep.subr.mxu0 %v1121
  %1185 = vmatpush1.msra.mxu0 %v1120
  %1186 = vmatprep.subr.mxu0 %v1123
  %1187 = vmatpush1.msra.mxu0 %v1122
  %1188 = vmatprep.subr.mxu0 %v1125
  %1189 = vmatpush1.msra.mxu0 %v1124
  %1190 = vmatprep.subr.mxu0 %v1127
  %1191 = vmatpush1.msra.mxu0 %v1126
  %1192 = vmatprep.subr.mxu0 %v1129
  %1193 = vmatpush1.msra.mxu0 %v1128
  %1194 = vmatprep.subr.mxu0 %v1131
  %1195 = vmatpush1.msra.mxu0 %v1130
  %1196 = vmatprep.subr.mxu0 %v1133
  %1197 = vmatpush1.msra.mxu0 %v1132
  %1198 = vmatprep.subr.mxu0 %v1135
  %1199 = vmatpush1.msra.mxu0 %v1134
  %1200 = vmatprep.subr.mxu0 %v1137
  %1201 = vmatpush1.msra.mxu0 %v1136
  %1202 = vmatprep.subr.mxu0 %v1139
  %1203 = vmatpush1.msra.mxu0 %v1138
  %1204 = vmatprep.subr.mxu0 %v1141
  %1205 = vmatpush1.msra.mxu0 %v1140
  %1206 = vmatprep.subr.mxu0 %v1143
  %1207 = vmatpush1.msra.mxu0 %v1142
  %1208 = vmatprep.subr.mxu0 %v1145
  %1209 = vmatpush1.msra.mxu0 %v1144
  %1210 = vmatprep.subr.mxu0 %v1147
  %1211 = vmatpush1.msra.mxu0 %v1146
  %1212 = vmatprep.mubr.f32.mxu0 %v1083
  %1213 = vmatmul.mubr.f32.gmra.mrb[0].mxu0 %v1070
  %v1214 = vpop.f32.mrb[0].mxu0
  %v1215 = vadd.f32 0.0, %v1214
  %v1216 = vpop.f32.mrb[0].mxu0
  %v1217 = vadd.f32 0.0, %v1216
  %1218 = vdwg.mxu0
  %v1219 = vmul.f32 %v1215, 0.00048828125
  %v1220 = vmul.f32 %v1217, 0.00048828125
  %v1221 = vlaneseq
  %v1222 = vshrl.u32 %v1221, 7
  %v1223 = vsub.s32 0, %v1222
  %v1224 = vrot.slane %v1219, %v1223
  %v1225 = vlaneseq
  %v1226 = vshrl.u32 %v1225, 7
  %v1227 = vsub.s32 0, %v1226
  %v1228 = vrot.slane %v1220, %v1227
  %v1229 = vsub.f32 %v1042, %v1224
  %v1230 = vsub.f32 %v1043, %v1228
  %v1231 = vsub.f32 %v1044, %v1224
  %v1232 = vsub.f32 %v1045, %v1228
  %v1233 = vsub.f32 %v1046, %v1224
  %v1234 = vsub.f32 %v1047, %v1228
  %v1235 = vsub.f32 %v1048, %v1224
  %v1236 = vsub.f32 %v1049, %v1228
  %v1237 = vsub.f32 %v1050, %v1224
  %v1238 = vsub.f32 %v1051, %v1228
  %v1239 = vsub.f32 %v1052, %v1224
  %v1240 = vsub.f32 %v1053, %v1228
  %v1241 = vsub.f32 %v1054, %v1224
  %v1242 = vsub.f32 %v1055, %v1228
  %v1243 = vsub.f32 %v1056, %v1224
  %v1244 = vsub.f32 %v1057, %v1228
  %v1245 = vmul.f32 %v1229, %v1229
  %v1246 = vmul.f32 %v1230, %v1230
  %v1247 = vmul.f32 %v1231, %v1231
  %v1248 = vmul.f32 %v1232, %v1232
  %v1249 = vmul.f32 %v1233, %v1233
  %v1250 = vmul.f32 %v1234, %v1234
  %v1251 = vmul.f32 %v1235, %v1235
  %v1252 = vmul.f32 %v1236, %v1236
  %v1253 = vmul.f32 %v1237, %v1237
  %v1254 = vmul.f32 %v1238, %v1238
  %v1255 = vmul.f32 %v1239, %v1239
  %v1256 = vmul.f32 %v1240, %v1240
  %v1257 = vmul.f32 %v1241, %v1241
  %v1258 = vmul.f32 %v1242, %v1242
  %v1259 = vmul.f32 %v1243, %v1243
  %v1260 = vmul.f32 %v1244, %v1244
  %v1261 = vadd.f32 %v1245, %v1247
  %v1262 = vadd.f32 %v1261, %v1249
  %v1263 = vadd.f32 %v1262, %v1251
  %v1264 = vadd.f32 %v1263, %v1253
  %v1265 = vadd.f32 %v1264, %v1255
  %v1266 = vadd.f32 %v1265, %v1257
  %v1267 = vadd.f32 %v1266, %v1259
  %v1268 = vrot.slane %v1267, 4
  %v1269 = vadd.f32 %v1267, %v1268
  %v1270 = vrot.slane %v1269, 2
  %v1271 = vadd.f32 %v1269, %v1270
  %v1272 = vrot.slane %v1271, 1
  %v1273 = vadd.f32 %v1271, %v1272
  %v1274 = vadd.f32 %v1246, %v1248
  %v1275 = vadd.f32 %v1274, %v1250
  %v1276 = vadd.f32 %v1275, %v1252
  %v1277 = vadd.f32 %v1276, %v1254
  %v1278 = vadd.f32 %v1277, %v1256
  %v1279 = vadd.f32 %v1278, %v1258
  %v1280 = vadd.f32 %v1279, %v1260
  %v1281 = vrot.slane %v1280, 4
  %v1282 = vadd.f32 %v1280, %v1281
  %v1283 = vrot.slane %v1282, 2
  %v1284 = vadd.f32 %v1282, %v1283
  %v1285 = vrot.slane %v1284, 1
  %v1286 = vadd.f32 %v1284, %v1285
  %1287 = vmatprep.subr.mxu0 %v1085
  %1288 = vmatpush1.msra.mxu0 %v1084
  %1289 = vmatprep.subr.mxu0 %v1087
  %1290 = vmatpush1.msra.mxu0 %v1086
  %1291 = vmatprep.subr.mxu0 %v1089
  %1292 = vmatpush1.msra.mxu0 %v1088
  %1293 = vmatprep.subr.mxu0 %v1091
  %1294 = vmatpush1.msra.mxu0 %v1090
  %1295 = vmatprep.subr.mxu0 %v1093
  %1296 = vmatpush1.msra.mxu0 %v1092
  %1297 = vmatprep.subr.mxu0 %v1095
  %1298 = vmatpush1.msra.mxu0 %v1094
  %1299 = vmatprep.subr.mxu0 %v1097
  %1300 = vmatpush1.msra.mxu0 %v1096
  %1301 = vmatprep.subr.mxu0 %v1099
  %1302 = vmatpush1.msra.mxu0 %v1098
  %1303 = vmatprep.subr.mxu0 %v1101
  %1304 = vmatpush1.msra.mxu0 %v1100
  %1305 = vmatprep.subr.mxu0 %v1103
  %1306 = vmatpush1.msra.mxu0 %v1102
  %1307 = vmatprep.subr.mxu0 %v1105
  %1308 = vmatpush1.msra.mxu0 %v1104
  %1309 = vmatprep.subr.mxu0 %v1107
  %1310 = vmatpush1.msra.mxu0 %v1106
  %1311 = vmatprep.subr.mxu0 %v1109
  %1312 = vmatpush1.msra.mxu0 %v1108
  %1313 = vmatprep.subr.mxu0 %v1111
  %1314 = vmatpush1.msra.mxu0 %v1110
  %1315 = vmatprep.subr.mxu0 %v1113
  %1316 = vmatpush1.msra.mxu0 %v1112
  %1317 = vmatprep.subr.mxu0 %v1115
  %1318 = vmatpush1.msra.mxu0 %v1114
  %1319 = vmatprep.subr.mxu0 %v1117
  %1320 = vmatpush1.msra.mxu0 %v1116
  %1321 = vmatprep.subr.mxu0 %v1119
  %1322 = vmatpush1.msra.mxu0 %v1118
  %1323 = vmatprep.subr.mxu0 %v1121
  %1324 = vmatpush1.msra.mxu0 %v1120
  %1325 = vmatprep.subr.mxu0 %v1123
  %1326 = vmatpush1.msra.mxu0 %v1122
  %1327 = vmatprep.subr.mxu0 %v1125
  %1328 = vmatpush1.msra.mxu0 %v1124
  %1329 = vmatprep.subr.mxu0 %v1127
  %1330 = vmatpush1.msra.mxu0 %v1126
  %1331 = vmatprep.subr.mxu0 %v1129
  %1332 = vmatpush1.msra.mxu0 %v1128
  %1333 = vmatprep.subr.mxu0 %v1131
  %1334 = vmatpush1.msra.mxu0 %v1130
  %1335 = vmatprep.subr.mxu0 %v1133
  %1336 = vmatpush1.msra.mxu0 %v1132
  %1337 = vmatprep.subr.mxu0 %v1135
  %1338 = vmatpush1.msra.mxu0 %v1134
  %1339 = vmatprep.subr.mxu0 %v1137
  %1340 = vmatpush1.msra.mxu0 %v1136
  %1341 = vmatprep.subr.mxu0 %v1139
  %1342 = vmatpush1.msra.mxu0 %v1138
  %1343 = vmatprep.subr.mxu0 %v1141
  %1344 = vmatpush1.msra.mxu0 %v1140
  %1345 = vmatprep.subr.mxu0 %v1143
  %1346 = vmatpush1.msra.mxu0 %v1142
  %1347 = vmatprep.subr.mxu0 %v1145
  %1348 = vmatpush1.msra.mxu0 %v1144
  %1349 = vmatprep.subr.mxu0 %v1147
  %1350 = vmatpush1.msra.mxu0 %v1146
  %1351 = vmatprep.mubr.f32.mxu0 %v1286
  %1352 = vmatmul.mubr.f32.gmra.mrb[0].mxu0 %v1273
  %v1353 = vpop.f32.mrb[0].mxu0
  %v1354 = vadd.f32 0.0, %v1353
  %v1355 = vpop.f32.mrb[0].mxu0
  %v1356 = vadd.f32 0.0, %v1355
  %1357 = vdwg.mxu0
  %v1358 = vmul.f32 %v1354, 0.00048828125
  %v1359 = vmul.f32 %v1356, 0.00048828125
  %v1360 = vld [vmem:[%s5] sm:$0x3]
  %v1361 = vadd.f32 %v1358, 1e-05
  %v1362 = vadd.f32 %v1359, 1e-05
  %v1363 = vrsqrt.pop %v1361
  %v1364 = vrsqrt.pop %v1362
  %v1367 = vcombine.low %v1363, %v1364
  %v1369 = vunpack.c.l.s4 1966171168
  %v1370 = vunpack.c.0.s8 %v1369
  %v1371 = vlaneseq
  %v1372 = vshrl.u32 %v1371, 7
  %v1373 = vsub.s32 %v1370, %v1372
  %v1374 = vrot.slane %v1367, %v1373
  %v1376 = vunpack.c.l.s4 1966171168
  %v1377 = vunpack.c.0.s8 %v1376
  %v1378 = vlaneseq
  %v1379 = vshrl.u32 %v1378, 7
  %v1380 = vsub.s32 %v1377, %v1379
  %v1381 = vrot.slane %v1374, %v1380
  %v1383 = vmul.f32 %v1360, %v1381
  %v1385 = vlaneseq
  %v1386 = vshrl.u32 %v1385, 7
  %v1387 = vsub.s32 0, %v1386
  %v1388 = vrot.slane %v1383, %v1387
  %v1389 = vlaneseq
  %v1390 = vshrl.u32 %v1389, 7
  %v1391 = vsub.s32 1, %v1390
  %v1392 = vrot.slane %v1383, %v1391
  %v1395 = vmul.f32 %v1229, %v1388
  %v1396 = vmul.f32 %v1230, %v1392
  %v1397 = vmul.f32 %v1231, %v1388
  %v1398 = vmul.f32 %v1232, %v1392
  %v1399 = vmul.f32 %v1233, %v1388
  %v1400 = vmul.f32 %v1234, %v1392
  %v1401 = vmul.f32 %v1235, %v1388
  %v1402 = vmul.f32 %v1236, %v1392
  %v1403 = vmul.f32 %v1237, %v1388
  %v1404 = vmul.f32 %v1238, %v1392
  %v1405 = vmul.f32 %v1239, %v1388
  %v1406 = vmul.f32 %v1240, %v1392
  %v1407 = vmul.f32 %v1241, %v1388
  %v1408 = vmul.f32 %v1242, %v1392
  %v1409 = vmul.f32 %v1243, %v1388
  %v1410 = vmul.f32 %v1244, %v1392
  %v1411 = vld [vmem:[%s6] sm:$0x3]
  %v1413 = vlaneseq
  %v1414 = vshrl.u32 %v1413, 7
  %v1415 = vsub.s32 0, %v1414
  %v1416 = vrot.slane %v1411, %v1415
  %v1417 = vlaneseq
  %v1418 = vshrl.u32 %v1417, 7
  %v1419 = vsub.s32 1, %v1418
  %v1420 = vrot.slane %v1411, %v1419
  %v1423 = vadd.f32 %v1395, %v1416
  %v1424 = vadd.f32 %v1396, %v1420
  %v1425 = vadd.f32 %v1397, %v1416
  %v1426 = vadd.f32 %v1398, %v1420
  %v1427 = vadd.f32 %v1399, %v1416
  %v1428 = vadd.f32 %v1400, %v1420
  %v1429 = vadd.f32 %v1401, %v1416
  %v1430 = vadd.f32 %v1402, %v1420
  %v1431 = vadd.f32 %v1403, %v1416
  %v1432 = vadd.f32 %v1404, %v1420
  %v1433 = vadd.f32 %v1405, %v1416
  %v1434 = vadd.f32 %v1406, %v1420
  %v1435 = vadd.f32 %v1407, %v1416
  %v1436 = vadd.f32 %v1408, %v1420
  %v1437 = vadd.f32 %v1409, %v1416
  %v1438 = vadd.f32 %v1410, %v1420
  %vm1439 = vcmp.gt.f32.partialorder %v1423, 0.0
  %vm1440 = vcmp.gt.f32.partialorder %v1424, 0.0
  %vm1441 = vcmp.gt.f32.partialorder %v1425, 0.0
  %vm1442 = vcmp.gt.f32.partialorder %v1426, 0.0
  %vm1443 = vcmp.gt.f32.partialorder %v1427, 0.0
  %vm1444 = vcmp.gt.f32.partialorder %v1428, 0.0
  %vm1445 = vcmp.gt.f32.partialorder %v1429, 0.0
  %vm1446 = vcmp.gt.f32.partialorder %v1430, 0.0
  %vm1447 = vcmp.gt.f32.partialorder %v1431, 0.0
  %vm1448 = vcmp.gt.f32.partialorder %v1432, 0.0
  %vm1449 = vcmp.gt.f32.partialorder %v1433, 0.0
  %vm1450 = vcmp.gt.f32.partialorder %v1434, 0.0
  %vm1451 = vcmp.gt.f32.partialorder %v1435, 0.0
  %vm1452 = vcmp.gt.f32.partialorder %v1436, 0.0
  %vm1453 = vcmp.gt.f32.partialorder %v1437, 0.0
  %vm1454 = vcmp.gt.f32.partialorder %v1438, 0.0
  %v1455 = vmul.f32 %v1423, 0.2
  %v1456 = vmul.f32 %v1424, 0.2
  %v1457 = vmul.f32 %v1425, 0.2
  %v1458 = vmul.f32 %v1426, 0.2
  %v1459 = vmul.f32 %v1427, 0.2
  %v1460 = vmul.f32 %v1428, 0.2
  %v1461 = vmul.f32 %v1429, 0.2
  %v1462 = vmul.f32 %v1430, 0.2
  %v1463 = vmul.f32 %v1431, 0.2
  %v1464 = vmul.f32 %v1432, 0.2
  %v1465 = vmul.f32 %v1433, 0.2
  %v1466 = vmul.f32 %v1434, 0.2
  %v1467 = vmul.f32 %v1435, 0.2
  %v1468 = vmul.f32 %v1436, 0.2
  %v1469 = vmul.f32 %v1437, 0.2
  %v1470 = vmul.f32 %v1438, 0.2
  %v1471 = vsel %vm1439, %v1423, %v1455
  %v1472 = vsel %vm1440, %v1424, %v1456
  %v1473 = vsel %vm1441, %v1425, %v1457
  %v1474 = vsel %vm1442, %v1426, %v1458
  %v1475 = vsel %vm1443, %v1427, %v1459
  %v1476 = vsel %vm1444, %v1428, %v1460
  %v1477 = vsel %vm1445, %v1429, %v1461
  %v1478 = vsel %vm1446, %v1430, %v1462
  %v1479 = vsel %vm1447, %v1431, %v1463
  %v1480 = vsel %vm1448, %v1432, %v1464
  %v1481 = vsel %vm1449, %v1433, %v1465
  %v1482 = vsel %vm1450, %v1434, %v1466
  %v1483 = vsel %vm1451, %v1435, %v1467
  %v1484 = vsel %vm1452, %v1436, %v1468
  %v1485 = vsel %vm1453, %v1437, %v1469
  %v1486 = vsel %vm1454, %v1438, %v1470
  %v1487 = vld [vmem:[%s7] sm:$0xff]
  %v1488 = vld [vmem:[%s7 + $0x8] sm:$0xff]
  %v1489 = vld [vmem:[%s7 + $0x10] sm:$0xff]
  %v1490 = vld [vmem:[%s7 + $0x18] sm:$0xff]
  %v1491 = vld [vmem:[%s7 + $0x20] sm:$0xff]
  %v1492 = vld [vmem:[%s7 + $0x28] sm:$0xff]
  %v1493 = vld [vmem:[%s7 + $0x30] sm:$0xff]
  %v1494 = vld [vmem:[%s7 + $0x38] sm:$0xff]
  %v1495 = vld [vmem:[%s7 + $0x40] sm:$0xff]
  %v1496 = vld [vmem:[%s7 + $0x48] sm:$0xff]
  %v1497 = vld [vmem:[%s7 + $0x50] sm:$0xff]
  %v1498 = vld [vmem:[%s7 + $0x58] sm:$0xff]
  %v1499 = vld [vmem:[%s7 + $0x60] sm:$0xff]
  %v1500 = vld [vmem:[%s7 + $0x68] sm:$0xff]
  %v1501 = vld [vmem:[%s7 + $0x70] sm:$0xff]
  %v1502 = vld [vmem:[%s7 + $0x78] sm:$0xff]
  %vm1503 = vcmask 523264
  %v1505 = vsel %vm1503, %v1487, 0
  %v1508 = vsel %vm1503, %v1488, 0
  %v1511 = vsel %vm1503, %v1489, 0
  %v1514 = vsel %vm1503, %v1490, 0
  %v1517 = vsel %vm1503, %v1491, 0
  %v1520 = vsel %vm1503, %v1492, 0
  %v1523 = vsel %vm1503, %v1493, 0
  %v1526 = vsel %vm1503, %v1494, 0
  %v1529 = vsel %vm1503, %v1495, 0
  %v1532 = vsel %vm1503, %v1496, 0
  %v1535 = vsel %vm1503, %v1497, 0
  %v1538 = vsel %vm1503, %v1498, 0
  %v1541 = vsel %vm1503, %v1499, 0
  %v1544 = vsel %vm1503, %v1500, 0
  %v1547 = vsel %vm1503, %v1501, 0
  %v1550 = vsel %vm1503, %v1502, 0
  %1552 = vmatprep.subr.mxu0 %v1472
  %1553 = vmatpush1.msra.mxu0 %v1471
  %1554 = vmatprep.subr.mxu0 %v1474
  %1555 = vmatpush1.msra.mxu0 %v1473
  %1556 = vmatprep.subr.mxu0 %v1476
  %1557 = vmatpush1.msra.mxu0 %v1475
  %1558 = vmatprep.subr.mxu0 %v1478
  %1559 = vmatpush1.msra.mxu0 %v1477
  %1560 = vmatprep.subr.mxu0 %v1480
  %1561 = vmatpush1.msra.mxu0 %v1479
  %1562 = vmatprep.subr.mxu0 %v1482
  %1563 = vmatpush1.msra.mxu0 %v1481
  %1564 = vmatprep.subr.mxu0 %v1484
  %1565 = vmatpush1.msra.mxu0 %v1483
  %1566 = vmatprep.subr.mxu0 %v1486
  %1567 = vmatpush1.msra.mxu0 %v1485
  %1568 = vmatprep.subr.mxu0 0.0
  %1569 = vmatpush1.msra.mxu0 0.0
  %1570 = vmatprep.subr.mxu0 0.0
  %1571 = vmatpush1.msra.mxu0 0.0
  %1572 = vmatprep.subr.mxu0 0.0
  %1573 = vmatpush1.msra.mxu0 0.0
  %1574 = vmatprep.subr.mxu0 0.0
  %1575 = vmatpush1.msra.mxu0 0.0
  %1576 = vmatprep.subr.mxu0 0.0
  %1577 = vmatpush1.msra.mxu0 0.0
  %1578 = vmatprep.subr.mxu0 0.0
  %1579 = vmatpush1.msra.mxu0 0.0
  %1580 = vmatprep.subr.mxu0 0.0
  %1581 = vmatpush1.msra.mxu0 0.0
  %1582 = vmatprep.subr.mxu0 0.0
  %1583 = vmatpush1.msra.mxu0 0.0
  %1584 = vmatprep.subr.mxu0 0.0
  %1585 = vmatpush1.msra.mxu0 0.0
  %1586 = vmatprep.subr.mxu0 0.0
  %1587 = vmatpush1.msra.mxu0 0.0
  %1588 = vmatprep.subr.mxu0 0.0
  %1589 = vmatpush1.msra.mxu0 0.0
  %1590 = vmatprep.subr.mxu0 0.0
  %1591 = vmatpush1.msra.mxu0 0.0
  %1592 = vmatprep.subr.mxu0 0.0
  %1593 = vmatpush1.msra.mxu0 0.0
  %1594 = vmatprep.subr.mxu0 0.0
  %1595 = vmatpush1.msra.mxu0 0.0
  %1596 = vmatprep.subr.mxu0 0.0
  %1597 = vmatpush1.msra.mxu0 0.0
  %1598 = vmatprep.subr.mxu0 0.0
  %1599 = vmatpush1.msra.mxu0 0.0
  %1600 = vmatprep.subr.mxu0 0.0
  %1601 = vmatpush1.msra.mxu0 0.0
  %1602 = vmatprep.subr.mxu0 0.0
  %1603 = vmatpush1.msra.mxu0 0.0
  %1604 = vmatprep.subr.mxu0 0.0
  %1605 = vmatpush1.msra.mxu0 0.0
  %1606 = vmatprep.subr.mxu0 0.0
  %1607 = vmatpush1.msra.mxu0 0.0
  %1608 = vmatprep.subr.mxu0 0.0
  %1609 = vmatpush1.msra.mxu0 0.0
  %1610 = vmatprep.subr.mxu0 0.0
  %1611 = vmatpush1.msra.mxu0 0.0
  %1612 = vmatprep.subr.mxu0 0.0
  %1613 = vmatpush1.msra.mxu0 0.0
  %1614 = vmatprep.subr.mxu0 0.0
  %1615 = vmatpush1.msra.mxu0 0.0
  %1616 = vmatprep.mubr.f32.mxu0 0.0
  %1617 = vmatmul.mubr.f32.gmra.mrb[0].mxu0 %v1505
  %v1618 = vpop.f32.mrb[0].mxu0
  %v1619 = vadd.f32 0.0, %v1618
  %v1620 = vpop.f32.mrb[0].mxu0
  %v1621 = vadd.f32 0.0, %v1620
  %1622 = vmatprep.mubr.f32.mxu0 0.0
  %1623 = vmatmul.mubr.f32.gmra.mrb[0].mxu0 %v1508
  %v1624 = vpop.f32.mrb[0].mxu0
  %v1625 = vadd.f32 0.0, %v1624
  %v1626 = vpop.f32.mrb[0].mxu0
  %v1627 = vadd.f32 0.0, %v1626
  %1628 = vmatprep.mubr.f32.mxu0 0.0
  %1629 = vmatmul.mubr.f32.gmra.mrb[0].mxu0 %v1511
  %v1630 = vpop.f32.mrb[0].mxu0
  %v1631 = vadd.f32 0.0, %v1630
  %v1632 = vpop.f32.mrb[0].mxu0
  %v1633 = vadd.f32 0.0, %v1632
  %1634 = vmatprep.mubr.f32.mxu0 0.0
  %1635 = vmatmul.mubr.f32.gmra.mrb[0].mxu0 %v1514
  %v1636 = vpop.f32.mrb[0].mxu0
  %v1637 = vadd.f32 0.0, %v1636
  %v1638 = vpop.f32.mrb[0].mxu0
  %v1639 = vadd.f32 0.0, %v1638
  %1640 = vmatprep.mubr.f32.mxu0 0.0
  %1641 = vmatmul.mubr.f32.gmra.mrb[0].mxu0 %v1517
  %v1642 = vpop.f32.mrb[0].mxu0
  %v1643 = vadd.f32 0.0, %v1642
  %v1644 = vpop.f32.mrb[0].mxu0
  %v1645 = vadd.f32 0.0, %v1644
  %1646 = vmatprep.mubr.f32.mxu0 0.0
  %1647 = vmatmul.mubr.f32.gmra.mrb[0].mxu0 %v1520
  %v1648 = vpop.f32.mrb[0].mxu0
  %v1649 = vadd.f32 0.0, %v1648
  %v1650 = vpop.f32.mrb[0].mxu0
  %v1651 = vadd.f32 0.0, %v1650
  %1652 = vmatprep.mubr.f32.mxu0 0.0
  %1653 = vmatmul.mubr.f32.gmra.mrb[0].mxu0 %v1523
  %v1654 = vpop.f32.mrb[0].mxu0
  %v1655 = vadd.f32 0.0, %v1654
  %v1656 = vpop.f32.mrb[0].mxu0
  %v1657 = vadd.f32 0.0, %v1656
  %1658 = vmatprep.mubr.f32.mxu0 0.0
  %1659 = vmatmul.mubr.f32.gmra.mrb[0].mxu0 %v1526
  %v1660 = vpop.f32.mrb[0].mxu0
  %v1661 = vadd.f32 0.0, %v1660
  %v1662 = vpop.f32.mrb[0].mxu0
  %v1663 = vadd.f32 0.0, %v1662
  %1664 = vmatprep.mubr.f32.mxu0 0.0
  %1665 = vmatmul.mubr.f32.gmra.mrb[0].mxu0 %v1529
  %v1666 = vpop.f32.mrb[0].mxu0
  %v1667 = vadd.f32 0.0, %v1666
  %v1668 = vpop.f32.mrb[0].mxu0
  %v1669 = vadd.f32 0.0, %v1668
  %1670 = vmatprep.mubr.f32.mxu0 0.0
  %1671 = vmatmul.mubr.f32.gmra.mrb[0].mxu0 %v1532
  %v1672 = vpop.f32.mrb[0].mxu0
  %v1673 = vadd.f32 0.0, %v1672
  %v1674 = vpop.f32.mrb[0].mxu0
  %v1675 = vadd.f32 0.0, %v1674
  %1676 = vmatprep.mubr.f32.mxu0 0.0
  %1677 = vmatmul.mubr.f32.gmra.mrb[0].mxu0 %v1535
  %v1678 = vpop.f32.mrb[0].mxu0
  %v1679 = vadd.f32 0.0, %v1678
  %v1680 = vpop.f32.mrb[0].mxu0
  %v1681 = vadd.f32 0.0, %v1680
  %1682 = vmatprep.mubr.f32.mxu0 0.0
  %1683 = vmatmul.mubr.f32.gmra.mrb[0].mxu0 %v1538
  %v1684 = vpop.f32.mrb[0].mxu0
  %v1685 = vadd.f32 0.0, %v1684
  %v1686 = vpop.f32.mrb[0].mxu0
  %v1687 = vadd.f32 0.0, %v1686
  %1688 = vmatprep.mubr.f32.mxu0 0.0
  %1689 = vmatmul.mubr.f32.gmra.mrb[0].mxu0 %v1541
  %v1690 = vpop.f32.mrb[0].mxu0
  %v1691 = vadd.f32 0.0, %v1690
  %v1692 = vpop.f32.mrb[0].mxu0
  %v1693 = vadd.f32 0.0, %v1692
  %1694 = vmatprep.mubr.f32.mxu0 0.0
  %1695 = vmatmul.mubr.f32.gmra.mrb[0].mxu0 %v1544
  %v1696 = vpop.f32.mrb[0].mxu0
  %v1697 = vadd.f32 0.0, %v1696
  %v1698 = vpop.f32.mrb[0].mxu0
  %v1699 = vadd.f32 0.0, %v1698
  %1700 = vmatprep.mubr.f32.mxu0 0.0
  %1701 = vmatmul.mubr.f32.gmra.mrb[0].mxu0 %v1547
  %v1702 = vpop.f32.mrb[0].mxu0
  %v1703 = vadd.f32 0.0, %v1702
  %v1704 = vpop.f32.mrb[0].mxu0
  %v1705 = vadd.f32 0.0, %v1704
  %1706 = vmatprep.mubr.f32.mxu0 0.0
  %1707 = vmatmul.mubr.f32.gmra.mrb[0].mxu0 %v1550
  %v1708 = vpop.f32.mrb[0].mxu0
  %v1709 = vadd.f32 0.0, %v1708
  %v1710 = vpop.f32.mrb[0].mxu0
  %v1711 = vadd.f32 0.0, %v1710
  %1712 = vdwg.mxu0
  %v1713 = vld [vmem:[%s8] sm:$0xff]
  %v1714 = vld [vmem:[%s8 + $0x8] sm:$0xff]
  %v1715 = vld [vmem:[%s8 + $0x10] sm:$0xff]
  %v1716 = vld [vmem:[%s8 + $0x18] sm:$0xff]
  %v1717 = vld [vmem:[%s8 + $0x20] sm:$0xff]
  %v1718 = vld [vmem:[%s8 + $0x28] sm:$0xff]
  %v1719 = vld [vmem:[%s8 + $0x30] sm:$0xff]
  %v1720 = vld [vmem:[%s8 + $0x38] sm:$0xff]
  %v1721 = vld [vmem:[%s8 + $0x40] sm:$0xff]
  %v1722 = vld [vmem:[%s8 + $0x48] sm:$0xff]
  %v1723 = vld [vmem:[%s8 + $0x50] sm:$0xff]
  %v1724 = vld [vmem:[%s8 + $0x58] sm:$0xff]
  %v1725 = vld [vmem:[%s8 + $0x60] sm:$0xff]
  %v1726 = vld [vmem:[%s8 + $0x68] sm:$0xff]
  %v1727 = vld [vmem:[%s8 + $0x70] sm:$0xff]
  %v1728 = vld [vmem:[%s8 + $0x78] sm:$0xff]
  %v1729 = vld [vmem:[%s8 + $0x80] sm:$0xff]
  %v1730 = vld [vmem:[%s8 + $0x88] sm:$0xff]
  %v1731 = vld [vmem:[%s8 + $0x90] sm:$0xff]
  %v1732 = vld [vmem:[%s8 + $0x98] sm:$0xff]
  %v1733 = vld [vmem:[%s8 + $0xa0] sm:$0xff]
  %v1734 = vld [vmem:[%s8 + $0xa8] sm:$0xff]
  %v1735 = vld [vmem:[%s8 + $0xb0] sm:$0xff]
  %v1736 = vld [vmem:[%s8 + $0xb8] sm:$0xff]
  %v1737 = vld [vmem:[%s8 + $0xc0] sm:$0xff]
  %v1738 = vld [vmem:[%s8 + $0xc8] sm:$0xff]
  %v1739 = vld [vmem:[%s8 + $0xd0] sm:$0xff]
  %v1740 = vld [vmem:[%s8 + $0xd8] sm:$0xff]
  %v1741 = vld [vmem:[%s8 + $0xe0] sm:$0xff]
  %v1742 = vld [vmem:[%s8 + $0xe8] sm:$0xff]
  %v1743 = vld [vmem:[%s8 + $0xf0] sm:$0xff]
  %v1744 = vld [vmem:[%s8 + $0xf8] sm:$0xff]
  %v1745 = vld [vmem:[%s8 + $0x100] sm:$0xff]
  %v1746 = vld [vmem:[%s8 + $0x108] sm:$0xff]
  %v1747 = vld [vmem:[%s8 + $0x110] sm:$0xff]
  %v1748 = vld [vmem:[%s8 + $0x118] sm:$0xff]
  %v1749 = vld [vmem:[%s8 + $0x120] sm:$0xff]
  %v1750 = vld [vmem:[%s8 + $0x128] sm:$0xff]
  %v1751 = vld [vmem:[%s8 + $0x130] sm:$0xff]
  %v1752 = vld [vmem:[%s8 + $0x138] sm:$0xff]
  %v1753 = vld [vmem:[%s8 + $0x140] sm:$0xff]
  %v1754 = vld [vmem:[%s8 + $0x148] sm:$0xff]
  %v1755 = vld [vmem:[%s8 + $0x150] sm:$0xff]
  %v1756 = vld [vmem:[%s8 + $0x158] sm:$0xff]
  %v1757 = vld [vmem:[%s8 + $0x160] sm:$0xff]
  %v1758 = vld [vmem:[%s8 + $0x168] sm:$0xff]
  %v1759 = vld [vmem:[%s8 + $0x170] sm:$0xff]
  %v1760 = vld [vmem:[%s8 + $0x178] sm:$0xff]
  %v1761 = vld [vmem:[%s8 + $0x180] sm:$0xff]
  %v1762 = vld [vmem:[%s8 + $0x188] sm:$0xff]
  %v1763 = vld [vmem:[%s8 + $0x190] sm:$0xff]
  %v1764 = vld [vmem:[%s8 + $0x198] sm:$0xff]
  %v1765 = vld [vmem:[%s8 + $0x1a0] sm:$0xff]
  %v1766 = vld [vmem:[%s8 + $0x1a8] sm:$0xff]
  %v1767 = vld [vmem:[%s8 + $0x1b0] sm:$0xff]
  %v1768 = vld [vmem:[%s8 + $0x1b8] sm:$0xff]
  %v1769 = vld [vmem:[%s8 + $0x1c0] sm:$0xff]
  %v1770 = vld [vmem:[%s8 + $0x1c8] sm:$0xff]
  %v1771 = vld [vmem:[%s8 + $0x1d0] sm:$0xff]
  %v1772 = vld [vmem:[%s8 + $0x1d8] sm:$0xff]
  %v1773 = vld [vmem:[%s8 + $0x1e0] sm:$0xff]
  %v1774 = vld [vmem:[%s8 + $0x1e8] sm:$0xff]
  %v1775 = vld [vmem:[%s8 + $0x1f0] sm:$0xff]
  %v1776 = vld [vmem:[%s8 + $0x1f8] sm:$0xff]
  %s1777 = scalar_lea.vmem %s7, 128
  %v1778 = vld [vmem:[%s1777] sm:$0xff]
  %v1779 = vld [vmem:[%s1777 + $0x8] sm:$0xff]
  %v1780 = vld [vmem:[%s1777 + $0x10] sm:$0xff]
  %v1781 = vld [vmem:[%s1777 + $0x18] sm:$0xff]
  %v1782 = vld [vmem:[%s1777 + $0x20] sm:$0xff]
  %v1783 = vld [vmem:[%s1777 + $0x28] sm:$0xff]
  %v1784 = vld [vmem:[%s1777 + $0x30] sm:$0xff]
  %v1785 = vld [vmem:[%s1777 + $0x38] sm:$0xff]
  %v1786 = vld [vmem:[%s1777 + $0x40] sm:$0xff]
  %v1787 = vld [vmem:[%s1777 + $0x48] sm:$0xff]
  %v1788 = vld [vmem:[%s1777 + $0x50] sm:$0xff]
  %v1789 = vld [vmem:[%s1777 + $0x58] sm:$0xff]
  %v1790 = vld [vmem:[%s1777 + $0x60] sm:$0xff]
  %v1791 = vld [vmem:[%s1777 + $0x68] sm:$0xff]
  %v1792 = vld [vmem:[%s1777 + $0x70] sm:$0xff]
  %v1793 = vld [vmem:[%s1777 + $0x78] sm:$0xff]
  %v1795 = vsel %vm1503, %v1778, 0
  %v1798 = vsel %vm1503, %v1779, 0
  %v1801 = vsel %vm1503, %v1780, 0
  %v1804 = vsel %vm1503, %v1781, 0
  %v1807 = vsel %vm1503, %v1782, 0
  %v1810 = vsel %vm1503, %v1783, 0
  %v1813 = vsel %vm1503, %v1784, 0
  %v1816 = vsel %vm1503, %v1785, 0
  %v1819 = vsel %vm1503, %v1786, 0
  %v1822 = vsel %vm1503, %v1787, 0
  %v1825 = vsel %vm1503, %v1788, 0
  %v1828 = vsel %vm1503, %v1789, 0
  %v1831 = vsel %vm1503, %v1790, 0
  %v1834 = vsel %vm1503, %v1791, 0
  %v1837 = vsel %vm1503, %v1792, 0
  %v1840 = vsel %vm1503, %v1793, 0
  %1842 = vmatprep.subr.mxu0 %v1472
  %1843 = vmatpush1.msra.mxu0 %v1471
  %1844 = vmatprep.subr.mxu0 %v1474
  %1845 = vmatpush1.msra.mxu0 %v1473
  %1846 = vmatprep.subr.mxu0 %v1476
  %1847 = vmatpush1.msra.mxu0 %v1475
  %1848 = vmatprep.subr.mxu0 %v1478
  %1849 = vmatpush1.msra.mxu0 %v1477
  %1850 = vmatprep.subr.mxu0 %v1480
  %1851 = vmatpush1.msra.mxu0 %v1479
  %1852 = vmatprep.subr.mxu0 %v1482
  %1853 = vmatpush1.msra.mxu0 %v1481
  %1854 = vmatprep.subr.mxu0 %v1484
  %1855 = vmatpush1.msra.mxu0 %v1483
  %1856 = vmatprep.subr.mxu0 %v1486
  %1857 = vmatpush1.msra.mxu0 %v1485
  %1858 = vmatprep.subr.mxu0 0.0
  %1859 = vmatpush1.msra.mxu0 0.0
  %1860 = vmatprep.subr.mxu0 0.0
  %1861 = vmatpush1.msra.mxu0 0.0
  %1862 = vmatprep.subr.mxu0 0.0
  %1863 = vmatpush1.msra.mxu0 0.0
  %1864 = vmatprep.subr.mxu0 0.0
  %1865 = vmatpush1.msra.mxu0 0.0
  %1866 = vmatprep.subr.mxu0 0.0
  %1867 = vmatpush1.msra.mxu0 0.0
  %1868 = vmatprep.subr.mxu0 0.0
  %1869 = vmatpush1.msra.mxu0 0.0
  %1870 = vmatprep.subr.mxu0 0.0
  %1871 = vmatpush1.msra.mxu0 0.0
  %1872 = vmatprep.subr.mxu0 0.0
  %1873 = vmatpush1.msra.mxu0 0.0
  %1874 = vmatprep.subr.mxu0 0.0
  %1875 = vmatpush1.msra.mxu0 0.0
  %1876 = vmatprep.subr.mxu0 0.0
  %1877 = vmatpush1.msra.mxu0 0.0
  %1878 = vmatprep.subr.mxu0 0.0
  %1879 = vmatpush1.msra.mxu0 0.0
  %1880 = vmatprep.subr.mxu0 0.0
  %1881 = vmatpush1.msra.mxu0 0.0
  %1882 = vmatprep.subr.mxu0 0.0
  %1883 = vmatpush1.msra.mxu0 0.0
  %1884 = vmatprep.subr.mxu0 0.0
  %1885 = vmatpush1.msra.mxu0 0.0
  %1886 = vmatprep.subr.mxu0 0.0
  %1887 = vmatpush1.msra.mxu0 0.0
  %1888 = vmatprep.subr.mxu0 0.0
  %1889 = vmatpush1.msra.mxu0 0.0
  %1890 = vmatprep.subr.mxu0 0.0
  %1891 = vmatpush1.msra.mxu0 0.0
  %1892 = vmatprep.subr.mxu0 0.0
  %1893 = vmatpush1.msra.mxu0 0.0
  %1894 = vmatprep.subr.mxu0 0.0
  %1895 = vmatpush1.msra.mxu0 0.0
  %1896 = vmatprep.subr.mxu0 0.0
  %1897 = vmatpush1.msra.mxu0 0.0
  %1898 = vmatprep.subr.mxu0 0.0
  %1899 = vmatpush1.msra.mxu0 0.0
  %1900 = vmatprep.subr.mxu0 0.0
  %1901 = vmatpush1.msra.mxu0 0.0
  %1902 = vmatprep.subr.mxu0 0.0
  %1903 = vmatpush1.msra.mxu0 0.0
  %1904 = vmatprep.subr.mxu0 0.0
  %1905 = vmatpush1.msra.mxu0 0.0
  %1906 = vmatprep.mubr.f32.mxu0 0.0
  %1907 = vmatmul.mubr.f32.gmra.mrb[0].mxu0 %v1795
  %v1908 = vpop.f32.mrb[0].mxu0
  %v1909 = vadd.f32 0.0, %v1908
  %v1910 = vpop.f32.mrb[0].mxu0
  %v1911 = vadd.f32 0.0, %v1910
  %1912 = vmatprep.mubr.f32.mxu0 0.0
  %1913 = vmatmul.mubr.f32.gmra.mrb[0].mxu0 %v1798
  %v1914 = vpop.f32.mrb[0].mxu0
  %v1915 = vadd.f32 0.0, %v1914
  %v1916 = vpop.f32.mrb[0].mxu0
  %v1917 = vadd.f32 0.0, %v1916
  %1918 = vmatprep.mubr.f32.mxu0 0.0
  %1919 = vmatmul.mubr.f32.gmra.mrb[0].mxu0 %v1801
  %v1920 = vpop.f32.mrb[0].mxu0
  %v1921 = vadd.f32 0.0, %v1920
  %v1922 = vpop.f32.mrb[0].mxu0
  %v1923 = vadd.f32 0.0, %v1922
  %1924 = vmatprep.mubr.f32.mxu0 0.0
  %1925 = vmatmul.mubr.f32.gmra.mrb[0].mxu0 %v1804
  %v1926 = vpop.f32.mrb[0].mxu0
  %v1927 = vadd.f32 0.0, %v1926
  %v1928 = vpop.f32.mrb[0].mxu0
  %v1929 = vadd.f32 0.0, %v1928
  %1930 = vmatprep.mubr.f32.mxu0 0.0
  %1931 = vmatmul.mubr.f32.gmra.mrb[0].mxu0 %v1807
  %v1932 = vpop.f32.mrb[0].mxu0
  %v1933 = vadd.f32 0.0, %v1932
  %v1934 = vpop.f32.mrb[0].mxu0
  %v1935 = vadd.f32 0.0, %v1934
  %1936 = vmatprep.mubr.f32.mxu0 0.0
  %1937 = vmatmul.mubr.f32.gmra.mrb[0].mxu0 %v1810
  %v1938 = vpop.f32.mrb[0].mxu0
  %v1939 = vadd.f32 0.0, %v1938
  %v1940 = vpop.f32.mrb[0].mxu0
  %v1941 = vadd.f32 0.0, %v1940
  %1942 = vmatprep.mubr.f32.mxu0 0.0
  %1943 = vmatmul.mubr.f32.gmra.mrb[0].mxu0 %v1813
  %v1944 = vpop.f32.mrb[0].mxu0
  %v1945 = vadd.f32 0.0, %v1944
  %v1946 = vpop.f32.mrb[0].mxu0
  %v1947 = vadd.f32 0.0, %v1946
  %1948 = vmatprep.mubr.f32.mxu0 0.0
  %1949 = vmatmul.mubr.f32.gmra.mrb[0].mxu0 %v1816
  %v1950 = vpop.f32.mrb[0].mxu0
  %v1951 = vadd.f32 0.0, %v1950
  %v1952 = vpop.f32.mrb[0].mxu0
  %v1953 = vadd.f32 0.0, %v1952
  %1954 = vmatprep.mubr.f32.mxu0 0.0
  %1955 = vmatmul.mubr.f32.gmra.mrb[0].mxu0 %v1819
  %v1956 = vpop.f32.mrb[0].mxu0
  %v1957 = vadd.f32 0.0, %v1956
  %v1958 = vpop.f32.mrb[0].mxu0
  %v1959 = vadd.f32 0.0, %v1958
  %1960 = vmatprep.mubr.f32.mxu0 0.0
  %1961 = vmatmul.mubr.f32.gmra.mrb[0].mxu0 %v1822
  %v1962 = vpop.f32.mrb[0].mxu0
  %v1963 = vadd.f32 0.0, %v1962
  %v1964 = vpop.f32.mrb[0].mxu0
  %v1965 = vadd.f32 0.0, %v1964
  %1966 = vmatprep.mubr.f32.mxu0 0.0
  %1967 = vmatmul.mubr.f32.gmra.mrb[0].mxu0 %v1825
  %v1968 = vpop.f32.mrb[0].mxu0
  %v1969 = vadd.f32 0.0, %v1968
  %v1970 = vpop.f32.mrb[0].mxu0
  %v1971 = vadd.f32 0.0, %v1970
  %1972 = vmatprep.mubr.f32.mxu0 0.0
  %1973 = vmatmul.mubr.f32.gmra.mrb[0].mxu0 %v1828
  %v1974 = vpop.f32.mrb[0].mxu0
  %v1975 = vadd.f32 0.0, %v1974
  %v1976 = vpop.f32.mrb[0].mxu0
  %v1977 = vadd.f32 0.0, %v1976
  %1978 = vmatprep.mubr.f32.mxu0 0.0
  %1979 = vmatmul.mubr.f32.gmra.mrb[0].mxu0 %v1831
  %v1980 = vpop.f32.mrb[0].mxu0
  %v1981 = vadd.f32 0.0, %v1980
  %v1982 = vpop.f32.mrb[0].mxu0
  %v1983 = vadd.f32 0.0, %v1982
  %1984 = vmatprep.mubr.f32.mxu0 0.0
  %1985 = vmatmul.mubr.f32.gmra.mrb[0].mxu0 %v1834
  %v1986 = vpop.f32.mrb[0].mxu0
  %v1987 = vadd.f32 0.0, %v1986
  %v1988 = vpop.f32.mrb[0].mxu0
  %v1989 = vadd.f32 0.0, %v1988
  %1990 = vmatprep.mubr.f32.mxu0 0.0
  %1991 = vmatmul.mubr.f32.gmra.mrb[0].mxu0 %v1837
  %v1992 = vpop.f32.mrb[0].mxu0
  %v1993 = vadd.f32 0.0, %v1992
  %v1994 = vpop.f32.mrb[0].mxu0
  %v1995 = vadd.f32 0.0, %v1994
  %1996 = vmatprep.mubr.f32.mxu0 0.0
  %1997 = vmatmul.mubr.f32.gmra.mrb[0].mxu0 %v1840
  %v1998 = vpop.f32.mrb[0].mxu0
  %v1999 = vadd.f32 0.0, %v1998
  %v2000 = vpop.f32.mrb[0].mxu0
  %v2001 = vadd.f32 0.0, %v2000
  %2002 = vdwg.mxu0
  %s2003 = scalar_lea.vmem %s8, 512
  %v2004 = vld [vmem:[%s2003] sm:$0xff]
  %v2005 = vld [vmem:[%s2003 + $0x8] sm:$0xff]
  %v2006 = vld [vmem:[%s2003 + $0x10] sm:$0xff]
  %v2007 = vld [vmem:[%s2003 + $0x18] sm:$0xff]
  %v2008 = vld [vmem:[%s2003 + $0x20] sm:$0xff]
  %v2009 = vld [vmem:[%s2003 + $0x28] sm:$0xff]
  %v2010 = vld [vmem:[%s2003 + $0x30] sm:$0xff]
  %v2011 = vld [vmem:[%s2003 + $0x38] sm:$0xff]
  %v2012 = vld [vmem:[%s2003 + $0x40] sm:$0xff]
  %v2013 = vld [vmem:[%s2003 + $0x48] sm:$0xff]
  %v2014 = vld [vmem:[%s2003 + $0x50] sm:$0xff]
  %v2015 = vld [vmem:[%s2003 + $0x58] sm:$0xff]
  %v2016 = vld [vmem:[%s2003 + $0x60] sm:$0xff]
  %v2017 = vld [vmem:[%s2003 + $0x68] sm:$0xff]
  %v2018 = vld [vmem:[%s2003 + $0x70] sm:$0xff]
  %v2019 = vld [vmem:[%s2003 + $0x78] sm:$0xff]
  %v2020 = vld [vmem:[%s2003 + $0x80] sm:$0xff]
  %v2021 = vld [vmem:[%s2003 + $0x88] sm:$0xff]
  %v2022 = vld [vmem:[%s2003 + $0x90] sm:$0xff]
  %v2023 = vld [vmem:[%s2003 + $0x98] sm:$0xff]
  %v2024 = vld [vmem:[%s2003 + $0xa0] sm:$0xff]
  %v2025 = vld [vmem:[%s2003 + $0xa8] sm:$0xff]
  %v2026 = vld [vmem:[%s2003 + $0xb0] sm:$0xff]
  %v2027 = vld [vmem:[%s2003 + $0xb8] sm:$0xff]
  %v2028 = vld [vmem:[%s2003 + $0xc0] sm:$0xff]
  %v2029 = vld [vmem:[%s2003 + $0xc8] sm:$0xff]
  %v2030 = vld [vmem:[%s2003 + $0xd0] sm:$0xff]
  %v2031 = vld [vmem:[%s2003 + $0xd8] sm:$0xff]
  %v2032 = vld [vmem:[%s2003 + $0xe0] sm:$0xff]
  %v2033 = vld [vmem:[%s2003 + $0xe8] sm:$0xff]
  %v2034 = vld [vmem:[%s2003 + $0xf0] sm:$0xff]
  %v2035 = vld [vmem:[%s2003 + $0xf8] sm:$0xff]
  %v2036 = vld [vmem:[%s2003 + $0x100] sm:$0xff]
  %v2037 = vld [vmem:[%s2003 + $0x108] sm:$0xff]
  %v2038 = vld [vmem:[%s2003 + $0x110] sm:$0xff]
  %v2039 = vld [vmem:[%s2003 + $0x118] sm:$0xff]
  %v2040 = vld [vmem:[%s2003 + $0x120] sm:$0xff]
  %v2041 = vld [vmem:[%s2003 + $0x128] sm:$0xff]
  %v2042 = vld [vmem:[%s2003 + $0x130] sm:$0xff]
  %v2043 = vld [vmem:[%s2003 + $0x138] sm:$0xff]
  %v2044 = vld [vmem:[%s2003 + $0x140] sm:$0xff]
  %v2045 = vld [vmem:[%s2003 + $0x148] sm:$0xff]
  %v2046 = vld [vmem:[%s2003 + $0x150] sm:$0xff]
  %v2047 = vld [vmem:[%s2003 + $0x158] sm:$0xff]
  %v2048 = vld [vmem:[%s2003 + $0x160] sm:$0xff]
  %v2049 = vld [vmem:[%s2003 + $0x168] sm:$0xff]
  %v2050 = vld [vmem:[%s2003 + $0x170] sm:$0xff]
  %v2051 = vld [vmem:[%s2003 + $0x178] sm:$0xff]
  %v2052 = vld [vmem:[%s2003 + $0x180] sm:$0xff]
  %v2053 = vld [vmem:[%s2003 + $0x188] sm:$0xff]
  %v2054 = vld [vmem:[%s2003 + $0x190] sm:$0xff]
  %v2055 = vld [vmem:[%s2003 + $0x198] sm:$0xff]
  %v2056 = vld [vmem:[%s2003 + $0x1a0] sm:$0xff]
  %v2057 = vld [vmem:[%s2003 + $0x1a8] sm:$0xff]
  %v2058 = vld [vmem:[%s2003 + $0x1b0] sm:$0xff]
  %v2059 = vld [vmem:[%s2003 + $0x1b8] sm:$0xff]
  %v2060 = vld [vmem:[%s2003 + $0x1c0] sm:$0xff]
  %v2061 = vld [vmem:[%s2003 + $0x1c8] sm:$0xff]
  %v2062 = vld [vmem:[%s2003 + $0x1d0] sm:$0xff]
  %v2063 = vld [vmem:[%s2003 + $0x1d8] sm:$0xff]
  %v2064 = vld [vmem:[%s2003 + $0x1e0] sm:$0xff]
  %v2065 = vld [vmem:[%s2003 + $0x1e8] sm:$0xff]
  %v2066 = vld [vmem:[%s2003 + $0x1f0] sm:$0xff]
  %v2067 = vld [vmem:[%s2003 + $0x1f8] sm:$0xff]
  %2068 = vmatprep.subr.mxu0 %v2005
  %2069 = vmatpush1.msra.mxu0 %v2004
  %2070 = vmatprep.subr.mxu0 %v2007
  %2071 = vmatpush1.msra.mxu0 %v2006
  %2072 = vmatprep.subr.mxu0 %v2009
  %2073 = vmatpush1.msra.mxu0 %v2008
  %2074 = vmatprep.subr.mxu0 %v2011
  %2075 = vmatpush1.msra.mxu0 %v2010
  %2076 = vmatprep.subr.mxu0 %v2013
  %2077 = vmatpush1.msra.mxu0 %v2012
  %2078 = vmatprep.subr.mxu0 %v2015
  %2079 = vmatpush1.msra.mxu0 %v2014
  %2080 = vmatprep.subr.mxu0 %v2017
  %2081 = vmatpush1.msra.mxu0 %v2016
  %2082 = vmatprep.subr.mxu0 %v2019
  %2083 = vmatpush1.msra.mxu0 %v2018
  %2084 = vmatprep.subr.mxu0 %v2021
  %2085 = vmatpush1.msra.mxu0 %v2020
  %2086 = vmatprep.subr.mxu0 %v2023
  %2087 = vmatpush1.msra.mxu0 %v2022
  %2088 = vmatprep.subr.mxu0 %v2025
  %2089 = vmatpush1.msra.mxu0 %v2024
  %2090 = vmatprep.subr.mxu0 %v2027
  %2091 = vmatpush1.msra.mxu0 %v2026
  %2092 = vmatprep.subr.mxu0 %v2029
  %2093 = vmatpush1.msra.mxu0 %v2028
  %2094 = vmatprep.subr.mxu0 %v2031
  %2095 = vmatpush1.msra.mxu0 %v2030
  %2096 = vmatprep.subr.mxu0 %v2033
  %2097 = vmatpush1.msra.mxu0 %v2032
  %2098 = vmatprep.subr.mxu0 %v2035
  %2099 = vmatpush1.msra.mxu0 %v2034
  %2100 = vmatprep.subr.mxu0 %v2037
  %2101 = vmatpush1.msra.mxu0 %v2036
  %2102 = vmatprep.subr.mxu0 %v2039
  %2103 = vmatpush1.msra.mxu0 %v2038
  %2104 = vmatprep.subr.mxu0 %v2041
  %2105 = vmatpush1.msra.mxu0 %v2040
  %2106 = vmatprep.subr.mxu0 %v2043
  %2107 = vmatpush1.msra.mxu0 %v2042
  %2108 = vmatprep.subr.mxu0 %v2045
  %2109 = vmatpush1.msra.mxu0 %v2044
  %2110 = vmatprep.subr.mxu0 %v2047
  %2111 = vmatpush1.msra.mxu0 %v2046
  %2112 = vmatprep.subr.mxu0 %v2049
  %2113 = vmatpush1.msra.mxu0 %v2048
  %2114 = vmatprep.subr.mxu0 %v2051
  %2115 = vmatpush1.msra.mxu0 %v2050
  %2116 = vmatprep.subr.mxu0 %v2053
  %2117 = vmatpush1.msra.mxu0 %v2052
  %2118 = vmatprep.subr.mxu0 %v2055
  %2119 = vmatpush1.msra.mxu0 %v2054
  %2120 = vmatprep.subr.mxu0 %v2057
  %2121 = vmatpush1.msra.mxu0 %v2056
  %2122 = vmatprep.subr.mxu0 %v2059
  %2123 = vmatpush1.msra.mxu0 %v2058
  %2124 = vmatprep.subr.mxu0 %v2061
  %2125 = vmatpush1.msra.mxu0 %v2060
  %2126 = vmatprep.subr.mxu0 %v2063
  %2127 = vmatpush1.msra.mxu0 %v2062
  %2128 = vmatprep.subr.mxu0 %v2065
  %2129 = vmatpush1.msra.mxu0 %v2064
  %2130 = vmatprep.subr.mxu0 %v2067
  %2131 = vmatpush1.msra.mxu0 %v2066
  %2132 = vmatprep.mubr.f32.mxu0 %v1911
  %2133 = vmatmul.mubr.f32.gmra.mrb[0].mxu0 %v1909
  %v2134 = vpop.f32.mrb[0].mxu0
  %v2135 = vadd.f32 0.0, %v2134
  %v2136 = vpop.f32.mrb[0].mxu0
  %v2137 = vadd.f32 0.0, %v2136
  %2138 = vmatprep.mubr.f32.mxu0 %v1917
  %2139 = vmatmul.mubr.f32.gmra.mrb[0].mxu0 %v1915
  %v2140 = vpop.f32.mrb[0].mxu0
  %v2141 = vadd.f32 0.0, %v2140
  %v2142 = vpop.f32.mrb[0].mxu0
  %v2143 = vadd.f32 0.0, %v2142
  %2144 = vmatprep.mubr.f32.mxu0 %v1923
  %2145 = vmatmul.mubr.f32.gmra.mrb[0].mxu0 %v1921
  %v2146 = vpop.f32.mrb[0].mxu0
  %v2147 = vadd.f32 0.0, %v2146
  %v2148 = vpop.f32.mrb[0].mxu0
  %v2149 = vadd.f32 0.0, %v2148
  %2150 = vmatprep.mubr.f32.mxu0 %v1929
  %2151 = vmatmul.mubr.f32.gmra.mrb[0].mxu0 %v1927
  %v2152 = vpop.f32.mrb[0].mxu0
  %v2153 = vadd.f32 0.0, %v2152
  %v2154 = vpop.f32.mrb[0].mxu0
  %v2155 = vadd.f32 0.0, %v2154
  %2156 = vmatprep.mubr.f32.mxu0 %v1935
  %2157 = vmatmul.mubr.f32.gmra.mrb[0].mxu0 %v1933
  %v2158 = vpop.f32.mrb[0].mxu0
  %v2159 = vadd.f32 0.0, %v2158
  %v2160 = vpop.f32.mrb[0].mxu0
  %v2161 = vadd.f32 0.0, %v2160
  %2162 = vmatprep.mubr.f32.mxu0 %v1941
  %2163 = vmatmul.mubr.f32.gmra.mrb[0].mxu0 %v1939
  %v2164 = vpop.f32.mrb[0].mxu0
  %v2165 = vadd.f32 0.0, %v2164
  %v2166 = vpop.f32.mrb[0].mxu0
  %v2167 = vadd.f32 0.0, %v2166
  %2168 = vmatprep.mubr.f32.mxu0 %v1947
  %2169 = vmatmul.mubr.f32.gmra.mrb[0].mxu0 %v1945
  %v2170 = vpop.f32.mrb[0].mxu0
  %v2171 = vadd.f32 0.0, %v2170
  %v2172 = vpop.f32.mrb[0].mxu0
  %v2173 = vadd.f32 0.0, %v2172
  %2174 = vmatprep.mubr.f32.mxu0 %v1953
  %2175 = vmatmul.mubr.f32.gmra.mrb[0].mxu0 %v1951
  %v2176 = vpop.f32.mrb[0].mxu0
  %v2177 = vadd.f32 0.0, %v2176
  %v2178 = vpop.f32.mrb[0].mxu0
  %v2179 = vadd.f32 0.0, %v2178
  %2180 = vmatprep.mubr.f32.mxu0 %v1959
  %2181 = vmatmul.mubr.f32.gmra.mrb[0].mxu0 %v1957
  %v2182 = vpop.f32.mrb[0].mxu0
  %v2183 = vadd.f32 0.0, %v2182
  %v2184 = vpop.f32.mrb[0].mxu0
  %v2185 = vadd.f32 0.0, %v2184
  %2186 = vmatprep.mubr.f32.mxu0 %v1965
  %2187 = vmatmul.mubr.f32.gmra.mrb[0].mxu0 %v1963
  %v2188 = vpop.f32.mrb[0].mxu0
  %v2189 = vadd.f32 0.0, %v2188
  %v2190 = vpop.f32.mrb[0].mxu0
  %v2191 = vadd.f32 0.0, %v2190
  %2192 = vmatprep.mubr.f32.mxu0 %v1971
  %2193 = vmatmul.mubr.f32.gmra.mrb[0].mxu0 %v1969
  %v2194 = vpop.f32.mrb[0].mxu0
  %v2195 = vadd.f32 0.0, %v2194
  %v2196 = vpop.f32.mrb[0].mxu0
  %v2197 = vadd.f32 0.0, %v2196
  %2198 = vmatprep.mubr.f32.mxu0 %v1977
  %2199 = vmatmul.mubr.f32.gmra.mrb[0].mxu0 %v1975
  %v2200 = vpop.f32.mrb[0].mxu0
  %v2201 = vadd.f32 0.0, %v2200
  %v2202 = vpop.f32.mrb[0].mxu0
  %v2203 = vadd.f32 0.0, %v2202
  %2204 = vmatprep.mubr.f32.mxu0 %v1983
  %2205 = vmatmul.mubr.f32.gmra.mrb[0].mxu0 %v1981
  %v2206 = vpop.f32.mrb[0].mxu0
  %v2207 = vadd.f32 0.0, %v2206
  %v2208 = vpop.f32.mrb[0].mxu0
  %v2209 = vadd.f32 0.0, %v2208
  %2210 = vmatprep.mubr.f32.mxu0 %v1989
  %2211 = vmatmul.mubr.f32.gmra.mrb[0].mxu0 %v1987
  %v2212 = vpop.f32.mrb[0].mxu0
  %v2213 = vadd.f32 0.0, %v2212
  %v2214 = vpop.f32.mrb[0].mxu0
  %v2215 = vadd.f32 0.0, %v2214
  %2216 = vmatprep.mubr.f32.mxu0 %v1995
  %2217 = vmatmul.mubr.f32.gmra.mrb[0].mxu0 %v1993
  %v2218 = vpop.f32.mrb[0].mxu0
  %v2219 = vadd.f32 0.0, %v2218
  %v2220 = vpop.f32.mrb[0].mxu0
  %v2221 = vadd.f32 0.0, %v2220
  %2222 = vmatprep.mubr.f32.mxu0 %v2001
  %2223 = vmatmul.mubr.f32.gmra.mrb[0].mxu0 %v1999
  %v2224 = vpop.f32.mrb[0].mxu0
  %v2225 = vadd.f32 0.0, %v2224
  %v2226 = vpop.f32.mrb[0].mxu0
  %v2227 = vadd.f32 0.0, %v2226
  %2228 = vdwg.mxu0
  %2229 = vmatprep.subr.mxu0 %v1714
  %2230 = vmatpush1.msra.mxu0 %v1713
  %2231 = vmatprep.subr.mxu0 %v1716
  %2232 = vmatpush1.msra.mxu0 %v1715
  %2233 = vmatprep.subr.mxu0 %v1718
  %2234 = vmatpush1.msra.mxu0 %v1717
  %2235 = vmatprep.subr.mxu0 %v1720
  %2236 = vmatpush1.msra.mxu0 %v1719
  %2237 = vmatprep.subr.mxu0 %v1722
  %2238 = vmatpush1.msra.mxu0 %v1721
  %2239 = vmatprep.subr.mxu0 %v1724
  %2240 = vmatpush1.msra.mxu0 %v1723
  %2241 = vmatprep.subr.mxu0 %v1726
  %2242 = vmatpush1.msra.mxu0 %v1725
  %2243 = vmatprep.subr.mxu0 %v1728
  %2244 = vmatpush1.msra.mxu0 %v1727
  %2245 = vmatprep.subr.mxu0 %v1730
  %2246 = vmatpush1.msra.mxu0 %v1729
  %2247 = vmatprep.subr.mxu0 %v1732
  %2248 = vmatpush1.msra.mxu0 %v1731
  %2249 = vmatprep.subr.mxu0 %v1734
  %2250 = vmatpush1.msra.mxu0 %v1733
  %2251 = vmatprep.subr.mxu0 %v1736
  %2252 = vmatpush1.msra.mxu0 %v1735
  %2253 = vmatprep.subr.mxu0 %v1738
  %2254 = vmatpush1.msra.mxu0 %v1737
  %2255 = vmatprep.subr.mxu0 %v1740
  %2256 = vmatpush1.msra.mxu0 %v1739
  %2257 = vmatprep.subr.mxu0 %v1742
  %2258 = vmatpush1.msra.mxu0 %v1741
  %2259 = vmatprep.subr.mxu0 %v1744
  %2260 = vmatpush1.msra.mxu0 %v1743
  %2261 = vmatprep.subr.mxu0 %v1746
  %2262 = vmatpush1.msra.mxu0 %v1745
  %2263 = vmatprep.subr.mxu0 %v1748
  %2264 = vmatpush1.msra.mxu0 %v1747
  %2265 = vmatprep.subr.mxu0 %v1750
  %2266 = vmatpush1.msra.mxu0 %v1749
  %2267 = vmatprep.subr.mxu0 %v1752
  %2268 = vmatpush1.msra.mxu0 %v1751
  %2269 = vmatprep.subr.mxu0 %v1754
  %2270 = vmatpush1.msra.mxu0 %v1753
  %2271 = vmatprep.subr.mxu0 %v1756
  %2272 = vmatpush1.msra.mxu0 %v1755
  %2273 = vmatprep.subr.mxu0 %v1758
  %2274 = vmatpush1.msra.mxu0 %v1757
  %2275 = vmatprep.subr.mxu0 %v1760
  %2276 = vmatpush1.msra.mxu0 %v1759
  %2277 = vmatprep.subr.mxu0 %v1762
  %2278 = vmatpush1.msra.mxu0 %v1761
  %2279 = vmatprep.subr.mxu0 %v1764
  %2280 = vmatpush1.msra.mxu0 %v1763
  %2281 = vmatprep.subr.mxu0 %v1766
  %2282 = vmatpush1.msra.mxu0 %v1765
  %2283 = vmatprep.subr.mxu0 %v1768
  %2284 = vmatpush1.msra.mxu0 %v1767
  %2285 = vmatprep.subr.mxu0 %v1770
  %2286 = vmatpush1.msra.mxu0 %v1769
  %2287 = vmatprep.subr.mxu0 %v1772
  %2288 = vmatpush1.msra.mxu0 %v1771
  %2289 = vmatprep.subr.mxu0 %v1774
  %2290 = vmatpush1.msra.mxu0 %v1773
  %2291 = vmatprep.subr.mxu0 %v1776
  %2292 = vmatpush1.msra.mxu0 %v1775
  %2293 = vmatprep.mubr.f32.mxu0 %v1621
  %2294 = vmatmul.mubr.f32.gmra.mrb[0].mxu0 %v1619
  %v2295 = vpop.f32.mrb[0].mxu0
  %v2296 = vadd.f32 %v2135, %v2295
  %v2297 = vpop.f32.mrb[0].mxu0
  %v2298 = vadd.f32 %v2137, %v2297
  %2299 = vmatprep.mubr.f32.mxu0 %v1627
  %2300 = vmatmul.mubr.f32.gmra.mrb[0].mxu0 %v1625
  %v2301 = vpop.f32.mrb[0].mxu0
  %v2302 = vadd.f32 %v2141, %v2301
  %v2303 = vpop.f32.mrb[0].mxu0
  %v2304 = vadd.f32 %v2143, %v2303
  %2305 = vmatprep.mubr.f32.mxu0 %v1633
  %2306 = vmatmul.mubr.f32.gmra.mrb[0].mxu0 %v1631
  %v2307 = vpop.f32.mrb[0].mxu0
  %v2308 = vadd.f32 %v2147, %v2307
  %v2309 = vpop.f32.mrb[0].mxu0
  %v2310 = vadd.f32 %v2149, %v2309
  %2311 = vmatprep.mubr.f32.mxu0 %v1639
  %2312 = vmatmul.mubr.f32.gmra.mrb[0].mxu0 %v1637
  %v2313 = vpop.f32.mrb[0].mxu0
  %v2314 = vadd.f32 %v2153, %v2313
  %v2315 = vpop.f32.mrb[0].mxu0
  %v2316 = vadd.f32 %v2155, %v2315
  %2317 = vmatprep.mubr.f32.mxu0 %v1645
  %2318 = vmatmul.mubr.f32.gmra.mrb[0].mxu0 %v1643
  %v2319 = vpop.f32.mrb[0].mxu0
  %v2320 = vadd.f32 %v2159, %v2319
  %v2321 = vpop.f32.mrb[0].mxu0
  %v2322 = vadd.f32 %v2161, %v2321
  %2323 = vmatprep.mubr.f32.mxu0 %v1651
  %2324 = vmatmul.mubr.f32.gmra.mrb[0].mxu0 %v1649
  %v2325 = vpop.f32.mrb[0].mxu0
  %v2326 = vadd.f32 %v2165, %v2325
  %v2327 = vpop.f32.mrb[0].mxu0
  %v2328 = vadd.f32 %v2167, %v2327
  %2329 = vmatprep.mubr.f32.mxu0 %v1657
  %2330 = vmatmul.mubr.f32.gmra.mrb[0].mxu0 %v1655
  %v2331 = vpop.f32.mrb[0].mxu0
  %v2332 = vadd.f32 %v2171, %v2331
  %v2333 = vpop.f32.mrb[0].mxu0
  %v2334 = vadd.f32 %v2173, %v2333
  %2335 = vmatprep.mubr.f32.mxu0 %v1663
  %2336 = vmatmul.mubr.f32.gmra.mrb[0].mxu0 %v1661
  %v2337 = vpop.f32.mrb[0].mxu0
  %v2338 = vadd.f32 %v2177, %v2337
  %v2339 = vpop.f32.mrb[0].mxu0
  %v2340 = vadd.f32 %v2179, %v2339
  %2341 = vmatprep.mubr.f32.mxu0 %v1669
  %2342 = vmatmul.mubr.f32.gmra.mrb[0].mxu0 %v1667
  %v2343 = vpop.f32.mrb[0].mxu0
  %v2344 = vadd.f32 %v2183, %v2343
  %v2345 = vpop.f32.mrb[0].mxu0
  %v2346 = vadd.f32 %v2185, %v2345
  %2347 = vmatprep.mubr.f32.mxu0 %v1675
  %2348 = vmatmul.mubr.f32.gmra.mrb[0].mxu0 %v1673
  %v2349 = vpop.f32.mrb[0].mxu0
  %v2350 = vadd.f32 %v2189, %v2349
  %v2351 = vpop.f32.mrb[0].mxu0
  %v2352 = vadd.f32 %v2191, %v2351
  %2353 = vmatprep.mubr.f32.mxu0 %v1681
  %2354 = vmatmul.mubr.f32.gmra.mrb[0].mxu0 %v1679
  %v2355 = vpop.f32.mrb[0].mxu0
  %v2356 = vadd.f32 %v2195, %v2355
  %v2357 = vpop.f32.mrb[0].mxu0
  %v2358 = vadd.f32 %v2197, %v2357
  %2359 = vmatprep.mubr.f32.mxu0 %v1687
  %2360 = vmatmul.mubr.f32.gmra.mrb[0].mxu0 %v1685
  %v2361 = vpop.f32.mrb[0].mxu0
  %v2362 = vadd.f32 %v2201, %v2361
  %v2363 = vpop.f32.mrb[0].mxu0
  %v2364 = vadd.f32 %v2203, %v2363
  %2365 = vmatprep.mubr.f32.mxu0 %v1693
  %2366 = vmatmul.mubr.f32.gmra.mrb[0].mxu0 %v1691
  %v2367 = vpop.f32.mrb[0].mxu0
  %v2368 = vadd.f32 %v2207, %v2367
  %v2369 = vpop.f32.mrb[0].mxu0
  %v2370 = vadd.f32 %v2209, %v2369
  %2371 = vmatprep.mubr.f32.mxu0 %v1699
  %2372 = vmatmul.mubr.f32.gmra.mrb[0].mxu0 %v1697
  %v2373 = vpop.f32.mrb[0].mxu0
  %v2374 = vadd.f32 %v2213, %v2373
  %v2375 = vpop.f32.mrb[0].mxu0
  %v2376 = vadd.f32 %v2215, %v2375
  %2377 = vmatprep.mubr.f32.mxu0 %v1705
  %2378 = vmatmul.mubr.f32.gmra.mrb[0].mxu0 %v1703
  %v2379 = vpop.f32.mrb[0].mxu0
  %v2380 = vadd.f32 %v2219, %v2379
  %v2381 = vpop.f32.mrb[0].mxu0
  %v2382 = vadd.f32 %v2221, %v2381
  %2383 = vmatprep.mubr.f32.mxu0 %v1711
  %2384 = vmatmul.mubr.f32.gmra.mrb[0].mxu0 %v1709
  %v2385 = vpop.f32.mrb[0].mxu0
  %v2386 = vadd.f32 %v2225, %v2385
  %v2387 = vpop.f32.mrb[0].mxu0
  %v2388 = vadd.f32 %v2227, %v2387
  %2389 = vdwg.mxu0
  %s2390 = scalar_lea.vmem %s7, 256
  %v2391 = vld [vmem:[%s2390] sm:$0xff]
  %v2392 = vld [vmem:[%s2390 + $0x8] sm:$0xff]
  %v2393 = vld [vmem:[%s2390 + $0x10] sm:$0xff]
  %v2394 = vld [vmem:[%s2390 + $0x18] sm:$0xff]
  %v2395 = vld [vmem:[%s2390 + $0x20] sm:$0xff]
  %v2396 = vld [vmem:[%s2390 + $0x28] sm:$0xff]
  %v2397 = vld [vmem:[%s2390 + $0x30] sm:$0xff]
  %v2398 = vld [vmem:[%s2390 + $0x38] sm:$0xff]
  %v2399 = vld [vmem:[%s2390 + $0x40] sm:$0xff]
  %v2400 = vld [vmem:[%s2390 + $0x48] sm:$0xff]
  %v2401 = vld [vmem:[%s2390 + $0x50] sm:$0xff]
  %v2402 = vld [vmem:[%s2390 + $0x58] sm:$0xff]
  %v2403 = vld [vmem:[%s2390 + $0x60] sm:$0xff]
  %v2404 = vld [vmem:[%s2390 + $0x68] sm:$0xff]
  %v2405 = vld [vmem:[%s2390 + $0x70] sm:$0xff]
  %v2406 = vld [vmem:[%s2390 + $0x78] sm:$0xff]
  %v2408 = vsel %vm1503, %v2391, 0
  %v2411 = vsel %vm1503, %v2392, 0
  %v2414 = vsel %vm1503, %v2393, 0
  %v2417 = vsel %vm1503, %v2394, 0
  %v2420 = vsel %vm1503, %v2395, 0
  %v2423 = vsel %vm1503, %v2396, 0
  %v2426 = vsel %vm1503, %v2397, 0
  %v2429 = vsel %vm1503, %v2398, 0
  %v2432 = vsel %vm1503, %v2399, 0
  %v2435 = vsel %vm1503, %v2400, 0
  %v2438 = vsel %vm1503, %v2401, 0
  %v2441 = vsel %vm1503, %v2402, 0
  %v2444 = vsel %vm1503, %v2403, 0
  %v2447 = vsel %vm1503, %v2404, 0
  %v2450 = vsel %vm1503, %v2405, 0
  %v2453 = vsel %vm1503, %v2406, 0
  %2455 = vmatprep.subr.mxu0 %v1472
  %2456 = vmatpush1.msra.mxu0 %v1471
  %2457 = vmatprep.subr.mxu0 %v1474
  %2458 = vmatpush1.msra.mxu0 %v1473
  %2459 = vmatprep.subr.mxu0 %v1476
  %2460 = vmatpush1.msra.mxu0 %v1475
  %2461 = vmatprep.subr.mxu0 %v1478
  %2462 = vmatpush1.msra.mxu0 %v1477
  %2463 = vmatprep.subr.mxu0 %v1480
  %2464 = vmatpush1.msra.mxu0 %v1479
  %2465 = vmatprep.subr.mxu0 %v1482
  %2466 = vmatpush1.msra.mxu0 %v1481
  %2467 = vmatprep.subr.mxu0 %v1484
  %2468 = vmatpush1.msra.mxu0 %v1483
  %2469 = vmatprep.subr.mxu0 %v1486
  %2470 = vmatpush1.msra.mxu0 %v1485
  %2471 = vmatprep.subr.mxu0 0.0
  %2472 = vmatpush1.msra.mxu0 0.0
  %2473 = vmatprep.subr.mxu0 0.0
  %2474 = vmatpush1.msra.mxu0 0.0
  %2475 = vmatprep.subr.mxu0 0.0
  %2476 = vmatpush1.msra.mxu0 0.0
  %2477 = vmatprep.subr.mxu0 0.0
  %2478 = vmatpush1.msra.mxu0 0.0
  %2479 = vmatprep.subr.mxu0 0.0
  %2480 = vmatpush1.msra.mxu0 0.0
  %2481 = vmatprep.subr.mxu0 0.0
  %2482 = vmatpush1.msra.mxu0 0.0
  %2483 = vmatprep.subr.mxu0 0.0
  %2484 = vmatpush1.msra.mxu0 0.0
  %2485 = vmatprep.subr.mxu0 0.0
  %2486 = vmatpush1.msra.mxu0 0.0
  %2487 = vmatprep.subr.mxu0 0.0
  %2488 = vmatpush1.msra.mxu0 0.0
  %2489 = vmatprep.subr.mxu0 0.0
  %2490 = vmatpush1.msra.mxu0 0.0
  %2491 = vmatprep.subr.mxu0 0.0
  %2492 = vmatpush1.msra.mxu0 0.0
  %2493 = vmatprep.subr.mxu0 0.0
  %2494 = vmatpush1.msra.mxu0 0.0
  %2495 = vmatprep.subr.mxu0 0.0
  %2496 = vmatpush1.msra.mxu0 0.0
  %2497 = vmatprep.subr.mxu0 0.0
  %2498 = vmatpush1.msra.mxu0 0.0
  %2499 = vmatprep.subr.mxu0 0.0
  %2500 = vmatpush1.msra.mxu0 0.0
  %2501 = vmatprep.subr.mxu0 0.0
  %2502 = vmatpush1.msra.mxu0 0.0
  %2503 = vmatprep.subr.mxu0 0.0
  %2504 = vmatpush1.msra.mxu0 0.0
  %2505 = vmatprep.subr.mxu0 0.0
  %2506 = vmatpush1.msra.mxu0 0.0
  %2507 = vmatprep.subr.mxu0 0.0
  %2508 = vmatpush1.msra.mxu0 0.0
  %2509 = vmatprep.subr.mxu0 0.0
  %2510 = vmatpush1.msra.mxu0 0.0
  %2511 = vmatprep.subr.mxu0 0.0
  %2512 = vmatpush1.msra.mxu0 0.0
  %2513 = vmatprep.subr.mxu0 0.0
  %2514 = vmatpush1.msra.mxu0 0.0
  %2515 = vmatprep.subr.mxu0 0.0
  %2516 = vmatpush1.msra.mxu0 0.0
  %2517 = vmatprep.subr.mxu0 0.0
  %2518 = vmatpush1.msra.mxu0 0.0
  %2519 = vmatprep.mubr.f32.mxu0 0.0
  %2520 = vmatmul.mubr.f32.gmra.mrb[0].mxu0 %v2408
  %v2521 = vpop.f32.mrb[0].mxu0
  %v2522 = vadd.f32 0.0, %v2521
  %v2523 = vpop.f32.mrb[0].mxu0
  %v2524 = vadd.f32 0.0, %v2523
  %2525 = vmatprep.mubr.f32.mxu0 0.0
  %2526 = vmatmul.mubr.f32.gmra.mrb[0].mxu0 %v2411
  %v2527 = vpop.f32.mrb[0].mxu0
  %v2528 = vadd.f32 0.0, %v2527
  %v2529 = vpop.f32.mrb[0].mxu0
  %v2530 = vadd.f32 0.0, %v2529
  %2531 = vmatprep.mubr.f32.mxu0 0.0
  %2532 = vmatmul.mubr.f32.gmra.mrb[0].mxu0 %v2414
  %v2533 = vpop.f32.mrb[0].mxu0
  %v2534 = vadd.f32 0.0, %v2533
  %v2535 = vpop.f32.mrb[0].mxu0
  %v2536 = vadd.f32 0.0, %v2535
  %2537 = vmatprep.mubr.f32.mxu0 0.0
  %2538 = vmatmul.mubr.f32.gmra.mrb[0].mxu0 %v2417
  %v2539 = vpop.f32.mrb[0].mxu0
  %v2540 = vadd.f32 0.0, %v2539
  %v2541 = vpop.f32.mrb[0].mxu0
  %v2542 = vadd.f32 0.0, %v2541
  %2543 = vmatprep.mubr.f32.mxu0 0.0
  %2544 = vmatmul.mubr.f32.gmra.mrb[0].mxu0 %v2420
  %v2545 = vpop.f32.mrb[0].mxu0
  %v2546 = vadd.f32 0.0, %v2545
  %v2547 = vpop.f32.mrb[0].mxu0
  %v2548 = vadd.f32 0.0, %v2547
  %2549 = vmatprep.mubr.f32.mxu0 0.0
  %2550 = vmatmul.mubr.f32.gmra.mrb[0].mxu0 %v2423
  %v2551 = vpop.f32.mrb[0].mxu0
  %v2552 = vadd.f32 0.0, %v2551
  %v2553 = vpop.f32.mrb[0].mxu0
  %v2554 = vadd.f32 0.0, %v2553
  %2555 = vmatprep.mubr.f32.mxu0 0.0
  %2556 = vmatmul.mubr.f32.gmra.mrb[0].mxu0 %v2426
  %v2557 = vpop.f32.mrb[0].mxu0
  %v2558 = vadd.f32 0.0, %v2557
  %v2559 = vpop.f32.mrb[0].mxu0
  %v2560 = vadd.f32 0.0, %v2559
  %2561 = vmatprep.mubr.f32.mxu0 0.0
  %2562 = vmatmul.mubr.f32.gmra.mrb[0].mxu0 %v2429
  %v2563 = vpop.f32.mrb[0].mxu0
  %v2564 = vadd.f32 0.0, %v2563
  %v2565 = vpop.f32.mrb[0].mxu0
  %v2566 = vadd.f32 0.0, %v2565
  %2567 = vmatprep.mubr.f32.mxu0 0.0
  %2568 = vmatmul.mubr.f32.gmra.mrb[0].mxu0 %v2432
  %v2569 = vpop.f32.mrb[0].mxu0
  %v2570 = vadd.f32 0.0, %v2569
  %v2571 = vpop.f32.mrb[0].mxu0
  %v2572 = vadd.f32 0.0, %v2571
  %2573 = vmatprep.mubr.f32.mxu0 0.0
  %2574 = vmatmul.mubr.f32.gmra.mrb[0].mxu0 %v2435
  %v2575 = vpop.f32.mrb[0].mxu0
  %v2576 = vadd.f32 0.0, %v2575
  %v2577 = vpop.f32.mrb[0].mxu0
  %v2578 = vadd.f32 0.0, %v2577
  %2579 = vmatprep.mubr.f32.mxu0 0.0
  %2580 = vmatmul.mubr.f32.gmra.mrb[0].mxu0 %v2438
  %v2581 = vpop.f32.mrb[0].mxu0
  %v2582 = vadd.f32 0.0, %v2581
  %v2583 = vpop.f32.mrb[0].mxu0
  %v2584 = vadd.f32 0.0, %v2583
  %2585 = vmatprep.mubr.f32.mxu0 0.0
  %2586 = vmatmul.mubr.f32.gmra.mrb[0].mxu0 %v2441
  %v2587 = vpop.f32.mrb[0].mxu0
  %v2588 = vadd.f32 0.0, %v2587
  %v2589 = vpop.f32.mrb[0].mxu0
  %v2590 = vadd.f32 0.0, %v2589
  %2591 = vmatprep.mubr.f32.mxu0 0.0
  %2592 = vmatmul.mubr.f32.gmra.mrb[0].mxu0 %v2444
  %v2593 = vpop.f32.mrb[0].mxu0
  %v2594 = vadd.f32 0.0, %v2593
  %v2595 = vpop.f32.mrb[0].mxu0
  %v2596 = vadd.f32 0.0, %v2595
  %2597 = vmatprep.mubr.f32.mxu0 0.0
  %2598 = vmatmul.mubr.f32.gmra.mrb[0].mxu0 %v2447
  %v2599 = vpop.f32.mrb[0].mxu0
  %v2600 = vadd.f32 0.0, %v2599
  %v2601 = vpop.f32.mrb[0].mxu0
  %v2602 = vadd.f32 0.0, %v2601
  %2603 = vmatprep.mubr.f32.mxu0 0.0
  %2604 = vmatmul.mubr.f32.gmra.mrb[0].mxu0 %v2450
  %v2605 = vpop.f32.mrb[0].mxu0
  %v2606 = vadd.f32 0.0, %v2605
  %v2607 = vpop.f32.mrb[0].mxu0
  %v2608 = vadd.f32 0.0, %v2607
  %2609 = vmatprep.mubr.f32.mxu0 0.0
  %2610 = vmatmul.mubr.f32.gmra.mrb[0].mxu0 %v2453
  %v2611 = vpop.f32.mrb[0].mxu0
  %v2612 = vadd.f32 0.0, %v2611
  %v2613 = vpop.f32.mrb[0].mxu0
  %v2614 = vadd.f32 0.0, %v2613
  %2615 = vdwg.mxu0
  %s2616 = scalar_lea.vmem %s8, 1024
  %v2617 = vld [vmem:[%s2616] sm:$0xff]
  %v2618 = vld [vmem:[%s2616 + $0x8] sm:$0xff]
  %v2619 = vld [vmem:[%s2616 + $0x10] sm:$0xff]
  %v2620 = vld [vmem:[%s2616 + $0x18] sm:$0xff]
  %v2621 = vld [vmem:[%s2616 + $0x20] sm:$0xff]
  %v2622 = vld [vmem:[%s2616 + $0x28] sm:$0xff]
  %v2623 = vld [vmem:[%s2616 + $0x30] sm:$0xff]
  %v2624 = vld [vmem:[%s2616 + $0x38] sm:$0xff]
  %v2625 = vld [vmem:[%s2616 + $0x40] sm:$0xff]
  %v2626 = vld [vmem:[%s2616 + $0x48] sm:$0xff]
  %v2627 = vld [vmem:[%s2616 + $0x50] sm:$0xff]
  %v2628 = vld [vmem:[%s2616 + $0x58] sm:$0xff]
  %v2629 = vld [vmem:[%s2616 + $0x60] sm:$0xff]
  %v2630 = vld [vmem:[%s2616 + $0x68] sm:$0xff]
  %v2631 = vld [vmem:[%s2616 + $0x70] sm:$0xff]
  %v2632 = vld [vmem:[%s2616 + $0x78] sm:$0xff]
  %v2633 = vld [vmem:[%s2616 + $0x80] sm:$0xff]
  %v2634 = vld [vmem:[%s2616 + $0x88] sm:$0xff]
  %v2635 = vld [vmem:[%s2616 + $0x90] sm:$0xff]
  %v2636 = vld [vmem:[%s2616 + $0x98] sm:$0xff]
  %v2637 = vld [vmem:[%s2616 + $0xa0] sm:$0xff]
  %v2638 = vld [vmem:[%s2616 + $0xa8] sm:$0xff]
  %v2639 = vld [vmem:[%s2616 + $0xb0] sm:$0xff]
  %v2640 = vld [vmem:[%s2616 + $0xb8] sm:$0xff]
  %v2641 = vld [vmem:[%s2616 + $0xc0] sm:$0xff]
  %v2642 = vld [vmem:[%s2616 + $0xc8] sm:$0xff]
  %v2643 = vld [vmem:[%s2616 + $0xd0] sm:$0xff]
  %v2644 = vld [vmem:[%s2616 + $0xd8] sm:$0xff]
  %v2645 = vld [vmem:[%s2616 + $0xe0] sm:$0xff]
  %v2646 = vld [vmem:[%s2616 + $0xe8] sm:$0xff]
  %v2647 = vld [vmem:[%s2616 + $0xf0] sm:$0xff]
  %v2648 = vld [vmem:[%s2616 + $0xf8] sm:$0xff]
  %v2649 = vld [vmem:[%s2616 + $0x100] sm:$0xff]
  %v2650 = vld [vmem:[%s2616 + $0x108] sm:$0xff]
  %v2651 = vld [vmem:[%s2616 + $0x110] sm:$0xff]
  %v2652 = vld [vmem:[%s2616 + $0x118] sm:$0xff]
  %v2653 = vld [vmem:[%s2616 + $0x120] sm:$0xff]
  %v2654 = vld [vmem:[%s2616 + $0x128] sm:$0xff]
  %v2655 = vld [vmem:[%s2616 + $0x130] sm:$0xff]
  %v2656 = vld [vmem:[%s2616 + $0x138] sm:$0xff]
  %v2657 = vld [vmem:[%s2616 + $0x140] sm:$0xff]
  %v2658 = vld [vmem:[%s2616 + $0x148] sm:$0xff]
  %v2659 = vld [vmem:[%s2616 + $0x150] sm:$0xff]
  %v2660 = vld [vmem:[%s2616 + $0x158] sm:$0xff]
  %v2661 = vld [vmem:[%s2616 + $0x160] sm:$0xff]
  %v2662 = vld [vmem:[%s2616 + $0x168] sm:$0xff]
  %v2663 = vld [vmem:[%s2616 + $0x170] sm:$0xff]
  %v2664 = vld [vmem:[%s2616 + $0x178] sm:$0xff]
  %v2665 = vld [vmem:[%s2616 + $0x180] sm:$0xff]
  %v2666 = vld [vmem:[%s2616 + $0x188] sm:$0xff]
  %v2667 = vld [vmem:[%s2616 + $0x190] sm:$0xff]
  %v2668 = vld [vmem:[%s2616 + $0x198] sm:$0xff]
  %v2669 = vld [vmem:[%s2616 + $0x1a0] sm:$0xff]
  %v2670 = vld [vmem:[%s2616 + $0x1a8] sm:$0xff]
  %v2671 = vld [vmem:[%s2616 + $0x1b0] sm:$0xff]
  %v2672 = vld [vmem:[%s2616 + $0x1b8] sm:$0xff]
  %v2673 = vld [vmem:[%s2616 + $0x1c0] sm:$0xff]
  %v2674 = vld [vmem:[%s2616 + $0x1c8] sm:$0xff]
  %v2675 = vld [vmem:[%s2616 + $0x1d0] sm:$0xff]
  %v2676 = vld [vmem:[%s2616 + $0x1d8] sm:$0xff]
  %v2677 = vld [vmem:[%s2616 + $0x1e0] sm:$0xff]
  %v2678 = vld [vmem:[%s2616 + $0x1e8] sm:$0xff]
  %v2679 = vld [vmem:[%s2616 + $0x1f0] sm:$0xff]
  %v2680 = vld [vmem:[%s2616 + $0x1f8] sm:$0xff]
  %2681 = vmatprep.subr.mxu0 %v2618
  %2682 = vmatpush1.msra.mxu0 %v2617
  %2683 = vmatprep.subr.mxu0 %v2620
  %2684 = vmatpush1.msra.mxu0 %v2619
  %2685 = vmatprep.subr.mxu0 %v2622
  %2686 = vmatpush1.msra.mxu0 %v2621
  %2687 = vmatprep.subr.mxu0 %v2624
  %2688 = vmatpush1.msra.mxu0 %v2623
  %2689 = vmatprep.subr.mxu0 %v2626
  %2690 = vmatpush1.msra.mxu0 %v2625
  %2691 = vmatprep.subr.mxu0 %v2628
  %2692 = vmatpush1.msra.mxu0 %v2627
  %2693 = vmatprep.subr.mxu0 %v2630
  %2694 = vmatpush1.msra.mxu0 %v2629
  %2695 = vmatprep.subr.mxu0 %v2632
  %2696 = vmatpush1.msra.mxu0 %v2631
  %2697 = vmatprep.subr.mxu0 %v2634
  %2698 = vmatpush1.msra.mxu0 %v2633
  %2699 = vmatprep.subr.mxu0 %v2636
  %2700 = vmatpush1.msra.mxu0 %v2635
  %2701 = vmatprep.subr.mxu0 %v2638
  %2702 = vmatpush1.msra.mxu0 %v2637
  %2703 = vmatprep.subr.mxu0 %v2640
  %2704 = vmatpush1.msra.mxu0 %v2639
  %2705 = vmatprep.subr.mxu0 %v2642
  %2706 = vmatpush1.msra.mxu0 %v2641
  %2707 = vmatprep.subr.mxu0 %v2644
  %2708 = vmatpush1.msra.mxu0 %v2643
  %2709 = vmatprep.subr.mxu0 %v2646
  %2710 = vmatpush1.msra.mxu0 %v2645
  %2711 = vmatprep.subr.mxu0 %v2648
  %2712 = vmatpush1.msra.mxu0 %v2647
  %2713 = vmatprep.subr.mxu0 %v2650
  %2714 = vmatpush1.msra.mxu0 %v2649
  %2715 = vmatprep.subr.mxu0 %v2652
  %2716 = vmatpush1.msra.mxu0 %v2651
  %2717 = vmatprep.subr.mxu0 %v2654
  %2718 = vmatpush1.msra.mxu0 %v2653
  %2719 = vmatprep.subr.mxu0 %v2656
  %2720 = vmatpush1.msra.mxu0 %v2655
  %2721 = vmatprep.subr.mxu0 %v2658
  %2722 = vmatpush1.msra.mxu0 %v2657
  %2723 = vmatprep.subr.mxu0 %v2660
  %2724 = vmatpush1.msra.mxu0 %v2659
  %2725 = vmatprep.subr.mxu0 %v2662
  %2726 = vmatpush1.msra.mxu0 %v2661
  %2727 = vmatprep.subr.mxu0 %v2664
  %2728 = vmatpush1.msra.mxu0 %v2663
  %2729 = vmatprep.subr.mxu0 %v2666
  %2730 = vmatpush1.msra.mxu0 %v2665
  %2731 = vmatprep.subr.mxu0 %v2668
  %2732 = vmatpush1.msra.mxu0 %v2667
  %2733 = vmatprep.subr.mxu0 %v2670
  %2734 = vmatpush1.msra.mxu0 %v2669
  %2735 = vmatprep.subr.mxu0 %v2672
  %2736 = vmatpush1.msra.mxu0 %v2671
  %2737 = vmatprep.subr.mxu0 %v2674
  %2738 = vmatpush1.msra.mxu0 %v2673
  %2739 = vmatprep.subr.mxu0 %v2676
  %2740 = vmatpush1.msra.mxu0 %v2675
  %2741 = vmatprep.subr.mxu0 %v2678
  %2742 = vmatpush1.msra.mxu0 %v2677
  %2743 = vmatprep.subr.mxu0 %v2680
  %2744 = vmatpush1.msra.mxu0 %v2679
  %2745 = vmatprep.mubr.f32.mxu0 %v2524
  %2746 = vmatmul.mubr.f32.gmra.mrb[0].mxu0 %v2522
  %v2747 = vpop.f32.mrb[0].mxu0
  %v2748 = vadd.f32 0.0, %v2747
  %v2749 = vpop.f32.mrb[0].mxu0
  %v2750 = vadd.f32 0.0, %v2749
  %2751 = vmatprep.mubr.f32.mxu0 %v2530
  %2752 = vmatmul.mubr.f32.gmra.mrb[0].mxu0 %v2528
  %v2753 = vpop.f32.mrb[0].mxu0
  %v2754 = vadd.f32 0.0, %v2753
  %v2755 = vpop.f32.mrb[0].mxu0
  %v2756 = vadd.f32 0.0, %v2755
  %2757 = vmatprep.mubr.f32.mxu0 %v2536
  %2758 = vmatmul.mubr.f32.gmra.mrb[0].mxu0 %v2534
  %v2759 = vpop.f32.mrb[0].mxu0
  %v2760 = vadd.f32 0.0, %v2759
  %v2761 = vpop.f32.mrb[0].mxu0
  %v2762 = vadd.f32 0.0, %v2761
  %2763 = vmatprep.mubr.f32.mxu0 %v2542
  %2764 = vmatmul.mubr.f32.gmra.mrb[0].mxu0 %v2540
  %v2765 = vpop.f32.mrb[0].mxu0
  %v2766 = vadd.f32 0.0, %v2765
  %v2767 = vpop.f32.mrb[0].mxu0
  %v2768 = vadd.f32 0.0, %v2767
  %2769 = vmatprep.mubr.f32.mxu0 %v2548
  %2770 = vmatmul.mubr.f32.gmra.mrb[0].mxu0 %v2546
  %v2771 = vpop.f32.mrb[0].mxu0
  %v2772 = vadd.f32 0.0, %v2771
  %v2773 = vpop.f32.mrb[0].mxu0
  %v2774 = vadd.f32 0.0, %v2773
  %2775 = vmatprep.mubr.f32.mxu0 %v2554
  %2776 = vmatmul.mubr.f32.gmra.mrb[0].mxu0 %v2552
  %v2777 = vpop.f32.mrb[0].mxu0
  %v2778 = vadd.f32 0.0, %v2777
  %v2779 = vpop.f32.mrb[0].mxu0
  %v2780 = vadd.f32 0.0, %v2779
  %2781 = vmatprep.mubr.f32.mxu0 %v2560
  %2782 = vmatmul.mubr.f32.gmra.mrb[0].mxu0 %v2558
  %v2783 = vpop.f32.mrb[0].mxu0
  %v2784 = vadd.f32 0.0, %v2783
  %v2785 = vpop.f32.mrb[0].mxu0
  %v2786 = vadd.f32 0.0, %v2785
  %2787 = vmatprep.mubr.f32.mxu0 %v2566
  %2788 = vmatmul.mubr.f32.gmra.mrb[0].mxu0 %v2564
  %v2789 = vpop.f32.mrb[0].mxu0
  %v2790 = vadd.f32 0.0, %v2789
  %v2791 = vpop.f32.mrb[0].mxu0
  %v2792 = vadd.f32 0.0, %v2791
  %2793 = vmatprep.mubr.f32.mxu0 %v2572
  %2794 = vmatmul.mubr.f32.gmra.mrb[0].mxu0 %v2570
  %v2795 = vpop.f32.mrb[0].mxu0
  %v2796 = vadd.f32 0.0, %v2795
  %v2797 = vpop.f32.mrb[0].mxu0
  %v2798 = vadd.f32 0.0, %v2797
  %2799 = vmatprep.mubr.f32.mxu0 %v2578
  %2800 = vmatmul.mubr.f32.gmra.mrb[0].mxu0 %v2576
  %v2801 = vpop.f32.mrb[0].mxu0
  %v2802 = vadd.f32 0.0, %v2801
  %v2803 = vpop.f32.mrb[0].mxu0
  %v2804 = vadd.f32 0.0, %v2803
  %2805 = vmatprep.mubr.f32.mxu0 %v2584
  %2806 = vmatmul.mubr.f32.gmra.mrb[0].mxu0 %v2582
  %v2807 = vpop.f32.mrb[0].mxu0
  %v2808 = vadd.f32 0.0, %v2807
  %v2809 = vpop.f32.mrb[0].mxu0
  %v2810 = vadd.f32 0.0, %v2809
  %2811 = vmatprep.mubr.f32.mxu0 %v2590
  %2812 = vmatmul.mubr.f32.gmra.mrb[0].mxu0 %v2588
  %v2813 = vpop.f32.mrb[0].mxu0
  %v2814 = vadd.f32 0.0, %v2813
  %v2815 = vpop.f32.mrb[0].mxu0
  %v2816 = vadd.f32 0.0, %v2815
  %2817 = vmatprep.mubr.f32.mxu0 %v2596
  %2818 = vmatmul.mubr.f32.gmra.mrb[0].mxu0 %v2594
  %v2819 = vpop.f32.mrb[0].mxu0
  %v2820 = vadd.f32 0.0, %v2819
  %v2821 = vpop.f32.mrb[0].mxu0
  %v2822 = vadd.f32 0.0, %v2821
  %2823 = vmatprep.mubr.f32.mxu0 %v2602
  %2824 = vmatmul.mubr.f32.gmra.mrb[0].mxu0 %v2600
  %v2825 = vpop.f32.mrb[0].mxu0
  %v2826 = vadd.f32 0.0, %v2825
  %v2827 = vpop.f32.mrb[0].mxu0
  %v2828 = vadd.f32 0.0, %v2827
  %2829 = vmatprep.mubr.f32.mxu0 %v2608
  %2830 = vmatmul.mubr.f32.gmra.mrb[0].mxu0 %v2606
  %v2831 = vpop.f32.mrb[0].mxu0
  %v2832 = vadd.f32 0.0, %v2831
  %v2833 = vpop.f32.mrb[0].mxu0
  %v2834 = vadd.f32 0.0, %v2833
  %2835 = vmatprep.mubr.f32.mxu0 %v2614
  %2836 = vmatmul.mubr.f32.gmra.mrb[0].mxu0 %v2612
  %v2837 = vpop.f32.mrb[0].mxu0
  %v2838 = vadd.f32 0.0, %v2837
  %v2839 = vpop.f32.mrb[0].mxu0
  %v2840 = vadd.f32 0.0, %v2839
  %2841 = vdwg.mxu0
  %v2842 = vadd.f32 %v2296, %v2748
  %v2843 = vadd.f32 %v2298, %v2750
  %v2844 = vadd.f32 %v2302, %v2754
  %v2845 = vadd.f32 %v2304, %v2756
  %v2846 = vadd.f32 %v2308, %v2760
  %v2847 = vadd.f32 %v2310, %v2762
  %v2848 = vadd.f32 %v2314, %v2766
  %v2849 = vadd.f32 %v2316, %v2768
  %v2850 = vadd.f32 %v2320, %v2772
  %v2851 = vadd.f32 %v2322, %v2774
  %v2852 = vadd.f32 %v2326, %v2778
  %v2853 = vadd.f32 %v2328, %v2780
  %v2854 = vadd.f32 %v2332, %v2784
  %v2855 = vadd.f32 %v2334, %v2786
  %v2856 = vadd.f32 %v2338, %v2790
  %v2857 = vadd.f32 %v2340, %v2792
  %v2858 = vadd.f32 %v2344, %v2796
  %v2859 = vadd.f32 %v2346, %v2798
  %v2860 = vadd.f32 %v2350, %v2802
  %v2861 = vadd.f32 %v2352, %v2804
  %v2862 = vadd.f32 %v2356, %v2808
  %v2863 = vadd.f32 %v2358, %v2810
  %v2864 = vadd.f32 %v2362, %v2814
  %v2865 = vadd.f32 %v2364, %v2816
  %v2866 = vadd.f32 %v2368, %v2820
  %v2867 = vadd.f32 %v2370, %v2822
  %v2868 = vadd.f32 %v2374, %v2826
  %v2869 = vadd.f32 %v2376, %v2828
  %v2870 = vadd.f32 %v2380, %v2832
  %v2871 = vadd.f32 %v2382, %v2834
  %v2872 = vadd.f32 %v2386, %v2838
  %v2873 = vadd.f32 %v2388, %v2840
  %v2874 = vld [vmem:[%s9] sm:$0x3]
  %v2876 = vlaneseq
  %v2877 = vshrl.u32 %v2876, 7
  %v2878 = vsub.s32 0, %v2877
  %v2879 = vrot.slane %v2874, %v2878
  %v2880 = vlaneseq
  %v2881 = vshrl.u32 %v2880, 7
  %v2882 = vsub.s32 1, %v2881
  %v2883 = vrot.slane %v2874, %v2882
  %v2886 = vadd.f32 %v2842, %v2879
  %v2887 = vadd.f32 %v2843, %v2883
  %v2888 = vadd.f32 %v2844, %v2879
  %v2889 = vadd.f32 %v2845, %v2883
  %v2890 = vadd.f32 %v2846, %v2879
  %v2891 = vadd.f32 %v2847, %v2883
  %v2892 = vadd.f32 %v2848, %v2879
  %v2893 = vadd.f32 %v2849, %v2883
  %v2894 = vadd.f32 %v2850, %v2879
  %v2895 = vadd.f32 %v2851, %v2883
  %v2896 = vadd.f32 %v2852, %v2879
  %v2897 = vadd.f32 %v2853, %v2883
  %v2898 = vadd.f32 %v2854, %v2879
  %v2899 = vadd.f32 %v2855, %v2883
  %v2900 = vadd.f32 %v2856, %v2879
  %v2901 = vadd.f32 %v2857, %v2883
  %v2902 = vadd.f32 %v2858, %v2879
  %v2903 = vadd.f32 %v2859, %v2883
  %v2904 = vadd.f32 %v2860, %v2879
  %v2905 = vadd.f32 %v2861, %v2883
  %v2906 = vadd.f32 %v2862, %v2879
  %v2907 = vadd.f32 %v2863, %v2883
  %v2908 = vadd.f32 %v2864, %v2879
  %v2909 = vadd.f32 %v2865, %v2883
  %v2910 = vadd.f32 %v2866, %v2879
  %v2911 = vadd.f32 %v2867, %v2883
  %v2912 = vadd.f32 %v2868, %v2879
  %v2913 = vadd.f32 %v2869, %v2883
  %v2914 = vadd.f32 %v2870, %v2879
  %v2915 = vadd.f32 %v2871, %v2883
  %v2916 = vadd.f32 %v2872, %v2879
  %v2917 = vadd.f32 %v2873, %v2883
  %v2918 = vtanh.pop %v2886
  %v2919 = vtanh.pop %v2887
  %v2920 = vtanh.pop %v2888
  %v2921 = vtanh.pop %v2889
  %v2922 = vtanh.pop %v2890
  %v2923 = vtanh.pop %v2891
  %v2924 = vtanh.pop %v2892
  %v2925 = vtanh.pop %v2893
  %v2926 = vtanh.pop %v2894
  %v2927 = vtanh.pop %v2895
  %v2928 = vtanh.pop %v2896
  %v2929 = vtanh.pop %v2897
  %v2930 = vtanh.pop %v2898
  %v2931 = vtanh.pop %v2899
  %v2932 = vtanh.pop %v2900
  %v2933 = vtanh.pop %v2901
  %v2934 = vtanh.pop %v2902
  %v2935 = vtanh.pop %v2903
  %v2936 = vtanh.pop %v2904
  %v2937 = vtanh.pop %v2905
  %v2938 = vtanh.pop %v2906
  %v2939 = vtanh.pop %v2907
  %v2940 = vtanh.pop %v2908
  %v2941 = vtanh.pop %v2909
  %v2942 = vtanh.pop %v2910
  %v2943 = vtanh.pop %v2911
  %v2944 = vtanh.pop %v2912
  %v2945 = vtanh.pop %v2913
  %v2946 = vtanh.pop %v2914
  %v2947 = vtanh.pop %v2915
  %v2948 = vtanh.pop %v2916
  %v2949 = vtanh.pop %v2917
  %2950 = vst [vmem:[%s10] sm:$0xff] %v2918
  %2951 = vst [vmem:[%s10 + $0x8] sm:$0xff] %v2919
  %2952 = vst [vmem:[%s10 + $0x10] sm:$0xff] %v2920
  %2953 = vst [vmem:[%s10 + $0x18] sm:$0xff] %v2921
  %2954 = vst [vmem:[%s10 + $0x20] sm:$0xff] %v2922
  %2955 = vst [vmem:[%s10 + $0x28] sm:$0xff] %v2923
  %2956 = vst [vmem:[%s10 + $0x30] sm:$0xff] %v2924
  %2957 = vst [vmem:[%s10 + $0x38] sm:$0xff] %v2925
  %2958 = vst [vmem:[%s10 + $0x40] sm:$0xff] %v2926
  %2959 = vst [vmem:[%s10 + $0x48] sm:$0xff] %v2927
  %2960 = vst [vmem:[%s10 + $0x50] sm:$0xff] %v2928
  %2961 = vst [vmem:[%s10 + $0x58] sm:$0xff] %v2929
  %2962 = vst [vmem:[%s10 + $0x60] sm:$0xff] %v2930
  %2963 = vst [vmem:[%s10 + $0x68] sm:$0xff] %v2931
  %2964 = vst [vmem:[%s10 + $0x70] sm:$0xff] %v2932
  %2965 = vst [vmem:[%s10 + $0x78] sm:$0xff] %v2933
  %2966 = vst [vmem:[%s10 + $0x80] sm:$0xff] %v2934
  %2967 = vst [vmem:[%s10 + $0x88] sm:$0xff] %v2935
  %2968 = vst [vmem:[%s10 + $0x90] sm:$0xff] %v2936
  %2969 = vst [vmem:[%s10 + $0x98] sm:$0xff] %v2937
  %2970 = vst [vmem:[%s10 + $0xa0] sm:$0xff] %v2938
  %2971 = vst [vmem:[%s10 + $0xa8] sm:$0xff] %v2939
  %2972 = vst [vmem:[%s10 + $0xb0] sm:$0xff] %v2940
  %2973 = vst [vmem:[%s10 + $0xb8] sm:$0xff] %v2941
  %2974 = vst [vmem:[%s10 + $0xc0] sm:$0xff] %v2942
  %2975 = vst [vmem:[%s10 + $0xc8] sm:$0xff] %v2943
  %2976 = vst [vmem:[%s10 + $0xd0] sm:$0xff] %v2944
  %2977 = vst [vmem:[%s10 + $0xd8] sm:$0xff] %v2945
  %2978 = vst [vmem:[%s10 + $0xe0] sm:$0xff] %v2946
  %2979 = vst [vmem:[%s10 + $0xe8] sm:$0xff] %v2947
  %2980 = vst [vmem:[%s10 + $0xf0] sm:$0xff] %v2948
  %2981 = vst [vmem:[%s10 + $0xf8] sm:$0xff] %v2949
  // Predicated region
  $region42: #{autoencoder_forward.5} parent=0 // pred_check
    _
  $region43: #{autoencoder_forward.5} parent=0 // pred_check_branch
    %2983 = sbr.rel (0) target = $region45
  $region44: #{autoencoder_forward.5} parent=0 // pred_region
    _
  $region45: #{autoencoder_forward.5} parent=0 // pred_fallthru
    _
  // Predicated region
  $region46: #{autoencoder_forward.5} parent=0 // pred_check
    _
  $region47: #{autoencoder_forward.5} parent=0 // pred_check_branch
    %2985 = sbr.rel (0) target = $region49
  $region48: #{autoencoder_forward.5} parent=0 // pred_region
    _
  $region49: #{autoencoder_forward.5} parent=0 // pred_fallthru
    _

// kernel: autoencoder_forward.4
$region0: #{autoencoder_forward.4}
  #allocation0 [shape = 'u32[]', space=smem, size = 0x4, offset = 0x4, fixed_abs, tag = 'smem constant byte address 0x4 - core index']
  #allocation1 [shape = 'u32[144,128]{1,0:T(1,128)}', space=vmem, size = 0x12000, scoped, tag = 'internal scratch']
  %s0 = inlined_call_operand.vmem [shape: f32[8,4096], index: 0, kind: input, shape index: {}]
  %s1 = inlined_call_operand.vmem [shape: f32[4096,128], index: 1, kind: input, shape index: {}]
  %s2 = inlined_call_operand.vmem [shape: f32[1,128], index: 2, kind: input, shape index: {}]
  %s3 = inlined_call_operand.vmem [shape: f32[128,128], index: 3, kind: input, shape index: {}]
  %s4 = inlined_call_operand.vmem [shape: f32[1,128], index: 4, kind: input, shape index: {}]
  %s5 = inlined_call_operand.vmem [shape: f32[128,128], index: 5, kind: input, shape index: {}]
  %s6 = inlined_call_operand.vmem [shape: f32[1,128], index: 6, kind: input, shape index: {}]
  %s7 = inlined_call_operand.vmem [shape: f32[128,128], index: 7, kind: input, shape index: {}]
  %s8 = inlined_call_operand.vmem [shape: f32[1,128], index: 8, kind: input, shape index: {}]
  %s9 = inlined_call_operand.vmem [shape: f32[128,128], index: 9, kind: input, shape index: {}]
  %s10 = inlined_call_operand.vmem [shape: f32[1,128], index: 10, kind: input, shape index: {}]
  %s11 = inlined_call_operand.hbm [shape: f32[128,4096], index: 11, kind: input, shape index: {}]
  %s12 = inlined_call_operand.vmem [shape: f32[1,4096], index: 12, kind: input, shape index: {}]
  %s13 = inlined_call_operand.vmem [shape: f32[8,128], index: 13, kind: output, shape index: {0}]
  %s14 = inlined_call_operand.vmem [shape: f32[8,4096], index: 14, kind: output, shape index: {1}]
  %15 = xla_tuple %s13, %s14
  %s16 = sld [smem:[#allocation0]]
  $region74: #{autoencoder_forward.4} parent=0
    _
  %s18 = ssub.s32 1, %s16
  %s19 = scalar_select 0, %s18, %s16
  $region1: #{autoencoder_forward.4} parent=0
    #allocation2 [shape = 'u8[2097152]{0}', space=vmem, size = 0x200000, scoped, tag = 'input window, operand 11, single buffered']
    #allocation3 [shape = 's32[1]{0}', space=sflag, size = 0x4, scoped, tag = 'scoped memory for autoencoder_forward.4']
    %20 = vsyncpa [#allocation3], 0
    // Predicated region
    $region2: #{autoencoder_forward.4} parent=1 // pred_check
      _
    $region3: #{autoencoder_forward.4} parent=1 // pred_check_branch
      %22 = sbr.rel (0) target = $region5
    $region4: #{autoencoder_forward.4} parent=1 // pred_region
      _
    $region5: #{autoencoder_forward.4} parent=1 // pred_fallthru
      _
    // Predicated region
    $region6: #{autoencoder_forward.4} parent=1 // pred_check
      _
    $region7: #{autoencoder_forward.4} parent=1 // pred_check_branch
      %24 = sbr.rel (0) target = $region9
    $region8: #{autoencoder_forward.4} parent=1 // pred_region
      _
    $region9: #{autoencoder_forward.4} parent=1 // pred_fallthru
      _
    // Predicated region
    $region10: #{autoencoder_forward.4} parent=1 // pred_check
      _
    $region11: #{autoencoder_forward.4} parent=1 // pred_check_branch
      %26 = sbr.rel (0) target = $region13
    $region12: #{autoencoder_forward.4} parent=1 // pred_region
      _
    $region13: #{autoencoder_forward.4} parent=1 // pred_fallthru
      _
    // Predicated region
    $region14: #{autoencoder_forward.4} parent=1 // pred_check
      _
    $region15: #{autoencoder_forward.4} parent=1 // pred_check_branch
      %28 = sbr.rel (0) target = $region17
    $region16: #{autoencoder_forward.4} parent=1 // pred_region
      _
    $region17: #{autoencoder_forward.4} parent=1 // pred_fallthru
      _
    // Predicated region
    $region18: #{autoencoder_forward.4} parent=1 // pred_check
      _
    $region19: #{autoencoder_forward.4} parent=1 // pred_check_branch
      %30 = sbr.rel (0) target = $region21
    $region20: #{autoencoder_forward.4} parent=1 // pred_region
      _
    $region21: #{autoencoder_forward.4} parent=1 // pred_fallthru
      _
    // Predicated region
    $region22: #{autoencoder_forward.4} parent=1 // pred_check
      _
    $region23: #{autoencoder_forward.4} parent=1 // pred_check_branch
      %32 = sbr.rel (0) target = $region25
    $region24: #{autoencoder_forward.4} parent=1 // pred_region
      _
    $region25: #{autoencoder_forward.4} parent=1 // pred_fallthru
      _
    // Predicated region
    $region26: #{autoencoder_forward.4} parent=1 // pred_check
      _
    $region27: #{autoencoder_forward.4} parent=1 // pred_check_branch
      %34 = sbr.rel (0) target = $region29
    $region28: #{autoencoder_forward.4} parent=1 // pred_region
      _
    $region29: #{autoencoder_forward.4} parent=1 // pred_fallthru
      _
    // Predicated region
    $region30: #{autoencoder_forward.4} parent=1 // pred_check
      _
    $region31: #{autoencoder_forward.4} parent=1 // pred_check_branch
      %36 = sbr.rel (0) target = $region33
    $region32: #{autoencoder_forward.4} parent=1 // pred_region
      _
    $region33: #{autoencoder_forward.4} parent=1 // pred_fallthru
      _
    // Predicated region
    $region34: #{autoencoder_forward.4} parent=1 // pred_check
      _
    $region35: #{autoencoder_forward.4} parent=1 // pred_check_branch
      %38 = sbr.rel (0) target = $region37
    $region36: #{autoencoder_forward.4} parent=1 // pred_region
      _
    $region37: #{autoencoder_forward.4} parent=1 // pred_fallthru
      _
    // Predicated region
    $region38: #{autoencoder_forward.4} parent=1 // pred_check
      _
    $region39: #{autoencoder_forward.4} parent=1 // pred_check_branch
      %40 = sbr.rel (0) target = $region41
    $region40: #{autoencoder_forward.4} parent=1 // pred_region
      _
    $region41: #{autoencoder_forward.4} parent=1 // pred_fallthru
      _
    // Predicated region
    $region42: #{autoencoder_forward.4} parent=1 // pred_check
      _
    $region43: #{autoencoder_forward.4} parent=1 // pred_check_branch
      %42 = sbr.rel (0) target = $region45
    $region44: #{autoencoder_forward.4} parent=1 // pred_region
      _
    $region45: #{autoencoder_forward.4} parent=1 // pred_fallthru
      _
    // Predicated region
    $region46: #{autoencoder_forward.4} parent=1 // pred_check
      _
    $region47: #{autoencoder_forward.4} parent=1 // pred_check_branch
      %44 = sbr.rel (0) target = $region49
    $region48: #{autoencoder_forward.4} parent=1 // pred_region
      %s46 = ssub.s32 65536, 65536
      %47 = vsyncadd [#allocation3], %s46
      %s48 = sshll.u32 [#allocation2], 4
      %s49 = int_to_ptr.vmem [resolvable:$true] %s48
      %54 = dma.hbm_to_vmem [thread:$0]  %s11, 65536, %s49, [#allocation3], 4096, 4096, 256
    $region49: #{autoencoder_forward.4} parent=1 // pred_fallthru
      _
    // Predicated region
    $region50: #{autoencoder_forward.4} parent=1 // pred_check
      _
    $region51: #{autoencoder_forward.4} parent=1 // pred_check_branch
      %56 = sbr.rel (0) target = $region53
    $region52: #{autoencoder_forward.4} parent=1 // pred_region
      _
    $region53: #{autoencoder_forward.4} parent=1 // pred_fallthru
      _
    // Predicated region
    $region54: #{autoencoder_forward.4} parent=1 // pred_check
      _
    $region55: #{autoencoder_forward.4} parent=1 // pred_check_branch
      %58 = sbr.rel (0) target = $region57
    $region56: #{autoencoder_forward.4} parent=1 // pred_region
      %59 = dma.done [#allocation3], 65536
    $region57: #{autoencoder_forward.4} parent=1 // pred_fallthru
      _
    %v60 = vld [vmem:[%s0] sm:$0xff]
    %v61 = vld [vmem:[%s0 + $0x8] sm:$0xff]
    %v62 = vld [vmem:[%s0 + $0x10] sm:$0xff]
    %v63 = vld [vmem:[%s0 + $0x18] sm:$0xff]
    %v64 = vld [vmem:[%s0 + $0x20] sm:$0xff]
    %v65 = vld [vmem:[%s0 + $0x28] sm:$0xff]
    %v66 = vld [vmem:[%s0 + $0x30] sm:$0xff]
    %v67 = vld [vmem:[%s0 + $0x38] sm:$0xff]
    %v68 = vld [vmem:[%s0 + $0x40] sm:$0xff]
    %v69 = vld [vmem:[%s0 + $0x48] sm:$0xff]
    %v70 = vld [vmem:[%s0 + $0x50] sm:$0xff]
    %v71 = vld [vmem:[%s0 + $0x58] sm:$0xff]
    %v72 = vld [vmem:[%s0 + $0x60] sm:$0xff]
    %v73 = vld [vmem:[%s0 + $0x68] sm:$0xff]
    %v74 = vld [vmem:[%s0 + $0x70] sm:$0xff]
    %v75 = vld [vmem:[%s0 + $0x78] sm:$0xff]
    %v76 = vld [vmem:[%s0 + $0x80] sm:$0xff]
    %v77 = vld [vmem:[%s0 + $0x88] sm:$0xff]
    %v78 = vld [vmem:[%s0 + $0x90] sm:$0xff]
    %v79 = vld [vmem:[%s0 + $0x98] sm:$0xff]
    %v80 = vld [vmem:[%s0 + $0xa0] sm:$0xff]
    %v81 = vld [vmem:[%s0 + $0xa8] sm:$0xff]
    %v82 = vld [vmem:[%s0 + $0xb0] sm:$0xff]
    %v83 = vld [vmem:[%s0 + $0xb8] sm:$0xff]
    %v84 = vld [vmem:[%s0 + $0xc0] sm:$0xff]
    %v85 = vld [vmem:[%s0 + $0xc8] sm:$0xff]
    %v86 = vld [vmem:[%s0 + $0xd0] sm:$0xff]
    %v87 = vld [vmem:[%s0 + $0xd8] sm:$0xff]
    %v88 = vld [vmem:[%s0 + $0xe0] sm:$0xff]
    %v89 = vld [vmem:[%s0 + $0xe8] sm:$0xff]
    %v90 = vld [vmem:[%s0 + $0xf0] sm:$0xff]
    %v91 = vld [vmem:[%s0 + $0xf8] sm:$0xff]
    %v92 = vld [vmem:[%s1] sm:$0xff]
    %v93 = vld [vmem:[%s1 + $0x8] sm:$0xff]
    %v94 = vld [vmem:[%s1 + $0x10] sm:$0xff]
    %v95 = vld [vmem:[%s1 + $0x18] sm:$0xff]
    %v96 = vld [vmem:[%s1 + $0x20] sm:$0xff]
    %v97 = vld [vmem:[%s1 + $0x28] sm:$0xff]
    %v98 = vld [vmem:[%s1 + $0x30] sm:$0xff]
    %v99 = vld [vmem:[%s1 + $0x38] sm:$0xff]
    %v100 = vld [vmem:[%s1 + $0x40] sm:$0xff]
    %v101 = vld [vmem:[%s1 + $0x48] sm:$0xff]
    %v102 = vld [vmem:[%s1 + $0x50] sm:$0xff]
    %v103 = vld [vmem:[%s1 + $0x58] sm:$0xff]
    %v104 = vld [vmem:[%s1 + $0x60] sm:$0xff]
    %v105 = vld [vmem:[%s1 + $0x68] sm:$0xff]
    %v106 = vld [vmem:[%s1 + $0x70] sm:$0xff]
    %v107 = vld [vmem:[%s1 + $0x78] sm:$0xff]
    %v108 = vld [vmem:[%s1 + $0x80] sm:$0xff]
    %v109 = vld [vmem:[%s1 + $0x88] sm:$0xff]
    %v110 = vld [vmem:[%s1 + $0x90] sm:$0xff]
    %v111 = vld [vmem:[%s1 + $0x98] sm:$0xff]
    %v112 = vld [vmem:[%s1 + $0xa0] sm:$0xff]
    %v113 = vld [vmem:[%s1 + $0xa8] sm:$0xff]
    %v114 = vld [vmem:[%s1 + $0xb0] sm:$0xff]
    %v115 = vld [vmem:[%s1 + $0xb8] sm:$0xff]
    %v116 = vld [vmem:[%s1 + $0xc0] sm:$0xff]
    %v117 = vld [vmem:[%s1 + $0xc8] sm:$0xff]
    %v118 = vld [vmem:[%s1 + $0xd0] sm:$0xff]
    %v119 = vld [vmem:[%s1 + $0xd8] sm:$0xff]
    %v120 = vld [vmem:[%s1 + $0xe0] sm:$0xff]
    %v121 = vld [vmem:[%s1 + $0xe8] sm:$0xff]
    %v122 = vld [vmem:[%s1 + $0xf0] sm:$0xff]
    %v123 = vld [vmem:[%s1 + $0xf8] sm:$0xff]
    %v124 = vld [vmem:[%s1 + $0x100] sm:$0xff]
    %v125 = vld [vmem:[%s1 + $0x108] sm:$0xff]
    %v126 = vld [vmem:[%s1 + $0x110] sm:$0xff]
    %v127 = vld [vmem:[%s1 + $0x118] sm:$0xff]
    %v128 = vld [vmem:[%s1 + $0x120] sm:$0xff]
    %v129 = vld [vmem:[%s1 + $0x128] sm:$0xff]
    %v130 = vld [vmem:[%s1 + $0x130] sm:$0xff]
    %v131 = vld [vmem:[%s1 + $0x138] sm:$0xff]
    %v132 = vld [vmem:[%s1 + $0x140] sm:$0xff]
    %v133 = vld [vmem:[%s1 + $0x148] sm:$0xff]
    %v134 = vld [vmem:[%s1 + $0x150] sm:$0xff]
    %v135 = vld [vmem:[%s1 + $0x158] sm:$0xff]
    %v136 = vld [vmem:[%s1 + $0x160] sm:$0xff]
    %v137 = vld [vmem:[%s1 + $0x168] sm:$0xff]
    %v138 = vld [vmem:[%s1 + $0x170] sm:$0xff]
    %v139 = vld [vmem:[%s1 + $0x178] sm:$0xff]
    %v140 = vld [vmem:[%s1 + $0x180] sm:$0xff]
    %v141 = vld [vmem:[%s1 + $0x188] sm:$0xff]
    %v142 = vld [vmem:[%s1 + $0x190] sm:$0xff]
    %v143 = vld [vmem:[%s1 + $0x198] sm:$0xff]
    %v144 = vld [vmem:[%s1 + $0x1a0] sm:$0xff]
    %v145 = vld [vmem:[%s1 + $0x1a8] sm:$0xff]
    %v146 = vld [vmem:[%s1 + $0x1b0] sm:$0xff]
    %v147 = vld [vmem:[%s1 + $0x1b8] sm:$0xff]
    %v148 = vld [vmem:[%s1 + $0x1c0] sm:$0xff]
    %v149 = vld [vmem:[%s1 + $0x1c8] sm:$0xff]
    %v150 = vld [vmem:[%s1 + $0x1d0] sm:$0xff]
    %v151 = vld [vmem:[%s1 + $0x1d8] sm:$0xff]
    %v152 = vld [vmem:[%s1 + $0x1e0] sm:$0xff]
    %v153 = vld [vmem:[%s1 + $0x1e8] sm:$0xff]
    %v154 = vld [vmem:[%s1 + $0x1f0] sm:$0xff]
    %v155 = vld [vmem:[%s1 + $0x1f8] sm:$0xff]
    %v156 = vld [vmem:[%s1 + $0x200] sm:$0xff]
    %v157 = vld [vmem:[%s1 + $0x208] sm:$0xff]
    %v158 = vld [vmem:[%s1 + $0x210] sm:$0xff]
    %v159 = vld [vmem:[%s1 + $0x218] sm:$0xff]
    %v160 = vld [vmem:[%s1 + $0x220] sm:$0xff]
    %v161 = vld [vmem:[%s1 + $0x228] sm:$0xff]
    %v162 = vld [vmem:[%s1 + $0x230] sm:$0xff]
    %v163 = vld [vmem:[%s1 + $0x238] sm:$0xff]
    %v164 = vld [vmem:[%s1 + $0x240] sm:$0xff]
    %v165 = vld [vmem:[%s1 + $0x248] sm:$0xff]
    %v166 = vld [vmem:[%s1 + $0x250] sm:$0xff]
    %v167 = vld [vmem:[%s1 + $0x258] sm:$0xff]
    %v168 = vld [vmem:[%s1 + $0x260] sm:$0xff]
    %v169 = vld [vmem:[%s1 + $0x268] sm:$0xff]
    %v170 = vld [vmem:[%s1 + $0x270] sm:$0xff]
    %v171 = vld [vmem:[%s1 + $0x278] sm:$0xff]
    %v172 = vld [vmem:[%s1 + $0x280] sm:$0xff]
    %v173 = vld [vmem:[%s1 + $0x288] sm:$0xff]
    %v174 = vld [vmem:[%s1 + $0x290] sm:$0xff]
    %v175 = vld [vmem:[%s1 + $0x298] sm:$0xff]
    %v176 = vld [vmem:[%s1 + $0x2a0] sm:$0xff]
    %v177 = vld [vmem:[%s1 + $0x2a8] sm:$0xff]
    %v178 = vld [vmem:[%s1 + $0x2b0] sm:$0xff]
    %v179 = vld [vmem:[%s1 + $0x2b8] sm:$0xff]
    %v180 = vld [vmem:[%s1 + $0x2c0] sm:$0xff]
    %v181 = vld [vmem:[%s1 + $0x2c8] sm:$0xff]
    %v182 = vld [vmem:[%s1 + $0x2d0] sm:$0xff]
    %v183 = vld [vmem:[%s1 + $0x2d8] sm:$0xff]
    %v184 = vld [vmem:[%s1 + $0x2e0] sm:$0xff]
    %v185 = vld [vmem:[%s1 + $0x2e8] sm:$0xff]
    %v186 = vld [vmem:[%s1 + $0x2f0] sm:$0xff]
    %v187 = vld [vmem:[%s1 + $0x2f8] sm:$0xff]
    %v188 = vld [vmem:[%s1 + $0x300] sm:$0xff]
    %v189 = vld [vmem:[%s1 + $0x308] sm:$0xff]
    %v190 = vld [vmem:[%s1 + $0x310] sm:$0xff]
    %v191 = vld [vmem:[%s1 + $0x318] sm:$0xff]
    %v192 = vld [vmem:[%s1 + $0x320] sm:$0xff]
    %v193 = vld [vmem:[%s1 + $0x328] sm:$0xff]
    %v194 = vld [vmem:[%s1 + $0x330] sm:$0xff]
    %v195 = vld [vmem:[%s1 + $0x338] sm:$0xff]
    %v196 = vld [vmem:[%s1 + $0x340] sm:$0xff]
    %v197 = vld [vmem:[%s1 + $0x348] sm:$0xff]
    %v198 = vld [vmem:[%s1 + $0x350] sm:$0xff]
    %v199 = vld [vmem:[%s1 + $0x358] sm:$0xff]
    %v200 = vld [vmem:[%s1 + $0x360] sm:$0xff]
    %v201 = vld [vmem:[%s1 + $0x368] sm:$0xff]
    %v202 = vld [vmem:[%s1 + $0x370] sm:$0xff]
    %v203 = vld [vmem:[%s1 + $0x378] sm:$0xff]
    %v204 = vld [vmem:[%s1 + $0x380] sm:$0xff]
    %v205 = vld [vmem:[%s1 + $0x388] sm:$0xff]
    %v206 = vld [vmem:[%s1 + $0x390] sm:$0xff]
    %v207 = vld [vmem:[%s1 + $0x398] sm:$0xff]
    %v208 = vld [vmem:[%s1 + $0x3a0] sm:$0xff]
    %v209 = vld [vmem:[%s1 + $0x3a8] sm:$0xff]
    %v210 = vld [vmem:[%s1 + $0x3b0] sm:$0xff]
    %v211 = vld [vmem:[%s1 + $0x3b8] sm:$0xff]
    %v212 = vld [vmem:[%s1 + $0x3c0] sm:$0xff]
    %v213 = vld [vmem:[%s1 + $0x3c8] sm:$0xff]
    %v214 = vld [vmem:[%s1 + $0x3d0] sm:$0xff]
    %v215 = vld [vmem:[%s1 + $0x3d8] sm:$0xff]
    %v216 = vld [vmem:[%s1 + $0x3e0] sm:$0xff]
    %v217 = vld [vmem:[%s1 + $0x3e8] sm:$0xff]
    %v218 = vld [vmem:[%s1 + $0x3f0] sm:$0xff]
    %v219 = vld [vmem:[%s1 + $0x3f8] sm:$0xff]
    %v220 = vld [vmem:[%s1 + $0x400] sm:$0xff]
    %v221 = vld [vmem:[%s1 + $0x408] sm:$0xff]
    %v222 = vld [vmem:[%s1 + $0x410] sm:$0xff]
    %v223 = vld [vmem:[%s1 + $0x418] sm:$0xff]
    %v224 = vld [vmem:[%s1 + $0x420] sm:$0xff]
    %v225 = vld [vmem:[%s1 + $0x428] sm:$0xff]
    %v226 = vld [vmem:[%s1 + $0x430] sm:$0xff]
    %v227 = vld [vmem:[%s1 + $0x438] sm:$0xff]
    %v228 = vld [vmem:[%s1 + $0x440] sm:$0xff]
    %v229 = vld [vmem:[%s1 + $0x448] sm:$0xff]
    %v230 = vld [vmem:[%s1 + $0x450] sm:$0xff]
    %v231 = vld [vmem:[%s1 + $0x458] sm:$0xff]
    %v232 = vld [vmem:[%s1 + $0x460] sm:$0xff]
    %v233 = vld [vmem:[%s1 + $0x468] sm:$0xff]
    %v234 = vld [vmem:[%s1 + $0x470] sm:$0xff]
    %v235 = vld [vmem:[%s1 + $0x478] sm:$0xff]
    %v236 = vld [vmem:[%s1 + $0x480] sm:$0xff]
    %v237 = vld [vmem:[%s1 + $0x488] sm:$0xff]
    %v238 = vld [vmem:[%s1 + $0x490] sm:$0xff]
    %v239 = vld [vmem:[%s1 + $0x498] sm:$0xff]
    %v240 = vld [vmem:[%s1 + $0x4a0] sm:$0xff]
    %v241 = vld [vmem:[%s1 + $0x4a8] sm:$0xff]
    %v242 = vld [vmem:[%s1 + $0x4b0] sm:$0xff]
    %v243 = vld [vmem:[%s1 + $0x4b8] sm:$0xff]
    %v244 = vld [vmem:[%s1 + $0x4c0] sm:$0xff]
    %v245 = vld [vmem:[%s1 + $0x4c8] sm:$0xff]
    %v246 = vld [vmem:[%s1 + $0x4d0] sm:$0xff]
    %v247 = vld [vmem:[%s1 + $0x4d8] sm:$0xff]
    %v248 = vld [vmem:[%s1 + $0x4e0] sm:$0xff]
    %v249 = vld [vmem:[%s1 + $0x4e8] sm:$0xff]
    %v250 = vld [vmem:[%s1 + $0x4f0] sm:$0xff]
    %v251 = vld [vmem:[%s1 + $0x4f8] sm:$0xff]
    %v252 = vld [vmem:[%s1 + $0x500] sm:$0xff]
    %v253 = vld [vmem:[%s1 + $0x508] sm:$0xff]
    %v254 = vld [vmem:[%s1 + $0x510] sm:$0xff]
    %v255 = vld [vmem:[%s1 + $0x518] sm:$0xff]
    %v256 = vld [vmem:[%s1 + $0x520] sm:$0xff]
    %v257 = vld [vmem:[%s1 + $0x528] sm:$0xff]
    %v258 = vld [vmem:[%s1 + $0x530] sm:$0xff]
    %v259 = vld [vmem:[%s1 + $0x538] sm:$0xff]
    %v260 = vld [vmem:[%s1 + $0x540] sm:$0xff]
    %v261 = vld [vmem:[%s1 + $0x548] sm:$0xff]
    %v262 = vld [vmem:[%s1 + $0x550] sm:$0xff]
    %v263 = vld [vmem:[%s1 + $0x558] sm:$0xff]
    %v264 = vld [vmem:[%s1 + $0x560] sm:$0xff]
    %v265 = vld [vmem:[%s1 + $0x568] sm:$0xff]
    %v266 = vld [vmem:[%s1 + $0x570] sm:$0xff]
    %v267 = vld [vmem:[%s1 + $0x578] sm:$0xff]
    %v268 = vld [vmem:[%s1 + $0x580] sm:$0xff]
    %v269 = vld [vmem:[%s1 + $0x588] sm:$0xff]
    %v270 = vld [vmem:[%s1 + $0x590] sm:$0xff]
    %v271 = vld [vmem:[%s1 + $0x598] sm:$0xff]
    %v272 = vld [vmem:[%s1 + $0x5a0] sm:$0xff]
    %v273 = vld [vmem:[%s1 + $0x5a8] sm:$0xff]
    %v274 = vld [vmem:[%s1 + $0x5b0] sm:$0xff]
    %v275 = vld [vmem:[%s1 + $0x5b8] sm:$0xff]
    %v276 = vld [vmem:[%s1 + $0x5c0] sm:$0xff]
    %v277 = vld [vmem:[%s1 + $0x5c8] sm:$0xff]
    %v278 = vld [vmem:[%s1 + $0x5d0] sm:$0xff]
    %v279 = vld [vmem:[%s1 + $0x5d8] sm:$0xff]
    %v280 = vld [vmem:[%s1 + $0x5e0] sm:$0xff]
    %v281 = vld [vmem:[%s1 + $0x5e8] sm:$0xff]
    %v282 = vld [vmem:[%s1 + $0x5f0] sm:$0xff]
    %v283 = vld [vmem:[%s1 + $0x5f8] sm:$0xff]
    %v284 = vld [vmem:[%s1 + $0x600] sm:$0xff]
    %v285 = vld [vmem:[%s1 + $0x608] sm:$0xff]
    %v286 = vld [vmem:[%s1 + $0x610] sm:$0xff]
    %v287 = vld [vmem:[%s1 + $0x618] sm:$0xff]
    %v288 = vld [vmem:[%s1 + $0x620] sm:$0xff]
    %v289 = vld [vmem:[%s1 + $0x628] sm:$0xff]
    %v290 = vld [vmem:[%s1 + $0x630] sm:$0xff]
    %v291 = vld [vmem:[%s1 + $0x638] sm:$0xff]
    %v292 = vld [vmem:[%s1 + $0x640] sm:$0xff]
    %v293 = vld [vmem:[%s1 + $0x648] sm:$0xff]
    %v294 = vld [vmem:[%s1 + $0x650] sm:$0xff]
    %v295 = vld [vmem:[%s1 + $0x658] sm:$0xff]
    %v296 = vld [vmem:[%s1 + $0x660] sm:$0xff]
    %v297 = vld [vmem:[%s1 + $0x668] sm:$0xff]
    %v298 = vld [vmem:[%s1 + $0x670] sm:$0xff]
    %v299 = vld [vmem:[%s1 + $0x678] sm:$0xff]
    %v300 = vld [vmem:[%s1 + $0x680] sm:$0xff]
    %v301 = vld [vmem:[%s1 + $0x688] sm:$0xff]
    %v302 = vld [vmem:[%s1 + $0x690] sm:$0xff]
    %v303 = vld [vmem:[%s1 + $0x698] sm:$0xff]
    %v304 = vld [vmem:[%s1 + $0x6a0] sm:$0xff]
    %v305 = vld [vmem:[%s1 + $0x6a8] sm:$0xff]
    %v306 = vld [vmem:[%s1 + $0x6b0] sm:$0xff]
    %v307 = vld [vmem:[%s1 + $0x6b8] sm:$0xff]
    %v308 = vld [vmem:[%s1 + $0x6c0] sm:$0xff]
    %v309 = vld [vmem:[%s1 + $0x6c8] sm:$0xff]
    %v310 = vld [vmem:[%s1 + $0x6d0] sm:$0xff]
    %v311 = vld [vmem:[%s1 + $0x6d8] sm:$0xff]
    %v312 = vld [vmem:[%s1 + $0x6e0] sm:$0xff]
    %v313 = vld [vmem:[%s1 + $0x6e8] sm:$0xff]
    %v314 = vld [vmem:[%s1 + $0x6f0] sm:$0xff]
    %v315 = vld [vmem:[%s1 + $0x6f8] sm:$0xff]
    %v316 = vld [vmem:[%s1 + $0x700] sm:$0xff]
    %v317 = vld [vmem:[%s1 + $0x708] sm:$0xff]
    %v318 = vld [vmem:[%s1 + $0x710] sm:$0xff]
    %v319 = vld [vmem:[%s1 + $0x718] sm:$0xff]
    %v320 = vld [vmem:[%s1 + $0x720] sm:$0xff]
    %v321 = vld [vmem:[%s1 + $0x728] sm:$0xff]
    %v322 = vld [vmem:[%s1 + $0x730] sm:$0xff]
    %v323 = vld [vmem:[%s1 + $0x738] sm:$0xff]
    %v324 = vld [vmem:[%s1 + $0x740] sm:$0xff]
    %v325 = vld [vmem:[%s1 + $0x748] sm:$0xff]
    %v326 = vld [vmem:[%s1 + $0x750] sm:$0xff]
    %v327 = vld [vmem:[%s1 + $0x758] sm:$0xff]
    %v328 = vld [vmem:[%s1 + $0x760] sm:$0xff]
    %v329 = vld [vmem:[%s1 + $0x768] sm:$0xff]
    %v330 = vld [vmem:[%s1 + $0x770] sm:$0xff]
    %v331 = vld [vmem:[%s1 + $0x778] sm:$0xff]
    %v332 = vld [vmem:[%s1 + $0x780] sm:$0xff]
    %v333 = vld [vmem:[%s1 + $0x788] sm:$0xff]
    %v334 = vld [vmem:[%s1 + $0x790] sm:$0xff]
    %v335 = vld [vmem:[%s1 + $0x798] sm:$0xff]
    %v336 = vld [vmem:[%s1 + $0x7a0] sm:$0xff]
    %v337 = vld [vmem:[%s1 + $0x7a8] sm:$0xff]
    %v338 = vld [vmem:[%s1 + $0x7b0] sm:$0xff]
    %v339 = vld [vmem:[%s1 + $0x7b8] sm:$0xff]
    %v340 = vld [vmem:[%s1 + $0x7c0] sm:$0xff]
    %v341 = vld [vmem:[%s1 + $0x7c8] sm:$0xff]
    %v342 = vld [vmem:[%s1 + $0x7d0] sm:$0xff]
    %v343 = vld [vmem:[%s1 + $0x7d8] sm:$0xff]
    %v344 = vld [vmem:[%s1 + $0x7e0] sm:$0xff]
    %v345 = vld [vmem:[%s1 + $0x7e8] sm:$0xff]
    %v346 = vld [vmem:[%s1 + $0x7f0] sm:$0xff]
    %v347 = vld [vmem:[%s1 + $0x7f8] sm:$0xff]
    %v348 = vld [vmem:[%s1 + $0x800] sm:$0xff]
    %v349 = vld [vmem:[%s1 + $0x808] sm:$0xff]
    %v350 = vld [vmem:[%s1 + $0x810] sm:$0xff]
    %v351 = vld [vmem:[%s1 + $0x818] sm:$0xff]
    %v352 = vld [vmem:[%s1 + $0x820] sm:$0xff]
    %v353 = vld [vmem:[%s1 + $0x828] sm:$0xff]
    %v354 = vld [vmem:[%s1 + $0x830] sm:$0xff]
    %v355 = vld [vmem:[%s1 + $0x838] sm:$0xff]
    %v356 = vld [vmem:[%s1 + $0x840] sm:$0xff]
    %v357 = vld [vmem:[%s1 + $0x848] sm:$0xff]
    %v358 = vld [vmem:[%s1 + $0x850] sm:$0xff]
    %v359 = vld [vmem:[%s1 + $0x858] sm:$0xff]
    %v360 = vld [vmem:[%s1 + $0x860] sm:$0xff]
    %v361 = vld [vmem:[%s1 + $0x868] sm:$0xff]
    %v362 = vld [vmem:[%s1 + $0x870] sm:$0xff]
    %v363 = vld [vmem:[%s1 + $0x878] sm:$0xff]
    %v364 = vld [vmem:[%s1 + $0x880] sm:$0xff]
    %v365 = vld [vmem:[%s1 + $0x888] sm:$0xff]
    %v366 = vld [vmem:[%s1 + $0x890] sm:$0xff]
    %v367 = vld [vmem:[%s1 + $0x898] sm:$0xff]
    %v368 = vld [vmem:[%s1 + $0x8a0] sm:$0xff]
    %v369 = vld [vmem:[%s1 + $0x8a8] sm:$0xff]
    %v370 = vld [vmem:[%s1 + $0x8b0] sm:$0xff]
    %v371 = vld [vmem:[%s1 + $0x8b8] sm:$0xff]
    %v372 = vld [vmem:[%s1 + $0x8c0] sm:$0xff]
    %v373 = vld [vmem:[%s1 + $0x8c8] sm:$0xff]
    %v374 = vld [vmem:[%s1 + $0x8d0] sm:$0xff]
    %v375 = vld [vmem:[%s1 + $0x8d8] sm:$0xff]
    %v376 = vld [vmem:[%s1 + $0x8e0] sm:$0xff]
    %v377 = vld [vmem:[%s1 + $0x8e8] sm:$0xff]
    %v378 = vld [vmem:[%s1 + $0x8f0] sm:$0xff]
    %v379 = vld [vmem:[%s1 + $0x8f8] sm:$0xff]
    %v380 = vld [vmem:[%s1 + $0x900] sm:$0xff]
    %v381 = vld [vmem:[%s1 + $0x908] sm:$0xff]
    %v382 = vld [vmem:[%s1 + $0x910] sm:$0xff]
    %v383 = vld [vmem:[%s1 + $0x918] sm:$0xff]
    %v384 = vld [vmem:[%s1 + $0x920] sm:$0xff]
    %v385 = vld [vmem:[%s1 + $0x928] sm:$0xff]
    %v386 = vld [vmem:[%s1 + $0x930] sm:$0xff]
    %v387 = vld [vmem:[%s1 + $0x938] sm:$0xff]
    %v388 = vld [vmem:[%s1 + $0x940] sm:$0xff]
    %v389 = vld [vmem:[%s1 + $0x948] sm:$0xff]
    %v390 = vld [vmem:[%s1 + $0x950] sm:$0xff]
    %v391 = vld [vmem:[%s1 + $0x958] sm:$0xff]
    %v392 = vld [vmem:[%s1 + $0x960] sm:$0xff]
    %v393 = vld [vmem:[%s1 + $0x968] sm:$0xff]
    %v394 = vld [vmem:[%s1 + $0x970] sm:$0xff]
    %v395 = vld [vmem:[%s1 + $0x978] sm:$0xff]
    %v396 = vld [vmem:[%s1 + $0x980] sm:$0xff]
    %v397 = vld [vmem:[%s1 + $0x988] sm:$0xff]
    %v398 = vld [vmem:[%s1 + $0x990] sm:$0xff]
    %v399 = vld [vmem:[%s1 + $0x998] sm:$0xff]
    %v400 = vld [vmem:[%s1 + $0x9a0] sm:$0xff]
    %v401 = vld [vmem:[%s1 + $0x9a8] sm:$0xff]
    %v402 = vld [vmem:[%s1 + $0x9b0] sm:$0xff]
    %v403 = vld [vmem:[%s1 + $0x9b8] sm:$0xff]
    %v404 = vld [vmem:[%s1 + $0x9c0] sm:$0xff]
    %v405 = vld [vmem:[%s1 + $0x9c8] sm:$0xff]
    %v406 = vld [vmem:[%s1 + $0x9d0] sm:$0xff]
    %v407 = vld [vmem:[%s1 + $0x9d8] sm:$0xff]
    %v408 = vld [vmem:[%s1 + $0x9e0] sm:$0xff]
    %v409 = vld [vmem:[%s1 + $0x9e8] sm:$0xff]
    %v410 = vld [vmem:[%s1 + $0x9f0] sm:$0xff]
    %v411 = vld [vmem:[%s1 + $0x9f8] sm:$0xff]
    %v412 = vld [vmem:[%s1 + $0xa00] sm:$0xff]
    %v413 = vld [vmem:[%s1 + $0xa08] sm:$0xff]
    %v414 = vld [vmem:[%s1 + $0xa10] sm:$0xff]
    %v415 = vld [vmem:[%s1 + $0xa18] sm:$0xff]
    %v416 = vld [vmem:[%s1 + $0xa20] sm:$0xff]
    %v417 = vld [vmem:[%s1 + $0xa28] sm:$0xff]
    %v418 = vld [vmem:[%s1 + $0xa30] sm:$0xff]
    %v419 = vld [vmem:[%s1 + $0xa38] sm:$0xff]
    %v420 = vld [vmem:[%s1 + $0xa40] sm:$0xff]
    %v421 = vld [vmem:[%s1 + $0xa48] sm:$0xff]
    %v422 = vld [vmem:[%s1 + $0xa50] sm:$0xff]
    %v423 = vld [vmem:[%s1 + $0xa58] sm:$0xff]
    %v424 = vld [vmem:[%s1 + $0xa60] sm:$0xff]
    %v425 = vld [vmem:[%s1 + $0xa68] sm:$0xff]
    %v426 = vld [vmem:[%s1 + $0xa70] sm:$0xff]
    %v427 = vld [vmem:[%s1 + $0xa78] sm:$0xff]
    %v428 = vld [vmem:[%s1 + $0xa80] sm:$0xff]
    %v429 = vld [vmem:[%s1 + $0xa88] sm:$0xff]
    %v430 = vld [vmem:[%s1 + $0xa90] sm:$0xff]
    %v431 = vld [vmem:[%s1 + $0xa98] sm:$0xff]
    %v432 = vld [vmem:[%s1 + $0xaa0] sm:$0xff]
    %v433 = vld [vmem:[%s1 + $0xaa8] sm:$0xff]
    %v434 = vld [vmem:[%s1 + $0xab0] sm:$0xff]
    %v435 = vld [vmem:[%s1 + $0xab8] sm:$0xff]
    %v436 = vld [vmem:[%s1 + $0xac0] sm:$0xff]
    %v437 = vld [vmem:[%s1 + $0xac8] sm:$0xff]
    %v438 = vld [vmem:[%s1 + $0xad0] sm:$0xff]
    %v439 = vld [vmem:[%s1 + $0xad8] sm:$0xff]
    %v440 = vld [vmem:[%s1 + $0xae0] sm:$0xff]
    %v441 = vld [vmem:[%s1 + $0xae8] sm:$0xff]
    %v442 = vld [vmem:[%s1 + $0xaf0] sm:$0xff]
    %v443 = vld [vmem:[%s1 + $0xaf8] sm:$0xff]
    %v444 = vld [vmem:[%s1 + $0xb00] sm:$0xff]
    %v445 = vld [vmem:[%s1 + $0xb08] sm:$0xff]
    %v446 = vld [vmem:[%s1 + $0xb10] sm:$0xff]
    %v447 = vld [vmem:[%s1 + $0xb18] sm:$0xff]
    %v448 = vld [vmem:[%s1 + $0xb20] sm:$0xff]
    %v449 = vld [vmem:[%s1 + $0xb28] sm:$0xff]
    %v450 = vld [vmem:[%s1 + $0xb30] sm:$0xff]
    %v451 = vld [vmem:[%s1 + $0xb38] sm:$0xff]
    %v452 = vld [vmem:[%s1 + $0xb40] sm:$0xff]
    %v453 = vld [vmem:[%s1 + $0xb48] sm:$0xff]
    %v454 = vld [vmem:[%s1 + $0xb50] sm:$0xff]
    %v455 = vld [vmem:[%s1 + $0xb58] sm:$0xff]
    %v456 = vld [vmem:[%s1 + $0xb60] sm:$0xff]
    %v457 = vld [vmem:[%s1 + $0xb68] sm:$0xff]
    %v458 = vld [vmem:[%s1 + $0xb70] sm:$0xff]
    %v459 = vld [vmem:[%s1 + $0xb78] sm:$0xff]
    %v460 = vld [vmem:[%s1 + $0xb80] sm:$0xff]
    %v461 = vld [vmem:[%s1 + $0xb88] sm:$0xff]
    %v462 = vld [vmem:[%s1 + $0xb90] sm:$0xff]
    %v463 = vld [vmem:[%s1 + $0xb98] sm:$0xff]
    %v464 = vld [vmem:[%s1 + $0xba0] sm:$0xff]
    %v465 = vld [vmem:[%s1 + $0xba8] sm:$0xff]
    %v466 = vld [vmem:[%s1 + $0xbb0] sm:$0xff]
    %v467 = vld [vmem:[%s1 + $0xbb8] sm:$0xff]
    %v468 = vld [vmem:[%s1 + $0xbc0] sm:$0xff]
    %v469 = vld [vmem:[%s1 + $0xbc8] sm:$0xff]
    %v470 = vld [vmem:[%s1 + $0xbd0] sm:$0xff]
    %v471 = vld [vmem:[%s1 + $0xbd8] sm:$0xff]
    %v472 = vld [vmem:[%s1 + $0xbe0] sm:$0xff]
    %v473 = vld [vmem:[%s1 + $0xbe8] sm:$0xff]
    %v474 = vld [vmem:[%s1 + $0xbf0] sm:$0xff]
    %v475 = vld [vmem:[%s1 + $0xbf8] sm:$0xff]
    %v476 = vld [vmem:[%s1 + $0xc00] sm:$0xff]
    %v477 = vld [vmem:[%s1 + $0xc08] sm:$0xff]
    %v478 = vld [vmem:[%s1 + $0xc10] sm:$0xff]
    %v479 = vld [vmem:[%s1 + $0xc18] sm:$0xff]
    %v480 = vld [vmem:[%s1 + $0xc20] sm:$0xff]
    %v481 = vld [vmem:[%s1 + $0xc28] sm:$0xff]
    %v482 = vld [vmem:[%s1 + $0xc30] sm:$0xff]
    %v483 = vld [vmem:[%s1 + $0xc38] sm:$0xff]
    %v484 = vld [vmem:[%s1 + $0xc40] sm:$0xff]
    %v485 = vld [vmem:[%s1 + $0xc48] sm:$0xff]
    %v486 = vld [vmem:[%s1 + $0xc50] sm:$0xff]
    %v487 = vld [vmem:[%s1 + $0xc58] sm:$0xff]
    %v488 = vld [vmem:[%s1 + $0xc60] sm:$0xff]
    %v489 = vld [vmem:[%s1 + $0xc68] sm:$0xff]
    %v490 = vld [vmem:[%s1 + $0xc70] sm:$0xff]
    %v491 = vld [vmem:[%s1 + $0xc78] sm:$0xff]
    %v492 = vld [vmem:[%s1 + $0xc80] sm:$0xff]
    %v493 = vld [vmem:[%s1 + $0xc88] sm:$0xff]
    %v494 = vld [vmem:[%s1 + $0xc90] sm:$0xff]
    %v495 = vld [vmem:[%s1 + $0xc98] sm:$0xff]
    %v496 = vld [vmem:[%s1 + $0xca0] sm:$0xff]
    %v497 = vld [vmem:[%s1 + $0xca8] sm:$0xff]
    %v498 = vld [vmem:[%s1 + $0xcb0] sm:$0xff]
    %v499 = vld [vmem:[%s1 + $0xcb8] sm:$0xff]
    %v500 = vld [vmem:[%s1 + $0xcc0] sm:$0xff]
    %v501 = vld [vmem:[%s1 + $0xcc8] sm:$0xff]
    %v502 = vld [vmem:[%s1 + $0xcd0] sm:$0xff]
    %v503 = vld [vmem:[%s1 + $0xcd8] sm:$0xff]
    %v504 = vld [vmem:[%s1 + $0xce0] sm:$0xff]
    %v505 = vld [vmem:[%s1 + $0xce8] sm:$0xff]
    %v506 = vld [vmem:[%s1 + $0xcf0] sm:$0xff]
    %v507 = vld [vmem:[%s1 + $0xcf8] sm:$0xff]
    %v508 = vld [vmem:[%s1 + $0xd00] sm:$0xff]
    %v509 = vld [vmem:[%s1 + $0xd08] sm:$0xff]
    %v510 = vld [vmem:[%s1 + $0xd10] sm:$0xff]
    %v511 = vld [vmem:[%s1 + $0xd18] sm:$0xff]
    %v512 = vld [vmem:[%s1 + $0xd20] sm:$0xff]
    %v513 = vld [vmem:[%s1 + $0xd28] sm:$0xff]
    %v514 = vld [vmem:[%s1 + $0xd30] sm:$0xff]
    %v515 = vld [vmem:[%s1 + $0xd38] sm:$0xff]
    %v516 = vld [vmem:[%s1 + $0xd40] sm:$0xff]
    %v517 = vld [vmem:[%s1 + $0xd48] sm:$0xff]
    %v518 = vld [vmem:[%s1 + $0xd50] sm:$0xff]
    %v519 = vld [vmem:[%s1 + $0xd58] sm:$0xff]
    %v520 = vld [vmem:[%s1 + $0xd60] sm:$0xff]
    %v521 = vld [vmem:[%s1 + $0xd68] sm:$0xff]
    %v522 = vld [vmem:[%s1 + $0xd70] sm:$0xff]
    %v523 = vld [vmem:[%s1 + $0xd78] sm:$0xff]
    %v524 = vld [vmem:[%s1 + $0xd80] sm:$0xff]
    %v525 = vld [vmem:[%s1 + $0xd88] sm:$0xff]
    %v526 = vld [vmem:[%s1 + $0xd90] sm:$0xff]
    %v527 = vld [vmem:[%s1 + $0xd98] sm:$0xff]
    %v528 = vld [vmem:[%s1 + $0xda0] sm:$0xff]
    %v529 = vld [vmem:[%s1 + $0xda8] sm:$0xff]
    %v530 = vld [vmem:[%s1 + $0xdb0] sm:$0xff]
    %v531 = vld [vmem:[%s1 + $0xdb8] sm:$0xff]
    %v532 = vld [vmem:[%s1 + $0xdc0] sm:$0xff]
    %v533 = vld [vmem:[%s1 + $0xdc8] sm:$0xff]
    %v534 = vld [vmem:[%s1 + $0xdd0] sm:$0xff]
    %v535 = vld [vmem:[%s1 + $0xdd8] sm:$0xff]
    %v536 = vld [vmem:[%s1 + $0xde0] sm:$0xff]
    %v537 = vld [vmem:[%s1 + $0xde8] sm:$0xff]
    %v538 = vld [vmem:[%s1 + $0xdf0] sm:$0xff]
    %v539 = vld [vmem:[%s1 + $0xdf8] sm:$0xff]
    %v540 = vld [vmem:[%s1 + $0xe00] sm:$0xff]
    %v541 = vld [vmem:[%s1 + $0xe08] sm:$0xff]
    %v542 = vld [vmem:[%s1 + $0xe10] sm:$0xff]
    %v543 = vld [vmem:[%s1 + $0xe18] sm:$0xff]
    %v544 = vld [vmem:[%s1 + $0xe20] sm:$0xff]
    %v545 = vld [vmem:[%s1 + $0xe28] sm:$0xff]
    %v546 = vld [vmem:[%s1 + $0xe30] sm:$0xff]
    %v547 = vld [vmem:[%s1 + $0xe38] sm:$0xff]
    %v548 = vld [vmem:[%s1 + $0xe40] sm:$0xff]
    %v549 = vld [vmem:[%s1 + $0xe48] sm:$0xff]
    %v550 = vld [vmem:[%s1 + $0xe50] sm:$0xff]
    %v551 = vld [vmem:[%s1 + $0xe58] sm:$0xff]
    %v552 = vld [vmem:[%s1 + $0xe60] sm:$0xff]
    %v553 = vld [vmem:[%s1 + $0xe68] sm:$0xff]
    %v554 = vld [vmem:[%s1 + $0xe70] sm:$0xff]
    %v555 = vld [vmem:[%s1 + $0xe78] sm:$0xff]
    %v556 = vld [vmem:[%s1 + $0xe80] sm:$0xff]
    %v557 = vld [vmem:[%s1 + $0xe88] sm:$0xff]
    %v558 = vld [vmem:[%s1 + $0xe90] sm:$0xff]
    %v559 = vld [vmem:[%s1 + $0xe98] sm:$0xff]
    %v560 = vld [vmem:[%s1 + $0xea0] sm:$0xff]
    %v561 = vld [vmem:[%s1 + $0xea8] sm:$0xff]
    %v562 = vld [vmem:[%s1 + $0xeb0] sm:$0xff]
    %v563 = vld [vmem:[%s1 + $0xeb8] sm:$0xff]
    %v564 = vld [vmem:[%s1 + $0xec0] sm:$0xff]
    %v565 = vld [vmem:[%s1 + $0xec8] sm:$0xff]
    %v566 = vld [vmem:[%s1 + $0xed0] sm:$0xff]
    %v567 = vld [vmem:[%s1 + $0xed8] sm:$0xff]
    %v568 = vld [vmem:[%s1 + $0xee0] sm:$0xff]
    %v569 = vld [vmem:[%s1 + $0xee8] sm:$0xff]
    %v570 = vld [vmem:[%s1 + $0xef0] sm:$0xff]
    %v571 = vld [vmem:[%s1 + $0xef8] sm:$0xff]
    %v572 = vld [vmem:[%s1 + $0xf00] sm:$0xff]
    %v573 = vld [vmem:[%s1 + $0xf08] sm:$0xff]
    %v574 = vld [vmem:[%s1 + $0xf10] sm:$0xff]
    %v575 = vld [vmem:[%s1 + $0xf18] sm:$0xff]
    %v576 = vld [vmem:[%s1 + $0xf20] sm:$0xff]
    %v577 = vld [vmem:[%s1 + $0xf28] sm:$0xff]
    %v578 = vld [vmem:[%s1 + $0xf30] sm:$0xff]
    %v579 = vld [vmem:[%s1 + $0xf38] sm:$0xff]
    %v580 = vld [vmem:[%s1 + $0xf40] sm:$0xff]
    %v581 = vld [vmem:[%s1 + $0xf48] sm:$0xff]
    %v582 = vld [vmem:[%s1 + $0xf50] sm:$0xff]
    %v583 = vld [vmem:[%s1 + $0xf58] sm:$0xff]
    %v584 = vld [vmem:[%s1 + $0xf60] sm:$0xff]
    %v585 = vld [vmem:[%s1 + $0xf68] sm:$0xff]
    %v586 = vld [vmem:[%s1 + $0xf70] sm:$0xff]
    %v587 = vld [vmem:[%s1 + $0xf78] sm:$0xff]
    %v588 = vld [vmem:[%s1 + $0xf80] sm:$0xff]
    %v589 = vld [vmem:[%s1 + $0xf88] sm:$0xff]
    %v590 = vld [vmem:[%s1 + $0xf90] sm:$0xff]
    %v591 = vld [vmem:[%s1 + $0xf98] sm:$0xff]
    %v592 = vld [vmem:[%s1 + $0xfa0] sm:$0xff]
    %v593 = vld [vmem:[%s1 + $0xfa8] sm:$0xff]
    %v594 = vld [vmem:[%s1 + $0xfb0] sm:$0xff]
    %v595 = vld [vmem:[%s1 + $0xfb8] sm:$0xff]
    %v596 = vld [vmem:[%s1 + $0xfc0] sm:$0xff]
    %v597 = vld [vmem:[%s1 + $0xfc8] sm:$0xff]
    %v598 = vld [vmem:[%s1 + $0xfd0] sm:$0xff]
    %v599 = vld [vmem:[%s1 + $0xfd8] sm:$0xff]
    %v600 = vld [vmem:[%s1 + $0xfe0] sm:$0xff]
    %v601 = vld [vmem:[%s1 + $0xfe8] sm:$0xff]
    %v602 = vld [vmem:[%s1 + $0xff0] sm:$0xff]
    %v603 = vld [vmem:[%s1 + $0xff8] sm:$0xff]
    %v604 = vld [vmem:[%s2] sm:$0x1]
    %v606 = vlaneseq
    %v607 = vshrl.u32 %v606, 7
    %v608 = vsub.s32 0, %v607
    %v609 = vrot.slane %v604, %v608
    %611 = vmatprep.subr.mxu0 0.0
    %612 = vmatpush1.msra.mxu0 %v92
    %613 = vmatprep.subr.mxu0 0.0
    %614 = vmatpush1.msra.mxu0 %v93
    %615 = vmatprep.subr.mxu0 0.0
    %616 = vmatpush1.msra.mxu0 %v94
    %617 = vmatprep.subr.mxu0 0.0
    %618 = vmatpush1.msra.mxu0 %v95
    %619 = vmatprep.subr.mxu0 0.0
    %620 = vmatpush1.msra.mxu0 %v96
    %621 = vmatprep.subr.mxu0 0.0
    %622 = vmatpush1.msra.mxu0 %v97
    %623 = vmatprep.subr.mxu0 0.0
    %624 = vmatpush1.msra.mxu0 %v98
    %625 = vmatprep.subr.mxu0 0.0
    %626 = vmatpush1.msra.mxu0 %v99
    %627 = vmatprep.subr.mxu0 0.0
    %628 = vmatpush1.msra.mxu0 %v100
    %629 = vmatprep.subr.mxu0 0.0
    %630 = vmatpush1.msra.mxu0 %v101
    %631 = vmatprep.subr.mxu0 0.0
    %632 = vmatpush1.msra.mxu0 %v102
    %633 = vmatprep.subr.mxu0 0.0
    %634 = vmatpush1.msra.mxu0 %v103
    %635 = vmatprep.subr.mxu0 0.0
    %636 = vmatpush1.msra.mxu0 %v104
    %637 = vmatprep.subr.mxu0 0.0
    %638 = vmatpush1.msra.mxu0 %v105
    %639 = vmatprep.subr.mxu0 0.0
    %640 = vmatpush1.msra.mxu0 %v106
    %641 = vmatprep.subr.mxu0 0.0
    %642 = vmatpush1.msra.mxu0 %v107
    %643 = vmatprep.subr.mxu0 0.0
    %644 = vmatpush1.msra.mxu0 %v108
    %645 = vmatprep.subr.mxu0 0.0
    %646 = vmatpush1.msra.mxu0 %v109
    %647 = vmatprep.subr.mxu0 0.0
    %648 = vmatpush1.msra.mxu0 %v110
    %649 = vmatprep.subr.mxu0 0.0
    %650 = vmatpush1.msra.mxu0 %v111
    %651 = vmatprep.subr.mxu0 0.0
    %652 = vmatpush1.msra.mxu0 %v112
    %653 = vmatprep.subr.mxu0 0.0
    %654 = vmatpush1.msra.mxu0 %v113
    %655 = vmatprep.subr.mxu0 0.0
    %656 = vmatpush1.msra.mxu0 %v114
    %657 = vmatprep.subr.mxu0 0.0
    %658 = vmatpush1.msra.mxu0 %v115
    %659 = vmatprep.subr.mxu0 0.0
    %660 = vmatpush1.msra.mxu0 %v116
    %661 = vmatprep.subr.mxu0 0.0
    %662 = vmatpush1.msra.mxu0 %v117
    %663 = vmatprep.subr.mxu0 0.0
    %664 = vmatpush1.msra.mxu0 %v118
    %665 = vmatprep.subr.mxu0 0.0
    %666 = vmatpush1.msra.mxu0 %v119
    %667 = vmatprep.subr.mxu0 0.0
    %668 = vmatpush1.msra.mxu0 %v120
    %669 = vmatprep.subr.mxu0 0.0
    %670 = vmatpush1.msra.mxu0 %v121
    %671 = vmatprep.subr.mxu0 0.0
    %672 = vmatpush1.msra.mxu0 %v122
    %673 = vmatprep.subr.mxu0 0.0
    %674 = vmatpush1.msra.mxu0 %v123
    %675 = vmatprep.mubr.f32.mxu0 %v61
    %676 = vmatmul.mubr.f32.gmra.mrb[0].mxu0 %v60
    %v677 = vpop.f32.mrb[0].mxu0
    %v678 = vadd.f32 %v609, %v677
    %v679 = vpop.f32.mrb[0].mxu0
    %680 = vdwg.mxu0
    %681 = vmatprep.subr.mxu0 0.0
    %682 = vmatpush1.msra.mxu0 %v124
    %683 = vmatprep.subr.mxu0 0.0
    %684 = vmatpush1.msra.mxu0 %v125
    %685 = vmatprep.subr.mxu0 0.0
    %686 = vmatpush1.msra.mxu0 %v126
    %687 = vmatprep.subr.mxu0 0.0
    %688 = vmatpush1.msra.mxu0 %v127
    %689 = vmatprep.subr.mxu0 0.0
    %690 = vmatpush1.msra.mxu0 %v128
    %691 = vmatprep.subr.mxu0 0.0
    %692 = vmatpush1.msra.mxu0 %v129
    %693 = vmatprep.subr.mxu0 0.0
    %694 = vmatpush1.msra.mxu0 %v130
    %695 = vmatprep.subr.mxu0 0.0
    %696 = vmatpush1.msra.mxu0 %v131
    %697 = vmatprep.subr.mxu0 0.0
    %698 = vmatpush1.msra.mxu0 %v132
    %699 = vmatprep.subr.mxu0 0.0
    %700 = vmatpush1.msra.mxu0 %v133
    %701 = vmatprep.subr.mxu0 0.0
    %702 = vmatpush1.msra.mxu0 %v134
    %703 = vmatprep.subr.mxu0 0.0
    %704 = vmatpush1.msra.mxu0 %v135
    %705 = vmatprep.subr.mxu0 0.0
    %706 = vmatpush1.msra.mxu0 %v136
    %707 = vmatprep.subr.mxu0 0.0
    %708 = vmatpush1.msra.mxu0 %v137
    %709 = vmatprep.subr.mxu0 0.0
    %710 = vmatpush1.msra.mxu0 %v138
    %711 = vmatprep.subr.mxu0 0.0
    %712 = vmatpush1.msra.mxu0 %v139
    %713 = vmatprep.subr.mxu0 0.0
    %714 = vmatpush1.msra.mxu0 %v140
    %715 = vmatprep.subr.mxu0 0.0
    %716 = vmatpush1.msra.mxu0 %v141
    %717 = vmatprep.subr.mxu0 0.0
    %718 = vmatpush1.msra.mxu0 %v142
    %719 = vmatprep.subr.mxu0 0.0
    %720 = vmatpush1.msra.mxu0 %v143
    %721 = vmatprep.subr.mxu0 0.0
    %722 = vmatpush1.msra.mxu0 %v144
    %723 = vmatprep.subr.mxu0 0.0
    %724 = vmatpush1.msra.mxu0 %v145
    %725 = vmatprep.subr.mxu0 0.0
    %726 = vmatpush1.msra.mxu0 %v146
    %727 = vmatprep.subr.mxu0 0.0
    %728 = vmatpush1.msra.mxu0 %v147
    %729 = vmatprep.subr.mxu0 0.0
    %730 = vmatpush1.msra.mxu0 %v148
    %731 = vmatprep.subr.mxu0 0.0
    %732 = vmatpush1.msra.mxu0 %v149
    %733 = vmatprep.subr.mxu0 0.0
    %734 = vmatpush1.msra.mxu0 %v150
    %735 = vmatprep.subr.mxu0 0.0
    %736 = vmatpush1.msra.mxu0 %v151
    %737 = vmatprep.subr.mxu0 0.0
    %738 = vmatpush1.msra.mxu0 %v152
    %739 = vmatprep.subr.mxu0 0.0
    %740 = vmatpush1.msra.mxu0 %v153
    %741 = vmatprep.subr.mxu0 0.0
    %742 = vmatpush1.msra.mxu0 %v154
    %743 = vmatprep.subr.mxu0 0.0
    %744 = vmatpush1.msra.mxu0 %v155
    %745 = vmatprep.mubr.f32.mxu0 %v63
    %746 = vmatmul.mubr.f32.gmra.mrb[0].mxu0 %v62
    %v747 = vpop.f32.mrb[0].mxu0
    %v748 = vadd.f32 %v678, %v747
    %v749 = vpop.f32.mrb[0].mxu0
    %750 = vdwg.mxu0
    %751 = vmatprep.subr.mxu0 0.0
    %752 = vmatpush1.msra.mxu0 %v156
    %753 = vmatprep.subr.mxu0 0.0
    %754 = vmatpush1.msra.mxu0 %v157
    %755 = vmatprep.subr.mxu0 0.0
    %756 = vmatpush1.msra.mxu0 %v158
    %757 = vmatprep.subr.mxu0 0.0
    %758 = vmatpush1.msra.mxu0 %v159
    %759 = vmatprep.subr.mxu0 0.0
    %760 = vmatpush1.msra.mxu0 %v160
    %761 = vmatprep.subr.mxu0 0.0
    %762 = vmatpush1.msra.mxu0 %v161
    %763 = vmatprep.subr.mxu0 0.0
    %764 = vmatpush1.msra.mxu0 %v162
    %765 = vmatprep.subr.mxu0 0.0
    %766 = vmatpush1.msra.mxu0 %v163
    %767 = vmatprep.subr.mxu0 0.0
    %768 = vmatpush1.msra.mxu0 %v164
    %769 = vmatprep.subr.mxu0 0.0
    %770 = vmatpush1.msra.mxu0 %v165
    %771 = vmatprep.subr.mxu0 0.0
    %772 = vmatpush1.msra.mxu0 %v166
    %773 = vmatprep.subr.mxu0 0.0
    %774 = vmatpush1.msra.mxu0 %v167
    %775 = vmatprep.subr.mxu0 0.0
    %776 = vmatpush1.msra.mxu0 %v168
    %777 = vmatprep.subr.mxu0 0.0
    %778 = vmatpush1.msra.mxu0 %v169
    %779 = vmatprep.subr.mxu0 0.0
    %780 = vmatpush1.msra.mxu0 %v170
    %781 = vmatprep.subr.mxu0 0.0
    %782 = vmatpush1.msra.mxu0 %v171
    %783 = vmatprep.subr.mxu0 0.0
    %784 = vmatpush1.msra.mxu0 %v172
    %785 = vmatprep.subr.mxu0 0.0
    %786 = vmatpush1.msra.mxu0 %v173
    %787 = vmatprep.subr.mxu0 0.0
    %788 = vmatpush1.msra.mxu0 %v174
    %789 = vmatprep.subr.mxu0 0.0
    %790 = vmatpush1.msra.mxu0 %v175
    %791 = vmatprep.subr.mxu0 0.0
    %792 = vmatpush1.msra.mxu0 %v176
    %793 = vmatprep.subr.mxu0 0.0
    %794 = vmatpush1.msra.mxu0 %v177
    %795 = vmatprep.subr.mxu0 0.0
    %796 = vmatpush1.msra.mxu0 %v178
    %797 = vmatprep.subr.mxu0 0.0
    %798 = vmatpush1.msra.mxu0 %v179
    %799 = vmatprep.subr.mxu0 0.0
    %800 = vmatpush1.msra.mxu0 %v180
    %801 = vmatprep.subr.mxu0 0.0
    %802 = vmatpush1.msra.mxu0 %v181
    %803 = vmatprep.subr.mxu0 0.0
    %804 = vmatpush1.msra.mxu0 %v182
    %805 = vmatprep.subr.mxu0 0.0
    %806 = vmatpush1.msra.mxu0 %v183
    %807 = vmatprep.subr.mxu0 0.0
    %808 = vmatpush1.msra.mxu0 %v184
    %809 = vmatprep.subr.mxu0 0.0
    %810 = vmatpush1.msra.mxu0 %v185
    %811 = vmatprep.subr.mxu0 0.0
    %812 = vmatpush1.msra.mxu0 %v186
    %813 = vmatprep.subr.mxu0 0.0
    %814 = vmatpush1.msra.mxu0 %v187
    %815 = vmatprep.mubr.f32.mxu0 %v65
    %816 = vmatmul.mubr.f32.gmra.mrb[0].mxu0 %v64
    %v817 = vpop.f32.mrb[0].mxu0
    %v818 = vadd.f32 %v748, %v817
    %v819 = vpop.f32.mrb[0].mxu0
    %820 = vdwg.mxu0
    %821 = vmatprep.subr.mxu0 0.0
    %822 = vmatpush1.msra.mxu0 %v188
    %823 = vmatprep.subr.mxu0 0.0
    %824 = vmatpush1.msra.mxu0 %v189
    %825 = vmatprep.subr.mxu0 0.0
    %826 = vmatpush1.msra.mxu0 %v190
    %827 = vmatprep.subr.mxu0 0.0
    %828 = vmatpush1.msra.mxu0 %v191
    %829 = vmatprep.subr.mxu0 0.0
    %830 = vmatpush1.msra.mxu0 %v192
    %831 = vmatprep.subr.mxu0 0.0
    %832 = vmatpush1.msra.mxu0 %v193
    %833 = vmatprep.subr.mxu0 0.0
    %834 = vmatpush1.msra.mxu0 %v194
    %835 = vmatprep.subr.mxu0 0.0
    %836 = vmatpush1.msra.mxu0 %v195
    %837 = vmatprep.subr.mxu0 0.0
    %838 = vmatpush1.msra.mxu0 %v196
    %839 = vmatprep.subr.mxu0 0.0
    %840 = vmatpush1.msra.mxu0 %v197
    %841 = vmatprep.subr.mxu0 0.0
    %842 = vmatpush1.msra.mxu0 %v198
    %843 = vmatprep.subr.mxu0 0.0
    %844 = vmatpush1.msra.mxu0 %v199
    %845 = vmatprep.subr.mxu0 0.0
    %846 = vmatpush1.msra.mxu0 %v200
    %847 = vmatprep.subr.mxu0 0.0
    %848 = vmatpush1.msra.mxu0 %v201
    %849 = vmatprep.subr.mxu0 0.0
    %850 = vmatpush1.msra.mxu0 %v202
    %851 = vmatprep.subr.mxu0 0.0
    %852 = vmatpush1.msra.mxu0 %v203
    %853 = vmatprep.subr.mxu0 0.0
    %854 = vmatpush1.msra.mxu0 %v204
    %855 = vmatprep.subr.mxu0 0.0
    %856 = vmatpush1.msra.mxu0 %v205
    %857 = vmatprep.subr.mxu0 0.0
    %858 = vmatpush1.msra.mxu0 %v206
    %859 = vmatprep.subr.mxu0 0.0
    %860 = vmatpush1.msra.mxu0 %v207
    %861 = vmatprep.subr.mxu0 0.0
    %862 = vmatpush1.msra.mxu0 %v208
    %863 = vmatprep.subr.mxu0 0.0
    %864 = vmatpush1.msra.mxu0 %v209
    %865 = vmatprep.subr.mxu0 0.0
    %866 = vmatpush1.msra.mxu0 %v210
    %867 = vmatprep.subr.mxu0 0.0
    %868 = vmatpush1.msra.mxu0 %v211
    %869 = vmatprep.subr.mxu0 0.0
    %870 = vmatpush1.msra.mxu0 %v212
    %871 = vmatprep.subr.mxu0 0.0
    %872 = vmatpush1.msra.mxu0 %v213
    %873 = vmatprep.subr.mxu0 0.0
    %874 = vmatpush1.msra.mxu0 %v214
    %875 = vmatprep.subr.mxu0 0.0
    %876 = vmatpush1.msra.mxu0 %v215
    %877 = vmatprep.subr.mxu0 0.0
    %878 = vmatpush1.msra.mxu0 %v216
    %879 = vmatprep.subr.mxu0 0.0
    %880 = vmatpush1.msra.mxu0 %v217
    %881 = vmatprep.subr.mxu0 0.0
    %882 = vmatpush1.msra.mxu0 %v218
    %883 = vmatprep.subr.mxu0 0.0
    %884 = vmatpush1.msra.mxu0 %v219
    %885 = vmatprep.mubr.f32.mxu0 %v67
    %886 = vmatmul.mubr.f32.gmra.mrb[0].mxu0 %v66
    %v887 = vpop.f32.mrb[0].mxu0
    %v888 = vadd.f32 %v818, %v887
    %v889 = vpop.f32.mrb[0].mxu0
    %890 = vdwg.mxu0
    %891 = vmatprep.subr.mxu0 0.0
    %892 = vmatpush1.msra.mxu0 %v220
    %893 = vmatprep.subr.mxu0 0.0
    %894 = vmatpush1.msra.mxu0 %v221
    %895 = vmatprep.subr.mxu0 0.0
    %896 = vmatpush1.msra.mxu0 %v222
    %897 = vmatprep.subr.mxu0 0.0
    %898 = vmatpush1.msra.mxu0 %v223
    %899 = vmatprep.subr.mxu0 0.0
    %900 = vmatpush1.msra.mxu0 %v224
    %901 = vmatprep.subr.mxu0 0.0
    %902 = vmatpush1.msra.mxu0 %v225
    %903 = vmatprep.subr.mxu0 0.0
    %904 = vmatpush1.msra.mxu0 %v226
    %905 = vmatprep.subr.mxu0 0.0
    %906 = vmatpush1.msra.mxu0 %v227
    %907 = vmatprep.subr.mxu0 0.0
    %908 = vmatpush1.msra.mxu0 %v228
    %909 = vmatprep.subr.mxu0 0.0
    %910 = vmatpush1.msra.mxu0 %v229
    %911 = vmatprep.subr.mxu0 0.0
    %912 = vmatpush1.msra.mxu0 %v230
    %913 = vmatprep.subr.mxu0 0.0
    %914 = vmatpush1.msra.mxu0 %v231
    %915 = vmatprep.subr.mxu0 0.0
    %916 = vmatpush1.msra.mxu0 %v232
    %917 = vmatprep.subr.mxu0 0.0
    %918 = vmatpush1.msra.mxu0 %v233
    %919 = vmatprep.subr.mxu0 0.0
    %920 = vmatpush1.msra.mxu0 %v234
    %921 = vmatprep.subr.mxu0 0.0
    %922 = vmatpush1.msra.mxu0 %v235
    %923 = vmatprep.subr.mxu0 0.0
    %924 = vmatpush1.msra.mxu0 %v236
    %925 = vmatprep.subr.mxu0 0.0
    %926 = vmatpush1.msra.mxu0 %v237
    %927 = vmatprep.subr.mxu0 0.0
    %928 = vmatpush1.msra.mxu0 %v238
    %929 = vmatprep.subr.mxu0 0.0
    %930 = vmatpush1.msra.mxu0 %v239
    %931 = vmatprep.subr.mxu0 0.0
    %932 = vmatpush1.msra.mxu0 %v240
    %933 = vmatprep.subr.mxu0 0.0
    %934 = vmatpush1.msra.mxu0 %v241
    %935 = vmatprep.subr.mxu0 0.0
    %936 = vmatpush1.msra.mxu0 %v242
    %937 = vmatprep.subr.mxu0 0.0
    %938 = vmatpush1.msra.mxu0 %v243
    %939 = vmatprep.subr.mxu0 0.0
    %940 = vmatpush1.msra.mxu0 %v244
    %941 = vmatprep.subr.mxu0 0.0
    %942 = vmatpush1.msra.mxu0 %v245
    %943 = vmatprep.subr.mxu0 0.0
    %944 = vmatpush1.msra.mxu0 %v246
    %945 = vmatprep.subr.mxu0 0.0
    %946 = vmatpush1.msra.mxu0 %v247
    %947 = vmatprep.subr.mxu0 0.0
    %948 = vmatpush1.msra.mxu0 %v248
    %949 = vmatprep.subr.mxu0 0.0
    %950 = vmatpush1.msra.mxu0 %v249
    %951 = vmatprep.subr.mxu0 0.0
    %952 = vmatpush1.msra.mxu0 %v250
    %953 = vmatprep.subr.mxu0 0.0
    %954 = vmatpush1.msra.mxu0 %v251
    %955 = vmatprep.mubr.f32.mxu0 %v69
    %956 = vmatmul.mubr.f32.gmra.mrb[0].mxu0 %v68
    %v957 = vpop.f32.mrb[0].mxu0
    %v958 = vadd.f32 %v888, %v957
    %v959 = vpop.f32.mrb[0].mxu0
    %960 = vdwg.mxu0
    %961 = vmatprep.subr.mxu0 0.0
    %962 = vmatpush1.msra.mxu0 %v252
    %963 = vmatprep.subr.mxu0 0.0
    %964 = vmatpush1.msra.mxu0 %v253
    %965 = vmatprep.subr.mxu0 0.0
    %966 = vmatpush1.msra.mxu0 %v254
    %967 = vmatprep.subr.mxu0 0.0
    %968 = vmatpush1.msra.mxu0 %v255
    %969 = vmatprep.subr.mxu0 0.0
    %970 = vmatpush1.msra.mxu0 %v256
    %971 = vmatprep.subr.mxu0 0.0
    %972 = vmatpush1.msra.mxu0 %v257
    %973 = vmatprep.subr.mxu0 0.0
    %974 = vmatpush1.msra.mxu0 %v258
    %975 = vmatprep.subr.mxu0 0.0
    %976 = vmatpush1.msra.mxu0 %v259
    %977 = vmatprep.subr.mxu0 0.0
    %978 = vmatpush1.msra.mxu0 %v260
    %979 = vmatprep.subr.mxu0 0.0
    %980 = vmatpush1.msra.mxu0 %v261
    %981 = vmatprep.subr.mxu0 0.0
    %982 = vmatpush1.msra.mxu0 %v262
    %983 = vmatprep.subr.mxu0 0.0
    %984 = vmatpush1.msra.mxu0 %v263
    %985 = vmatprep.subr.mxu0 0.0
    %986 = vmatpush1.msra.mxu0 %v264
    %987 = vmatprep.subr.mxu0 0.0
    %988 = vmatpush1.msra.mxu0 %v265
    %989 = vmatprep.subr.mxu0 0.0
    %990 = vmatpush1.msra.mxu0 %v266
    %991 = vmatprep.subr.mxu0 0.0
    %992 = vmatpush1.msra.mxu0 %v267
    %993 = vmatprep.subr.mxu0 0.0
    %994 = vmatpush1.msra.mxu0 %v268
    %995 = vmatprep.subr.mxu0 0.0
    %996 = vmatpush1.msra.mxu0 %v269
    %997 = vmatprep.subr.mxu0 0.0
    %998 = vmatpush1.msra.mxu0 %v270
    %999 = vmatprep.subr.mxu0 0.0
    %1000 = vmatpush1.msra.mxu0 %v271
    %1001 = vmatprep.subr.mxu0 0.0
    %1002 = vmatpush1.msra.mxu0 %v272
    %1003 = vmatprep.subr.mxu0 0.0
    %1004 = vmatpush1.msra.mxu0 %v273
    %1005 = vmatprep.subr.mxu0 0.0
    %1006 = vmatpush1.msra.mxu0 %v274
    %1007 = vmatprep.subr.mxu0 0.0
    %1008 = vmatpush1.msra.mxu0 %v275
    %1009 = vmatprep.subr.mxu0 0.0
    %1010 = vmatpush1.msra.mxu0 %v276
    %1011 = vmatprep.subr.mxu0 0.0
    %1012 = vmatpush1.msra.mxu0 %v277
    %1013 = vmatprep.subr.mxu0 0.0
    %1014 = vmatpush1.msra.mxu0 %v278
    %1015 = vmatprep.subr.mxu0 0.0
    %1016 = vmatpush1.msra.mxu0 %v279
    %1017 = vmatprep.subr.mxu0 0.0
    %1018 = vmatpush1.msra.mxu0 %v280
    %1019 = vmatprep.subr.mxu0 0.0
    %1020 = vmatpush1.msra.mxu0 %v281
    %1021 = vmatprep.subr.mxu0 0.0
    %1022 = vmatpush1.msra.mxu0 %v282
    %1023 = vmatprep.subr.mxu0 0.0
    %1024 = vmatpush1.msra.mxu0 %v283
    %1025 = vmatprep.mubr.f32.mxu0 %v71
    %1026 = vmatmul.mubr.f32.gmra.mrb[0].mxu0 %v70
    %v1027 = vpop.f32.mrb[0].mxu0
    %v1028 = vadd.f32 %v958, %v1027
    %v1029 = vpop.f32.mrb[0].mxu0
    %1030 = vdwg.mxu0
    %1031 = vmatprep.subr.mxu0 0.0
    %1032 = vmatpush1.msra.mxu0 %v284
    %1033 = vmatprep.subr.mxu0 0.0
    %1034 = vmatpush1.msra.mxu0 %v285
    %1035 = vmatprep.subr.mxu0 0.0
    %1036 = vmatpush1.msra.mxu0 %v286
    %1037 = vmatprep.subr.mxu0 0.0
    %1038 = vmatpush1.msra.mxu0 %v287
    %1039 = vmatprep.subr.mxu0 0.0
    %1040 = vmatpush1.msra.mxu0 %v288
    %1041 = vmatprep.subr.mxu0 0.0
    %1042 = vmatpush1.msra.mxu0 %v289
    %1043 = vmatprep.subr.mxu0 0.0
    %1044 = vmatpush1.msra.mxu0 %v290
    %1045 = vmatprep.subr.mxu0 0.0
    %1046 = vmatpush1.msra.mxu0 %v291
    %1047 = vmatprep.subr.mxu0 0.0
    %1048 = vmatpush1.msra.mxu0 %v292
    %1049 = vmatprep.subr.mxu0 0.0
    %1050 = vmatpush1.msra.mxu0 %v293
    %1051 = vmatprep.subr.mxu0 0.0
    %1052 = vmatpush1.msra.mxu0 %v294
    %1053 = vmatprep.subr.mxu0 0.0
    %1054 = vmatpush1.msra.mxu0 %v295
    %1055 = vmatprep.subr.mxu0 0.0
    %1056 = vmatpush1.msra.mxu0 %v296
    %1057 = vmatprep.subr.mxu0 0.0
    %1058 = vmatpush1.msra.mxu0 %v297
    %1059 = vmatprep.subr.mxu0 0.0
    %1060 = vmatpush1.msra.mxu0 %v298
    %1061 = vmatprep.subr.mxu0 0.0
    %1062 = vmatpush1.msra.mxu0 %v299
    %1063 = vmatprep.subr.mxu0 0.0
    %1064 = vmatpush1.msra.mxu0 %v300
    %1065 = vmatprep.subr.mxu0 0.0
    %1066 = vmatpush1.msra.mxu0 %v301
    %1067 = vmatprep.subr.mxu0 0.0
    %1068 = vmatpush1.msra.mxu0 %v302
    %1069 = vmatprep.subr.mxu0 0.0
    %1070 = vmatpush1.msra.mxu0 %v303
    %1071 = vmatprep.subr.mxu0 0.0
    %1072 = vmatpush1.msra.mxu0 %v304
    %1073 = vmatprep.subr.mxu0 0.0
    %1074 = vmatpush1.msra.mxu0 %v305
    %1075 = vmatprep.subr.mxu0 0.0
    %1076 = vmatpush1.msra.mxu0 %v306
    %1077 = vmatprep.subr.mxu0 0.0
    %1078 = vmatpush1.msra.mxu0 %v307
    %1079 = vmatprep.subr.mxu0 0.0
    %1080 = vmatpush1.msra.mxu0 %v308
    %1081 = vmatprep.subr.mxu0 0.0
    %1082 = vmatpush1.msra.mxu0 %v309
    %1083 = vmatprep.subr.mxu0 0.0
    %1084 = vmatpush1.msra.mxu0 %v310
    %1085 = vmatprep.subr.mxu0 0.0
    %1086 = vmatpush1.msra.mxu0 %v311
    %1087 = vmatprep.subr.mxu0 0.0
    %1088 = vmatpush1.msra.mxu0 %v312
    %1089 = vmatprep.subr.mxu0 0.0
    %1090 = vmatpush1.msra.mxu0 %v313
    %1091 = vmatprep.subr.mxu0 0.0
    %1092 = vmatpush1.msra.mxu0 %v314
    %1093 = vmatprep.subr.mxu0 0.0
    %1094 = vmatpush1.msra.mxu0 %v315
    %1095 = vmatprep.mubr.f32.mxu0 %v73
    %1096 = vmatmul.mubr.f32.gmra.mrb[0].mxu0 %v72
    %v1097 = vpop.f32.mrb[0].mxu0
    %v1098 = vadd.f32 %v1028, %v1097
    %v1099 = vpop.f32.mrb[0].mxu0
    %1100 = vdwg.mxu0
    %1101 = vmatprep.subr.mxu0 0.0
    %1102 = vmatpush1.msra.mxu0 %v316
    %1103 = vmatprep.subr.mxu0 0.0
    %1104 = vmatpush1.msra.mxu0 %v317
    %1105 = vmatprep.subr.mxu0 0.0
    %1106 = vmatpush1.msra.mxu0 %v318
    %1107 = vmatprep.subr.mxu0 0.0
    %1108 = vmatpush1.msra.mxu0 %v319
    %1109 = vmatprep.subr.mxu0 0.0
    %1110 = vmatpush1.msra.mxu0 %v320
    %1111 = vmatprep.subr.mxu0 0.0
    %1112 = vmatpush1.msra.mxu0 %v321
    %1113 = vmatprep.subr.mxu0 0.0
    %1114 = vmatpush1.msra.mxu0 %v322
    %1115 = vmatprep.subr.mxu0 0.0
    %1116 = vmatpush1.msra.mxu0 %v323
    %1117 = vmatprep.subr.mxu0 0.0
    %1118 = vmatpush1.msra.mxu0 %v324
    %1119 = vmatprep.subr.mxu0 0.0
    %1120 = vmatpush1.msra.mxu0 %v325
    %1121 = vmatprep.subr.mxu0 0.0
    %1122 = vmatpush1.msra.mxu0 %v326
    %1123 = vmatprep.subr.mxu0 0.0
    %1124 = vmatpush1.msra.mxu0 %v327
    %1125 = vmatprep.subr.mxu0 0.0
    %1126 = vmatpush1.msra.mxu0 %v328
    %1127 = vmatprep.subr.mxu0 0.0
    %1128 = vmatpush1.msra.mxu0 %v329
    %1129 = vmatprep.subr.mxu0 0.0
    %1130 = vmatpush1.msra.mxu0 %v330
    %1131 = vmatprep.subr.mxu0 0.0
    %1132 = vmatpush1.msra.mxu0 %v331
    %1133 = vmatprep.subr.mxu0 0.0
    %1134 = vmatpush1.msra.mxu0 %v332
    %1135 = vmatprep.subr.mxu0 0.0
    %1136 = vmatpush1.msra.mxu0 %v333
    %1137 = vmatprep.subr.mxu0 0.0
    %1138 = vmatpush1.msra.mxu0 %v334
    %1139 = vmatprep.subr.mxu0 0.0
    %1140 = vmatpush1.msra.mxu0 %v335
    %1141 = vmatprep.subr.mxu0 0.0
    %1142 = vmatpush1.msra.mxu0 %v336
    %1143 = vmatprep.subr.mxu0 0.0
    %1144 = vmatpush1.msra.mxu0 %v337
    %1145 = vmatprep.subr.mxu0 0.0
    %1146 = vmatpush1.msra.mxu0 %v338
    %1147 = vmatprep.subr.mxu0 0.0
    %1148 = vmatpush1.msra.mxu0 %v339
    %1149 = vmatprep.subr.mxu0 0.0
    %1150 = vmatpush1.msra.mxu0 %v340
    %1151 = vmatprep.subr.mxu0 0.0
    %1152 = vmatpush1.msra.mxu0 %v341
    %1153 = vmatprep.subr.mxu0 0.0
    %1154 = vmatpush1.msra.mxu0 %v342
    %1155 = vmatprep.subr.mxu0 0.0
    %1156 = vmatpush1.msra.mxu0 %v343
    %1157 = vmatprep.subr.mxu0 0.0
    %1158 = vmatpush1.msra.mxu0 %v344
    %1159 = vmatprep.subr.mxu0 0.0
    %1160 = vmatpush1.msra.mxu0 %v345
    %1161 = vmatprep.subr.mxu0 0.0
    %1162 = vmatpush1.msra.mxu0 %v346
    %1163 = vmatprep.subr.mxu0 0.0
    %1164 = vmatpush1.msra.mxu0 %v347
    %1165 = vmatprep.mubr.f32.mxu0 %v75
    %1166 = vmatmul.mubr.f32.gmra.mrb[0].mxu0 %v74
    %v1167 = vpop.f32.mrb[0].mxu0
    %v1168 = vadd.f32 %v1098, %v1167
    %v1169 = vpop.f32.mrb[0].mxu0
    %1170 = vdwg.mxu0
    %1171 = vmatprep.subr.mxu0 0.0
    %1172 = vmatpush1.msra.mxu0 %v348
    %1173 = vmatprep.subr.mxu0 0.0
    %1174 = vmatpush1.msra.mxu0 %v349
    %1175 = vmatprep.subr.mxu0 0.0
    %1176 = vmatpush1.msra.mxu0 %v350
    %1177 = vmatprep.subr.mxu0 0.0
    %1178 = vmatpush1.msra.mxu0 %v351
    %1179 = vmatprep.subr.mxu0 0.0
    %1180 = vmatpush1.msra.mxu0 %v352
    %1181 = vmatprep.subr.mxu0 0.0
    %1182 = vmatpush1.msra.mxu0 %v353
    %1183 = vmatprep.subr.mxu0 0.0
    %1184 = vmatpush1.msra.mxu0 %v354
    %1185 = vmatprep.subr.mxu0 0.0
    %1186 = vmatpush1.msra.mxu0 %v355
    %1187 = vmatprep.subr.mxu0 0.0
    %1188 = vmatpush1.msra.mxu0 %v356
    %1189 = vmatprep.subr.mxu0 0.0
    %1190 = vmatpush1.msra.mxu0 %v357
    %1191 = vmatprep.subr.mxu0 0.0
    %1192 = vmatpush1.msra.mxu0 %v358
    %1193 = vmatprep.subr.mxu0 0.0
    %1194 = vmatpush1.msra.mxu0 %v359
    %1195 = vmatprep.subr.mxu0 0.0
    %1196 = vmatpush1.msra.mxu0 %v360
    %1197 = vmatprep.subr.mxu0 0.0
    %1198 = vmatpush1.msra.mxu0 %v361
    %1199 = vmatprep.subr.mxu0 0.0
    %1200 = vmatpush1.msra.mxu0 %v362
    %1201 = vmatprep.subr.mxu0 0.0
    %1202 = vmatpush1.msra.mxu0 %v363
    %1203 = vmatprep.subr.mxu0 0.0
    %1204 = vmatpush1.msra.mxu0 %v364
    %1205 = vmatprep.subr.mxu0 0.0
    %1206 = vmatpush1.msra.mxu0 %v365
    %1207 = vmatprep.subr.mxu0 0.0
    %1208 = vmatpush1.msra.mxu0 %v366
    %1209 = vmatprep.subr.mxu0 0.0
    %1210 = vmatpush1.msra.mxu0 %v367
    %1211 = vmatprep.subr.mxu0 0.0
    %1212 = vmatpush1.msra.mxu0 %v368
    %1213 = vmatprep.subr.mxu0 0.0
    %1214 = vmatpush1.msra.mxu0 %v369
    %1215 = vmatprep.subr.mxu0 0.0
    %1216 = vmatpush1.msra.mxu0 %v370
    %1217 = vmatprep.subr.mxu0 0.0
    %1218 = vmatpush1.msra.mxu0 %v371
    %1219 = vmatprep.subr.mxu0 0.0
    %1220 = vmatpush1.msra.mxu0 %v372
    %1221 = vmatprep.subr.mxu0 0.0
    %1222 = vmatpush1.msra.mxu0 %v373
    %1223 = vmatprep.subr.mxu0 0.0
    %1224 = vmatpush1.msra.mxu0 %v374
    %1225 = vmatprep.subr.mxu0 0.0
    %1226 = vmatpush1.msra.mxu0 %v375
    %1227 = vmatprep.subr.mxu0 0.0
    %1228 = vmatpush1.msra.mxu0 %v376
    %1229 = vmatprep.subr.mxu0 0.0
    %1230 = vmatpush1.msra.mxu0 %v377
    %1231 = vmatprep.subr.mxu0 0.0
    %1232 = vmatpush1.msra.mxu0 %v378
    %1233 = vmatprep.subr.mxu0 0.0
    %1234 = vmatpush1.msra.mxu0 %v379
    %1235 = vmatprep.mubr.f32.mxu0 %v77
    %1236 = vmatmul.mubr.f32.gmra.mrb[0].mxu0 %v76
    %v1237 = vpop.f32.mrb[0].mxu0
    %v1238 = vadd.f32 %v1168, %v1237
    %v1239 = vpop.f32.mrb[0].mxu0
    %1240 = vdwg.mxu0
    %1241 = vmatprep.subr.mxu0 0.0
    %1242 = vmatpush1.msra.mxu0 %v380
    %1243 = vmatprep.subr.mxu0 0.0
    %1244 = vmatpush1.msra.mxu0 %v381
    %1245 = vmatprep.subr.mxu0 0.0
    %1246 = vmatpush1.msra.mxu0 %v382
    %1247 = vmatprep.subr.mxu0 0.0
    %1248 = vmatpush1.msra.mxu0 %v383
    %1249 = vmatprep.subr.mxu0 0.0
    %1250 = vmatpush1.msra.mxu0 %v384
    %1251 = vmatprep.subr.mxu0 0.0
    %1252 = vmatpush1.msra.mxu0 %v385
    %1253 = vmatprep.subr.mxu0 0.0
    %1254 = vmatpush1.msra.mxu0 %v386
    %1255 = vmatprep.subr.mxu0 0.0
    %1256 = vmatpush1.msra.mxu0 %v387
    %1257 = vmatprep.subr.mxu0 0.0
    %1258 = vmatpush1.msra.mxu0 %v388
    %1259 = vmatprep.subr.mxu0 0.0
    %1260 = vmatpush1.msra.mxu0 %v389
    %1261 = vmatprep.subr.mxu0 0.0
    %1262 = vmatpush1.msra.mxu0 %v390
    %1263 = vmatprep.subr.mxu0 0.0
    %1264 = vmatpush1.msra.mxu0 %v391
    %1265 = vmatprep.subr.mxu0 0.0
    %1266 = vmatpush1.msra.mxu0 %v392
    %1267 = vmatprep.subr.mxu0 0.0
    %1268 = vmatpush1.msra.mxu0 %v393
    %1269 = vmatprep.subr.mxu0 0.0
    %1270 = vmatpush1.msra.mxu0 %v394
    %1271 = vmatprep.subr.mxu0 0.0
    %1272 = vmatpush1.msra.mxu0 %v395
    %1273 = vmatprep.subr.mxu0 0.0
    %1274 = vmatpush1.msra.mxu0 %v396
    %1275 = vmatprep.subr.mxu0 0.0
    %1276 = vmatpush1.msra.mxu0 %v397
    %1277 = vmatprep.subr.mxu0 0.0
    %1278 = vmatpush1.msra.mxu0 %v398
    %1279 = vmatprep.subr.mxu0 0.0
    %1280 = vmatpush1.msra.mxu0 %v399
    %1281 = vmatprep.subr.mxu0 0.0
    %1282 = vmatpush1.msra.mxu0 %v400
    %1283 = vmatprep.subr.mxu0 0.0
    %1284 = vmatpush1.msra.mxu0 %v401
    %1285 = vmatprep.subr.mxu0 0.0
    %1286 = vmatpush1.msra.mxu0 %v402
    %1287 = vmatprep.subr.mxu0 0.0
    %1288 = vmatpush1.msra.mxu0 %v403
    %1289 = vmatprep.subr.mxu0 0.0
    %1290 = vmatpush1.msra.mxu0 %v404
    %1291 = vmatprep.subr.mxu0 0.0
    %1292 = vmatpush1.msra.mxu0 %v405
    %1293 = vmatprep.subr.mxu0 0.0
    %1294 = vmatpush1.msra.mxu0 %v406
    %1295 = vmatprep.subr.mxu0 0.0
    %1296 = vmatpush1.msra.mxu0 %v407
    %1297 = vmatprep.subr.mxu0 0.0
    %1298 = vmatpush1.msra.mxu0 %v408
    %1299 = vmatprep.subr.mxu0 0.0
    %1300 = vmatpush1.msra.mxu0 %v409
    %1301 = vmatprep.subr.mxu0 0.0
    %1302 = vmatpush1.msra.mxu0 %v410
    %1303 = vmatprep.subr.mxu0 0.0
    %1304 = vmatpush1.msra.mxu0 %v411
    %1305 = vmatprep.mubr.f32.mxu0 %v79
    %1306 = vmatmul.mubr.f32.gmra.mrb[0].mxu0 %v78
    %v1307 = vpop.f32.mrb[0].mxu0
    %v1308 = vadd.f32 %v1238, %v1307
    %v1309 = vpop.f32.mrb[0].mxu0
    %1310 = vdwg.mxu0
    %1311 = vmatprep.subr.mxu0 0.0
    %1312 = vmatpush1.msra.mxu0 %v412
    %1313 = vmatprep.subr.mxu0 0.0
    %1314 = vmatpush1.msra.mxu0 %v413
    %1315 = vmatprep.subr.mxu0 0.0
    %1316 = vmatpush1.msra.mxu0 %v414
    %1317 = vmatprep.subr.mxu0 0.0
    %1318 = vmatpush1.msra.mxu0 %v415
    %1319 = vmatprep.subr.mxu0 0.0
    %1320 = vmatpush1.msra.mxu0 %v416
    %1321 = vmatprep.subr.mxu0 0.0
    %1322 = vmatpush1.msra.mxu0 %v417
    %1323 = vmatprep.subr.mxu0 0.0
    %1324 = vmatpush1.msra.mxu0 %v418
    %1325 = vmatprep.subr.mxu0 0.0
    %1326 = vmatpush1.msra.mxu0 %v419
    %1327 = vmatprep.subr.mxu0 0.0
    %1328 = vmatpush1.msra.mxu0 %v420
    %1329 = vmatprep.subr.mxu0 0.0
    %1330 = vmatpush1.msra.mxu0 %v421
    %1331 = vmatprep.subr.mxu0 0.0
    %1332 = vmatpush1.msra.mxu0 %v422
    %1333 = vmatprep.subr.mxu0 0.0
    %1334 = vmatpush1.msra.mxu0 %v423
    %1335 = vmatprep.subr.mxu0 0.0
    %1336 = vmatpush1.msra.mxu0 %v424
    %1337 = vmatprep.subr.mxu0 0.0
    %1338 = vmatpush1.msra.mxu0 %v425
    %1339 = vmatprep.subr.mxu0 0.0
    %1340 = vmatpush1.msra.mxu0 %v426
    %1341 = vmatprep.subr.mxu0 0.0
    %1342 = vmatpush1.msra.mxu0 %v427
    %1343 = vmatprep.subr.mxu0 0.0
    %1344 = vmatpush1.msra.mxu0 %v428
    %1345 = vmatprep.subr.mxu0 0.0
    %1346 = vmatpush1.msra.mxu0 %v429
    %1347 = vmatprep.subr.mxu0 0.0
    %1348 = vmatpush1.msra.mxu0 %v430
    %1349 = vmatprep.subr.mxu0 0.0
    %1350 = vmatpush1.msra.mxu0 %v431
    %1351 = vmatprep.subr.mxu0 0.0
    %1352 = vmatpush1.msra.mxu0 %v432
    %1353 = vmatprep.subr.mxu0 0.0
    %1354 = vmatpush1.msra.mxu0 %v433
    %1355 = vmatprep.subr.mxu0 0.0
    %1356 = vmatpush1.msra.mxu0 %v434
    %1357 = vmatprep.subr.mxu0 0.0
    %1358 = vmatpush1.msra.mxu0 %v435
    %1359 = vmatprep.subr.mxu0 0.0
    %1360 = vmatpush1.msra.mxu0 %v436
    %1361 = vmatprep.subr.mxu0 0.0
    %1362 = vmatpush1.msra.mxu0 %v437
    %1363 = vmatprep.subr.mxu0 0.0
    %1364 = vmatpush1.msra.mxu0 %v438
    %1365 = vmatprep.subr.mxu0 0.0
    %1366 = vmatpush1.msra.mxu0 %v439
    %1367 = vmatprep.subr.mxu0 0.0
    %1368 = vmatpush1.msra.mxu0 %v440
    %1369 = vmatprep.subr.mxu0 0.0
    %1370 = vmatpush1.msra.mxu0 %v441
    %1371 = vmatprep.subr.mxu0 0.0
    %1372 = vmatpush1.msra.mxu0 %v442
    %1373 = vmatprep.subr.mxu0 0.0
    %1374 = vmatpush1.msra.mxu0 %v443
    %1375 = vmatprep.mubr.f32.mxu0 %v81
    %1376 = vmatmul.mubr.f32.gmra.mrb[0].mxu0 %v80
    %v1377 = vpop.f32.mrb[0].mxu0
    %v1378 = vadd.f32 %v1308, %v1377
    %v1379 = vpop.f32.mrb[0].mxu0
    %1380 = vdwg.mxu0
    %1381 = vmatprep.subr.mxu0 0.0
    %1382 = vmatpush1.msra.mxu0 %v444
    %1383 = vmatprep.subr.mxu0 0.0
    %1384 = vmatpush1.msra.mxu0 %v445
    %1385 = vmatprep.subr.mxu0 0.0
    %1386 = vmatpush1.msra.mxu0 %v446
    %1387 = vmatprep.subr.mxu0 0.0
    %1388 = vmatpush1.msra.mxu0 %v447
    %1389 = vmatprep.subr.mxu0 0.0
    %1390 = vmatpush1.msra.mxu0 %v448
    %1391 = vmatprep.subr.mxu0 0.0
    %1392 = vmatpush1.msra.mxu0 %v449
    %1393 = vmatprep.subr.mxu0 0.0
    %1394 = vmatpush1.msra.mxu0 %v450
    %1395 = vmatprep.subr.mxu0 0.0
    %1396 = vmatpush1.msra.mxu0 %v451
    %1397 = vmatprep.subr.mxu0 0.0
    %1398 = vmatpush1.msra.mxu0 %v452
    %1399 = vmatprep.subr.mxu0 0.0
    %1400 = vmatpush1.msra.mxu0 %v453
    %1401 = vmatprep.subr.mxu0 0.0
    %1402 = vmatpush1.msra.mxu0 %v454
    %1403 = vmatprep.subr.mxu0 0.0
    %1404 = vmatpush1.msra.mxu0 %v455
    %1405 = vmatprep.subr.mxu0 0.0
    %1406 = vmatpush1.msra.mxu0 %v456
    %1407 = vmatprep.subr.mxu0 0.0
    %1408 = vmatpush1.msra.mxu0 %v457
    %1409 = vmatprep.subr.mxu0 0.0
    %1410 = vmatpush1.msra.mxu0 %v458
    %1411 = vmatprep.subr.mxu0 0.0
    %1412 = vmatpush1.msra.mxu0 %v459
    %1413 = vmatprep.subr.mxu0 0.0
    %1414 = vmatpush1.msra.mxu0 %v460
    %1415 = vmatprep.subr.mxu0 0.0
    %1416 = vmatpush1.msra.mxu0 %v461
    %1417 = vmatprep.subr.mxu0 0.0
    %1418 = vmatpush1.msra.mxu0 %v462
    %1419 = vmatprep.subr.mxu0 0.0
    %1420 = vmatpush1.msra.mxu0 %v463
    %1421 = vmatprep.subr.mxu0 0.0
    %1422 = vmatpush1.msra.mxu0 %v464
    %1423 = vmatprep.subr.mxu0 0.0
    %1424 = vmatpush1.msra.mxu0 %v465
    %1425 = vmatprep.subr.mxu0 0.0
    %1426 = vmatpush1.msra.mxu0 %v466
    %1427 = vmatprep.subr.mxu0 0.0
    %1428 = vmatpush1.msra.mxu0 %v467
    %1429 = vmatprep.subr.mxu0 0.0
    %1430 = vmatpush1.msra.mxu0 %v468
    %1431 = vmatprep.subr.mxu0 0.0
    %1432 = vmatpush1.msra.mxu0 %v469
    %1433 = vmatprep.subr.mxu0 0.0
    %1434 = vmatpush1.msra.mxu0 %v470
    %1435 = vmatprep.subr.mxu0 0.0
    %1436 = vmatpush1.msra.mxu0 %v471
    %1437 = vmatprep.subr.mxu0 0.0
    %1438 = vmatpush1.msra.mxu0 %v472
    %1439 = vmatprep.subr.mxu0 0.0
    %1440 = vmatpush1.msra.mxu0 %v473
    %1441 = vmatprep.subr.mxu0 0.0
    %1442 = vmatpush1.msra.mxu0 %v474
    %1443 = vmatprep.subr.mxu0 0.0
    %1444 = vmatpush1.msra.mxu0 %v475
    %1445 = vmatprep.mubr.f32.mxu0 %v83
    %1446 = vmatmul.mubr.f32.gmra.mrb[0].mxu0 %v82
    %v1447 = vpop.f32.mrb[0].mxu0
    %v1448 = vadd.f32 %v1378, %v1447
    %v1449 = vpop.f32.mrb[0].mxu0
    %1450 = vdwg.mxu0
    %1451 = vmatprep.subr.mxu0 0.0
    %1452 = vmatpush1.msra.mxu0 %v476
    %1453 = vmatprep.subr.mxu0 0.0
    %1454 = vmatpush1.msra.mxu0 %v477
    %1455 = vmatprep.subr.mxu0 0.0
    %1456 = vmatpush1.msra.mxu0 %v478
    %1457 = vmatprep.subr.mxu0 0.0
    %1458 = vmatpush1.msra.mxu0 %v479
    %1459 = vmatprep.subr.mxu0 0.0
    %1460 = vmatpush1.msra.mxu0 %v480
    %1461 = vmatprep.subr.mxu0 0.0
    %1462 = vmatpush1.msra.mxu0 %v481
    %1463 = vmatprep.subr.mxu0 0.0
    %1464 = vmatpush1.msra.mxu0 %v482
    %1465 = vmatprep.subr.mxu0 0.0
    %1466 = vmatpush1.msra.mxu0 %v483
    %1467 = vmatprep.subr.mxu0 0.0
    %1468 = vmatpush1.msra.mxu0 %v484
    %1469 = vmatprep.subr.mxu0 0.0
    %1470 = vmatpush1.msra.mxu0 %v485
    %1471 = vmatprep.subr.mxu0 0.0
    %1472 = vmatpush1.msra.mxu0 %v486
    %1473 = vmatprep.subr.mxu0 0.0
    %1474 = vmatpush1.msra.mxu0 %v487
    %1475 = vmatprep.subr.mxu0 0.0
    %1476 = vmatpush1.msra.mxu0 %v488
    %1477 = vmatprep.subr.mxu0 0.0
    %1478 = vmatpush1.msra.mxu0 %v489
    %1479 = vmatprep.subr.mxu0 0.0
    %1480 = vmatpush1.msra.mxu0 %v490
    %1481 = vmatprep.subr.mxu0 0.0
    %1482 = vmatpush1.msra.mxu0 %v491
    %1483 = vmatprep.subr.mxu0 0.0
    %1484 = vmatpush1.msra.mxu0 %v492
    %1485 = vmatprep.subr.mxu0 0.0
    %1486 = vmatpush1.msra.mxu0 %v493
    %1487 = vmatprep.subr.mxu0 0.0
    %1488 = vmatpush1.msra.mxu0 %v494
    %1489 = vmatprep.subr.mxu0 0.0
    %1490 = vmatpush1.msra.mxu0 %v495
    %1491 = vmatprep.subr.mxu0 0.0
    %1492 = vmatpush1.msra.mxu0 %v496
    %1493 = vmatprep.subr.mxu0 0.0
    %1494 = vmatpush1.msra.mxu0 %v497
    %1495 = vmatprep.subr.mxu0 0.0
    %1496 = vmatpush1.msra.mxu0 %v498
    %1497 = vmatprep.subr.mxu0 0.0
    %1498 = vmatpush1.msra.mxu0 %v499
    %1499 = vmatprep.subr.mxu0 0.0
    %1500 = vmatpush1.msra.mxu0 %v500
    %1501 = vmatprep.subr.mxu0 0.0
    %1502 = vmatpush1.msra.mxu0 %v501
    %1503 = vmatprep.subr.mxu0 0.0
    %1504 = vmatpush1.msra.mxu0 %v502
    %1505 = vmatprep.subr.mxu0 0.0
    %1506 = vmatpush1.msra.mxu0 %v503
    %1507 = vmatprep.subr.mxu0 0.0
    %1508 = vmatpush1.msra.mxu0 %v504
    %1509 = vmatprep.subr.mxu0 0.0
    %1510 = vmatpush1.msra.mxu0 %v505
    %1511 = vmatprep.subr.mxu0 0.0
    %1512 = vmatpush1.msra.mxu0 %v506
    %1513 = vmatprep.subr.mxu0 0.0
    %1514 = vmatpush1.msra.mxu0 %v507
    %1515 = vmatprep.mubr.f32.mxu0 %v85
    %1516 = vmatmul.mubr.f32.gmra.mrb[0].mxu0 %v84
    %v1517 = vpop.f32.mrb[0].mxu0
    %v1518 = vadd.f32 %v1448, %v1517
    %v1519 = vpop.f32.mrb[0].mxu0
    %1520 = vdwg.mxu0
    %1521 = vmatprep.subr.mxu0 0.0
    %1522 = vmatpush1.msra.mxu0 %v508
    %1523 = vmatprep.subr.mxu0 0.0
    %1524 = vmatpush1.msra.mxu0 %v509
    %1525 = vmatprep.subr.mxu0 0.0
    %1526 = vmatpush1.msra.mxu0 %v510
    %1527 = vmatprep.subr.mxu0 0.0
    %1528 = vmatpush1.msra.mxu0 %v511
    %1529 = vmatprep.subr.mxu0 0.0
    %1530 = vmatpush1.msra.mxu0 %v512
    %1531 = vmatprep.subr.mxu0 0.0
    %1532 = vmatpush1.msra.mxu0 %v513
    %1533 = vmatprep.subr.mxu0 0.0
    %1534 = vmatpush1.msra.mxu0 %v514
    %1535 = vmatprep.subr.mxu0 0.0
    %1536 = vmatpush1.msra.mxu0 %v515
    %1537 = vmatprep.subr.mxu0 0.0
    %1538 = vmatpush1.msra.mxu0 %v516
    %1539 = vmatprep.subr.mxu0 0.0
    %1540 = vmatpush1.msra.mxu0 %v517
    %1541 = vmatprep.subr.mxu0 0.0
    %1542 = vmatpush1.msra.mxu0 %v518
    %1543 = vmatprep.subr.mxu0 0.0
    %1544 = vmatpush1.msra.mxu0 %v519
    %1545 = vmatprep.subr.mxu0 0.0
    %1546 = vmatpush1.msra.mxu0 %v520
    %1547 = vmatprep.subr.mxu0 0.0
    %1548 = vmatpush1.msra.mxu0 %v521
    %1549 = vmatprep.subr.mxu0 0.0
    %1550 = vmatpush1.msra.mxu0 %v522
    %1551 = vmatprep.subr.mxu0 0.0
    %1552 = vmatpush1.msra.mxu0 %v523
    %1553 = vmatprep.subr.mxu0 0.0
    %1554 = vmatpush1.msra.mxu0 %v524
    %1555 = vmatprep.subr.mxu0 0.0
    %1556 = vmatpush1.msra.mxu0 %v525
    %1557 = vmatprep.subr.mxu0 0.0
    %1558 = vmatpush1.msra.mxu0 %v526
    %1559 = vmatprep.subr.mxu0 0.0
    %1560 = vmatpush1.msra.mxu0 %v527
    %1561 = vmatprep.subr.mxu0 0.0
    %1562 = vmatpush1.msra.mxu0 %v528
    %1563 = vmatprep.subr.mxu0 0.0
    %1564 = vmatpush1.msra.mxu0 %v529
    %1565 = vmatprep.subr.mxu0 0.0
    %1566 = vmatpush1.msra.mxu0 %v530
    %1567 = vmatprep.subr.mxu0 0.0
    %1568 = vmatpush1.msra.mxu0 %v531
    %1569 = vmatprep.subr.mxu0 0.0
    %1570 = vmatpush1.msra.mxu0 %v532
    %1571 = vmatprep.subr.mxu0 0.0
    %1572 = vmatpush1.msra.mxu0 %v533
    %1573 = vmatprep.subr.mxu0 0.0
    %1574 = vmatpush1.msra.mxu0 %v534
    %1575 = vmatprep.subr.mxu0 0.0
    %1576 = vmatpush1.msra.mxu0 %v535
    %1577 = vmatprep.subr.mxu0 0.0
    %1578 = vmatpush1.msra.mxu0 %v536
    %1579 = vmatprep.subr.mxu0 0.0
    %1580 = vmatpush1.msra.mxu0 %v537
    %1581 = vmatprep.subr.mxu0 0.0
    %1582 = vmatpush1.msra.mxu0 %v538
    %1583 = vmatprep.subr.mxu0 0.0
    %1584 = vmatpush1.msra.mxu0 %v539
    %1585 = vmatprep.mubr.f32.mxu0 %v87
    %1586 = vmatmul.mubr.f32.gmra.mrb[0].mxu0 %v86
    %v1587 = vpop.f32.mrb[0].mxu0
    %v1588 = vadd.f32 %v1518, %v1587
    %v1589 = vpop.f32.mrb[0].mxu0
    %1590 = vdwg.mxu0
    %1591 = vmatprep.subr.mxu0 0.0
    %1592 = vmatpush1.msra.mxu0 %v540
    %1593 = vmatprep.subr.mxu0 0.0
    %1594 = vmatpush1.msra.mxu0 %v541
    %1595 = vmatprep.subr.mxu0 0.0
    %1596 = vmatpush1.msra.mxu0 %v542
    %1597 = vmatprep.subr.mxu0 0.0
    %1598 = vmatpush1.msra.mxu0 %v543
    %1599 = vmatprep.subr.mxu0 0.0
    %1600 = vmatpush1.msra.mxu0 %v544
    %1601 = vmatprep.subr.mxu0 0.0
    %1602 = vmatpush1.msra.mxu0 %v545
    %1603 = vmatprep.subr.mxu0 0.0
    %1604 = vmatpush1.msra.mxu0 %v546
    %1605 = vmatprep.subr.mxu0 0.0
    %1606 = vmatpush1.msra.mxu0 %v547
    %1607 = vmatprep.subr.mxu0 0.0
    %1608 = vmatpush1.msra.mxu0 %v548
    %1609 = vmatprep.subr.mxu0 0.0
    %1610 = vmatpush1.msra.mxu0 %v549
    %1611 = vmatprep.subr.mxu0 0.0
    %1612 = vmatpush1.msra.mxu0 %v550
    %1613 = vmatprep.subr.mxu0 0.0
    %1614 = vmatpush1.msra.mxu0 %v551
    %1615 = vmatprep.subr.mxu0 0.0
    %1616 = vmatpush1.msra.mxu0 %v552
    %1617 = vmatprep.subr.mxu0 0.0
    %1618 = vmatpush1.msra.mxu0 %v553
    %1619 = vmatprep.subr.mxu0 0.0
    %1620 = vmatpush1.msra.mxu0 %v554
    %1621 = vmatprep.subr.mxu0 0.0
    %1622 = vmatpush1.msra.mxu0 %v555
    %1623 = vmatprep.subr.mxu0 0.0
    %1624 = vmatpush1.msra.mxu0 %v556
    %1625 = vmatprep.subr.mxu0 0.0
    %1626 = vmatpush1.msra.mxu0 %v557
    %1627 = vmatprep.subr.mxu0 0.0
    %1628 = vmatpush1.msra.mxu0 %v558
    %1629 = vmatprep.subr.mxu0 0.0
    %1630 = vmatpush1.msra.mxu0 %v559
    %1631 = vmatprep.subr.mxu0 0.0
    %1632 = vmatpush1.msra.mxu0 %v560
    %1633 = vmatprep.subr.mxu0 0.0
    %1634 = vmatpush1.msra.mxu0 %v561
    %1635 = vmatprep.subr.mxu0 0.0
    %1636 = vmatpush1.msra.mxu0 %v562
    %1637 = vmatprep.subr.mxu0 0.0
    %1638 = vmatpush1.msra.mxu0 %v563
    %1639 = vmatprep.subr.mxu0 0.0
    %1640 = vmatpush1.msra.mxu0 %v564
    %1641 = vmatprep.subr.mxu0 0.0
    %1642 = vmatpush1.msra.mxu0 %v565
    %1643 = vmatprep.subr.mxu0 0.0
    %1644 = vmatpush1.msra.mxu0 %v566
    %1645 = vmatprep.subr.mxu0 0.0
    %1646 = vmatpush1.msra.mxu0 %v567
    %1647 = vmatprep.subr.mxu0 0.0
    %1648 = vmatpush1.msra.mxu0 %v568
    %1649 = vmatprep.subr.mxu0 0.0
    %1650 = vmatpush1.msra.mxu0 %v569
    %1651 = vmatprep.subr.mxu0 0.0
    %1652 = vmatpush1.msra.mxu0 %v570
    %1653 = vmatprep.subr.mxu0 0.0
    %1654 = vmatpush1.msra.mxu0 %v571
    %1655 = vmatprep.mubr.f32.mxu0 %v89
    %1656 = vmatmul.mubr.f32.gmra.mrb[0].mxu0 %v88
    %v1657 = vpop.f32.mrb[0].mxu0
    %v1658 = vadd.f32 %v1588, %v1657
    %v1659 = vpop.f32.mrb[0].mxu0
    %1660 = vdwg.mxu0
    %1661 = vmatprep.subr.mxu0 0.0
    %1662 = vmatpush1.msra.mxu0 %v572
    %1663 = vmatprep.subr.mxu0 0.0
    %1664 = vmatpush1.msra.mxu0 %v573
    %1665 = vmatprep.subr.mxu0 0.0
    %1666 = vmatpush1.msra.mxu0 %v574
    %1667 = vmatprep.subr.mxu0 0.0
    %1668 = vmatpush1.msra.mxu0 %v575
    %1669 = vmatprep.subr.mxu0 0.0
    %1670 = vmatpush1.msra.mxu0 %v576
    %1671 = vmatprep.subr.mxu0 0.0
    %1672 = vmatpush1.msra.mxu0 %v577
    %1673 = vmatprep.subr.mxu0 0.0
    %1674 = vmatpush1.msra.mxu0 %v578
    %1675 = vmatprep.subr.mxu0 0.0
    %1676 = vmatpush1.msra.mxu0 %v579
    %1677 = vmatprep.subr.mxu0 0.0
    %1678 = vmatpush1.msra.mxu0 %v580
    %1679 = vmatprep.subr.mxu0 0.0
    %1680 = vmatpush1.msra.mxu0 %v581
    %1681 = vmatprep.subr.mxu0 0.0
    %1682 = vmatpush1.msra.mxu0 %v582
    %1683 = vmatprep.subr.mxu0 0.0
    %1684 = vmatpush1.msra.mxu0 %v583
    %1685 = vmatprep.subr.mxu0 0.0
    %1686 = vmatpush1.msra.mxu0 %v584
    %1687 = vmatprep.subr.mxu0 0.0
    %1688 = vmatpush1.msra.mxu0 %v585
    %1689 = vmatprep.subr.mxu0 0.0
    %1690 = vmatpush1.msra.mxu0 %v586
    %1691 = vmatprep.subr.mxu0 0.0
    %1692 = vmatpush1.msra.mxu0 %v587
    %1693 = vmatprep.subr.mxu0 0.0
    %1694 = vmatpush1.msra.mxu0 %v588
    %1695 = vmatprep.subr.mxu0 0.0
    %1696 = vmatpush1.msra.mxu0 %v589
    %1697 = vmatprep.subr.mxu0 0.0
    %1698 = vmatpush1.msra.mxu0 %v590
    %1699 = vmatprep.subr.mxu0 0.0
    %1700 = vmatpush1.msra.mxu0 %v591
    %1701 = vmatprep.subr.mxu0 0.0
    %1702 = vmatpush1.msra.mxu0 %v592
    %1703 = vmatprep.subr.mxu0 0.0
    %1704 = vmatpush1.msra.mxu0 %v593
    %1705 = vmatprep.subr.mxu0 0.0
    %1706 = vmatpush1.msra.mxu0 %v594
    %1707 = vmatprep.subr.mxu0 0.0
    %1708 = vmatpush1.msra.mxu0 %v595
    %1709 = vmatprep.subr.mxu0 0.0
    %1710 = vmatpush1.msra.mxu0 %v596
    %1711 = vmatprep.subr.mxu0 0.0
    %1712 = vmatpush1.msra.mxu0 %v597
    %1713 = vmatprep.subr.mxu0 0.0
    %1714 = vmatpush1.msra.mxu0 %v598
    %1715 = vmatprep.subr.mxu0 0.0
    %1716 = vmatpush1.msra.mxu0 %v599
    %1717 = vmatprep.subr.mxu0 0.0
    %1718 = vmatpush1.msra.mxu0 %v600
    %1719 = vmatprep.subr.mxu0 0.0
    %1720 = vmatpush1.msra.mxu0 %v601
    %1721 = vmatprep.subr.mxu0 0.0
    %1722 = vmatpush1.msra.mxu0 %v602
    %1723 = vmatprep.subr.mxu0 0.0
    %1724 = vmatpush1.msra.mxu0 %v603
    %1725 = vmatprep.mubr.f32.mxu0 %v91
    %1726 = vmatmul.mubr.f32.gmra.mrb[0].mxu0 %v90
    %v1727 = vpop.f32.mrb[0].mxu0
    %v1728 = vadd.f32 %v1658, %v1727
    %v1729 = vpop.f32.mrb[0].mxu0
    %1730 = vdwg.mxu0
    %vm1731 = vcmp.gt.f32.partialorder %v1728, 0.0
    %v1732 = vmul.f32 %v1728, 0.2
    %v1733 = vsel %vm1731, %v1728, %v1732
    %v1734 = vld [vmem:[%s3] sm:$0xff]
    %v1735 = vld [vmem:[%s3 + $0x8] sm:$0xff]
    %v1736 = vld [vmem:[%s3 + $0x10] sm:$0xff]
    %v1737 = vld [vmem:[%s3 + $0x18] sm:$0xff]
    %v1738 = vld [vmem:[%s3 + $0x20] sm:$0xff]
    %v1739 = vld [vmem:[%s3 + $0x28] sm:$0xff]
    %v1740 = vld [vmem:[%s3 + $0x30] sm:$0xff]
    %v1741 = vld [vmem:[%s3 + $0x38] sm:$0xff]
    %v1742 = vld [vmem:[%s3 + $0x40] sm:$0xff]
    %v1743 = vld [vmem:[%s3 + $0x48] sm:$0xff]
    %v1744 = vld [vmem:[%s3 + $0x50] sm:$0xff]
    %v1745 = vld [vmem:[%s3 + $0x58] sm:$0xff]
    %v1746 = vld [vmem:[%s3 + $0x60] sm:$0xff]
    %v1747 = vld [vmem:[%s3 + $0x68] sm:$0xff]
    %v1748 = vld [vmem:[%s3 + $0x70] sm:$0xff]
    %v1749 = vld [vmem:[%s3 + $0x78] sm:$0xff]
    %v1750 = vld [vmem:[%s4] sm:$0x1]
    %v1752 = vlaneseq
    %v1753 = vshrl.u32 %v1752, 7
    %v1754 = vsub.s32 0, %v1753
    %v1755 = vrot.slane %v1750, %v1754
    %1757 = vmatprep.subr.mxu0 0.0
    %1758 = vmatpush1.msra.mxu0 %v1734
    %1759 = vmatprep.subr.mxu0 0.0
    %1760 = vmatpush1.msra.mxu0 %v1735
    %1761 = vmatprep.subr.mxu0 0.0
    %1762 = vmatpush1.msra.mxu0 %v1736
    %1763 = vmatprep.subr.mxu0 0.0
    %1764 = vmatpush1.msra.mxu0 %v1737
    %1765 = vmatprep.subr.mxu0 0.0
    %1766 = vmatpush1.msra.mxu0 %v1738
    %1767 = vmatprep.subr.mxu0 0.0
    %1768 = vmatpush1.msra.mxu0 %v1739
    %1769 = vmatprep.subr.mxu0 0.0
    %1770 = vmatpush1.msra.mxu0 %v1740
    %1771 = vmatprep.subr.mxu0 0.0
    %1772 = vmatpush1.msra.mxu0 %v1741
    %1773 = vmatprep.subr.mxu0 0.0
    %1774 = vmatpush1.msra.mxu0 %v1742
    %1775 = vmatprep.subr.mxu0 0.0
    %1776 = vmatpush1.msra.mxu0 %v1743
    %1777 = vmatprep.subr.mxu0 0.0
    %1778 = vmatpush1.msra.mxu0 %v1744
    %1779 = vmatprep.subr.mxu0 0.0
    %1780 = vmatpush1.msra.mxu0 %v1745
    %1781 = vmatprep.subr.mxu0 0.0
    %1782 = vmatpush1.msra.mxu0 %v1746
    %1783 = vmatprep.subr.mxu0 0.0
    %1784 = vmatpush1.msra.mxu0 %v1747
    %1785 = vmatprep.subr.mxu0 0.0
    %1786 = vmatpush1.msra.mxu0 %v1748
    %1787 = vmatprep.subr.mxu0 0.0
    %1788 = vmatpush1.msra.mxu0 %v1749
    %1789 = vmatprep.subr.mxu0 0.0
    %1790 = vmatpush1.msra.mxu0 0.0
    %1791 = vmatprep.subr.mxu0 0.0
    %1792 = vmatpush1.msra.mxu0 0.0
    %1793 = vmatprep.subr.mxu0 0.0
    %1794 = vmatpush1.msra.mxu0 0.0
    %1795 = vmatprep.subr.mxu0 0.0
    %1796 = vmatpush1.msra.mxu0 0.0
    %1797 = vmatprep.subr.mxu0 0.0
    %1798 = vmatpush1.msra.mxu0 0.0
    %1799 = vmatprep.subr.mxu0 0.0
    %1800 = vmatpush1.msra.mxu0 0.0
    %1801 = vmatprep.subr.mxu0 0.0
    %1802 = vmatpush1.msra.mxu0 0.0
    %1803 = vmatprep.subr.mxu0 0.0
    %1804 = vmatpush1.msra.mxu0 0.0
    %1805 = vmatprep.subr.mxu0 0.0
    %1806 = vmatpush1.msra.mxu0 0.0
    %1807 = vmatprep.subr.mxu0 0.0
    %1808 = vmatpush1.msra.mxu0 0.0
    %1809 = vmatprep.subr.mxu0 0.0
    %1810 = vmatpush1.msra.mxu0 0.0
    %1811 = vmatprep.subr.mxu0 0.0
    %1812 = vmatpush1.msra.mxu0 0.0
    %1813 = vmatprep.subr.mxu0 0.0
    %1814 = vmatpush1.msra.mxu0 0.0
    %1815 = vmatprep.subr.mxu0 0.0
    %1816 = vmatpush1.msra.mxu0 0.0
    %1817 = vmatprep.subr.mxu0 0.0
    %1818 = vmatpush1.msra.mxu0 0.0
    %1819 = vmatprep.subr.mxu0 0.0
    %1820 = vmatpush1.msra.mxu0 0.0
    %1821 = vmatprep.mubr.f32.mxu0 0.0
    %1822 = vmatmul.mubr.f32.gmra.mrb[0].mxu0 %v1733
    %v1823 = vpop.f32.mrb[0].mxu0
    %v1824 = vadd.f32 %v1755, %v1823
    %v1825 = vpop.f32.mrb[0].mxu0
    %1826 = vdwg.mxu0
    %vm1827 = vcmp.gt.f32.partialorder %v1824, 0.0
    %v1828 = vmul.f32 %v1824, 0.2
    %v1829 = vsel %vm1827, %v1824, %v1828
    %v1830 = vld [vmem:[%s5] sm:$0xff]
    %v1831 = vld [vmem:[%s5 + $0x8] sm:$0xff]
    %v1832 = vld [vmem:[%s5 + $0x10] sm:$0xff]
    %v1833 = vld [vmem:[%s5 + $0x18] sm:$0xff]
    %v1834 = vld [vmem:[%s5 + $0x20] sm:$0xff]
    %v1835 = vld [vmem:[%s5 + $0x28] sm:$0xff]
    %v1836 = vld [vmem:[%s5 + $0x30] sm:$0xff]
    %v1837 = vld [vmem:[%s5 + $0x38] sm:$0xff]
    %v1838 = vld [vmem:[%s5 + $0x40] sm:$0xff]
    %v1839 = vld [vmem:[%s5 + $0x48] sm:$0xff]
    %v1840 = vld [vmem:[%s5 + $0x50] sm:$0xff]
    %v1841 = vld [vmem:[%s5 + $0x58] sm:$0xff]
    %v1842 = vld [vmem:[%s5 + $0x60] sm:$0xff]
    %v1843 = vld [vmem:[%s5 + $0x68] sm:$0xff]
    %v1844 = vld [vmem:[%s5 + $0x70] sm:$0xff]
    %v1845 = vld [vmem:[%s5 + $0x78] sm:$0xff]
    %v1846 = vld [vmem:[%s6] sm:$0x1]
    %v1848 = vlaneseq
    %v1849 = vshrl.u32 %v1848, 7
    %v1850 = vsub.s32 0, %v1849
    %v1851 = vrot.slane %v1846, %v1850
    %1853 = vmatprep.subr.mxu0 0.0
    %1854 = vmatpush1.msra.mxu0 %v1830
    %1855 = vmatprep.subr.mxu0 0.0
    %1856 = vmatpush1.msra.mxu0 %v1831
    %1857 = vmatprep.subr.mxu0 0.0
    %1858 = vmatpush1.msra.mxu0 %v1832
    %1859 = vmatprep.subr.mxu0 0.0
    %1860 = vmatpush1.msra.mxu0 %v1833
    %1861 = vmatprep.subr.mxu0 0.0
    %1862 = vmatpush1.msra.mxu0 %v1834
    %1863 = vmatprep.subr.mxu0 0.0
    %1864 = vmatpush1.msra.mxu0 %v1835
    %1865 = vmatprep.subr.mxu0 0.0
    %1866 = vmatpush1.msra.mxu0 %v1836
    %1867 = vmatprep.subr.mxu0 0.0
    %1868 = vmatpush1.msra.mxu0 %v1837
    %1869 = vmatprep.subr.mxu0 0.0
    %1870 = vmatpush1.msra.mxu0 %v1838
    %1871 = vmatprep.subr.mxu0 0.0
    %1872 = vmatpush1.msra.mxu0 %v1839
    %1873 = vmatprep.subr.mxu0 0.0
    %1874 = vmatpush1.msra.mxu0 %v1840
    %1875 = vmatprep.subr.mxu0 0.0
    %1876 = vmatpush1.msra.mxu0 %v1841
    %1877 = vmatprep.subr.mxu0 0.0
    %1878 = vmatpush1.msra.mxu0 %v1842
    %1879 = vmatprep.subr.mxu0 0.0
    %1880 = vmatpush1.msra.mxu0 %v1843
    %1881 = vmatprep.subr.mxu0 0.0
    %1882 = vmatpush1.msra.mxu0 %v1844
    %1883 = vmatprep.subr.mxu0 0.0
    %1884 = vmatpush1.msra.mxu0 %v1845
    %1885 = vmatprep.subr.mxu0 0.0
    %1886 = vmatpush1.msra.mxu0 0.0
    %1887 = vmatprep.subr.mxu0 0.0
    %1888 = vmatpush1.msra.mxu0 0.0
    %1889 = vmatprep.subr.mxu0 0.0
    %1890 = vmatpush1.msra.mxu0 0.0
    %1891 = vmatprep.subr.mxu0 0.0
    %1892 = vmatpush1.msra.mxu0 0.0
    %1893 = vmatprep.subr.mxu0 0.0
    %1894 = vmatpush1.msra.mxu0 0.0
    %1895 = vmatprep.subr.mxu0 0.0
    %1896 = vmatpush1.msra.mxu0 0.0
    %1897 = vmatprep.subr.mxu0 0.0
    %1898 = vmatpush1.msra.mxu0 0.0
    %1899 = vmatprep.subr.mxu0 0.0
    %1900 = vmatpush1.msra.mxu0 0.0
    %1901 = vmatprep.subr.mxu0 0.0
    %1902 = vmatpush1.msra.mxu0 0.0
    %1903 = vmatprep.subr.mxu0 0.0
    %1904 = vmatpush1.msra.mxu0 0.0
    %1905 = vmatprep.subr.mxu0 0.0
    %1906 = vmatpush1.msra.mxu0 0.0
    %1907 = vmatprep.subr.mxu0 0.0
    %1908 = vmatpush1.msra.mxu0 0.0
    %1909 = vmatprep.subr.mxu0 0.0
    %1910 = vmatpush1.msra.mxu0 0.0
    %1911 = vmatprep.subr.mxu0 0.0
    %1912 = vmatpush1.msra.mxu0 0.0
    %1913 = vmatprep.subr.mxu0 0.0
    %1914 = vmatpush1.msra.mxu0 0.0
    %1915 = vmatprep.subr.mxu0 0.0
    %1916 = vmatpush1.msra.mxu0 0.0
    %1917 = vmatprep.mubr.f32.mxu0 0.0
    %1918 = vmatmul.mubr.f32.gmra.mrb[0].mxu0 %v1829
    %v1919 = vpop.f32.mrb[0].mxu0
    %v1920 = vadd.f32 %v1851, %v1919
    %v1921 = vpop.f32.mrb[0].mxu0
    %1922 = vdwg.mxu0
    %1923 = vst [vmem:[%s13] sm:$0xff] %v1920
    %v1924 = vld [vmem:[%s7] sm:$0xff]
    %v1925 = vld [vmem:[%s7 + $0x8] sm:$0xff]
    %v1926 = vld [vmem:[%s7 + $0x10] sm:$0xff]
    %v1927 = vld [vmem:[%s7 + $0x18] sm:$0xff]
    %v1928 = vld [vmem:[%s7 + $0x20] sm:$0xff]
    %v1929 = vld [vmem:[%s7 + $0x28] sm:$0xff]
    %v1930 = vld [vmem:[%s7 + $0x30] sm:$0xff]
    %v1931 = vld [vmem:[%s7 + $0x38] sm:$0xff]
    %v1932 = vld [vmem:[%s7 + $0x40] sm:$0xff]
    %v1933 = vld [vmem:[%s7 + $0x48] sm:$0xff]
    %v1934 = vld [vmem:[%s7 + $0x50] sm:$0xff]
    %v1935 = vld [vmem:[%s7 + $0x58] sm:$0xff]
    %v1936 = vld [vmem:[%s7 + $0x60] sm:$0xff]
    %v1937 = vld [vmem:[%s7 + $0x68] sm:$0xff]
    %v1938 = vld [vmem:[%s7 + $0x70] sm:$0xff]
    %v1939 = vld [vmem:[%s7 + $0x78] sm:$0xff]
    %v1940 = vld [vmem:[%s8] sm:$0x1]
    %v1942 = vlaneseq
    %v1943 = vshrl.u32 %v1942, 7
    %v1944 = vsub.s32 0, %v1943
    %v1945 = vrot.slane %v1940, %v1944
    %1947 = vmatprep.subr.mxu0 0.0
    %1948 = vmatpush1.msra.mxu0 %v1924
    %1949 = vmatprep.subr.mxu0 0.0
    %1950 = vmatpush1.msra.mxu0 %v1925
    %1951 = vmatprep.subr.mxu0 0.0
    %1952 = vmatpush1.msra.mxu0 %v1926
    %1953 = vmatprep.subr.mxu0 0.0
    %1954 = vmatpush1.msra.mxu0 %v1927
    %1955 = vmatprep.subr.mxu0 0.0
    %1956 = vmatpush1.msra.mxu0 %v1928
    %1957 = vmatprep.subr.mxu0 0.0
    %1958 = vmatpush1.msra.mxu0 %v1929
    %1959 = vmatprep.subr.mxu0 0.0
    %1960 = vmatpush1.msra.mxu0 %v1930
    %1961 = vmatprep.subr.mxu0 0.0
    %1962 = vmatpush1.msra.mxu0 %v1931
    %1963 = vmatprep.subr.mxu0 0.0
    %1964 = vmatpush1.msra.mxu0 %v1932
    %1965 = vmatprep.subr.mxu0 0.0
    %1966 = vmatpush1.msra.mxu0 %v1933
    %1967 = vmatprep.subr.mxu0 0.0
    %1968 = vmatpush1.msra.mxu0 %v1934
    %1969 = vmatprep.subr.mxu0 0.0
    %1970 = vmatpush1.msra.mxu0 %v1935
    %1971 = vmatprep.subr.mxu0 0.0
    %1972 = vmatpush1.msra.mxu0 %v1936
    %1973 = vmatprep.subr.mxu0 0.0
    %1974 = vmatpush1.msra.mxu0 %v1937
    %1975 = vmatprep.subr.mxu0 0.0
    %1976 = vmatpush1.msra.mxu0 %v1938
    %1977 = vmatprep.subr.mxu0 0.0
    %1978 = vmatpush1.msra.mxu0 %v1939
    %1979 = vmatprep.subr.mxu0 0.0
    %1980 = vmatpush1.msra.mxu0 0.0
    %1981 = vmatprep.subr.mxu0 0.0
    %1982 = vmatpush1.msra.mxu0 0.0
    %1983 = vmatprep.subr.mxu0 0.0
    %1984 = vmatpush1.msra.mxu0 0.0
    %1985 = vmatprep.subr.mxu0 0.0
    %1986 = vmatpush1.msra.mxu0 0.0
    %1987 = vmatprep.subr.mxu0 0.0
    %1988 = vmatpush1.msra.mxu0 0.0
    %1989 = vmatprep.subr.mxu0 0.0
    %1990 = vmatpush1.msra.mxu0 0.0
    %1991 = vmatprep.subr.mxu0 0.0
    %1992 = vmatpush1.msra.mxu0 0.0
    %1993 = vmatprep.subr.mxu0 0.0
    %1994 = vmatpush1.msra.mxu0 0.0
    %1995 = vmatprep.subr.mxu0 0.0
    %1996 = vmatpush1.msra.mxu0 0.0
    %1997 = vmatprep.subr.mxu0 0.0
    %1998 = vmatpush1.msra.mxu0 0.0
    %1999 = vmatprep.subr.mxu0 0.0
    %2000 = vmatpush1.msra.mxu0 0.0
    %2001 = vmatprep.subr.mxu0 0.0
    %2002 = vmatpush1.msra.mxu0 0.0
    %2003 = vmatprep.subr.mxu0 0.0
    %2004 = vmatpush1.msra.mxu0 0.0
    %2005 = vmatprep.subr.mxu0 0.0
    %2006 = vmatpush1.msra.mxu0 0.0
    %2007 = vmatprep.subr.mxu0 0.0
    %2008 = vmatpush1.msra.mxu0 0.0
    %2009 = vmatprep.subr.mxu0 0.0
    %2010 = vmatpush1.msra.mxu0 0.0
    %2011 = vmatprep.mubr.f32.mxu0 0.0
    %2012 = vmatmul.mubr.f32.gmra.mrb[0].mxu0 %v1920
    %v2013 = vpop.f32.mrb[0].mxu0
    %v2014 = vadd.f32 %v1945, %v2013
    %v2015 = vpop.f32.mrb[0].mxu0
    %2016 = vdwg.mxu0
    %vm2017 = vcmp.gt.f32.partialorder %v2014, 0.0
    %v2018 = vmul.f32 %v2014, 0.2
    %v2019 = vsel %vm2017, %v2014, %v2018
    %v2020 = vld [vmem:[%s9] sm:$0xff]
    %v2021 = vld [vmem:[%s9 + $0x8] sm:$0xff]
    %v2022 = vld [vmem:[%s9 + $0x10] sm:$0xff]
    %v2023 = vld [vmem:[%s9 + $0x18] sm:$0xff]
    %v2024 = vld [vmem:[%s9 + $0x20] sm:$0xff]
    %v2025 = vld [vmem:[%s9 + $0x28] sm:$0xff]
    %v2026 = vld [vmem:[%s9 + $0x30] sm:$0xff]
    %v2027 = vld [vmem:[%s9 + $0x38] sm:$0xff]
    %v2028 = vld [vmem:[%s9 + $0x40] sm:$0xff]
    %v2029 = vld [vmem:[%s9 + $0x48] sm:$0xff]
    %v2030 = vld [vmem:[%s9 + $0x50] sm:$0xff]
    %v2031 = vld [vmem:[%s9 + $0x58] sm:$0xff]
    %v2032 = vld [vmem:[%s9 + $0x60] sm:$0xff]
    %v2033 = vld [vmem:[%s9 + $0x68] sm:$0xff]
    %v2034 = vld [vmem:[%s9 + $0x70] sm:$0xff]
    %v2035 = vld [vmem:[%s9 + $0x78] sm:$0xff]
    %v2036 = vld [vmem:[%s10] sm:$0x1]
    %v2038 = vlaneseq
    %v2039 = vshrl.u32 %v2038, 7
    %v2040 = vsub.s32 0, %v2039
    %v2041 = vrot.slane %v2036, %v2040
    %2043 = vmatprep.subr.mxu0 0.0
    %2044 = vmatpush1.msra.mxu0 %v2020
    %2045 = vmatprep.subr.mxu0 0.0
    %2046 = vmatpush1.msra.mxu0 %v2021
    %2047 = vmatprep.subr.mxu0 0.0
    %2048 = vmatpush1.msra.mxu0 %v2022
    %2049 = vmatprep.subr.mxu0 0.0
    %2050 = vmatpush1.msra.mxu0 %v2023
    %2051 = vmatprep.subr.mxu0 0.0
    %2052 = vmatpush1.msra.mxu0 %v2024
    %2053 = vmatprep.subr.mxu0 0.0
    %2054 = vmatpush1.msra.mxu0 %v2025
    %2055 = vmatprep.subr.mxu0 0.0
    %2056 = vmatpush1.msra.mxu0 %v2026
    %2057 = vmatprep.subr.mxu0 0.0
    %2058 = vmatpush1.msra.mxu0 %v2027
    %2059 = vmatprep.subr.mxu0 0.0
    %2060 = vmatpush1.msra.mxu0 %v2028
    %2061 = vmatprep.subr.mxu0 0.0
    %2062 = vmatpush1.msra.mxu0 %v2029
    %2063 = vmatprep.subr.mxu0 0.0
    %2064 = vmatpush1.msra.mxu0 %v2030
    %2065 = vmatprep.subr.mxu0 0.0
    %2066 = vmatpush1.msra.mxu0 %v2031
    %2067 = vmatprep.subr.mxu0 0.0
    %2068 = vmatpush1.msra.mxu0 %v2032
    %2069 = vmatprep.subr.mxu0 0.0
    %2070 = vmatpush1.msra.mxu0 %v2033
    %2071 = vmatprep.subr.mxu0 0.0
    %2072 = vmatpush1.msra.mxu0 %v2034
    %2073 = vmatprep.subr.mxu0 0.0
    %2074 = vmatpush1.msra.mxu0 %v2035
    %2075 = vmatprep.subr.mxu0 0.0
    %2076 = vmatpush1.msra.mxu0 0.0
    %2077 = vmatprep.subr.mxu0 0.0
    %2078 = vmatpush1.msra.mxu0 0.0
    %2079 = vmatprep.subr.mxu0 0.0
    %2080 = vmatpush1.msra.mxu0 0.0
    %2081 = vmatprep.subr.mxu0 0.0
    %2082 = vmatpush1.msra.mxu0 0.0
    %2083 = vmatprep.subr.mxu0 0.0
    %2084 = vmatpush1.msra.mxu0 0.0
    %2085 = vmatprep.subr.mxu0 0.0
    %2086 = vmatpush1.msra.mxu0 0.0
    %2087 = vmatprep.subr.mxu0 0.0
    %2088 = vmatpush1.msra.mxu0 0.0
    %2089 = vmatprep.subr.mxu0 0.0
    %2090 = vmatpush1.msra.mxu0 0.0
    %2091 = vmatprep.subr.mxu0 0.0
    %2092 = vmatpush1.msra.mxu0 0.0
    %2093 = vmatprep.subr.mxu0 0.0
    %2094 = vmatpush1.msra.mxu0 0.0
    %2095 = vmatprep.subr.mxu0 0.0
    %2096 = vmatpush1.msra.mxu0 0.0
    %2097 = vmatprep.subr.mxu0 0.0
    %2098 = vmatpush1.msra.mxu0 0.0
    %2099 = vmatprep.subr.mxu0 0.0
    %2100 = vmatpush1.msra.mxu0 0.0
    %2101 = vmatprep.subr.mxu0 0.0
    %2102 = vmatpush1.msra.mxu0 0.0
    %2103 = vmatprep.subr.mxu0 0.0
    %2104 = vmatpush1.msra.mxu0 0.0
    %2105 = vmatprep.subr.mxu0 0.0
    %2106 = vmatpush1.msra.mxu0 0.0
    %2107 = vmatprep.mubr.f32.mxu0 0.0
    %2108 = vmatmul.mubr.f32.gmra.mrb[0].mxu0 %v2019
    %v2109 = vpop.f32.mrb[0].mxu0
    %v2110 = vadd.f32 %v2041, %v2109
    %v2111 = vpop.f32.mrb[0].mxu0
    %2112 = vdwg.mxu0
    %vm2113 = vcmp.gt.f32.partialorder %v2110, 0.0
    %v2114 = vmul.f32 %v2110, 0.2
    %v2115 = vsel %vm2113, %v2110, %v2114
    %v2116 = vld [vmem:[#allocation2] sm:$0xff]
    %v2117 = vld [vmem:[#allocation2 + $0x8] sm:$0xff]
    %v2118 = vld [vmem:[#allocation2 + $0x10] sm:$0xff]
    %v2119 = vld [vmem:[#allocation2 + $0x18] sm:$0xff]
    %v2120 = vld [vmem:[#allocation2 + $0x20] sm:$0xff]
    %v2121 = vld [vmem:[#allocation2 + $0x28] sm:$0xff]
    %v2122 = vld [vmem:[#allocation2 + $0x30] sm:$0xff]
    %v2123 = vld [vmem:[#allocation2 + $0x38] sm:$0xff]
    %v2124 = vld [vmem:[#allocation2 + $0x40] sm:$0xff]
    %v2125 = vld [vmem:[#allocation2 + $0x48] sm:$0xff]
    %v2126 = vld [vmem:[#allocation2 + $0x50] sm:$0xff]
    %v2127 = vld [vmem:[#allocation2 + $0x58] sm:$0xff]
    %v2128 = vld [vmem:[#allocation2 + $0x60] sm:$0xff]
    %v2129 = vld [vmem:[#allocation2 + $0x68] sm:$0xff]
    %v2130 = vld [vmem:[#allocation2 + $0x70] sm:$0xff]
    %v2131 = vld [vmem:[#allocation2 + $0x78] sm:$0xff]
    %v2132 = vld [vmem:[#allocation2 + $0x80] sm:$0xff]
    %v2133 = vld [vmem:[#allocation2 + $0x88] sm:$0xff]
    %v2134 = vld [vmem:[#allocation2 + $0x90] sm:$0xff]
    %v2135 = vld [vmem:[#allocation2 + $0x98] sm:$0xff]
    %v2136 = vld [vmem:[#allocation2 + $0xa0] sm:$0xff]
    %v2137 = vld [vmem:[#allocation2 + $0xa8] sm:$0xff]
    %v2138 = vld [vmem:[#allocation2 + $0xb0] sm:$0xff]
    %v2139 = vld [vmem:[#allocation2 + $0xb8] sm:$0xff]
    %v2140 = vld [vmem:[#allocation2 + $0xc0] sm:$0xff]
    %v2141 = vld [vmem:[#allocation2 + $0xc8] sm:$0xff]
    %v2142 = vld [vmem:[#allocation2 + $0xd0] sm:$0xff]
    %v2143 = vld [vmem:[#allocation2 + $0xd8] sm:$0xff]
    %v2144 = vld [vmem:[#allocation2 + $0xe0] sm:$0xff]
    %v2145 = vld [vmem:[#allocation2 + $0xe8] sm:$0xff]
    %v2146 = vld [vmem:[#allocation2 + $0xf0] sm:$0xff]
    %v2147 = vld [vmem:[#allocation2 + $0xf8] sm:$0xff]
    %v2148 = vld [vmem:[#allocation2 + $0x100] sm:$0xff]
    %v2149 = vld [vmem:[#allocation2 + $0x108] sm:$0xff]
    %v2150 = vld [vmem:[#allocation2 + $0x110] sm:$0xff]
    %v2151 = vld [vmem:[#allocation2 + $0x118] sm:$0xff]
    %v2152 = vld [vmem:[#allocation2 + $0x120] sm:$0xff]
    %v2153 = vld [vmem:[#allocation2 + $0x128] sm:$0xff]
    %v2154 = vld [vmem:[#allocation2 + $0x130] sm:$0xff]
    %v2155 = vld [vmem:[#allocation2 + $0x138] sm:$0xff]
    %v2156 = vld [vmem:[#allocation2 + $0x140] sm:$0xff]
    %v2157 = vld [vmem:[#allocation2 + $0x148] sm:$0xff]
    %v2158 = vld [vmem:[#allocation2 + $0x150] sm:$0xff]
    %v2159 = vld [vmem:[#allocation2 + $0x158] sm:$0xff]
    %v2160 = vld [vmem:[#allocation2 + $0x160] sm:$0xff]
    %v2161 = vld [vmem:[#allocation2 + $0x168] sm:$0xff]
    %v2162 = vld [vmem:[#allocation2 + $0x170] sm:$0xff]
    %v2163 = vld [vmem:[#allocation2 + $0x178] sm:$0xff]
    %v2164 = vld [vmem:[#allocation2 + $0x180] sm:$0xff]
    %v2165 = vld [vmem:[#allocation2 + $0x188] sm:$0xff]
    %v2166 = vld [vmem:[#allocation2 + $0x190] sm:$0xff]
    %v2167 = vld [vmem:[#allocation2 + $0x198] sm:$0xff]
    %v2168 = vld [vmem:[#allocation2 + $0x1a0] sm:$0xff]
    %v2169 = vld [vmem:[#allocation2 + $0x1a8] sm:$0xff]
    %v2170 = vld [vmem:[#allocation2 + $0x1b0] sm:$0xff]
    %v2171 = vld [vmem:[#allocation2 + $0x1b8] sm:$0xff]
    %v2172 = vld [vmem:[#allocation2 + $0x1c0] sm:$0xff]
    %v2173 = vld [vmem:[#allocation2 + $0x1c8] sm:$0xff]
    %v2174 = vld [vmem:[#allocation2 + $0x1d0] sm:$0xff]
    %v2175 = vld [vmem:[#allocation2 + $0x1d8] sm:$0xff]
    %v2176 = vld [vmem:[#allocation2 + $0x1e0] sm:$0xff]
    %v2177 = vld [vmem:[#allocation2 + $0x1e8] sm:$0xff]
    %v2178 = vld [vmem:[#allocation2 + $0x1f0] sm:$0xff]
    %v2179 = vld [vmem:[#allocation2 + $0x1f8] sm:$0xff]
    %v2180 = vld [vmem:[#allocation2 + $0x200] sm:$0xff]
    %v2181 = vld [vmem:[#allocation2 + $0x208] sm:$0xff]
    %v2182 = vld [vmem:[#allocation2 + $0x210] sm:$0xff]
    %v2183 = vld [vmem:[#allocation2 + $0x218] sm:$0xff]
    %v2184 = vld [vmem:[#allocation2 + $0x220] sm:$0xff]
    %v2185 = vld [vmem:[#allocation2 + $0x228] sm:$0xff]
    %v2186 = vld [vmem:[#allocation2 + $0x230] sm:$0xff]
    %v2187 = vld [vmem:[#allocation2 + $0x238] sm:$0xff]
    %v2188 = vld [vmem:[#allocation2 + $0x240] sm:$0xff]
    %v2189 = vld [vmem:[#allocation2 + $0x248] sm:$0xff]
    %v2190 = vld [vmem:[#allocation2 + $0x250] sm:$0xff]
    %v2191 = vld [vmem:[#allocation2 + $0x258] sm:$0xff]
    %v2192 = vld [vmem:[#allocation2 + $0x260] sm:$0xff]
    %v2193 = vld [vmem:[#allocation2 + $0x268] sm:$0xff]
    %v2194 = vld [vmem:[#allocation2 + $0x270] sm:$0xff]
    %v2195 = vld [vmem:[#allocation2 + $0x278] sm:$0xff]
    %v2196 = vld [vmem:[#allocation2 + $0x280] sm:$0xff]
    %v2197 = vld [vmem:[#allocation2 + $0x288] sm:$0xff]
    %v2198 = vld [vmem:[#allocation2 + $0x290] sm:$0xff]
    %v2199 = vld [vmem:[#allocation2 + $0x298] sm:$0xff]
    %v2200 = vld [vmem:[#allocation2 + $0x2a0] sm:$0xff]
    %v2201 = vld [vmem:[#allocation2 + $0x2a8] sm:$0xff]
    %v2202 = vld [vmem:[#allocation2 + $0x2b0] sm:$0xff]
    %v2203 = vld [vmem:[#allocation2 + $0x2b8] sm:$0xff]
    %v2204 = vld [vmem:[#allocation2 + $0x2c0] sm:$0xff]
    %v2205 = vld [vmem:[#allocation2 + $0x2c8] sm:$0xff]
    %v2206 = vld [vmem:[#allocation2 + $0x2d0] sm:$0xff]
    %v2207 = vld [vmem:[#allocation2 + $0x2d8] sm:$0xff]
    %v2208 = vld [vmem:[#allocation2 + $0x2e0] sm:$0xff]
    %v2209 = vld [vmem:[#allocation2 + $0x2e8] sm:$0xff]
    %v2210 = vld [vmem:[#allocation2 + $0x2f0] sm:$0xff]
    %v2211 = vld [vmem:[#allocation2 + $0x2f8] sm:$0xff]
    %v2212 = vld [vmem:[#allocation2 + $0x300] sm:$0xff]
    %v2213 = vld [vmem:[#allocation2 + $0x308] sm:$0xff]
    %v2214 = vld [vmem:[#allocation2 + $0x310] sm:$0xff]
    %v2215 = vld [vmem:[#allocation2 + $0x318] sm:$0xff]
    %v2216 = vld [vmem:[#allocation2 + $0x320] sm:$0xff]
    %v2217 = vld [vmem:[#allocation2 + $0x328] sm:$0xff]
    %v2218 = vld [vmem:[#allocation2 + $0x330] sm:$0xff]
    %v2219 = vld [vmem:[#allocation2 + $0x338] sm:$0xff]
    %v2220 = vld [vmem:[#allocation2 + $0x340] sm:$0xff]
    %v2221 = vld [vmem:[#allocation2 + $0x348] sm:$0xff]
    %v2222 = vld [vmem:[#allocation2 + $0x350] sm:$0xff]
    %v2223 = vld [vmem:[#allocation2 + $0x358] sm:$0xff]
    %v2224 = vld [vmem:[#allocation2 + $0x360] sm:$0xff]
    %v2225 = vld [vmem:[#allocation2 + $0x368] sm:$0xff]
    %v2226 = vld [vmem:[#allocation2 + $0x370] sm:$0xff]
    %v2227 = vld [vmem:[#allocation2 + $0x378] sm:$0xff]
    %v2228 = vld [vmem:[#allocation2 + $0x380] sm:$0xff]
    %v2229 = vld [vmem:[#allocation2 + $0x388] sm:$0xff]
    %v2230 = vld [vmem:[#allocation2 + $0x390] sm:$0xff]
    %v2231 = vld [vmem:[#allocation2 + $0x398] sm:$0xff]
    %v2232 = vld [vmem:[#allocation2 + $0x3a0] sm:$0xff]
    %v2233 = vld [vmem:[#allocation2 + $0x3a8] sm:$0xff]
    %v2234 = vld [vmem:[#allocation2 + $0x3b0] sm:$0xff]
    %v2235 = vld [vmem:[#allocation2 + $0x3b8] sm:$0xff]
    %v2236 = vld [vmem:[#allocation2 + $0x3c0] sm:$0xff]
    %v2237 = vld [vmem:[#allocation2 + $0x3c8] sm:$0xff]
    %v2238 = vld [vmem:[#allocation2 + $0x3d0] sm:$0xff]
    %v2239 = vld [vmem:[#allocation2 + $0x3d8] sm:$0xff]
    %v2240 = vld [vmem:[#allocation2 + $0x3e0] sm:$0xff]
    %v2241 = vld [vmem:[#allocation2 + $0x3e8] sm:$0xff]
    %v2242 = vld [vmem:[#allocation2 + $0x3f0] sm:$0xff]
    %v2243 = vld [vmem:[#allocation2 + $0x3f8] sm:$0xff]
    %v2244 = vld [vmem:[#allocation2 + $0x400] sm:$0xff]
    %v2245 = vld [vmem:[#allocation2 + $0x408] sm:$0xff]
    %v2246 = vld [vmem:[#allocation2 + $0x410] sm:$0xff]
    %v2247 = vld [vmem:[#allocation2 + $0x418] sm:$0xff]
    %v2248 = vld [vmem:[#allocation2 + $0x420] sm:$0xff]
    %v2249 = vld [vmem:[#allocation2 + $0x428] sm:$0xff]
    %v2250 = vld [vmem:[#allocation2 + $0x430] sm:$0xff]
    %v2251 = vld [vmem:[#allocation2 + $0x438] sm:$0xff]
    %v2252 = vld [vmem:[#allocation2 + $0x440] sm:$0xff]
    %v2253 = vld [vmem:[#allocation2 + $0x448] sm:$0xff]
    %v2254 = vld [vmem:[#allocation2 + $0x450] sm:$0xff]
    %v2255 = vld [vmem:[#allocation2 + $0x458] sm:$0xff]
    %v2256 = vld [vmem:[#allocation2 + $0x460] sm:$0xff]
    %v2257 = vld [vmem:[#allocation2 + $0x468] sm:$0xff]
    %v2258 = vld [vmem:[#allocation2 + $0x470] sm:$0xff]
    %v2259 = vld [vmem:[#allocation2 + $0x478] sm:$0xff]
    %v2260 = vld [vmem:[#allocation2 + $0x480] sm:$0xff]
    %v2261 = vld [vmem:[#allocation2 + $0x488] sm:$0xff]
    %v2262 = vld [vmem:[#allocation2 + $0x490] sm:$0xff]
    %v2263 = vld [vmem:[#allocation2 + $0x498] sm:$0xff]
    %v2264 = vld [vmem:[#allocation2 + $0x4a0] sm:$0xff]
    %v2265 = vld [vmem:[#allocation2 + $0x4a8] sm:$0xff]
    %v2266 = vld [vmem:[#allocation2 + $0x4b0] sm:$0xff]
    %v2267 = vld [vmem:[#allocation2 + $0x4b8] sm:$0xff]
    %v2268 = vld [vmem:[#allocation2 + $0x4c0] sm:$0xff]
    %v2269 = vld [vmem:[#allocation2 + $0x4c8] sm:$0xff]
    %v2270 = vld [vmem:[#allocation2 + $0x4d0] sm:$0xff]
    %v2271 = vld [vmem:[#allocation2 + $0x4d8] sm:$0xff]
    %v2272 = vld [vmem:[#allocation2 + $0x4e0] sm:$0xff]
    %v2273 = vld [vmem:[#allocation2 + $0x4e8] sm:$0xff]
    %v2274 = vld [vmem:[#allocation2 + $0x4f0] sm:$0xff]
    %v2275 = vld [vmem:[#allocation2 + $0x4f8] sm:$0xff]
    %v2276 = vld [vmem:[#allocation2 + $0x500] sm:$0xff]
    %v2277 = vld [vmem:[#allocation2 + $0x508] sm:$0xff]
    %v2278 = vld [vmem:[#allocation2 + $0x510] sm:$0xff]
    %v2279 = vld [vmem:[#allocation2 + $0x518] sm:$0xff]
    %v2280 = vld [vmem:[#allocation2 + $0x520] sm:$0xff]
    %v2281 = vld [vmem:[#allocation2 + $0x528] sm:$0xff]
    %v2282 = vld [vmem:[#allocation2 + $0x530] sm:$0xff]
    %v2283 = vld [vmem:[#allocation2 + $0x538] sm:$0xff]
    %v2284 = vld [vmem:[#allocation2 + $0x540] sm:$0xff]
    %v2285 = vld [vmem:[#allocation2 + $0x548] sm:$0xff]
    %v2286 = vld [vmem:[#allocation2 + $0x550] sm:$0xff]
    %v2287 = vld [vmem:[#allocation2 + $0x558] sm:$0xff]
    %v2288 = vld [vmem:[#allocation2 + $0x560] sm:$0xff]
    %v2289 = vld [vmem:[#allocation2 + $0x568] sm:$0xff]
    %v2290 = vld [vmem:[#allocation2 + $0x570] sm:$0xff]
    %v2291 = vld [vmem:[#allocation2 + $0x578] sm:$0xff]
    %v2292 = vld [vmem:[#allocation2 + $0x580] sm:$0xff]
    %v2293 = vld [vmem:[#allocation2 + $0x588] sm:$0xff]
    %v2294 = vld [vmem:[#allocation2 + $0x590] sm:$0xff]
    %v2295 = vld [vmem:[#allocation2 + $0x598] sm:$0xff]
    %v2296 = vld [vmem:[#allocation2 + $0x5a0] sm:$0xff]
    %v2297 = vld [vmem:[#allocation2 + $0x5a8] sm:$0xff]
    %v2298 = vld [vmem:[#allocation2 + $0x5b0] sm:$0xff]
    %v2299 = vld [vmem:[#allocation2 + $0x5b8] sm:$0xff]
    %v2300 = vld [vmem:[#allocation2 + $0x5c0] sm:$0xff]
    %v2301 = vld [vmem:[#allocation2 + $0x5c8] sm:$0xff]
    %v2302 = vld [vmem:[#allocation2 + $0x5d0] sm:$0xff]
    %v2303 = vld [vmem:[#allocation2 + $0x5d8] sm:$0xff]
    %v2304 = vld [vmem:[#allocation2 + $0x5e0] sm:$0xff]
    %v2305 = vld [vmem:[#allocation2 + $0x5e8] sm:$0xff]
    %v2306 = vld [vmem:[#allocation2 + $0x5f0] sm:$0xff]
    %v2307 = vld [vmem:[#allocation2 + $0x5f8] sm:$0xff]
    %v2308 = vld [vmem:[#allocation2 + $0x600] sm:$0xff]
    %v2309 = vld [vmem:[#allocation2 + $0x608] sm:$0xff]
    %v2310 = vld [vmem:[#allocation2 + $0x610] sm:$0xff]
    %v2311 = vld [vmem:[#allocation2 + $0x618] sm:$0xff]
    %v2312 = vld [vmem:[#allocation2 + $0x620] sm:$0xff]
    %v2313 = vld [vmem:[#allocation2 + $0x628] sm:$0xff]
    %v2314 = vld [vmem:[#allocation2 + $0x630] sm:$0xff]
    %v2315 = vld [vmem:[#allocation2 + $0x638] sm:$0xff]
    %v2316 = vld [vmem:[#allocation2 + $0x640] sm:$0xff]
    %v2317 = vld [vmem:[#allocation2 + $0x648] sm:$0xff]
    %v2318 = vld [vmem:[#allocation2 + $0x650] sm:$0xff]
    %v2319 = vld [vmem:[#allocation2 + $0x658] sm:$0xff]
    %v2320 = vld [vmem:[#allocation2 + $0x660] sm:$0xff]
    %v2321 = vld [vmem:[#allocation2 + $0x668] sm:$0xff]
    %v2322 = vld [vmem:[#allocation2 + $0x670] sm:$0xff]
    %v2323 = vld [vmem:[#allocation2 + $0x678] sm:$0xff]
    %v2324 = vld [vmem:[#allocation2 + $0x680] sm:$0xff]
    %v2325 = vld [vmem:[#allocation2 + $0x688] sm:$0xff]
    %v2326 = vld [vmem:[#allocation2 + $0x690] sm:$0xff]
    %v2327 = vld [vmem:[#allocation2 + $0x698] sm:$0xff]
    %v2328 = vld [vmem:[#allocation2 + $0x6a0] sm:$0xff]
    %v2329 = vld [vmem:[#allocation2 + $0x6a8] sm:$0xff]
    %v2330 = vld [vmem:[#allocation2 + $0x6b0] sm:$0xff]
    %v2331 = vld [vmem:[#allocation2 + $0x6b8] sm:$0xff]
    %v2332 = vld [vmem:[#allocation2 + $0x6c0] sm:$0xff]
    %v2333 = vld [vmem:[#allocation2 + $0x6c8] sm:$0xff]
    %v2334 = vld [vmem:[#allocation2 + $0x6d0] sm:$0xff]
    %v2335 = vld [vmem:[#allocation2 + $0x6d8] sm:$0xff]
    %v2336 = vld [vmem:[#allocation2 + $0x6e0] sm:$0xff]
    %v2337 = vld [vmem:[#allocation2 + $0x6e8] sm:$0xff]
    %v2338 = vld [vmem:[#allocation2 + $0x6f0] sm:$0xff]
    %v2339 = vld [vmem:[#allocation2 + $0x6f8] sm:$0xff]
    %v2340 = vld [vmem:[#allocation2 + $0x700] sm:$0xff]
    %v2341 = vld [vmem:[#allocation2 + $0x708] sm:$0xff]
    %v2342 = vld [vmem:[#allocation2 + $0x710] sm:$0xff]
    %v2343 = vld [vmem:[#allocation2 + $0x718] sm:$0xff]
    %v2344 = vld [vmem:[#allocation2 + $0x720] sm:$0xff]
    %v2345 = vld [vmem:[#allocation2 + $0x728] sm:$0xff]
    %v2346 = vld [vmem:[#allocation2 + $0x730] sm:$0xff]
    %v2347 = vld [vmem:[#allocation2 + $0x738] sm:$0xff]
    %v2348 = vld [vmem:[#allocation2 + $0x740] sm:$0xff]
    %v2349 = vld [vmem:[#allocation2 + $0x748] sm:$0xff]
    %v2350 = vld [vmem:[#allocation2 + $0x750] sm:$0xff]
    %v2351 = vld [vmem:[#allocation2 + $0x758] sm:$0xff]
    %v2352 = vld [vmem:[#allocation2 + $0x760] sm:$0xff]
    %v2353 = vld [vmem:[#allocation2 + $0x768] sm:$0xff]
    %v2354 = vld [vmem:[#allocation2 + $0x770] sm:$0xff]
    %v2355 = vld [vmem:[#allocation2 + $0x778] sm:$0xff]
    %v2356 = vld [vmem:[#allocation2 + $0x780] sm:$0xff]
    %v2357 = vld [vmem:[#allocation2 + $0x788] sm:$0xff]
    %v2358 = vld [vmem:[#allocation2 + $0x790] sm:$0xff]
    %v2359 = vld [vmem:[#allocation2 + $0x798] sm:$0xff]
    %v2360 = vld [vmem:[#allocation2 + $0x7a0] sm:$0xff]
    %v2361 = vld [vmem:[#allocation2 + $0x7a8] sm:$0xff]
    %v2362 = vld [vmem:[#allocation2 + $0x7b0] sm:$0xff]
    %v2363 = vld [vmem:[#allocation2 + $0x7b8] sm:$0xff]
    %v2364 = vld [vmem:[#allocation2 + $0x7c0] sm:$0xff]
    %v2365 = vld [vmem:[#allocation2 + $0x7c8] sm:$0xff]
    %v2366 = vld [vmem:[#allocation2 + $0x7d0] sm:$0xff]
    %v2367 = vld [vmem:[#allocation2 + $0x7d8] sm:$0xff]
    %v2368 = vld [vmem:[#allocation2 + $0x7e0] sm:$0xff]
    %v2369 = vld [vmem:[#allocation2 + $0x7e8] sm:$0xff]
    %v2370 = vld [vmem:[#allocation2 + $0x7f0] sm:$0xff]
    %v2371 = vld [vmem:[#allocation2 + $0x7f8] sm:$0xff]
    %v2372 = vld [vmem:[#allocation2 + $0x800] sm:$0xff]
    %v2373 = vld [vmem:[#allocation2 + $0x808] sm:$0xff]
    %v2374 = vld [vmem:[#allocation2 + $0x810] sm:$0xff]
    %v2375 = vld [vmem:[#allocation2 + $0x818] sm:$0xff]
    %v2376 = vld [vmem:[#allocation2 + $0x820] sm:$0xff]
    %v2377 = vld [vmem:[#allocation2 + $0x828] sm:$0xff]
    %v2378 = vld [vmem:[#allocation2 + $0x830] sm:$0xff]
    %v2379 = vld [vmem:[#allocation2 + $0x838] sm:$0xff]
    %v2380 = vld [vmem:[#allocation2 + $0x840] sm:$0xff]
    %v2381 = vld [vmem:[#allocation2 + $0x848] sm:$0xff]
    %v2382 = vld [vmem:[#allocation2 + $0x850] sm:$0xff]
    %v2383 = vld [vmem:[#allocation2 + $0x858] sm:$0xff]
    %v2384 = vld [vmem:[#allocation2 + $0x860] sm:$0xff]
    %v2385 = vld [vmem:[#allocation2 + $0x868] sm:$0xff]
    %v2386 = vld [vmem:[#allocation2 + $0x870] sm:$0xff]
    %v2387 = vld [vmem:[#allocation2 + $0x878] sm:$0xff]
    %v2388 = vld [vmem:[#allocation2 + $0x880] sm:$0xff]
    %v2389 = vld [vmem:[#allocation2 + $0x888] sm:$0xff]
    %v2390 = vld [vmem:[#allocation2 + $0x890] sm:$0xff]
    %v2391 = vld [vmem:[#allocation2 + $0x898] sm:$0xff]
    %v2392 = vld [vmem:[#allocation2 + $0x8a0] sm:$0xff]
    %v2393 = vld [vmem:[#allocation2 + $0x8a8] sm:$0xff]
    %v2394 = vld [vmem:[#allocation2 + $0x8b0] sm:$0xff]
    %v2395 = vld [vmem:[#allocation2 + $0x8b8] sm:$0xff]
    %v2396 = vld [vmem:[#allocation2 + $0x8c0] sm:$0xff]
    %v2397 = vld [vmem:[#allocation2 + $0x8c8] sm:$0xff]
    %v2398 = vld [vmem:[#allocation2 + $0x8d0] sm:$0xff]
    %v2399 = vld [vmem:[#allocation2 + $0x8d8] sm:$0xff]
    %v2400 = vld [vmem:[#allocation2 + $0x8e0] sm:$0xff]
    %v2401 = vld [vmem:[#allocation2 + $0x8e8] sm:$0xff]
    %v2402 = vld [vmem:[#allocation2 + $0x8f0] sm:$0xff]
    %v2403 = vld [vmem:[#allocation2 + $0x8f8] sm:$0xff]
    %v2404 = vld [vmem:[#allocation2 + $0x900] sm:$0xff]
    %v2405 = vld [vmem:[#allocation2 + $0x908] sm:$0xff]
    %v2406 = vld [vmem:[#allocation2 + $0x910] sm:$0xff]
    %v2407 = vld [vmem:[#allocation2 + $0x918] sm:$0xff]
    %v2408 = vld [vmem:[#allocation2 + $0x920] sm:$0xff]
    %v2409 = vld [vmem:[#allocation2 + $0x928] sm:$0xff]
    %v2410 = vld [vmem:[#allocation2 + $0x930] sm:$0xff]
    %v2411 = vld [vmem:[#allocation2 + $0x938] sm:$0xff]
    %v2412 = vld [vmem:[#allocation2 + $0x940] sm:$0xff]
    %v2413 = vld [vmem:[#allocation2 + $0x948] sm:$0xff]
    %v2414 = vld [vmem:[#allocation2 + $0x950] sm:$0xff]
    %v2415 = vld [vmem:[#allocation2 + $0x958] sm:$0xff]
    %v2416 = vld [vmem:[#allocation2 + $0x960] sm:$0xff]
    %v2417 = vld [vmem:[#allocation2 + $0x968] sm:$0xff]
    %v2418 = vld [vmem:[#allocation2 + $0x970] sm:$0xff]
    %v2419 = vld [vmem:[#allocation2 + $0x978] sm:$0xff]
    %v2420 = vld [vmem:[#allocation2 + $0x980] sm:$0xff]
    %v2421 = vld [vmem:[#allocation2 + $0x988] sm:$0xff]
    %v2422 = vld [vmem:[#allocation2 + $0x990] sm:$0xff]
    %v2423 = vld [vmem:[#allocation2 + $0x998] sm:$0xff]
    %v2424 = vld [vmem:[#allocation2 + $0x9a0] sm:$0xff]
    %v2425 = vld [vmem:[#allocation2 + $0x9a8] sm:$0xff]
    %v2426 = vld [vmem:[#allocation2 + $0x9b0] sm:$0xff]
    %v2427 = vld [vmem:[#allocation2 + $0x9b8] sm:$0xff]
    %v2428 = vld [vmem:[#allocation2 + $0x9c0] sm:$0xff]
    %v2429 = vld [vmem:[#allocation2 + $0x9c8] sm:$0xff]
    %v2430 = vld [vmem:[#allocation2 + $0x9d0] sm:$0xff]
    %v2431 = vld [vmem:[#allocation2 + $0x9d8] sm:$0xff]
    %v2432 = vld [vmem:[#allocation2 + $0x9e0] sm:$0xff]
    %v2433 = vld [vmem:[#allocation2 + $0x9e8] sm:$0xff]
    %v2434 = vld [vmem:[#allocation2 + $0x9f0] sm:$0xff]
    %v2435 = vld [vmem:[#allocation2 + $0x9f8] sm:$0xff]
    %v2436 = vld [vmem:[#allocation2 + $0xa00] sm:$0xff]
    %v2437 = vld [vmem:[#allocation2 + $0xa08] sm:$0xff]
    %v2438 = vld [vmem:[#allocation2 + $0xa10] sm:$0xff]
    %v2439 = vld [vmem:[#allocation2 + $0xa18] sm:$0xff]
    %v2440 = vld [vmem:[#allocation2 + $0xa20] sm:$0xff]
    %v2441 = vld [vmem:[#allocation2 + $0xa28] sm:$0xff]
    %v2442 = vld [vmem:[#allocation2 + $0xa30] sm:$0xff]
    %v2443 = vld [vmem:[#allocation2 + $0xa38] sm:$0xff]
    %v2444 = vld [vmem:[#allocation2 + $0xa40] sm:$0xff]
    %v2445 = vld [vmem:[#allocation2 + $0xa48] sm:$0xff]
    %v2446 = vld [vmem:[#allocation2 + $0xa50] sm:$0xff]
    %v2447 = vld [vmem:[#allocation2 + $0xa58] sm:$0xff]
    %v2448 = vld [vmem:[#allocation2 + $0xa60] sm:$0xff]
    %v2449 = vld [vmem:[#allocation2 + $0xa68] sm:$0xff]
    %v2450 = vld [vmem:[#allocation2 + $0xa70] sm:$0xff]
    %v2451 = vld [vmem:[#allocation2 + $0xa78] sm:$0xff]
    %v2452 = vld [vmem:[#allocation2 + $0xa80] sm:$0xff]
    %v2453 = vld [vmem:[#allocation2 + $0xa88] sm:$0xff]
    %v2454 = vld [vmem:[#allocation2 + $0xa90] sm:$0xff]
    %v2455 = vld [vmem:[#allocation2 + $0xa98] sm:$0xff]
    %v2456 = vld [vmem:[#allocation2 + $0xaa0] sm:$0xff]
    %v2457 = vld [vmem:[#allocation2 + $0xaa8] sm:$0xff]
    %v2458 = vld [vmem:[#allocation2 + $0xab0] sm:$0xff]
    %v2459 = vld [vmem:[#allocation2 + $0xab8] sm:$0xff]
    %v2460 = vld [vmem:[#allocation2 + $0xac0] sm:$0xff]
    %v2461 = vld [vmem:[#allocation2 + $0xac8] sm:$0xff]
    %v2462 = vld [vmem:[#allocation2 + $0xad0] sm:$0xff]
    %v2463 = vld [vmem:[#allocation2 + $0xad8] sm:$0xff]
    %v2464 = vld [vmem:[#allocation2 + $0xae0] sm:$0xff]
    %v2465 = vld [vmem:[#allocation2 + $0xae8] sm:$0xff]
    %v2466 = vld [vmem:[#allocation2 + $0xaf0] sm:$0xff]
    %v2467 = vld [vmem:[#allocation2 + $0xaf8] sm:$0xff]
    %v2468 = vld [vmem:[#allocation2 + $0xb00] sm:$0xff]
    %v2469 = vld [vmem:[#allocation2 + $0xb08] sm:$0xff]
    %v2470 = vld [vmem:[#allocation2 + $0xb10] sm:$0xff]
    %v2471 = vld [vmem:[#allocation2 + $0xb18] sm:$0xff]
    %v2472 = vld [vmem:[#allocation2 + $0xb20] sm:$0xff]
    %v2473 = vld [vmem:[#allocation2 + $0xb28] sm:$0xff]
    %v2474 = vld [vmem:[#allocation2 + $0xb30] sm:$0xff]
    %v2475 = vld [vmem:[#allocation2 + $0xb38] sm:$0xff]
    %v2476 = vld [vmem:[#allocation2 + $0xb40] sm:$0xff]
    %v2477 = vld [vmem:[#allocation2 + $0xb48] sm:$0xff]
    %v2478 = vld [vmem:[#allocation2 + $0xb50] sm:$0xff]
    %v2479 = vld [vmem:[#allocation2 + $0xb58] sm:$0xff]
    %v2480 = vld [vmem:[#allocation2 + $0xb60] sm:$0xff]
    %v2481 = vld [vmem:[#allocation2 + $0xb68] sm:$0xff]
    %v2482 = vld [vmem:[#allocation2 + $0xb70] sm:$0xff]
    %v2483 = vld [vmem:[#allocation2 + $0xb78] sm:$0xff]
    %v2484 = vld [vmem:[#allocation2 + $0xb80] sm:$0xff]
    %v2485 = vld [vmem:[#allocation2 + $0xb88] sm:$0xff]
    %v2486 = vld [vmem:[#allocation2 + $0xb90] sm:$0xff]
    %v2487 = vld [vmem:[#allocation2 + $0xb98] sm:$0xff]
    %v2488 = vld [vmem:[#allocation2 + $0xba0] sm:$0xff]
    %v2489 = vld [vmem:[#allocation2 + $0xba8] sm:$0xff]
    %v2490 = vld [vmem:[#allocation2 + $0xbb0] sm:$0xff]
    %v2491 = vld [vmem:[#allocation2 + $0xbb8] sm:$0xff]
    %v2492 = vld [vmem:[#allocation2 + $0xbc0] sm:$0xff]
    %v2493 = vld [vmem:[#allocation2 + $0xbc8] sm:$0xff]
    %v2494 = vld [vmem:[#allocation2 + $0xbd0] sm:$0xff]
    %v2495 = vld [vmem:[#allocation2 + $0xbd8] sm:$0xff]
    %v2496 = vld [vmem:[#allocation2 + $0xbe0] sm:$0xff]
    %v2497 = vld [vmem:[#allocation2 + $0xbe8] sm:$0xff]
    %v2498 = vld [vmem:[#allocation2 + $0xbf0] sm:$0xff]
    %v2499 = vld [vmem:[#allocation2 + $0xbf8] sm:$0xff]
    %v2500 = vld [vmem:[#allocation2 + $0xc00] sm:$0xff]
    %v2501 = vld [vmem:[#allocation2 + $0xc08] sm:$0xff]
    %v2502 = vld [vmem:[#allocation2 + $0xc10] sm:$0xff]
    %v2503 = vld [vmem:[#allocation2 + $0xc18] sm:$0xff]
    %v2504 = vld [vmem:[#allocation2 + $0xc20] sm:$0xff]
    %v2505 = vld [vmem:[#allocation2 + $0xc28] sm:$0xff]
    %v2506 = vld [vmem:[#allocation2 + $0xc30] sm:$0xff]
    %v2507 = vld [vmem:[#allocation2 + $0xc38] sm:$0xff]
    %v2508 = vld [vmem:[#allocation2 + $0xc40] sm:$0xff]
    %v2509 = vld [vmem:[#allocation2 + $0xc48] sm:$0xff]
    %v2510 = vld [vmem:[#allocation2 + $0xc50] sm:$0xff]
    %v2511 = vld [vmem:[#allocation2 + $0xc58] sm:$0xff]
    %v2512 = vld [vmem:[#allocation2 + $0xc60] sm:$0xff]
    %v2513 = vld [vmem:[#allocation2 + $0xc68] sm:$0xff]
    %v2514 = vld [vmem:[#allocation2 + $0xc70] sm:$0xff]
    %v2515 = vld [vmem:[#allocation2 + $0xc78] sm:$0xff]
    %v2516 = vld [vmem:[#allocation2 + $0xc80] sm:$0xff]
    %v2517 = vld [vmem:[#allocation2 + $0xc88] sm:$0xff]
    %v2518 = vld [vmem:[#allocation2 + $0xc90] sm:$0xff]
    %v2519 = vld [vmem:[#allocation2 + $0xc98] sm:$0xff]
    %v2520 = vld [vmem:[#allocation2 + $0xca0] sm:$0xff]
    %v2521 = vld [vmem:[#allocation2 + $0xca8] sm:$0xff]
    %v2522 = vld [vmem:[#allocation2 + $0xcb0] sm:$0xff]
    %v2523 = vld [vmem:[#allocation2 + $0xcb8] sm:$0xff]
    %v2524 = vld [vmem:[#allocation2 + $0xcc0] sm:$0xff]
    %v2525 = vld [vmem:[#allocation2 + $0xcc8] sm:$0xff]
    %v2526 = vld [vmem:[#allocation2 + $0xcd0] sm:$0xff]
    %v2527 = vld [vmem:[#allocation2 + $0xcd8] sm:$0xff]
    %v2528 = vld [vmem:[#allocation2 + $0xce0] sm:$0xff]
    %v2529 = vld [vmem:[#allocation2 + $0xce8] sm:$0xff]
    %v2530 = vld [vmem:[#allocation2 + $0xcf0] sm:$0xff]
    %v2531 = vld [vmem:[#allocation2 + $0xcf8] sm:$0xff]
    %v2532 = vld [vmem:[#allocation2 + $0xd00] sm:$0xff]
    %v2533 = vld [vmem:[#allocation2 + $0xd08] sm:$0xff]
    %v2534 = vld [vmem:[#allocation2 + $0xd10] sm:$0xff]
    %v2535 = vld [vmem:[#allocation2 + $0xd18] sm:$0xff]
    %v2536 = vld [vmem:[#allocation2 + $0xd20] sm:$0xff]
    %v2537 = vld [vmem:[#allocation2 + $0xd28] sm:$0xff]
    %v2538 = vld [vmem:[#allocation2 + $0xd30] sm:$0xff]
    %v2539 = vld [vmem:[#allocation2 + $0xd38] sm:$0xff]
    %v2540 = vld [vmem:[#allocation2 + $0xd40] sm:$0xff]
    %v2541 = vld [vmem:[#allocation2 + $0xd48] sm:$0xff]
    %v2542 = vld [vmem:[#allocation2 + $0xd50] sm:$0xff]
    %v2543 = vld [vmem:[#allocation2 + $0xd58] sm:$0xff]
    %v2544 = vld [vmem:[#allocation2 + $0xd60] sm:$0xff]
    %v2545 = vld [vmem:[#allocation2 + $0xd68] sm:$0xff]
    %v2546 = vld [vmem:[#allocation2 + $0xd70] sm:$0xff]
    %v2547 = vld [vmem:[#allocation2 + $0xd78] sm:$0xff]
    %v2548 = vld [vmem:[#allocation2 + $0xd80] sm:$0xff]
    %v2549 = vld [vmem:[#allocation2 + $0xd88] sm:$0xff]
    %v2550 = vld [vmem:[#allocation2 + $0xd90] sm:$0xff]
    %v2551 = vld [vmem:[#allocation2 + $0xd98] sm:$0xff]
    %v2552 = vld [vmem:[#allocation2 + $0xda0] sm:$0xff]
    %v2553 = vld [vmem:[#allocation2 + $0xda8] sm:$0xff]
    %v2554 = vld [vmem:[#allocation2 + $0xdb0] sm:$0xff]
    %v2555 = vld [vmem:[#allocation2 + $0xdb8] sm:$0xff]
    %v2556 = vld [vmem:[#allocation2 + $0xdc0] sm:$0xff]
    %v2557 = vld [vmem:[#allocation2 + $0xdc8] sm:$0xff]
    %v2558 = vld [vmem:[#allocation2 + $0xdd0] sm:$0xff]
    %v2559 = vld [vmem:[#allocation2 + $0xdd8] sm:$0xff]
    %v2560 = vld [vmem:[#allocation2 + $0xde0] sm:$0xff]
    %v2561 = vld [vmem:[#allocation2 + $0xde8] sm:$0xff]
    %v2562 = vld [vmem:[#allocation2 + $0xdf0] sm:$0xff]
    %v2563 = vld [vmem:[#allocation2 + $0xdf8] sm:$0xff]
    %v2564 = vld [vmem:[#allocation2 + $0xe00] sm:$0xff]
    %v2565 = vld [vmem:[#allocation2 + $0xe08] sm:$0xff]
    %v2566 = vld [vmem:[#allocation2 + $0xe10] sm:$0xff]
    %v2567 = vld [vmem:[#allocation2 + $0xe18] sm:$0xff]
    %v2568 = vld [vmem:[#allocation2 + $0xe20] sm:$0xff]
    %v2569 = vld [vmem:[#allocation2 + $0xe28] sm:$0xff]
    %v2570 = vld [vmem:[#allocation2 + $0xe30] sm:$0xff]
    %v2571 = vld [vmem:[#allocation2 + $0xe38] sm:$0xff]
    %v2572 = vld [vmem:[#allocation2 + $0xe40] sm:$0xff]
    %v2573 = vld [vmem:[#allocation2 + $0xe48] sm:$0xff]
    %v2574 = vld [vmem:[#allocation2 + $0xe50] sm:$0xff]
    %v2575 = vld [vmem:[#allocation2 + $0xe58] sm:$0xff]
    %v2576 = vld [vmem:[#allocation2 + $0xe60] sm:$0xff]
    %v2577 = vld [vmem:[#allocation2 + $0xe68] sm:$0xff]
    %v2578 = vld [vmem:[#allocation2 + $0xe70] sm:$0xff]
    %v2579 = vld [vmem:[#allocation2 + $0xe78] sm:$0xff]
    %v2580 = vld [vmem:[#allocation2 + $0xe80] sm:$0xff]
    %v2581 = vld [vmem:[#allocation2 + $0xe88] sm:$0xff]
    %v2582 = vld [vmem:[#allocation2 + $0xe90] sm:$0xff]
    %v2583 = vld [vmem:[#allocation2 + $0xe98] sm:$0xff]
    %v2584 = vld [vmem:[#allocation2 + $0xea0] sm:$0xff]
    %v2585 = vld [vmem:[#allocation2 + $0xea8] sm:$0xff]
    %v2586 = vld [vmem:[#allocation2 + $0xeb0] sm:$0xff]
    %v2587 = vld [vmem:[#allocation2 + $0xeb8] sm:$0xff]
    %v2588 = vld [vmem:[#allocation2 + $0xec0] sm:$0xff]
    %v2589 = vld [vmem:[#allocation2 + $0xec8] sm:$0xff]
    %v2590 = vld [vmem:[#allocation2 + $0xed0] sm:$0xff]
    %v2591 = vld [vmem:[#allocation2 + $0xed8] sm:$0xff]
    %v2592 = vld [vmem:[#allocation2 + $0xee0] sm:$0xff]
    %v2593 = vld [vmem:[#allocation2 + $0xee8] sm:$0xff]
    %v2594 = vld [vmem:[#allocation2 + $0xef0] sm:$0xff]
    %v2595 = vld [vmem:[#allocation2 + $0xef8] sm:$0xff]
    %v2596 = vld [vmem:[#allocation2 + $0xf00] sm:$0xff]
    %v2597 = vld [vmem:[#allocation2 + $0xf08] sm:$0xff]
    %v2598 = vld [vmem:[#allocation2 + $0xf10] sm:$0xff]
    %v2599 = vld [vmem:[#allocation2 + $0xf18] sm:$0xff]
    %v2600 = vld [vmem:[#allocation2 + $0xf20] sm:$0xff]
    %v2601 = vld [vmem:[#allocation2 + $0xf28] sm:$0xff]
    %v2602 = vld [vmem:[#allocation2 + $0xf30] sm:$0xff]
    %v2603 = vld [vmem:[#allocation2 + $0xf38] sm:$0xff]
    %v2604 = vld [vmem:[#allocation2 + $0xf40] sm:$0xff]
    %v2605 = vld [vmem:[#allocation2 + $0xf48] sm:$0xff]
    %v2606 = vld [vmem:[#allocation2 + $0xf50] sm:$0xff]
    %v2607 = vld [vmem:[#allocation2 + $0xf58] sm:$0xff]
    %v2608 = vld [vmem:[#allocation2 + $0xf60] sm:$0xff]
    %v2609 = vld [vmem:[#allocation2 + $0xf68] sm:$0xff]
    %v2610 = vld [vmem:[#allocation2 + $0xf70] sm:$0xff]
    %v2611 = vld [vmem:[#allocation2 + $0xf78] sm:$0xff]
    %v2612 = vld [vmem:[#allocation2 + $0xf80] sm:$0xff]
    %v2613 = vld [vmem:[#allocation2 + $0xf88] sm:$0xff]
    %v2614 = vld [vmem:[#allocation2 + $0xf90] sm:$0xff]
    %v2615 = vld [vmem:[#allocation2 + $0xf98] sm:$0xff]
    %v2616 = vld [vmem:[#allocation2 + $0xfa0] sm:$0xff]
    %v2617 = vld [vmem:[#allocation2 + $0xfa8] sm:$0xff]
    %v2618 = vld [vmem:[#allocation2 + $0xfb0] sm:$0xff]
    %v2619 = vld [vmem:[#allocation2 + $0xfb8] sm:$0xff]
    %v2620 = vld [vmem:[#allocation2 + $0xfc0] sm:$0xff]
    %v2621 = vld [vmem:[#allocation2 + $0xfc8] sm:$0xff]
    %v2622 = vld [vmem:[#allocation2 + $0xfd0] sm:$0xff]
    %v2623 = vld [vmem:[#allocation2 + $0xfd8] sm:$0xff]
    %v2624 = vld [vmem:[#allocation2 + $0xfe0] sm:$0xff]
    %v2625 = vld [vmem:[#allocation2 + $0xfe8] sm:$0xff]
    %v2626 = vld [vmem:[#allocation2 + $0xff0] sm:$0xff]
    %v2627 = vld [vmem:[#allocation2 + $0xff8] sm:$0xff]
    %v2628 = vld [vmem:[%s12] sm:$0xff]
    %v2629 = vld [vmem:[%s12 + $0x8] sm:$0xff]
    %v2630 = vld [vmem:[%s12 + $0x10] sm:$0xff]
    %v2631 = vld [vmem:[%s12 + $0x18] sm:$0xff]
    %v2636 = vlaneseq
    %v2637 = vshrl.u32 %v2636, 7
    %v2638 = vsub.s32 0, %v2637
    %v2639 = vrot.slane %v2628, %v2638
    %v2640 = vlaneseq
    %v2641 = vshrl.u32 %v2640, 7
    %v2642 = vsub.s32 1, %v2641
    %v2643 = vrot.slane %v2628, %v2642
    %v2644 = vlaneseq
    %v2645 = vshrl.u32 %v2644, 7
    %v2646 = vsub.s32 2, %v2645
    %v2647 = vrot.slane %v2628, %v2646
    %v2648 = vlaneseq
    %v2649 = vshrl.u32 %v2648, 7
    %v2650 = vsub.s32 3, %v2649
    %v2651 = vrot.slane %v2628, %v2650
    %v2652 = vlaneseq
    %v2653 = vshrl.u32 %v2652, 7
    %v2654 = vsub.s32 4, %v2653
    %v2655 = vrot.slane %v2628, %v2654
    %v2656 = vlaneseq
    %v2657 = vshrl.u32 %v2656, 7
    %v2658 = vsub.s32 5, %v2657
    %v2659 = vrot.slane %v2628, %v2658
    %v2660 = vlaneseq
    %v2661 = vshrl.u32 %v2660, 7
    %v2662 = vsub.s32 6, %v2661
    %v2663 = vrot.slane %v2628, %v2662
    %v2664 = vlaneseq
    %v2665 = vshrl.u32 %v2664, 7
    %v2666 = vsub.s32 7, %v2665
    %v2667 = vrot.slane %v2628, %v2666
    %v2668 = vlaneseq
    %v2669 = vshrl.u32 %v2668, 7
    %v2670 = vsub.s32 0, %v2669
    %v2671 = vrot.slane %v2629, %v2670
    %v2672 = vlaneseq
    %v2673 = vshrl.u32 %v2672, 7
    %v2674 = vsub.s32 1, %v2673
    %v2675 = vrot.slane %v2629, %v2674
    %v2676 = vlaneseq
    %v2677 = vshrl.u32 %v2676, 7
    %v2678 = vsub.s32 2, %v2677
    %v2679 = vrot.slane %v2629, %v2678
    %v2680 = vlaneseq
    %v2681 = vshrl.u32 %v2680, 7
    %v2682 = vsub.s32 3, %v2681
    %v2683 = vrot.slane %v2629, %v2682
    %v2684 = vlaneseq
    %v2685 = vshrl.u32 %v2684, 7
    %v2686 = vsub.s32 4, %v2685
    %v2687 = vrot.slane %v2629, %v2686
    %v2688 = vlaneseq
    %v2689 = vshrl.u32 %v2688, 7
    %v2690 = vsub.s32 5, %v2689
    %v2691 = vrot.slane %v2629, %v2690
    %v2692 = vlaneseq
    %v2693 = vshrl.u32 %v2692, 7
    %v2694 = vsub.s32 6, %v2693
    %v2695 = vrot.slane %v2629, %v2694
    %v2696 = vlaneseq
    %v2697 = vshrl.u32 %v2696, 7
    %v2698 = vsub.s32 7, %v2697
    %v2699 = vrot.slane %v2629, %v2698
    %v2700 = vlaneseq
    %v2701 = vshrl.u32 %v2700, 7
    %v2702 = vsub.s32 0, %v2701
    %v2703 = vrot.slane %v2630, %v2702
    %v2704 = vlaneseq
    %v2705 = vshrl.u32 %v2704, 7
    %v2706 = vsub.s32 1, %v2705
    %v2707 = vrot.slane %v2630, %v2706
    %v2708 = vlaneseq
    %v2709 = vshrl.u32 %v2708, 7
    %v2710 = vsub.s32 2, %v2709
    %v2711 = vrot.slane %v2630, %v2710
    %v2712 = vlaneseq
    %v2713 = vshrl.u32 %v2712, 7
    %v2714 = vsub.s32 3, %v2713
    %v2715 = vrot.slane %v2630, %v2714
    %v2716 = vlaneseq
    %v2717 = vshrl.u32 %v2716, 7
    %v2718 = vsub.s32 4, %v2717
    %v2719 = vrot.slane %v2630, %v2718
    %v2720 = vlaneseq
    %v2721 = vshrl.u32 %v2720, 7
    %v2722 = vsub.s32 5, %v2721
    %v2723 = vrot.slane %v2630, %v2722
    %v2724 = vlaneseq
    %v2725 = vshrl.u32 %v2724, 7
    %v2726 = vsub.s32 6, %v2725
    %v2727 = vrot.slane %v2630, %v2726
    %v2728 = vlaneseq
    %v2729 = vshrl.u32 %v2728, 7
    %v2730 = vsub.s32 7, %v2729
    %v2731 = vrot.slane %v2630, %v2730
    %v2732 = vlaneseq
    %v2733 = vshrl.u32 %v2732, 7
    %v2734 = vsub.s32 0, %v2733
    %v2735 = vrot.slane %v2631, %v2734
    %v2736 = vlaneseq
    %v2737 = vshrl.u32 %v2736, 7
    %v2738 = vsub.s32 1, %v2737
    %v2739 = vrot.slane %v2631, %v2738
    %v2740 = vlaneseq
    %v2741 = vshrl.u32 %v2740, 7
    %v2742 = vsub.s32 2, %v2741
    %v2743 = vrot.slane %v2631, %v2742
    %v2744 = vlaneseq
    %v2745 = vshrl.u32 %v2744, 7
    %v2746 = vsub.s32 3, %v2745
    %v2747 = vrot.slane %v2631, %v2746
    %v2748 = vlaneseq
    %v2749 = vshrl.u32 %v2748, 7
    %v2750 = vsub.s32 4, %v2749
    %v2751 = vrot.slane %v2631, %v2750
    %v2752 = vlaneseq
    %v2753 = vshrl.u32 %v2752, 7
    %v2754 = vsub.s32 5, %v2753
    %v2755 = vrot.slane %v2631, %v2754
    %v2756 = vlaneseq
    %v2757 = vshrl.u32 %v2756, 7
    %v2758 = vsub.s32 6, %v2757
    %v2759 = vrot.slane %v2631, %v2758
    %v2760 = vlaneseq
    %v2761 = vshrl.u32 %v2760, 7
    %v2762 = vsub.s32 7, %v2761
    %v2763 = vrot.slane %v2631, %v2762
    %2796 = vmatprep.subr.mxu0 %v2117
    %2797 = vmatpush1.msra.mxu0 %v2116
    %2798 = vmatprep.subr.mxu0 %v2149
    %2799 = vmatpush1.msra.mxu0 %v2148
    %2800 = vmatprep.subr.mxu0 %v2181
    %2801 = vmatpush1.msra.mxu0 %v2180
    %2802 = vmatprep.subr.mxu0 %v2213
    %2803 = vmatpush1.msra.mxu0 %v2212
    %2804 = vmatprep.subr.mxu0 %v2245
    %2805 = vmatpush1.msra.mxu0 %v2244
    %2806 = vmatprep.subr.mxu0 %v2277
    %2807 = vmatpush1.msra.mxu0 %v2276
    %2808 = vmatprep.subr.mxu0 %v2309
    %2809 = vmatpush1.msra.mxu0 %v2308
    %2810 = vmatprep.subr.mxu0 %v2341
    %2811 = vmatpush1.msra.mxu0 %v2340
    %2812 = vmatprep.subr.mxu0 %v2373
    %2813 = vmatpush1.msra.mxu0 %v2372
    %2814 = vmatprep.subr.mxu0 %v2405
    %2815 = vmatpush1.msra.mxu0 %v2404
    %2816 = vmatprep.subr.mxu0 %v2437
    %2817 = vmatpush1.msra.mxu0 %v2436
    %2818 = vmatprep.subr.mxu0 %v2469
    %2819 = vmatpush1.msra.mxu0 %v2468
    %2820 = vmatprep.subr.mxu0 %v2501
    %2821 = vmatpush1.msra.mxu0 %v2500
    %2822 = vmatprep.subr.mxu0 %v2533
    %2823 = vmatpush1.msra.mxu0 %v2532
    %2824 = vmatprep.subr.mxu0 %v2565
    %2825 = vmatpush1.msra.mxu0 %v2564
    %2826 = vmatprep.subr.mxu0 %v2597
    %2827 = vmatpush1.msra.mxu0 %v2596
    %2828 = vmatprep.subr.mxu0 0.0
    %2829 = vmatpush1.msra.mxu0 0.0
    %2830 = vmatprep.subr.mxu0 0.0
    %2831 = vmatpush1.msra.mxu0 0.0
    %2832 = vmatprep.subr.mxu0 0.0
    %2833 = vmatpush1.msra.mxu0 0.0
    %2834 = vmatprep.subr.mxu0 0.0
    %2835 = vmatpush1.msra.mxu0 0.0
    %2836 = vmatprep.subr.mxu0 0.0
    %2837 = vmatpush1.msra.mxu0 0.0
    %2838 = vmatprep.subr.mxu0 0.0
    %2839 = vmatpush1.msra.mxu0 0.0
    %2840 = vmatprep.subr.mxu0 0.0
    %2841 = vmatpush1.msra.mxu0 0.0
    %2842 = vmatprep.subr.mxu0 0.0
    %2843 = vmatpush1.msra.mxu0 0.0
    %2844 = vmatprep.subr.mxu0 0.0
    %2845 = vmatpush1.msra.mxu0 0.0
    %2846 = vmatprep.subr.mxu0 0.0
    %2847 = vmatpush1.msra.mxu0 0.0
    %2848 = vmatprep.subr.mxu0 0.0
    %2849 = vmatpush1.msra.mxu0 0.0
    %2850 = vmatprep.subr.mxu0 0.0
    %2851 = vmatpush1.msra.mxu0 0.0
    %2852 = vmatprep.subr.mxu0 0.0
    %2853 = vmatpush1.msra.mxu0 0.0
    %2854 = vmatprep.subr.mxu0 0.0
    %2855 = vmatpush1.msra.mxu0 0.0
    %2856 = vmatprep.subr.mxu0 0.0
    %2857 = vmatpush1.msra.mxu0 0.0
    %2858 = vmatprep.subr.mxu0 0.0
    %2859 = vmatpush1.msra.mxu0 0.0
    %2860 = vmatprep.mubr.f32.mxu0 0.0
    %2861 = vmatmul.mubr.f32.gmra.mrb[0].mxu0 %v2115
    %v2862 = vpop.f32.mrb[0].mxu0
    %v2863 = vadd.f32 %v2639, %v2862
    %v2864 = vpop.f32.mrb[0].mxu0
    %v2865 = vadd.f32 %v2643, %v2864
    %2866 = vdwg.mxu0
    %2867 = vmatprep.subr.mxu0 %v2119
    %2868 = vmatpush1.msra.mxu0 %v2118
    %2869 = vmatprep.subr.mxu0 %v2151
    %2870 = vmatpush1.msra.mxu0 %v2150
    %2871 = vmatprep.subr.mxu0 %v2183
    %2872 = vmatpush1.msra.mxu0 %v2182
    %2873 = vmatprep.subr.mxu0 %v2215
    %2874 = vmatpush1.msra.mxu0 %v2214
    %2875 = vmatprep.subr.mxu0 %v2247
    %2876 = vmatpush1.msra.mxu0 %v2246
    %2877 = vmatprep.subr.mxu0 %v2279
    %2878 = vmatpush1.msra.mxu0 %v2278
    %2879 = vmatprep.subr.mxu0 %v2311
    %2880 = vmatpush1.msra.mxu0 %v2310
    %2881 = vmatprep.subr.mxu0 %v2343
    %2882 = vmatpush1.msra.mxu0 %v2342
    %2883 = vmatprep.subr.mxu0 %v2375
    %2884 = vmatpush1.msra.mxu0 %v2374
    %2885 = vmatprep.subr.mxu0 %v2407
    %2886 = vmatpush1.msra.mxu0 %v2406
    %2887 = vmatprep.subr.mxu0 %v2439
    %2888 = vmatpush1.msra.mxu0 %v2438
    %2889 = vmatprep.subr.mxu0 %v2471
    %2890 = vmatpush1.msra.mxu0 %v2470
    %2891 = vmatprep.subr.mxu0 %v2503
    %2892 = vmatpush1.msra.mxu0 %v2502
    %2893 = vmatprep.subr.mxu0 %v2535
    %2894 = vmatpush1.msra.mxu0 %v2534
    %2895 = vmatprep.subr.mxu0 %v2567
    %2896 = vmatpush1.msra.mxu0 %v2566
    %2897 = vmatprep.subr.mxu0 %v2599
    %2898 = vmatpush1.msra.mxu0 %v2598
    %2899 = vmatprep.subr.mxu0 0.0
    %2900 = vmatpush1.msra.mxu0 0.0
    %2901 = vmatprep.subr.mxu0 0.0
    %2902 = vmatpush1.msra.mxu0 0.0
    %2903 = vmatprep.subr.mxu0 0.0
    %2904 = vmatpush1.msra.mxu0 0.0
    %2905 = vmatprep.subr.mxu0 0.0
    %2906 = vmatpush1.msra.mxu0 0.0
    %2907 = vmatprep.subr.mxu0 0.0
    %2908 = vmatpush1.msra.mxu0 0.0
    %2909 = vmatprep.subr.mxu0 0.0
    %2910 = vmatpush1.msra.mxu0 0.0
    %2911 = vmatprep.subr.mxu0 0.0
    %2912 = vmatpush1.msra.mxu0 0.0
    %2913 = vmatprep.subr.mxu0 0.0
    %2914 = vmatpush1.msra.mxu0 0.0
    %2915 = vmatprep.subr.mxu0 0.0
    %2916 = vmatpush1.msra.mxu0 0.0
    %2917 = vmatprep.subr.mxu0 0.0
    %2918 = vmatpush1.msra.mxu0 0.0
    %2919 = vmatprep.subr.mxu0 0.0
    %2920 = vmatpush1.msra.mxu0 0.0
    %2921 = vmatprep.subr.mxu0 0.0
    %2922 = vmatpush1.msra.mxu0 0.0
    %2923 = vmatprep.subr.mxu0 0.0
    %2924 = vmatpush1.msra.mxu0 0.0
    %2925 = vmatprep.subr.mxu0 0.0
    %2926 = vmatpush1.msra.mxu0 0.0
    %2927 = vmatprep.subr.mxu0 0.0
    %2928 = vmatpush1.msra.mxu0 0.0
    %2929 = vmatprep.subr.mxu0 0.0
    %2930 = vmatpush1.msra.mxu0 0.0
    %2931 = vmatprep.mubr.f32.mxu0 0.0
    %2932 = vmatmul.mubr.f32.gmra.mrb[0].mxu0 %v2115
    %v2933 = vpop.f32.mrb[0].mxu0
    %v2934 = vadd.f32 %v2647, %v2933
    %v2935 = vpop.f32.mrb[0].mxu0
    %v2936 = vadd.f32 %v2651, %v2935
    %2937 = vdwg.mxu0
    %2938 = vmatprep.subr.mxu0 %v2121
    %2939 = vmatpush1.msra.mxu0 %v2120
    %2940 = vmatprep.subr.mxu0 %v2153
    %2941 = vmatpush1.msra.mxu0 %v2152
    %2942 = vmatprep.subr.mxu0 %v2185
    %2943 = vmatpush1.msra.mxu0 %v2184
    %2944 = vmatprep.subr.mxu0 %v2217
    %2945 = vmatpush1.msra.mxu0 %v2216
    %2946 = vmatprep.subr.mxu0 %v2249
    %2947 = vmatpush1.msra.mxu0 %v2248
    %2948 = vmatprep.subr.mxu0 %v2281
    %2949 = vmatpush1.msra.mxu0 %v2280
    %2950 = vmatprep.subr.mxu0 %v2313
    %2951 = vmatpush1.msra.mxu0 %v2312
    %2952 = vmatprep.subr.mxu0 %v2345
    %2953 = vmatpush1.msra.mxu0 %v2344
    %2954 = vmatprep.subr.mxu0 %v2377
    %2955 = vmatpush1.msra.mxu0 %v2376
    %2956 = vmatprep.subr.mxu0 %v2409
    %2957 = vmatpush1.msra.mxu0 %v2408
    %2958 = vmatprep.subr.mxu0 %v2441
    %2959 = vmatpush1.msra.mxu0 %v2440
    %2960 = vmatprep.subr.mxu0 %v2473
    %2961 = vmatpush1.msra.mxu0 %v2472
    %2962 = vmatprep.subr.mxu0 %v2505
    %2963 = vmatpush1.msra.mxu0 %v2504
    %2964 = vmatprep.subr.mxu0 %v2537
    %2965 = vmatpush1.msra.mxu0 %v2536
    %2966 = vmatprep.subr.mxu0 %v2569
    %2967 = vmatpush1.msra.mxu0 %v2568
    %2968 = vmatprep.subr.mxu0 %v2601
    %2969 = vmatpush1.msra.mxu0 %v2600
    %2970 = vmatprep.subr.mxu0 0.0
    %2971 = vmatpush1.msra.mxu0 0.0
    %2972 = vmatprep.subr.mxu0 0.0
    %2973 = vmatpush1.msra.mxu0 0.0
    %2974 = vmatprep.subr.mxu0 0.0
    %2975 = vmatpush1.msra.mxu0 0.0
    %2976 = vmatprep.subr.mxu0 0.0
    %2977 = vmatpush1.msra.mxu0 0.0
    %2978 = vmatprep.subr.mxu0 0.0
    %2979 = vmatpush1.msra.mxu0 0.0
    %2980 = vmatprep.subr.mxu0 0.0
    %2981 = vmatpush1.msra.mxu0 0.0
    %2982 = vmatprep.subr.mxu0 0.0
    %2983 = vmatpush1.msra.mxu0 0.0
    %2984 = vmatprep.subr.mxu0 0.0
    %2985 = vmatpush1.msra.mxu0 0.0
    %2986 = vmatprep.subr.mxu0 0.0
    %2987 = vmatpush1.msra.mxu0 0.0
    %2988 = vmatprep.subr.mxu0 0.0
    %2989 = vmatpush1.msra.mxu0 0.0
    %2990 = vmatprep.subr.mxu0 0.0
    %2991 = vmatpush1.msra.mxu0 0.0
    %2992 = vmatprep.subr.mxu0 0.0
    %2993 = vmatpush1.msra.mxu0 0.0
    %2994 = vmatprep.subr.mxu0 0.0
    %2995 = vmatpush1.msra.mxu0 0.0
    %2996 = vmatprep.subr.mxu0 0.0
    %2997 = vmatpush1.msra.mxu0 0.0
    %2998 = vmatprep.subr.mxu0 0.0
    %2999 = vmatpush1.msra.mxu0 0.0
    %3000 = vmatprep.subr.mxu0 0.0
    %3001 = vmatpush1.msra.mxu0 0.0
    %3002 = vmatprep.mubr.f32.mxu0 0.0
    %3003 = vmatmul.mubr.f32.gmra.mrb[0].mxu0 %v2115
    %v3004 = vpop.f32.mrb[0].mxu0
    %v3005 = vadd.f32 %v2655, %v3004
    %v3006 = vpop.f32.mrb[0].mxu0
    %v3007 = vadd.f32 %v2659, %v3006
    %3008 = vdwg.mxu0
    %3009 = vmatprep.subr.mxu0 %v2123
    %3010 = vmatpush1.msra.mxu0 %v2122
    %3011 = vmatprep.subr.mxu0 %v2155
    %3012 = vmatpush1.msra.mxu0 %v2154
    %3013 = vmatprep.subr.mxu0 %v2187
    %3014 = vmatpush1.msra.mxu0 %v2186
    %3015 = vmatprep.subr.mxu0 %v2219
    %3016 = vmatpush1.msra.mxu0 %v2218
    %3017 = vmatprep.subr.mxu0 %v2251
    %3018 = vmatpush1.msra.mxu0 %v2250
    %3019 = vmatprep.subr.mxu0 %v2283
    %3020 = vmatpush1.msra.mxu0 %v2282
    %3021 = vmatprep.subr.mxu0 %v2315
    %3022 = vmatpush1.msra.mxu0 %v2314
    %3023 = vmatprep.subr.mxu0 %v2347
    %3024 = vmatpush1.msra.mxu0 %v2346
    %3025 = vmatprep.subr.mxu0 %v2379
    %3026 = vmatpush1.msra.mxu0 %v2378
    %3027 = vmatprep.subr.mxu0 %v2411
    %3028 = vmatpush1.msra.mxu0 %v2410
    %3029 = vmatprep.subr.mxu0 %v2443
    %3030 = vmatpush1.msra.mxu0 %v2442
    %3031 = vmatprep.subr.mxu0 %v2475
    %3032 = vmatpush1.msra.mxu0 %v2474
    %3033 = vmatprep.subr.mxu0 %v2507
    %3034 = vmatpush1.msra.mxu0 %v2506
    %3035 = vmatprep.subr.mxu0 %v2539
    %3036 = vmatpush1.msra.mxu0 %v2538
    %3037 = vmatprep.subr.mxu0 %v2571
    %3038 = vmatpush1.msra.mxu0 %v2570
    %3039 = vmatprep.subr.mxu0 %v2603
    %3040 = vmatpush1.msra.mxu0 %v2602
    %3041 = vmatprep.subr.mxu0 0.0
    %3042 = vmatpush1.msra.mxu0 0.0
    %3043 = vmatprep.subr.mxu0 0.0
    %3044 = vmatpush1.msra.mxu0 0.0
    %3045 = vmatprep.subr.mxu0 0.0
    %3046 = vmatpush1.msra.mxu0 0.0
    %3047 = vmatprep.subr.mxu0 0.0
    %3048 = vmatpush1.msra.mxu0 0.0
    %3049 = vmatprep.subr.mxu0 0.0
    %3050 = vmatpush1.msra.mxu0 0.0
    %3051 = vmatprep.subr.mxu0 0.0
    %3052 = vmatpush1.msra.mxu0 0.0
    %3053 = vmatprep.subr.mxu0 0.0
    %3054 = vmatpush1.msra.mxu0 0.0
    %3055 = vmatprep.subr.mxu0 0.0
    %3056 = vmatpush1.msra.mxu0 0.0
    %3057 = vmatprep.subr.mxu0 0.0
    %3058 = vmatpush1.msra.mxu0 0.0
    %3059 = vmatprep.subr.mxu0 0.0
    %3060 = vmatpush1.msra.mxu0 0.0
    %3061 = vmatprep.subr.mxu0 0.0
    %3062 = vmatpush1.msra.mxu0 0.0
    %3063 = vmatprep.subr.mxu0 0.0
    %3064 = vmatpush1.msra.mxu0 0.0
    %3065 = vmatprep.subr.mxu0 0.0
    %3066 = vmatpush1.msra.mxu0 0.0
    %3067 = vmatprep.subr.mxu0 0.0
    %3068 = vmatpush1.msra.mxu0 0.0
    %3069 = vmatprep.subr.mxu0 0.0
    %3070 = vmatpush1.msra.mxu0 0.0
    %3071 = vmatprep.subr.mxu0 0.0
    %3072 = vmatpush1.msra.mxu0 0.0
    %3073 = vmatprep.mubr.f32.mxu0 0.0
    %3074 = vmatmul.mubr.f32.gmra.mrb[0].mxu0 %v2115
    %v3075 = vpop.f32.mrb[0].mxu0
    %v3076 = vadd.f32 %v2663, %v3075
    %v3077 = vpop.f32.mrb[0].mxu0
    %v3078 = vadd.f32 %v2667, %v3077
    %3079 = vdwg.mxu0
    %3080 = vmatprep.subr.mxu0 %v2125
    %3081 = vmatpush1.msra.mxu0 %v2124
    %3082 = vmatprep.subr.mxu0 %v2157
    %3083 = vmatpush1.msra.mxu0 %v2156
    %3084 = vmatprep.subr.mxu0 %v2189
    %3085 = vmatpush1.msra.mxu0 %v2188
    %3086 = vmatprep.subr.mxu0 %v2221
    %3087 = vmatpush1.msra.mxu0 %v2220
    %3088 = vmatprep.subr.mxu0 %v2253
    %3089 = vmatpush1.msra.mxu0 %v2252
    %3090 = vmatprep.subr.mxu0 %v2285
    %3091 = vmatpush1.msra.mxu0 %v2284
    %3092 = vmatprep.subr.mxu0 %v2317
    %3093 = vmatpush1.msra.mxu0 %v2316
    %3094 = vmatprep.subr.mxu0 %v2349
    %3095 = vmatpush1.msra.mxu0 %v2348
    %3096 = vmatprep.subr.mxu0 %v2381
    %3097 = vmatpush1.msra.mxu0 %v2380
    %3098 = vmatprep.subr.mxu0 %v2413
    %3099 = vmatpush1.msra.mxu0 %v2412
    %3100 = vmatprep.subr.mxu0 %v2445
    %3101 = vmatpush1.msra.mxu0 %v2444
    %3102 = vmatprep.subr.mxu0 %v2477
    %3103 = vmatpush1.msra.mxu0 %v2476
    %3104 = vmatprep.subr.mxu0 %v2509
    %3105 = vmatpush1.msra.mxu0 %v2508
    %3106 = vmatprep.subr.mxu0 %v2541
    %3107 = vmatpush1.msra.mxu0 %v2540
    %3108 = vmatprep.subr.mxu0 %v2573
    %3109 = vmatpush1.msra.mxu0 %v2572
    %3110 = vmatprep.subr.mxu0 %v2605
    %3111 = vmatpush1.msra.mxu0 %v2604
    %3112 = vmatprep.subr.mxu0 0.0
    %3113 = vmatpush1.msra.mxu0 0.0
    %3114 = vmatprep.subr.mxu0 0.0
    %3115 = vmatpush1.msra.mxu0 0.0
    %3116 = vmatprep.subr.mxu0 0.0
    %3117 = vmatpush1.msra.mxu0 0.0
    %3118 = vmatprep.subr.mxu0 0.0
    %3119 = vmatpush1.msra.mxu0 0.0
    %3120 = vmatprep.subr.mxu0 0.0
    %3121 = vmatpush1.msra.mxu0 0.0
    %3122 = vmatprep.subr.mxu0 0.0
    %3123 = vmatpush1.msra.mxu0 0.0
    %3124 = vmatprep.subr.mxu0 0.0
    %3125 = vmatpush1.msra.mxu0 0.0
    %3126 = vmatprep.subr.mxu0 0.0
    %3127 = vmatpush1.msra.mxu0 0.0
    %3128 = vmatprep.subr.mxu0 0.0
    %3129 = vmatpush1.msra.mxu0 0.0
    %3130 = vmatprep.subr.mxu0 0.0
    %3131 = vmatpush1.msra.mxu0 0.0
    %3132 = vmatprep.subr.mxu0 0.0
    %3133 = vmatpush1.msra.mxu0 0.0
    %3134 = vmatprep.subr.mxu0 0.0
    %3135 = vmatpush1.msra.mxu0 0.0
    %3136 = vmatprep.subr.mxu0 0.0
    %3137 = vmatpush1.msra.mxu0 0.0
    %3138 = vmatprep.subr.mxu0 0.0
    %3139 = vmatpush1.msra.mxu0 0.0
    %3140 = vmatprep.subr.mxu0 0.0
    %3141 = vmatpush1.msra.mxu0 0.0
    %3142 = vmatprep.subr.mxu0 0.0
    %3143 = vmatpush1.msra.mxu0 0.0
    %3144 = vmatprep.mubr.f32.mxu0 0.0
    %3145 = vmatmul.mubr.f32.gmra.mrb[0].mxu0 %v2115
    %v3146 = vpop.f32.mrb[0].mxu0
    %v3147 = vadd.f32 %v2671, %v3146
    %v3148 = vpop.f32.mrb[0].mxu0
    %v3149 = vadd.f32 %v2675, %v3148
    %3150 = vdwg.mxu0
    %3151 = vmatprep.subr.mxu0 %v2127
    %3152 = vmatpush1.msra.mxu0 %v2126
    %3153 = vmatprep.subr.mxu0 %v2159
    %3154 = vmatpush1.msra.mxu0 %v2158
    %3155 = vmatprep.subr.mxu0 %v2191
    %3156 = vmatpush1.msra.mxu0 %v2190
    %3157 = vmatprep.subr.mxu0 %v2223
    %3158 = vmatpush1.msra.mxu0 %v2222
    %3159 = vmatprep.subr.mxu0 %v2255
    %3160 = vmatpush1.msra.mxu0 %v2254
    %3161 = vmatprep.subr.mxu0 %v2287
    %3162 = vmatpush1.msra.mxu0 %v2286
    %3163 = vmatprep.subr.mxu0 %v2319
    %3164 = vmatpush1.msra.mxu0 %v2318
    %3165 = vmatprep.subr.mxu0 %v2351
    %3166 = vmatpush1.msra.mxu0 %v2350
    %3167 = vmatprep.subr.mxu0 %v2383
    %3168 = vmatpush1.msra.mxu0 %v2382
    %3169 = vmatprep.subr.mxu0 %v2415
    %3170 = vmatpush1.msra.mxu0 %v2414
    %3171 = vmatprep.subr.mxu0 %v2447
    %3172 = vmatpush1.msra.mxu0 %v2446
    %3173 = vmatprep.subr.mxu0 %v2479
    %3174 = vmatpush1.msra.mxu0 %v2478
    %3175 = vmatprep.subr.mxu0 %v2511
    %3176 = vmatpush1.msra.mxu0 %v2510
    %3177 = vmatprep.subr.mxu0 %v2543
    %3178 = vmatpush1.msra.mxu0 %v2542
    %3179 = vmatprep.subr.mxu0 %v2575
    %3180 = vmatpush1.msra.mxu0 %v2574
    %3181 = vmatprep.subr.mxu0 %v2607
    %3182 = vmatpush1.msra.mxu0 %v2606
    %3183 = vmatprep.subr.mxu0 0.0
    %3184 = vmatpush1.msra.mxu0 0.0
    %3185 = vmatprep.subr.mxu0 0.0
    %3186 = vmatpush1.msra.mxu0 0.0
    %3187 = vmatprep.subr.mxu0 0.0
    %3188 = vmatpush1.msra.mxu0 0.0
    %3189 = vmatprep.subr.mxu0 0.0
    %3190 = vmatpush1.msra.mxu0 0.0
    %3191 = vmatprep.subr.mxu0 0.0
    %3192 = vmatpush1.msra.mxu0 0.0
    %3193 = vmatprep.subr.mxu0 0.0
    %3194 = vmatpush1.msra.mxu0 0.0
    %3195 = vmatprep.subr.mxu0 0.0
    %3196 = vmatpush1.msra.mxu0 0.0
    %3197 = vmatprep.subr.mxu0 0.0
    %3198 = vmatpush1.msra.mxu0 0.0
    %3199 = vmatprep.subr.mxu0 0.0
    %3200 = vmatpush1.msra.mxu0 0.0
    %3201 = vmatprep.subr.mxu0 0.0
    %3202 = vmatpush1.msra.mxu0 0.0
    %3203 = vmatprep.subr.mxu0 0.0
    %3204 = vmatpush1.msra.mxu0 0.0
    %3205 = vmatprep.subr.mxu0 0.0
    %3206 = vmatpush1.msra.mxu0 0.0
    %3207 = vmatprep.subr.mxu0 0.0
    %3208 = vmatpush1.msra.mxu0 0.0
    %3209 = vmatprep.subr.mxu0 0.0
    %3210 = vmatpush1.msra.mxu0 0.0
    %3211 = vmatprep.subr.mxu0 0.0
    %3212 = vmatpush1.msra.mxu0 0.0
    %3213 = vmatprep.subr.mxu0 0.0
    %3214 = vmatpush1.msra.mxu0 0.0
    %3215 = vmatprep.mubr.f32.mxu0 0.0
    %3216 = vmatmul.mubr.f32.gmra.mrb[0].mxu0 %v2115
    %v3217 = vpop.f32.mrb[0].mxu0
    %v3218 = vadd.f32 %v2679, %v3217
    %v3219 = vpop.f32.mrb[0].mxu0
    %v3220 = vadd.f32 %v2683, %v3219
    %3221 = vdwg.mxu0
    %3222 = vmatprep.subr.mxu0 %v2129
    %3223 = vmatpush1.msra.mxu0 %v2128
    %3224 = vmatprep.subr.mxu0 %v2161
    %3225 = vmatpush1.msra.mxu0 %v2160
    %3226 = vmatprep.subr.mxu0 %v2193
    %3227 = vmatpush1.msra.mxu0 %v2192
    %3228 = vmatprep.subr.mxu0 %v2225
    %3229 = vmatpush1.msra.mxu0 %v2224
    %3230 = vmatprep.subr.mxu0 %v2257
    %3231 = vmatpush1.msra.mxu0 %v2256
    %3232 = vmatprep.subr.mxu0 %v2289
    %3233 = vmatpush1.msra.mxu0 %v2288
    %3234 = vmatprep.subr.mxu0 %v2321
    %3235 = vmatpush1.msra.mxu0 %v2320
    %3236 = vmatprep.subr.mxu0 %v2353
    %3237 = vmatpush1.msra.mxu0 %v2352
    %3238 = vmatprep.subr.mxu0 %v2385
    %3239 = vmatpush1.msra.mxu0 %v2384
    %3240 = vmatprep.subr.mxu0 %v2417
    %3241 = vmatpush1.msra.mxu0 %v2416
    %3242 = vmatprep.subr.mxu0 %v2449
    %3243 = vmatpush1.msra.mxu0 %v2448
    %3244 = vmatprep.subr.mxu0 %v2481
    %3245 = vmatpush1.msra.mxu0 %v2480
    %3246 = vmatprep.subr.mxu0 %v2513
    %3247 = vmatpush1.msra.mxu0 %v2512
    %3248 = vmatprep.subr.mxu0 %v2545
    %3249 = vmatpush1.msra.mxu0 %v2544
    %3250 = vmatprep.subr.mxu0 %v2577
    %3251 = vmatpush1.msra.mxu0 %v2576
    %3252 = vmatprep.subr.mxu0 %v2609
    %3253 = vmatpush1.msra.mxu0 %v2608
    %3254 = vmatprep.subr.mxu0 0.0
    %3255 = vmatpush1.msra.mxu0 0.0
    %3256 = vmatprep.subr.mxu0 0.0
    %3257 = vmatpush1.msra.mxu0 0.0
    %3258 = vmatprep.subr.mxu0 0.0
    %3259 = vmatpush1.msra.mxu0 0.0
    %3260 = vmatprep.subr.mxu0 0.0
    %3261 = vmatpush1.msra.mxu0 0.0
    %3262 = vmatprep.subr.mxu0 0.0
    %3263 = vmatpush1.msra.mxu0 0.0
    %3264 = vmatprep.subr.mxu0 0.0
    %3265 = vmatpush1.msra.mxu0 0.0
    %3266 = vmatprep.subr.mxu0 0.0
    %3267 = vmatpush1.msra.mxu0 0.0
    %3268 = vmatprep.subr.mxu0 0.0
    %3269 = vmatpush1.msra.mxu0 0.0
    %3270 = vmatprep.subr.mxu0 0.0
    %3271 = vmatpush1.msra.mxu0 0.0
    %3272 = vmatprep.subr.mxu0 0.0
    %3273 = vmatpush1.msra.mxu0 0.0
    %3274 = vmatprep.subr.mxu0 0.0
    %3275 = vmatpush1.msra.mxu0 0.0
    %3276 = vmatprep.subr.mxu0 0.0
    %3277 = vmatpush1.msra.mxu0 0.0
    %3278 = vmatprep.subr.mxu0 0.0
    %3279 = vmatpush1.msra.mxu0 0.0
    %3280 = vmatprep.subr.mxu0 0.0
    %3281 = vmatpush1.msra.mxu0 0.0
    %3282 = vmatprep.subr.mxu0 0.0
    %3283 = vmatpush1.msra.mxu0 0.0
    %3284 = vmatprep.subr.mxu0 0.0
    %3285 = vmatpush1.msra.mxu0 0.0
    %3286 = vmatprep.mubr.f32.mxu0 0.0
    %3287 = vmatmul.mubr.f32.gmra.mrb[0].mxu0 %v2115
    %v3288 = vpop.f32.mrb[0].mxu0
    %v3289 = vadd.f32 %v2687, %v3288
    %v3290 = vpop.f32.mrb[0].mxu0
    %v3291 = vadd.f32 %v2691, %v3290
    %3292 = vdwg.mxu0
    %3293 = vmatprep.subr.mxu0 %v2131
    %3294 = vmatpush1.msra.mxu0 %v2130
    %3295 = vmatprep.subr.mxu0 %v2163
    %3296 = vmatpush1.msra.mxu0 %v2162
    %3297 = vmatprep.subr.mxu0 %v2195
    %3298 = vmatpush1.msra.mxu0 %v2194
    %3299 = vmatprep.subr.mxu0 %v2227
    %3300 = vmatpush1.msra.mxu0 %v2226
    %3301 = vmatprep.subr.mxu0 %v2259
    %3302 = vmatpush1.msra.mxu0 %v2258
    %3303 = vmatprep.subr.mxu0 %v2291
    %3304 = vmatpush1.msra.mxu0 %v2290
    %3305 = vmatprep.subr.mxu0 %v2323
    %3306 = vmatpush1.msra.mxu0 %v2322
    %3307 = vmatprep.subr.mxu0 %v2355
    %3308 = vmatpush1.msra.mxu0 %v2354
    %3309 = vmatprep.subr.mxu0 %v2387
    %3310 = vmatpush1.msra.mxu0 %v2386
    %3311 = vmatprep.subr.mxu0 %v2419
    %3312 = vmatpush1.msra.mxu0 %v2418
    %3313 = vmatprep.subr.mxu0 %v2451
    %3314 = vmatpush1.msra.mxu0 %v2450
    %3315 = vmatprep.subr.mxu0 %v2483
    %3316 = vmatpush1.msra.mxu0 %v2482
    %3317 = vmatprep.subr.mxu0 %v2515
    %3318 = vmatpush1.msra.mxu0 %v2514
    %3319 = vmatprep.subr.mxu0 %v2547
    %3320 = vmatpush1.msra.mxu0 %v2546
    %3321 = vmatprep.subr.mxu0 %v2579
    %3322 = vmatpush1.msra.mxu0 %v2578
    %3323 = vmatprep.subr.mxu0 %v2611
    %3324 = vmatpush1.msra.mxu0 %v2610
    %3325 = vmatprep.subr.mxu0 0.0
    %3326 = vmatpush1.msra.mxu0 0.0
    %3327 = vmatprep.subr.mxu0 0.0
    %3328 = vmatpush1.msra.mxu0 0.0
    %3329 = vmatprep.subr.mxu0 0.0
    %3330 = vmatpush1.msra.mxu0 0.0
    %3331 = vmatprep.subr.mxu0 0.0
    %3332 = vmatpush1.msra.mxu0 0.0
    %3333 = vmatprep.subr.mxu0 0.0
    %3334 = vmatpush1.msra.mxu0 0.0
    %3335 = vmatprep.subr.mxu0 0.0
    %3336 = vmatpush1.msra.mxu0 0.0
    %3337 = vmatprep.subr.mxu0 0.0
    %3338 = vmatpush1.msra.mxu0 0.0
    %3339 = vmatprep.subr.mxu0 0.0
    %3340 = vmatpush1.msra.mxu0 0.0
    %3341 = vmatprep.subr.mxu0 0.0
    %3342 = vmatpush1.msra.mxu0 0.0
    %3343 = vmatprep.subr.mxu0 0.0
    %3344 = vmatpush1.msra.mxu0 0.0
    %3345 = vmatprep.subr.mxu0 0.0
    %3346 = vmatpush1.msra.mxu0 0.0
    %3347 = vmatprep.subr.mxu0 0.0
    %3348 = vmatpush1.msra.mxu0 0.0
    %3349 = vmatprep.subr.mxu0 0.0
    %3350 = vmatpush1.msra.mxu0 0.0
    %3351 = vmatprep.subr.mxu0 0.0
    %3352 = vmatpush1.msra.mxu0 0.0
    %3353 = vmatprep.subr.mxu0 0.0
    %3354 = vmatpush1.msra.mxu0 0.0
    %3355 = vmatprep.subr.mxu0 0.0
    %3356 = vmatpush1.msra.mxu0 0.0
    %3357 = vmatprep.mubr.f32.mxu0 0.0
    %3358 = vmatmul.mubr.f32.gmra.mrb[0].mxu0 %v2115
    %v3359 = vpop.f32.mrb[0].mxu0
    %v3360 = vadd.f32 %v2695, %v3359
    %v3361 = vpop.f32.mrb[0].mxu0
    %v3362 = vadd.f32 %v2699, %v3361
    %3363 = vdwg.mxu0
    %3364 = vmatprep.subr.mxu0 %v2133
    %3365 = vmatpush1.msra.mxu0 %v2132
    %3366 = vmatprep.subr.mxu0 %v2165
    %3367 = vmatpush1.msra.mxu0 %v2164
    %3368 = vmatprep.subr.mxu0 %v2197
    %3369 = vmatpush1.msra.mxu0 %v2196
    %3370 = vmatprep.subr.mxu0 %v2229
    %3371 = vmatpush1.msra.mxu0 %v2228
    %3372 = vmatprep.subr.mxu0 %v2261
    %3373 = vmatpush1.msra.mxu0 %v2260
    %3374 = vmatprep.subr.mxu0 %v2293
    %3375 = vmatpush1.msra.mxu0 %v2292
    %3376 = vmatprep.subr.mxu0 %v2325
    %3377 = vmatpush1.msra.mxu0 %v2324
    %3378 = vmatprep.subr.mxu0 %v2357
    %3379 = vmatpush1.msra.mxu0 %v2356
    %3380 = vmatprep.subr.mxu0 %v2389
    %3381 = vmatpush1.msra.mxu0 %v2388
    %3382 = vmatprep.subr.mxu0 %v2421
    %3383 = vmatpush1.msra.mxu0 %v2420
    %3384 = vmatprep.subr.mxu0 %v2453
    %3385 = vmatpush1.msra.mxu0 %v2452
    %3386 = vmatprep.subr.mxu0 %v2485
    %3387 = vmatpush1.msra.mxu0 %v2484
    %3388 = vmatprep.subr.mxu0 %v2517
    %3389 = vmatpush1.msra.mxu0 %v2516
    %3390 = vmatprep.subr.mxu0 %v2549
    %3391 = vmatpush1.msra.mxu0 %v2548
    %3392 = vmatprep.subr.mxu0 %v2581
    %3393 = vmatpush1.msra.mxu0 %v2580
    %3394 = vmatprep.subr.mxu0 %v2613
    %3395 = vmatpush1.msra.mxu0 %v2612
    %3396 = vmatprep.subr.mxu0 0.0
    %3397 = vmatpush1.msra.mxu0 0.0
    %3398 = vmatprep.subr.mxu0 0.0
    %3399 = vmatpush1.msra.mxu0 0.0
    %3400 = vmatprep.subr.mxu0 0.0
    %3401 = vmatpush1.msra.mxu0 0.0
    %3402 = vmatprep.subr.mxu0 0.0
    %3403 = vmatpush1.msra.mxu0 0.0
    %3404 = vmatprep.subr.mxu0 0.0
    %3405 = vmatpush1.msra.mxu0 0.0
    %3406 = vmatprep.subr.mxu0 0.0
    %3407 = vmatpush1.msra.mxu0 0.0
    %3408 = vmatprep.subr.mxu0 0.0
    %3409 = vmatpush1.msra.mxu0 0.0
    %3410 = vmatprep.subr.mxu0 0.0
    %3411 = vmatpush1.msra.mxu0 0.0
    %3412 = vmatprep.subr.mxu0 0.0
    %3413 = vmatpush1.msra.mxu0 0.0
    %3414 = vmatprep.subr.mxu0 0.0
    %3415 = vmatpush1.msra.mxu0 0.0
    %3416 = vmatprep.subr.mxu0 0.0
    %3417 = vmatpush1.msra.mxu0 0.0
    %3418 = vmatprep.subr.mxu0 0.0
    %3419 = vmatpush1.msra.mxu0 0.0
    %3420 = vmatprep.subr.mxu0 0.0
    %3421 = vmatpush1.msra.mxu0 0.0
    %3422 = vmatprep.subr.mxu0 0.0
    %3423 = vmatpush1.msra.mxu0 0.0
    %3424 = vmatprep.subr.mxu0 0.0
    %3425 = vmatpush1.msra.mxu0 0.0
    %3426 = vmatprep.subr.mxu0 0.0
    %3427 = vmatpush1.msra.mxu0 0.0
    %3428 = vmatprep.mubr.f32.mxu0 0.0
    %3429 = vmatmul.mubr.f32.gmra.mrb[0].mxu0 %v2115
    %v3430 = vpop.f32.mrb[0].mxu0
    %v3431 = vadd.f32 %v2703, %v3430
    %v3432 = vpop.f32.mrb[0].mxu0
    %v3433 = vadd.f32 %v2707, %v3432
    %3434 = vdwg.mxu0
    %3435 = vmatprep.subr.mxu0 %v2135
    %3436 = vmatpush1.msra.mxu0 %v2134
    %3437 = vmatprep.subr.mxu0 %v2167
    %3438 = vmatpush1.msra.mxu0 %v2166
    %3439 = vmatprep.subr.mxu0 %v2199
    %3440 = vmatpush1.msra.mxu0 %v2198
    %3441 = vmatprep.subr.mxu0 %v2231
    %3442 = vmatpush1.msra.mxu0 %v2230
    %3443 = vmatprep.subr.mxu0 %v2263
    %3444 = vmatpush1.msra.mxu0 %v2262
    %3445 = vmatprep.subr.mxu0 %v2295
    %3446 = vmatpush1.msra.mxu0 %v2294
    %3447 = vmatprep.subr.mxu0 %v2327
    %3448 = vmatpush1.msra.mxu0 %v2326
    %3449 = vmatprep.subr.mxu0 %v2359
    %3450 = vmatpush1.msra.mxu0 %v2358
    %3451 = vmatprep.subr.mxu0 %v2391
    %3452 = vmatpush1.msra.mxu0 %v2390
    %3453 = vmatprep.subr.mxu0 %v2423
    %3454 = vmatpush1.msra.mxu0 %v2422
    %3455 = vmatprep.subr.mxu0 %v2455
    %3456 = vmatpush1.msra.mxu0 %v2454
    %3457 = vmatprep.subr.mxu0 %v2487
    %3458 = vmatpush1.msra.mxu0 %v2486
    %3459 = vmatprep.subr.mxu0 %v2519
    %3460 = vmatpush1.msra.mxu0 %v2518
    %3461 = vmatprep.subr.mxu0 %v2551
    %3462 = vmatpush1.msra.mxu0 %v2550
    %3463 = vmatprep.subr.mxu0 %v2583
    %3464 = vmatpush1.msra.mxu0 %v2582
    %3465 = vmatprep.subr.mxu0 %v2615
    %3466 = vmatpush1.msra.mxu0 %v2614
    %3467 = vmatprep.subr.mxu0 0.0
    %3468 = vmatpush1.msra.mxu0 0.0
    %3469 = vmatprep.subr.mxu0 0.0
    %3470 = vmatpush1.msra.mxu0 0.0
    %3471 = vmatprep.subr.mxu0 0.0
    %3472 = vmatpush1.msra.mxu0 0.0
    %3473 = vmatprep.subr.mxu0 0.0
    %3474 = vmatpush1.msra.mxu0 0.0
    %3475 = vmatprep.subr.mxu0 0.0
    %3476 = vmatpush1.msra.mxu0 0.0
    %3477 = vmatprep.subr.mxu0 0.0
    %3478 = vmatpush1.msra.mxu0 0.0
    %3479 = vmatprep.subr.mxu0 0.0
    %3480 = vmatpush1.msra.mxu0 0.0
    %3481 = vmatprep.subr.mxu0 0.0
    %3482 = vmatpush1.msra.mxu0 0.0
    %3483 = vmatprep.subr.mxu0 0.0
    %3484 = vmatpush1.msra.mxu0 0.0
    %3485 = vmatprep.subr.mxu0 0.0
    %3486 = vmatpush1.msra.mxu0 0.0
    %3487 = vmatprep.subr.mxu0 0.0
    %3488 = vmatpush1.msra.mxu0 0.0
    %3489 = vmatprep.subr.mxu0 0.0
    %3490 = vmatpush1.msra.mxu0 0.0
    %3491 = vmatprep.subr.mxu0 0.0
    %3492 = vmatpush1.msra.mxu0 0.0
    %3493 = vmatprep.subr.mxu0 0.0
    %3494 = vmatpush1.msra.mxu0 0.0
    %3495 = vmatprep.subr.mxu0 0.0
    %3496 = vmatpush1.msra.mxu0 0.0
    %3497 = vmatprep.subr.mxu0 0.0
    %3498 = vmatpush1.msra.mxu0 0.0
    %3499 = vmatprep.mubr.f32.mxu0 0.0
    %3500 = vmatmul.mubr.f32.gmra.mrb[0].mxu0 %v2115
    %v3501 = vpop.f32.mrb[0].mxu0
    %v3502 = vadd.f32 %v2711, %v3501
    %v3503 = vpop.f32.mrb[0].mxu0
    %v3504 = vadd.f32 %v2715, %v3503
    %3505 = vdwg.mxu0
    %3506 = vmatprep.subr.mxu0 %v2137
    %3507 = vmatpush1.msra.mxu0 %v2136
    %3508 = vmatprep.subr.mxu0 %v2169
    %3509 = vmatpush1.msra.mxu0 %v2168
    %3510 = vmatprep.subr.mxu0 %v2201
    %3511 = vmatpush1.msra.mxu0 %v2200
    %3512 = vmatprep.subr.mxu0 %v2233
    %3513 = vmatpush1.msra.mxu0 %v2232
    %3514 = vmatprep.subr.mxu0 %v2265
    %3515 = vmatpush1.msra.mxu0 %v2264
    %3516 = vmatprep.subr.mxu0 %v2297
    %3517 = vmatpush1.msra.mxu0 %v2296
    %3518 = vmatprep.subr.mxu0 %v2329
    %3519 = vmatpush1.msra.mxu0 %v2328
    %3520 = vmatprep.subr.mxu0 %v2361
    %3521 = vmatpush1.msra.mxu0 %v2360
    %3522 = vmatprep.subr.mxu0 %v2393
    %3523 = vmatpush1.msra.mxu0 %v2392
    %3524 = vmatprep.subr.mxu0 %v2425
    %3525 = vmatpush1.msra.mxu0 %v2424
    %3526 = vmatprep.subr.mxu0 %v2457
    %3527 = vmatpush1.msra.mxu0 %v2456
    %3528 = vmatprep.subr.mxu0 %v2489
    %3529 = vmatpush1.msra.mxu0 %v2488
    %3530 = vmatprep.subr.mxu0 %v2521
    %3531 = vmatpush1.msra.mxu0 %v2520
    %3532 = vmatprep.subr.mxu0 %v2553
    %3533 = vmatpush1.msra.mxu0 %v2552
    %3534 = vmatprep.subr.mxu0 %v2585
    %3535 = vmatpush1.msra.mxu0 %v2584
    %3536 = vmatprep.subr.mxu0 %v2617
    %3537 = vmatpush1.msra.mxu0 %v2616
    %3538 = vmatprep.subr.mxu0 0.0
    %3539 = vmatpush1.msra.mxu0 0.0
    %3540 = vmatprep.subr.mxu0 0.0
    %3541 = vmatpush1.msra.mxu0 0.0
    %3542 = vmatprep.subr.mxu0 0.0
    %3543 = vmatpush1.msra.mxu0 0.0
    %3544 = vmatprep.subr.mxu0 0.0
    %3545 = vmatpush1.msra.mxu0 0.0
    %3546 = vmatprep.subr.mxu0 0.0
    %3547 = vmatpush1.msra.mxu0 0.0
    %3548 = vmatprep.subr.mxu0 0.0
    %3549 = vmatpush1.msra.mxu0 0.0
    %3550 = vmatprep.subr.mxu0 0.0
    %3551 = vmatpush1.msra.mxu0 0.0
    %3552 = vmatprep.subr.mxu0 0.0
    %3553 = vmatpush1.msra.mxu0 0.0
    %3554 = vmatprep.subr.mxu0 0.0
    %3555 = vmatpush1.msra.mxu0 0.0
    %3556 = vmatprep.subr.mxu0 0.0
    %3557 = vmatpush1.msra.mxu0 0.0
    %3558 = vmatprep.subr.mxu0 0.0
    %3559 = vmatpush1.msra.mxu0 0.0
    %3560 = vmatprep.subr.mxu0 0.0
    %3561 = vmatpush1.msra.mxu0 0.0
    %3562 = vmatprep.subr.mxu0 0.0
    %3563 = vmatpush1.msra.mxu0 0.0
    %3564 = vmatprep.subr.mxu0 0.0
    %3565 = vmatpush1.msra.mxu0 0.0
    %3566 = vmatprep.subr.mxu0 0.0
    %3567 = vmatpush1.msra.mxu0 0.0
    %3568 = vmatprep.subr.mxu0 0.0
    %3569 = vmatpush1.msra.mxu0 0.0
    %3570 = vmatprep.mubr.f32.mxu0 0.0
    %3571 = vmatmul.mubr.f32.gmra.mrb[0].mxu0 %v2115
    %v3572 = vpop.f32.mrb[0].mxu0
    %v3573 = vadd.f32 %v2719, %v3572
    %v3574 = vpop.f32.mrb[0].mxu0
    %v3575 = vadd.f32 %v2723, %v3574
    %3576 = vdwg.mxu0
    %3577 = vmatprep.subr.mxu0 %v2139
    %3578 = vmatpush1.msra.mxu0 %v2138
    %3579 = vmatprep.subr.mxu0 %v2171
    %3580 = vmatpush1.msra.mxu0 %v2170
    %3581 = vmatprep.subr.mxu0 %v2203
    %3582 = vmatpush1.msra.mxu0 %v2202
    %3583 = vmatprep.subr.mxu0 %v2235
    %3584 = vmatpush1.msra.mxu0 %v2234
    %3585 = vmatprep.subr.mxu0 %v2267
    %3586 = vmatpush1.msra.mxu0 %v2266
    %3587 = vmatprep.subr.mxu0 %v2299
    %3588 = vmatpush1.msra.mxu0 %v2298
    %3589 = vmatprep.subr.mxu0 %v2331
    %3590 = vmatpush1.msra.mxu0 %v2330
    %3591 = vmatprep.subr.mxu0 %v2363
    %3592 = vmatpush1.msra.mxu0 %v2362
    %3593 = vmatprep.subr.mxu0 %v2395
    %3594 = vmatpush1.msra.mxu0 %v2394
    %3595 = vmatprep.subr.mxu0 %v2427
    %3596 = vmatpush1.msra.mxu0 %v2426
    %3597 = vmatprep.subr.mxu0 %v2459
    %3598 = vmatpush1.msra.mxu0 %v2458
    %3599 = vmatprep.subr.mxu0 %v2491
    %3600 = vmatpush1.msra.mxu0 %v2490
    %3601 = vmatprep.subr.mxu0 %v2523
    %3602 = vmatpush1.msra.mxu0 %v2522
    %3603 = vmatprep.subr.mxu0 %v2555
    %3604 = vmatpush1.msra.mxu0 %v2554
    %3605 = vmatprep.subr.mxu0 %v2587
    %3606 = vmatpush1.msra.mxu0 %v2586
    %3607 = vmatprep.subr.mxu0 %v2619
    %3608 = vmatpush1.msra.mxu0 %v2618
    %3609 = vmatprep.subr.mxu0 0.0
    %3610 = vmatpush1.msra.mxu0 0.0
    %3611 = vmatprep.subr.mxu0 0.0
    %3612 = vmatpush1.msra.mxu0 0.0
    %3613 = vmatprep.subr.mxu0 0.0
    %3614 = vmatpush1.msra.mxu0 0.0
    %3615 = vmatprep.subr.mxu0 0.0
    %3616 = vmatpush1.msra.mxu0 0.0
    %3617 = vmatprep.subr.mxu0 0.0
    %3618 = vmatpush1.msra.mxu0 0.0
    %3619 = vmatprep.subr.mxu0 0.0
    %3620 = vmatpush1.msra.mxu0 0.0
    %3621 = vmatprep.subr.mxu0 0.0
    %3622 = vmatpush1.msra.mxu0 0.0
    %3623 = vmatprep.subr.mxu0 0.0
    %3624 = vmatpush1.msra.mxu0 0.0
    %3625 = vmatprep.subr.mxu0 0.0
    %3626 = vmatpush1.msra.mxu0 0.0
    %3627 = vmatprep.subr.mxu0 0.0
    %3628 = vmatpush1.msra.mxu0 0.0
    %3629 = vmatprep.subr.mxu0 0.0
    %3630 = vmatpush1.msra.mxu0 0.0
    %3631 = vmatprep.subr.mxu0 0.0
    %3632 = vmatpush1.msra.mxu0 0.0
    %3633 = vmatprep.subr.mxu0 0.0
    %3634 = vmatpush1.msra.mxu0 0.0
    %3635 = vmatprep.subr.mxu0 0.0
    %3636 = vmatpush1.msra.mxu0 0.0
    %3637 = vmatprep.subr.mxu0 0.0
    %3638 = vmatpush1.msra.mxu0 0.0
    %3639 = vmatprep.subr.mxu0 0.0
    %3640 = vmatpush1.msra.mxu0 0.0
    %3641 = vmatprep.mubr.f32.mxu0 0.0
    %3642 = vmatmul.mubr.f32.gmra.mrb[0].mxu0 %v2115
    %v3643 = vpop.f32.mrb[0].mxu0
    %v3644 = vadd.f32 %v2727, %v3643
    %v3645 = vpop.f32.mrb[0].mxu0
    %v3646 = vadd.f32 %v2731, %v3645
    %3647 = vdwg.mxu0
    %3648 = vmatprep.subr.mxu0 %v2141
    %3649 = vmatpush1.msra.mxu0 %v2140
    %3650 = vmatprep.subr.mxu0 %v2173
    %3651 = vmatpush1.msra.mxu0 %v2172
    %3652 = vmatprep.subr.mxu0 %v2205
    %3653 = vmatpush1.msra.mxu0 %v2204
    %3654 = vmatprep.subr.mxu0 %v2237
    %3655 = vmatpush1.msra.mxu0 %v2236
    %3656 = vmatprep.subr.mxu0 %v2269
    %3657 = vmatpush1.msra.mxu0 %v2268
    %3658 = vmatprep.subr.mxu0 %v2301
    %3659 = vmatpush1.msra.mxu0 %v2300
    %3660 = vmatprep.subr.mxu0 %v2333
    %3661 = vmatpush1.msra.mxu0 %v2332
    %3662 = vmatprep.subr.mxu0 %v2365
    %3663 = vmatpush1.msra.mxu0 %v2364
    %3664 = vmatprep.subr.mxu0 %v2397
    %3665 = vmatpush1.msra.mxu0 %v2396
    %3666 = vmatprep.subr.mxu0 %v2429
    %3667 = vmatpush1.msra.mxu0 %v2428
    %3668 = vmatprep.subr.mxu0 %v2461
    %3669 = vmatpush1.msra.mxu0 %v2460
    %3670 = vmatprep.subr.mxu0 %v2493
    %3671 = vmatpush1.msra.mxu0 %v2492
    %3672 = vmatprep.subr.mxu0 %v2525
    %3673 = vmatpush1.msra.mxu0 %v2524
    %3674 = vmatprep.subr.mxu0 %v2557
    %3675 = vmatpush1.msra.mxu0 %v2556
    %3676 = vmatprep.subr.mxu0 %v2589
    %3677 = vmatpush1.msra.mxu0 %v2588
    %3678 = vmatprep.subr.mxu0 %v2621
    %3679 = vmatpush1.msra.mxu0 %v2620
    %3680 = vmatprep.subr.mxu0 0.0
    %3681 = vmatpush1.msra.mxu0 0.0
    %3682 = vmatprep.subr.mxu0 0.0
    %3683 = vmatpush1.msra.mxu0 0.0
    %3684 = vmatprep.subr.mxu0 0.0
    %3685 = vmatpush1.msra.mxu0 0.0
    %3686 = vmatprep.subr.mxu0 0.0
    %3687 = vmatpush1.msra.mxu0 0.0
    %3688 = vmatprep.subr.mxu0 0.0
    %3689 = vmatpush1.msra.mxu0 0.0
    %3690 = vmatprep.subr.mxu0 0.0
    %3691 = vmatpush1.msra.mxu0 0.0
    %3692 = vmatprep.subr.mxu0 0.0
    %3693 = vmatpush1.msra.mxu0 0.0
    %3694 = vmatprep.subr.mxu0 0.0
    %3695 = vmatpush1.msra.mxu0 0.0
    %3696 = vmatprep.subr.mxu0 0.0
    %3697 = vmatpush1.msra.mxu0 0.0
    %3698 = vmatprep.subr.mxu0 0.0
    %3699 = vmatpush1.msra.mxu0 0.0
    %3700 = vmatprep.subr.mxu0 0.0
    %3701 = vmatpush1.msra.mxu0 0.0
    %3702 = vmatprep.subr.mxu0 0.0
    %3703 = vmatpush1.msra.mxu0 0.0
    %3704 = vmatprep.subr.mxu0 0.0
    %3705 = vmatpush1.msra.mxu0 0.0
    %3706 = vmatprep.subr.mxu0 0.0
    %3707 = vmatpush1.msra.mxu0 0.0
    %3708 = vmatprep.subr.mxu0 0.0
    %3709 = vmatpush1.msra.mxu0 0.0
    %3710 = vmatprep.subr.mxu0 0.0
    %3711 = vmatpush1.msra.mxu0 0.0
    %3712 = vmatprep.mubr.f32.mxu0 0.0
    %3713 = vmatmul.mubr.f32.gmra.mrb[0].mxu0 %v2115
    %v3714 = vpop.f32.mrb[0].mxu0
    %v3715 = vadd.f32 %v2735, %v3714
    %v3716 = vpop.f32.mrb[0].mxu0
    %v3717 = vadd.f32 %v2739, %v3716
    %3718 = vdwg.mxu0
    %3719 = vmatprep.subr.mxu0 %v2143
    %3720 = vmatpush1.msra.mxu0 %v2142
    %3721 = vmatprep.subr.mxu0 %v2175
    %3722 = vmatpush1.msra.mxu0 %v2174
    %3723 = vmatprep.subr.mxu0 %v2207
    %3724 = vmatpush1.msra.mxu0 %v2206
    %3725 = vmatprep.subr.mxu0 %v2239
    %3726 = vmatpush1.msra.mxu0 %v2238
    %3727 = vmatprep.subr.mxu0 %v2271
    %3728 = vmatpush1.msra.mxu0 %v2270
    %3729 = vmatprep.subr.mxu0 %v2303
    %3730 = vmatpush1.msra.mxu0 %v2302
    %3731 = vmatprep.subr.mxu0 %v2335
    %3732 = vmatpush1.msra.mxu0 %v2334
    %3733 = vmatprep.subr.mxu0 %v2367
    %3734 = vmatpush1.msra.mxu0 %v2366
    %3735 = vmatprep.subr.mxu0 %v2399
    %3736 = vmatpush1.msra.mxu0 %v2398
    %3737 = vmatprep.subr.mxu0 %v2431
    %3738 = vmatpush1.msra.mxu0 %v2430
    %3739 = vmatprep.subr.mxu0 %v2463
    %3740 = vmatpush1.msra.mxu0 %v2462
    %3741 = vmatprep.subr.mxu0 %v2495
    %3742 = vmatpush1.msra.mxu0 %v2494
    %3743 = vmatprep.subr.mxu0 %v2527
    %3744 = vmatpush1.msra.mxu0 %v2526
    %3745 = vmatprep.subr.mxu0 %v2559
    %3746 = vmatpush1.msra.mxu0 %v2558
    %3747 = vmatprep.subr.mxu0 %v2591
    %3748 = vmatpush1.msra.mxu0 %v2590
    %3749 = vmatprep.subr.mxu0 %v2623
    %3750 = vmatpush1.msra.mxu0 %v2622
    %3751 = vmatprep.subr.mxu0 0.0
    %3752 = vmatpush1.msra.mxu0 0.0
    %3753 = vmatprep.subr.mxu0 0.0
    %3754 = vmatpush1.msra.mxu0 0.0
    %3755 = vmatprep.subr.mxu0 0.0
    %3756 = vmatpush1.msra.mxu0 0.0
    %3757 = vmatprep.subr.mxu0 0.0
    %3758 = vmatpush1.msra.mxu0 0.0
    %3759 = vmatprep.subr.mxu0 0.0
    %3760 = vmatpush1.msra.mxu0 0.0
    %3761 = vmatprep.subr.mxu0 0.0
    %3762 = vmatpush1.msra.mxu0 0.0
    %3763 = vmatprep.subr.mxu0 0.0
    %3764 = vmatpush1.msra.mxu0 0.0
    %3765 = vmatprep.subr.mxu0 0.0
    %3766 = vmatpush1.msra.mxu0 0.0
    %3767 = vmatprep.subr.mxu0 0.0
    %3768 = vmatpush1.msra.mxu0 0.0
    %3769 = vmatprep.subr.mxu0 0.0
    %3770 = vmatpush1.msra.mxu0 0.0
    %3771 = vmatprep.subr.mxu0 0.0
    %3772 = vmatpush1.msra.mxu0 0.0
    %3773 = vmatprep.subr.mxu0 0.0
    %3774 = vmatpush1.msra.mxu0 0.0
    %3775 = vmatprep.subr.mxu0 0.0
    %3776 = vmatpush1.msra.mxu0 0.0
    %3777 = vmatprep.subr.mxu0 0.0
    %3778 = vmatpush1.msra.mxu0 0.0
    %3779 = vmatprep.subr.mxu0 0.0
    %3780 = vmatpush1.msra.mxu0 0.0
    %3781 = vmatprep.subr.mxu0 0.0
    %3782 = vmatpush1.msra.mxu0 0.0
    %3783 = vmatprep.mubr.f32.mxu0 0.0
    %3784 = vmatmul.mubr.f32.gmra.mrb[0].mxu0 %v2115
    %v3785 = vpop.f32.mrb[0].mxu0
    %v3786 = vadd.f32 %v2743, %v3785
    %v3787 = vpop.f32.mrb[0].mxu0
    %v3788 = vadd.f32 %v2747, %v3787
    %3789 = vdwg.mxu0
    %3790 = vmatprep.subr.mxu0 %v2145
    %3791 = vmatpush1.msra.mxu0 %v2144
    %3792 = vmatprep.subr.mxu0 %v2177
    %3793 = vmatpush1.msra.mxu0 %v2176
    %3794 = vmatprep.subr.mxu0 %v2209
    %3795 = vmatpush1.msra.mxu0 %v2208
    %3796 = vmatprep.subr.mxu0 %v2241
    %3797 = vmatpush1.msra.mxu0 %v2240
    %3798 = vmatprep.subr.mxu0 %v2273
    %3799 = vmatpush1.msra.mxu0 %v2272
    %3800 = vmatprep.subr.mxu0 %v2305
    %3801 = vmatpush1.msra.mxu0 %v2304
    %3802 = vmatprep.subr.mxu0 %v2337
    %3803 = vmatpush1.msra.mxu0 %v2336
    %3804 = vmatprep.subr.mxu0 %v2369
    %3805 = vmatpush1.msra.mxu0 %v2368
    %3806 = vmatprep.subr.mxu0 %v2401
    %3807 = vmatpush1.msra.mxu0 %v2400
    %3808 = vmatprep.subr.mxu0 %v2433
    %3809 = vmatpush1.msra.mxu0 %v2432
    %3810 = vmatprep.subr.mxu0 %v2465
    %3811 = vmatpush1.msra.mxu0 %v2464
    %3812 = vmatprep.subr.mxu0 %v2497
    %3813 = vmatpush1.msra.mxu0 %v2496
    %3814 = vmatprep.subr.mxu0 %v2529
    %3815 = vmatpush1.msra.mxu0 %v2528
    %3816 = vmatprep.subr.mxu0 %v2561
    %3817 = vmatpush1.msra.mxu0 %v2560
    %3818 = vmatprep.subr.mxu0 %v2593
    %3819 = vmatpush1.msra.mxu0 %v2592
    %3820 = vmatprep.subr.mxu0 %v2625
    %3821 = vmatpush1.msra.mxu0 %v2624
    %3822 = vmatprep.subr.mxu0 0.0
    %3823 = vmatpush1.msra.mxu0 0.0
    %3824 = vmatprep.subr.mxu0 0.0
    %3825 = vmatpush1.msra.mxu0 0.0
    %3826 = vmatprep.subr.mxu0 0.0
    %3827 = vmatpush1.msra.mxu0 0.0
    %3828 = vmatprep.subr.mxu0 0.0
    %3829 = vmatpush1.msra.mxu0 0.0
    %3830 = vmatprep.subr.mxu0 0.0
    %3831 = vmatpush1.msra.mxu0 0.0
    %3832 = vmatprep.subr.mxu0 0.0
    %3833 = vmatpush1.msra.mxu0 0.0
    %3834 = vmatprep.subr.mxu0 0.0
    %3835 = vmatpush1.msra.mxu0 0.0
    %3836 = vmatprep.subr.mxu0 0.0
    %3837 = vmatpush1.msra.mxu0 0.0
    %3838 = vmatprep.subr.mxu0 0.0
    %3839 = vmatpush1.msra.mxu0 0.0
    %3840 = vmatprep.subr.mxu0 0.0
    %3841 = vmatpush1.msra.mxu0 0.0
    %3842 = vmatprep.subr.mxu0 0.0
    %3843 = vmatpush1.msra.mxu0 0.0
    %3844 = vmatprep.subr.mxu0 0.0
    %3845 = vmatpush1.msra.mxu0 0.0
    %3846 = vmatprep.subr.mxu0 0.0
    %3847 = vmatpush1.msra.mxu0 0.0
    %3848 = vmatprep.subr.mxu0 0.0
    %3849 = vmatpush1.msra.mxu0 0.0
    %3850 = vmatprep.subr.mxu0 0.0
    %3851 = vmatpush1.msra.mxu0 0.0
    %3852 = vmatprep.subr.mxu0 0.0
    %3853 = vmatpush1.msra.mxu0 0.0
    %3854 = vmatprep.mubr.f32.mxu0 0.0
    %3855 = vmatmul.mubr.f32.gmra.mrb[0].mxu0 %v2115
    %v3856 = vpop.f32.mrb[0].mxu0
    %v3857 = vadd.f32 %v2751, %v3856
    %v3858 = vpop.f32.mrb[0].mxu0
    %v3859 = vadd.f32 %v2755, %v3858
    %3860 = vdwg.mxu0
    %3861 = vmatprep.subr.mxu0 %v2147
    %3862 = vmatpush1.msra.mxu0 %v2146
    %3863 = vmatprep.subr.mxu0 %v2179
    %3864 = vmatpush1.msra.mxu0 %v2178
    %3865 = vmatprep.subr.mxu0 %v2211
    %3866 = vmatpush1.msra.mxu0 %v2210
    %3867 = vmatprep.subr.mxu0 %v2243
    %3868 = vmatpush1.msra.mxu0 %v2242
    %3869 = vmatprep.subr.mxu0 %v2275
    %3870 = vmatpush1.msra.mxu0 %v2274
    %3871 = vmatprep.subr.mxu0 %v2307
    %3872 = vmatpush1.msra.mxu0 %v2306
    %3873 = vmatprep.subr.mxu0 %v2339
    %3874 = vmatpush1.msra.mxu0 %v2338
    %3875 = vmatprep.subr.mxu0 %v2371
    %3876 = vmatpush1.msra.mxu0 %v2370
    %3877 = vmatprep.subr.mxu0 %v2403
    %3878 = vmatpush1.msra.mxu0 %v2402
    %3879 = vmatprep.subr.mxu0 %v2435
    %3880 = vmatpush1.msra.mxu0 %v2434
    %3881 = vmatprep.subr.mxu0 %v2467
    %3882 = vmatpush1.msra.mxu0 %v2466
    %3883 = vmatprep.subr.mxu0 %v2499
    %3884 = vmatpush1.msra.mxu0 %v2498
    %3885 = vmatprep.subr.mxu0 %v2531
    %3886 = vmatpush1.msra.mxu0 %v2530
    %3887 = vmatprep.subr.mxu0 %v2563
    %3888 = vmatpush1.msra.mxu0 %v2562
    %3889 = vmatprep.subr.mxu0 %v2595
    %3890 = vmatpush1.msra.mxu0 %v2594
    %3891 = vmatprep.subr.mxu0 %v2627
    %3892 = vmatpush1.msra.mxu0 %v2626
    %3893 = vmatprep.subr.mxu0 0.0
    %3894 = vmatpush1.msra.mxu0 0.0
    %3895 = vmatprep.subr.mxu0 0.0
    %3896 = vmatpush1.msra.mxu0 0.0
    %3897 = vmatprep.subr.mxu0 0.0
    %3898 = vmatpush1.msra.mxu0 0.0
    %3899 = vmatprep.subr.mxu0 0.0
    %3900 = vmatpush1.msra.mxu0 0.0
    %3901 = vmatprep.subr.mxu0 0.0
    %3902 = vmatpush1.msra.mxu0 0.0
    %3903 = vmatprep.subr.mxu0 0.0
    %3904 = vmatpush1.msra.mxu0 0.0
    %3905 = vmatprep.subr.mxu0 0.0
    %3906 = vmatpush1.msra.mxu0 0.0
    %3907 = vmatprep.subr.mxu0 0.0
    %3908 = vmatpush1.msra.mxu0 0.0
    %3909 = vmatprep.subr.mxu0 0.0
    %3910 = vmatpush1.msra.mxu0 0.0
    %3911 = vmatprep.subr.mxu0 0.0
    %3912 = vmatpush1.msra.mxu0 0.0
    %3913 = vmatprep.subr.mxu0 0.0
    %3914 = vmatpush1.msra.mxu0 0.0
    %3915 = vmatprep.subr.mxu0 0.0
    %3916 = vmatpush1.msra.mxu0 0.0
    %3917 = vmatprep.subr.mxu0 0.0
    %3918 = vmatpush1.msra.mxu0 0.0
    %3919 = vmatprep.subr.mxu0 0.0
    %3920 = vmatpush1.msra.mxu0 0.0
    %3921 = vmatprep.subr.mxu0 0.0
    %3922 = vmatpush1.msra.mxu0 0.0
    %3923 = vmatprep.subr.mxu0 0.0
    %3924 = vmatpush1.msra.mxu0 0.0
    %3925 = vmatprep.mubr.f32.mxu0 0.0
    %3926 = vmatmul.mubr.f32.gmra.mrb[0].mxu0 %v2115
    %v3927 = vpop.f32.mrb[0].mxu0
    %v3928 = vadd.f32 %v2759, %v3927
    %v3929 = vpop.f32.mrb[0].mxu0
    %v3930 = vadd.f32 %v2763, %v3929
    %3931 = vdwg.mxu0
    %vm3932 = vcmp.gt.f32.partialorder %v2863, 0.0
    %vm3933 = vcmp.gt.f32.partialorder %v2865, 0.0
    %vm3934 = vcmp.gt.f32.partialorder %v2934, 0.0
    %vm3935 = vcmp.gt.f32.partialorder %v2936, 0.0
    %vm3936 = vcmp.gt.f32.partialorder %v3005, 0.0
    %vm3937 = vcmp.gt.f32.partialorder %v3007, 0.0
    %vm3938 = vcmp.gt.f32.partialorder %v3076, 0.0
    %vm3939 = vcmp.gt.f32.partialorder %v3078, 0.0
    %vm3940 = vcmp.gt.f32.partialorder %v3147, 0.0
    %vm3941 = vcmp.gt.f32.partialorder %v3149, 0.0
    %vm3942 = vcmp.gt.f32.partialorder %v3218, 0.0
    %vm3943 = vcmp.gt.f32.partialorder %v3220, 0.0
    %vm3944 = vcmp.gt.f32.partialorder %v3289, 0.0
    %vm3945 = vcmp.gt.f32.partialorder %v3291, 0.0
    %vm3946 = vcmp.gt.f32.partialorder %v3360, 0.0
    %vm3947 = vcmp.gt.f32.partialorder %v3362, 0.0
    %vm3948 = vcmp.gt.f32.partialorder %v3431, 0.0
    %vm3949 = vcmp.gt.f32.partialorder %v3433, 0.0
    %vm3950 = vcmp.gt.f32.partialorder %v3502, 0.0
    %vm3951 = vcmp.gt.f32.partialorder %v3504, 0.0
    %vm3952 = vcmp.gt.f32.partialorder %v3573, 0.0
    %vm3953 = vcmp.gt.f32.partialorder %v3575, 0.0
    %vm3954 = vcmp.gt.f32.partialorder %v3644, 0.0
    %vm3955 = vcmp.gt.f32.partialorder %v3646, 0.0
    %vm3956 = vcmp.gt.f32.partialorder %v3715, 0.0
    %vm3957 = vcmp.gt.f32.partialorder %v3717, 0.0
    %vm3958 = vcmp.gt.f32.partialorder %v3786, 0.0
    %vm3959 = vcmp.gt.f32.partialorder %v3788, 0.0
    %vm3960 = vcmp.gt.f32.partialorder %v3857, 0.0
    %vm3961 = vcmp.gt.f32.partialorder %v3859, 0.0
    %vm3962 = vcmp.gt.f32.partialorder %v3928, 0.0
    %vm3963 = vcmp.gt.f32.partialorder %v3930, 0.0
    %v3964 = vmul.f32 %v2863, 0.2
    %v3965 = vmul.f32 %v2865, 0.2
    %v3966 = vmul.f32 %v2934, 0.2
    %v3967 = vmul.f32 %v2936, 0.2
    %v3968 = vmul.f32 %v3005, 0.2
    %v3969 = vmul.f32 %v3007, 0.2
    %v3970 = vmul.f32 %v3076, 0.2
    %v3971 = vmul.f32 %v3078, 0.2
    %v3972 = vmul.f32 %v3147, 0.2
    %v3973 = vmul.f32 %v3149, 0.2
    %v3974 = vmul.f32 %v3218, 0.2
    %v3975 = vmul.f32 %v3220, 0.2
    %v3976 = vmul.f32 %v3289, 0.2
    %v3977 = vmul.f32 %v3291, 0.2
    %v3978 = vmul.f32 %v3360, 0.2
    %v3979 = vmul.f32 %v3362, 0.2
    %v3980 = vmul.f32 %v3431, 0.2
    %v3981 = vmul.f32 %v3433, 0.2
    %v3982 = vmul.f32 %v3502, 0.2
    %v3983 = vmul.f32 %v3504, 0.2
    %v3984 = vmul.f32 %v3573, 0.2
    %v3985 = vmul.f32 %v3575, 0.2
    %v3986 = vmul.f32 %v3644, 0.2
    %v3987 = vmul.f32 %v3646, 0.2
    %v3988 = vmul.f32 %v3715, 0.2
    %v3989 = vmul.f32 %v3717, 0.2
    %v3990 = vmul.f32 %v3786, 0.2
    %v3991 = vmul.f32 %v3788, 0.2
    %v3992 = vmul.f32 %v3857, 0.2
    %v3993 = vmul.f32 %v3859, 0.2
    %v3994 = vmul.f32 %v3928, 0.2
    %v3995 = vmul.f32 %v3930, 0.2
    %v3996 = vsel %vm3932, %v2863, %v3964
    %v3997 = vsel %vm3933, %v2865, %v3965
    %v3998 = vsel %vm3934, %v2934, %v3966
    %v3999 = vsel %vm3935, %v2936, %v3967
    %v4000 = vsel %vm3936, %v3005, %v3968
    %v4001 = vsel %vm3937, %v3007, %v3969
    %v4002 = vsel %vm3938, %v3076, %v3970
    %v4003 = vsel %vm3939, %v3078, %v3971
    %v4004 = vsel %vm3940, %v3147, %v3972
    %v4005 = vsel %vm3941, %v3149, %v3973
    %v4006 = vsel %vm3942, %v3218, %v3974
    %v4007 = vsel %vm3943, %v3220, %v3975
    %v4008 = vsel %vm3944, %v3289, %v3976
    %v4009 = vsel %vm3945, %v3291, %v3977
    %v4010 = vsel %vm3946, %v3360, %v3978
    %v4011 = vsel %vm3947, %v3362, %v3979
    %v4012 = vsel %vm3948, %v3431, %v3980
    %v4013 = vsel %vm3949, %v3433, %v3981
    %v4014 = vsel %vm3950, %v3502, %v3982
    %v4015 = vsel %vm3951, %v3504, %v3983
    %v4016 = vsel %vm3952, %v3573, %v3984
    %v4017 = vsel %vm3953, %v3575, %v3985
    %v4018 = vsel %vm3954, %v3644, %v3986
    %v4019 = vsel %vm3955, %v3646, %v3987
    %v4020 = vsel %vm3956, %v3715, %v3988
    %v4021 = vsel %vm3957, %v3717, %v3989
    %v4022 = vsel %vm3958, %v3786, %v3990
    %v4023 = vsel %vm3959, %v3788, %v3991
    %v4024 = vsel %vm3960, %v3857, %v3992
    %v4025 = vsel %vm3961, %v3859, %v3993
    %v4026 = vsel %vm3962, %v3928, %v3994
    %v4027 = vsel %vm3963, %v3930, %v3995
    %4028 = vst [vmem:[%s14] sm:$0xff] %v3996
    %4029 = vst [vmem:[%s14 + $0x8] sm:$0xff] %v3997
    %4030 = vst [vmem:[%s14 + $0x10] sm:$0xff] %v3998
    %4031 = vst [vmem:[%s14 + $0x18] sm:$0xff] %v3999
    %4032 = vst [vmem:[%s14 + $0x20] sm:$0xff] %v4000
    %4033 = vst [vmem:[%s14 + $0x28] sm:$0xff] %v4001
    %4034 = vst [vmem:[%s14 + $0x30] sm:$0xff] %v4002
    %4035 = vst [vmem:[%s14 + $0x38] sm:$0xff] %v4003
    %4036 = vst [vmem:[%s14 + $0x40] sm:$0xff] %v4004
    %4037 = vst [vmem:[%s14 + $0x48] sm:$0xff] %v4005
    %4038 = vst [vmem:[%s14 + $0x50] sm:$0xff] %v4006
    %4039 = vst [vmem:[%s14 + $0x58] sm:$0xff] %v4007
    %4040 = vst [vmem:[%s14 + $0x60] sm:$0xff] %v4008
    %4041 = vst [vmem:[%s14 + $0x68] sm:$0xff] %v4009
    %4042 = vst [vmem:[%s14 + $0x70] sm:$0xff] %v4010
    %4043 = vst [vmem:[%s14 + $0x78] sm:$0xff] %v4011
    %4044 = vst [vmem:[%s14 + $0x80] sm:$0xff] %v4012
    %4045 = vst [vmem:[%s14 + $0x88] sm:$0xff] %v4013
    %4046 = vst [vmem:[%s14 + $0x90] sm:$0xff] %v4014
    %4047 = vst [vmem:[%s14 + $0x98] sm:$0xff] %v4015
    %4048 = vst [vmem:[%s14 + $0xa0] sm:$0xff] %v4016
    %4049 = vst [vmem:[%s14 + $0xa8] sm:$0xff] %v4017
    %4050 = vst [vmem:[%s14 + $0xb0] sm:$0xff] %v4018
    %4051 = vst [vmem:[%s14 + $0xb8] sm:$0xff] %v4019
    %4052 = vst [vmem:[%s14 + $0xc0] sm:$0xff] %v4020
    %4053 = vst [vmem:[%s14 + $0xc8] sm:$0xff] %v4021
    %4054 = vst [vmem:[%s14 + $0xd0] sm:$0xff] %v4022
    %4055 = vst [vmem:[%s14 + $0xd8] sm:$0xff] %v4023
    %4056 = vst [vmem:[%s14 + $0xe0] sm:$0xff] %v4024
    %4057 = vst [vmem:[%s14 + $0xe8] sm:$0xff] %v4025
    %4058 = vst [vmem:[%s14 + $0xf0] sm:$0xff] %v4026
    %4059 = vst [vmem:[%s14 + $0xf8] sm:$0xff] %v4027
    // Predicated region
    $region58: #{autoencoder_forward.4} parent=1 // pred_check
      _
    $region59: #{autoencoder_forward.4} parent=1 // pred_check_branch
      %4061 = sbr.rel (0) target = $region61
    $region60: #{autoencoder_forward.4} parent=1 // pred_region
      _
    $region61: #{autoencoder_forward.4} parent=1 // pred_fallthru
      _
    // Predicated region
    $region62: #{autoencoder_forward.4} parent=1 // pred_check
      _
    $region63: #{autoencoder_forward.4} parent=1 // pred_check_branch
      %4063 = sbr.rel (0) target = $region65
    $region64: #{autoencoder_forward.4} parent=1 // pred_region
      _
    $region65: #{autoencoder_forward.4} parent=1 // pred_fallthru
      _
    // Predicated region
    $region66: #{autoencoder_forward.4} parent=1 // pred_check
      _
    $region67: #{autoencoder_forward.4} parent=1 // pred_check_branch
      %4065 = sbr.rel (0) target = $region69
    $region68: #{autoencoder_forward.4} parent=1 // pred_region
      _
    $region69: #{autoencoder_forward.4} parent=1 // pred_fallthru
      _
    // Predicated region
    $region70: #{autoencoder_forward.4} parent=1 // pred_check
      _
    $region71: #{autoencoder_forward.4} parent=1 // pred_check_branch
      %4067 = sbr.rel (0) target = $region73
    $region72: #{autoencoder_forward.4} parent=1 // pred_region
      _
    $region73: #{autoencoder_forward.4} parent=1 // pred_fallthru
      _
    %4068 = vsyncpa [#allocation3], 1

</llo_original>
